<compile_context>
chip_gen: v6e
topology: v6e:2x2x1
jax: 0.10.0
libtpu: 0.0.40
codegen_flags: <defaults>
</compile_context>

<pallas_src>
import jax
import jax.numpy as jnp
import numpy as np
from jax.experimental import pallas as pl
from jax.experimental.pallas import tpu as pltpu


# ---------------------------------------------------------------------------
# Fused forward kernel
# ---------------------------------------------------------------------------
def _fused_gnn_kernel(
    pt_ref,        # (B*n_probes, 1)  probe temperatures, b-major column
    sbig_ref,      # (B*N, B*n_probes) block-diag 0/1 probe scatter matrix
    pmcol_ref,     # (B*N, 1)         probe mask column (tiled over batch)
    a_ref,         # (N, N)           gcn-normalized adjacency (symmetric)
    mbig_ref,      # (P*B, B*N)       block-diag cell->pin scatter-mean (p-major rows)
    we1_ref, be1_ref,    # encoder layer 1: (2, C1), (1, C1)
    we2_ref, be2_ref,    # encoder layer 2: (C1, C2), (1, C2)
    wp1_ref, bp1_ref,    # pin head lin 1: (P*C2, H1), (1, H1)
    wp2_ref, bp2_ref,    # pin head lin 2: (H1, P), (1, P)
    wt1t_ref, bt1c_ref,  # temp head gcn 1 (transposed): (T1, C2), (T1, 1)
    wt2t_ref, bt2_ref,   # temp head gcn 2 (transposed): (1, T1), (1, 1)
    pin_out_ref,         # (B, P)
    temp_out_ref,        # (1, B*N)   lane-dense temperature row
    x1_scr,              # VMEM (B*N, C1)
    xe_scr,              # VMEM (B*N, C2)
):
    f32 = jnp.float32
    HI = jax.lax.Precision.HIGHEST
    N = a_ref.shape[0]
    BN = pmcol_ref.shape[0]
    B = BN // N
    P = wp2_ref.shape[1]

    def mm(x, y):
        return jnp.dot(x, y, precision=HI, preferred_element_type=f32)

    a = a_ref[...]

    # ---------------- input features + encoder layer 1 ----------------------
    # probe scatter as one matmul; x @ We1 as two broadcast outer-products
    # (x has only 2 columns, so this stays on the VPU while the MXU is free).
    pv_col = mm(sbig_ref[...], pt_ref[...])                       # (B*N, 1)
    h = pv_col * we1_ref[0:1, :] + pmcol_ref[...] * we1_ref[1:2, :]   # (B*N, C1)
    b1 = be1_ref[...]
    x1_scr[...] = jnp.maximum(h + b1, 0.0)                        # all rows (identity A)
    x1_scr[0:N, :] = jnp.maximum(mm(a, h[0:N, :]) + b1, 0.0)      # batch 0: real aggregation

    # ---------------- encoder layer 2 ----------------------------------------
    h2 = mm(x1_scr[...], we2_ref[...])                            # (B*N, C2)
    b2 = be2_ref[...]
    xe_scr[...] = jnp.maximum(h2 + b2, 0.0)
    xe_scr[0:N, :] = jnp.maximum(mm(a, h2[0:N, :]) + b2, 0.0)
    xe = xe_scr[...]                                              # (B*N, C2)

    # ---------------- pin power head -----------------------------------------
    # One pooled matmul for ALL batches via the block-diagonal pin matrix
    # (rows ordered p-major, b-minor), then the PyTorch row-major (p, c)
    # flatten as a static lane concatenation, then two plain matmuls.
    pinf = mm(mbig_ref[...], xe)                                  # (P*B, C2)
    blocks = [pinf[p * B:(p + 1) * B, :] for p in range(P)]       # each (B, C2)
    pin_flat = jnp.concatenate(blocks, axis=1) if P > 1 else blocks[0]   # (B, P*C2)
    hh = jnp.maximum(mm(pin_flat, wp1_ref[...]) + bp1_ref[...], 0.0)     # (B, H1)
    pin_out_ref[...] = mm(hh, wp2_ref[...]) + bp2_ref[...]               # (B, P)

    # ---------------- temperature head (row orientation) ---------------------
    # Channels on sublanes, nodes on lanes -> lane-dense output, MXU-only
    # aggregation, no eye / broadcast-reduce transposes.
    htT = jax.lax.dot_general(wt1t_ref[...], xe, (((1,), (1,)), ((), ())),
                              precision=HI, preferred_element_type=f32)   # (T1, B*N)
    ht0 = mm(htT[:, 0:N], a)                                      # batch 0: (X W)^T A^T, A sym.
    if B > 1:
        htT = jnp.concatenate([ht0, htT[:, N:]], axis=1)
    else:
        htT = ht0
    htT = jnp.maximum(htT + bt1c_ref[...], 0.0)                   # (T1, B*N)
    rowT = mm(wt2t_ref[...], htT)                                 # (1, B*N)
    bt2 = bt2_ref[...]
    temp_out_ref[:, 0:N] = mm(rowT[:, 0:N], a) + bt2              # batch 0 aggregation on MXU
    if B > 1:
        temp_out_ref[:, N:] = rowT[:, N:] + bt2                   # identity adjacency


def _full_spec(arr):
    nd = arr.ndim
    return pl.BlockSpec(arr.shape, lambda i: (0,) * nd)


def gnn_forward(probe_temperature, params, buffers):
    """Single fused pallas_call for the whole GNNModel forward."""
    B = probe_temperature.shape[0]
    N = buffers["a_hat"].shape[0]
    P = buffers["pin_map"].shape[0]

    # only remaining host glue: flatten the (B, n_probes) input to a column
    pt_col = probe_temperature.reshape(-1, 1)

    (we1, be1), (we2, be2) = params["encoder"]
    (wp1, bp1), (wp2, bp2) = params["pin_head"]
    (wt1, bt1), (wt2, bt2) = params["temp_head"]
    C1, C2 = we1.shape[1], we2.shape[1]
    wt1t = wt1.T            # (T1, C2)
    bt1c = bt1.reshape(-1, 1)
    wt2t = wt2.T            # (1, T1)

    inputs = (pt_col, buffers["s_big"], buffers["pm_col"], buffers["a_hat"],
              buffers["m_big"],
              we1, be1, we2, be2, wp1, bp1, wp2, bp2, wt1t, bt1c, wt2t, bt2)

    pin_power, temp_row = pl.pallas_call(
        _fused_gnn_kernel,
        out_shape=(jax.ShapeDtypeStruct((B, P), jnp.float32),
                   jax.ShapeDtypeStruct((1, B * N), jnp.float32)),
        grid=(1,),
        in_specs=[_full_spec(arr) for arr in inputs],
        out_specs=(pl.BlockSpec((B, P), lambda i: (0, 0)),
                   pl.BlockSpec((1, B * N), lambda i: (0, 0))),
        scratch_shapes=[pltpu.VMEM((B * N, C1), jnp.float32),
                        pltpu.VMEM((B * N, C2), jnp.float32)],
        compiler_params=pltpu.CompilerParams(
            dimension_semantics=("arbitrary",)),
    )(*inputs)
    return pin_power, temp_row.reshape(B, N)


# ---------------------------------------------------------------------------
# Buffers / params (plain JAX, built once, host side)
# ---------------------------------------------------------------------------
def build_gcn_norm_adjacency(edge_index, num_nodes):
    """Dense A_hat = D^-1/2 (A + I) D^-1/2, matching torch_geometric gcn_norm."""
    src, dst = edge_index[0], edge_index[1]
    a = jnp.zeros((num_nodes, num_nodes), jnp.float32).at[dst, src].add(1.0)
    a = a + jnp.eye(num_nodes, dtype=jnp.float32)        # add_self_loops=True
    deg = a.sum(axis=1)
    dinv = 1.0 / jnp.sqrt(deg)
    return a * dinv[:, None] * dinv[None, :]


def build_pin_mapping_matrix(cell_to_pin_mapping, num_pins):
    """M[p, c] = 1/count[p] if mapping[c] == p (and valid) else 0."""
    valid = cell_to_pin_mapping >= 0
    onehot = ((cell_to_pin_mapping[None, :] == jnp.arange(num_pins)[:, None])
              & valid[None, :]).astype(jnp.float32)
    counts = jnp.maximum(onehot.sum(axis=1), 1.0)
    return onehot / counts[:, None]


def build_buffers(edge_index, num_cells, num_pins, probe_locations,
                  cell_to_pin_mapping, batch):
    """Fixed (registered-buffer-like) matrices, specialized to the batch size."""
    N, P = num_cells, num_pins
    a_hat = build_gcn_norm_adjacency(edge_index, N)
    # the kernel drops a_hat^T and relies on symmetry (undirected graph)
    assert bool(jnp.allclose(a_hat, a_hat.T, atol=1e-6)), "a_hat must be symmetric"
    probe_mask = jnp.zeros((N,), jnp.float32).at[probe_locations].set(1.0)
    pin_map = build_pin_mapping_matrix(cell_to_pin_mapping, P)

    eye_b = jnp.eye(batch, dtype=jnp.float32)
    # 0/1 scatter matrix: probe j -> cell probe_locations[j] (no duplicate probes)
    s_scat = (jnp.arange(N)[:, None] == probe_locations[None, :]).astype(jnp.float32)
    s_big = jnp.kron(eye_b, s_scat)                                  # (B*N, B*np)
    pm_col = jnp.tile(probe_mask, batch).reshape(batch * N, 1)       # (B*N, 1)
    # block-diag pin pooling with rows ordered p-major, b-minor:
    # m_big[p*B + b, b'*N + n] = pin_map[p, n] * (b == b')
    m_big = jnp.einsum("pn,bc->pbcn", pin_map, eye_b).reshape(P * batch, batch * N)
    return dict(a_hat=a_hat, probe_locations=probe_locations, probe_mask=probe_mask,
                pin_map=pin_map, s_big=s_big, pm_col=pm_col, m_big=m_big)


def init_linear_params(key, cin, cout, scale=0.1):
    kw, kb = jax.random.split(key)
    w = scale * jax.random.normal(kw, (cin, cout), jnp.float32)
    b = scale * jax.random.normal(kb, (1, cout), jnp.float32)
    return w, b


# pure-JAX reference (same semantics, incl. the batch-0-only aggregation quirk)
def reference_forward(probe_temperature, params, buffers):
    B = probe_temperature.shape[0]
    a_hat = buffers["a_hat"]
    N = a_hat.shape[0]
    pin_map = buffers["pin_map"]
    probe_values = jnp.zeros((B, N), jnp.float32).at[
        :, buffers["probe_locations"]].set(probe_temperature)
    probe_mask = jnp.broadcast_to(buffers["probe_mask"][None, :], (B, N))
    x = jnp.stack([probe_values, probe_mask], axis=2)                # (B, N, 2)
    a_b = jnp.stack([a_hat] + [jnp.eye(N, dtype=jnp.float32)] * (B - 1), axis=0)
    for (w, b) in params["encoder"]:
        x = jnp.maximum(jnp.einsum("bij,bjc->bic", a_b, x @ w) + b, 0.0)
    pin_feat = jnp.einsum("pn,bnc->bpc", pin_map, x)
    h = pin_feat.reshape(B, -1)
    (wp1, bp1), (wp2, bp2) = params["pin_head"]
    h = jnp.maximum(h @ wp1 + bp1, 0.0)
    pin_power = h @ wp2 + bp2
    t = x
    tl = params["temp_head"]
    for i, (w, b) in enumerate(tl):
        t = jnp.einsum("bij,bjc->bic", a_b, t @ w) + b
        if i < len(tl) - 1:
            t = jnp.maximum(t, 0.0)
    return pin_power, t.reshape(B, N)


if __name__ == "__main__":
    batch = 2
    num_cells = 16            # 4x4 grid of cells
    num_pins = 8
    encoder_sizes = [16, 32]
    pin_power_head_sizes = [32]
    temperature_head_sizes = [16]

    # 4x4 grid graph (bidirectional edges)
    side = 4
    edges = []
    for r in range(side):
        for c in range(side):
            i = r * side + c
            if c + 1 < side:
                edges.append((i, i + 1)); edges.append((i + 1, i))
            if r + 1 < side:
                edges.append((i, i + side)); edges.append((i + side, i))
    edge_index = jnp.asarray(np.array(edges, dtype=np.int32).T)          # (2, E)

    cell_to_pin_mapping = jnp.asarray(
        np.array([0, 0, 1, 1, 2, 2, 3, 3, 4, 4, 5, 5, 6, -1, 7, 7], dtype=np.int32))
    probe_locations = jnp.asarray(np.array([0, 5, 10, 15], dtype=np.int32))

    buffers = build_buffers(edge_index, num_cells, num_pins, probe_locations,
                            cell_to_pin_mapping, batch)

    key = jax.random.PRNGKey(0)
    keys = jax.random.split(key, 8)
    enc_dim = encoder_sizes[-1]
    params = {
        "encoder": [
            init_linear_params(keys[0], 2, encoder_sizes[0]),
            init_linear_params(keys[1], encoder_sizes[0], encoder_sizes[1]),
        ],
        "pin_head": [
            init_linear_params(keys[2], num_pins * enc_dim, pin_power_head_sizes[0]),
            init_linear_params(keys[3], pin_power_head_sizes[0], num_pins),
        ],
        "temp_head": [
            init_linear_params(keys[4], enc_dim, temperature_head_sizes[0]),
            init_linear_params(keys[5], temperature_head_sizes[0], 1),
        ],
    }

    probe_temperature = jax.random.normal(
        keys[6], (batch, probe_locations.shape[0]), jnp.float32)

    pin_power, temperature = jax.jit(gnn_forward)(probe_temperature, params, buffers)
    jax.block_until_ready((pin_power, temperature))

    assert pin_power.shape == (batch, num_pins)
    assert temperature.shape == (batch, num_cells)
    assert pin_power.dtype == jnp.float32 and temperature.dtype == jnp.float32

    # sanity check: both sides at highest matmul precision -> tight agreement
    with jax.default_matmul_precision("highest"):
        ref_pp, ref_t = reference_forward(probe_temperature, params, buffers)
        jax.block_until_ready((ref_pp, ref_t))
    np.testing.assert_allclose(np.asarray(pin_power), np.asarray(ref_pp),
                               rtol=2e-2, atol=1e-3)
    np.testing.assert_allclose(np.asarray(temperature), np.asarray(ref_t),
                               rtol=2e-2, atol=1e-3)

    print("KERNEL_OK")
</pallas_src>

<mosaic_0001>
module attributes {stable_mosaic.version = 11 : i64} {
  func.func @_fused_gnn_kernel(%arg0: i32, %arg1: memref<8x1xf32, #tpu.memory_space<vmem>>, %arg2: memref<32x8xf32, #tpu.memory_space<vmem>>, %arg3: memref<32x1xf32, #tpu.memory_space<vmem>>, %arg4: memref<16x16xf32, #tpu.memory_space<vmem>>, %arg5: memref<16x32xf32, #tpu.memory_space<vmem>>, %arg6: memref<2x16xf32, #tpu.memory_space<vmem>>, %arg7: memref<1x16xf32, #tpu.memory_space<vmem>>, %arg8: memref<16x32xf32, #tpu.memory_space<vmem>>, %arg9: memref<1x32xf32, #tpu.memory_space<vmem>>, %arg10: memref<256x32xf32, #tpu.memory_space<vmem>>, %arg11: memref<1x32xf32, #tpu.memory_space<vmem>>, %arg12: memref<32x8xf32, #tpu.memory_space<vmem>>, %arg13: memref<1x8xf32, #tpu.memory_space<vmem>>, %arg14: memref<16x32xf32, #tpu.memory_space<vmem>>, %arg15: memref<16x1xf32, #tpu.memory_space<vmem>>, %arg16: memref<1x16xf32, #tpu.memory_space<vmem>>, %arg17: memref<1x1xf32, #tpu.memory_space<vmem>>, %arg18: memref<2x8xf32, #tpu.memory_space<vmem>>, %arg19: memref<1x32xf32, #tpu.memory_space<vmem>>, %arg20: memref<32x16xf32, #tpu.memory_space<vmem>>, %arg21: memref<32x32xf32, #tpu.memory_space<vmem>>) attributes {dimension_semantics = [#tpu.dimension_semantics<arbitrary>], iteration_bounds = array<i64: 1>, scalar_prefetch = 0 : i64, scratch_operands = 2 : i64, tpu.core_type = #tpu.core_type<tc>, window_params = [{pipeline_mode = #tpu.pipeline_mode<synchronous>, transform_indices = @transform_0, window_bounds = array<i64: 8, 1>}, {pipeline_mode = #tpu.pipeline_mode<synchronous>, transform_indices = @transform_1, window_bounds = array<i64: 32, 8>}, {pipeline_mode = #tpu.pipeline_mode<synchronous>, transform_indices = @transform_2, window_bounds = array<i64: 32, 1>}, {pipeline_mode = #tpu.pipeline_mode<synchronous>, transform_indices = @transform_3, window_bounds = array<i64: 16, 16>}, {pipeline_mode = #tpu.pipeline_mode<synchronous>, transform_indices = @transform_4, window_bounds = array<i64: 16, 32>}, {pipeline_mode = #tpu.pipeline_mode<synchronous>, transform_indices = @transform_5, window_bounds = array<i64: 2, 16>}, {pipeline_mode = #tpu.pipeline_mode<synchronous>, transform_indices = @transform_6, window_bounds = array<i64: 1, 16>}, {pipeline_mode = #tpu.pipeline_mode<synchronous>, transform_indices = @transform_7, window_bounds = array<i64: 16, 32>}, {pipeline_mode = #tpu.pipeline_mode<synchronous>, transform_indices = @transform_8, window_bounds = array<i64: 1, 32>}, {pipeline_mode = #tpu.pipeline_mode<synchronous>, transform_indices = @transform_9, window_bounds = array<i64: 256, 32>}, {pipeline_mode = #tpu.pipeline_mode<synchronous>, transform_indices = @transform_10, window_bounds = array<i64: 1, 32>}, {pipeline_mode = #tpu.pipeline_mode<synchronous>, transform_indices = @transform_11, window_bounds = array<i64: 32, 8>}, {pipeline_mode = #tpu.pipeline_mode<synchronous>, transform_indices = @transform_12, window_bounds = array<i64: 1, 8>}, {pipeline_mode = #tpu.pipeline_mode<synchronous>, transform_indices = @transform_13, window_bounds = array<i64: 16, 32>}, {pipeline_mode = #tpu.pipeline_mode<synchronous>, transform_indices = @transform_14, window_bounds = array<i64: 16, 1>}, {pipeline_mode = #tpu.pipeline_mode<synchronous>, transform_indices = @transform_15, window_bounds = array<i64: 1, 16>}, {pipeline_mode = #tpu.pipeline_mode<synchronous>, transform_indices = @transform_16, window_bounds = array<i64: 1, 1>}, {pipeline_mode = #tpu.pipeline_mode<synchronous>, transform_indices = @transform_17, window_bounds = array<i64: 2, 8>}, {pipeline_mode = #tpu.pipeline_mode<synchronous>, transform_indices = @transform_18, window_bounds = array<i64: 1, 32>}]} {
    %c0 = arith.constant 0 : index
    %c0_0 = arith.constant 0 : index
    %0 = vector.load %arg4[%c0, %c0_0] : memref<16x16xf32, #tpu.memory_space<vmem>>, vector<16x16xf32>
    %c0_1 = arith.constant 0 : index
    %c0_2 = arith.constant 0 : index
    %1 = vector.load %arg2[%c0_1, %c0_2] : memref<32x8xf32, #tpu.memory_space<vmem>>, vector<32x8xf32>
    %c0_3 = arith.constant 0 : index
    %c0_4 = arith.constant 0 : index
    %2 = vector.load %arg1[%c0_3, %c0_4] : memref<8x1xf32, #tpu.memory_space<vmem>>, vector<8x1xf32>
    %cst = arith.constant dense<0.000000e+00> : vector<32x1xf32>
    %3 = tpu.matmul %1, %2, %cst {dimension_numbers = #tpu.dot_dimension_numbers<[1], [0], [0], [1], [0, 0, 1, 1], [], []>, precision = #tpu.contract_precision<fp32>} : vector<32x8xf32>, vector<8x1xf32>, vector<32x1xf32> -> vector<32x1xf32>
    %c0_5 = arith.constant 0 : index
    %c0_6 = arith.constant 0 : index
    %4 = vector.load %arg6[%c0_5, %c0_6] : memref<2x16xf32, #tpu.memory_space<vmem>>, vector<1x16xf32>
    %5 = vector.broadcast %3 : vector<32x1xf32> to vector<32x16xf32>
    %6 = vector.broadcast %4 : vector<1x16xf32> to vector<32x16xf32>
    %7 = arith.mulf %5, %6 : vector<32x16xf32>
    %c0_7 = arith.constant 0 : index
    %c0_8 = arith.constant 0 : index
    %8 = vector.load %arg3[%c0_7, %c0_8] : memref<32x1xf32, #tpu.memory_space<vmem>>, vector<32x1xf32>
    %c1 = arith.constant 1 : index
    %c0_9 = arith.constant 0 : index
    %9 = vector.load %arg6[%c1, %c0_9] : memref<2x16xf32, #tpu.memory_space<vmem>>, vector<1x16xf32>
    %10 = vector.broadcast %8 : vector<32x1xf32> to vector<32x16xf32>
    %11 = vector.broadcast %9 : vector<1x16xf32> to vector<32x16xf32>
    %12 = arith.mulf %10, %11 : vector<32x16xf32>
    %13 = arith.addf %7, %12 : vector<32x16xf32>
    %c0_10 = arith.constant 0 : index
    %c0_11 = arith.constant 0 : index
    %14 = vector.load %arg7[%c0_10, %c0_11] : memref<1x16xf32, #tpu.memory_space<vmem>>, vector<1x16xf32>
    %15 = vector.broadcast %14 : vector<1x16xf32> to vector<32x16xf32>
    %16 = arith.addf %13, %15 : vector<32x16xf32>
    %cst_12 = arith.constant 0.000000e+00 : f32
    %17 = vector.broadcast %cst_12 : f32 to vector<32x16xf32>
    %18 = arith.maximumf %16, %17 : vector<32x16xf32>
    %c0_13 = arith.constant 0 : index
    %c0_14 = arith.constant 0 : index
    %19 = vector.load %arg20[%c0_13, %c0_14] : memref<32x16xf32, #tpu.memory_space<vmem>>, vector<32x16xf32>
    tpu.vector_store %arg20[%c0_13, %c0_14], %18 {strides = array<i32>} : memref<32x16xf32, #tpu.memory_space<vmem>>, vector<32x16xf32>,
    %20 = vector.extract_strided_slice %13 {offsets = [0, 0], sizes = [16, 16], strides = [1, 1]} : vector<32x16xf32> to vector<16x16xf32>
    %cst_15 = arith.constant dense<0.000000e+00> : vector<16x16xf32>
    %21 = tpu.matmul %0, %20, %cst_15 {dimension_numbers = #tpu.dot_dimension_numbers<[1], [0], [0], [1], [0, 0, 1, 1], [], []>, precision = #tpu.contract_precision<fp32>} : vector<16x16xf32>, vector<16x16xf32>, vector<16x16xf32> -> vector<16x16xf32>
    %22 = vector.broadcast %14 : vector<1x16xf32> to vector<16x16xf32>
    %23 = arith.addf %21, %22 : vector<16x16xf32>
    %cst_16 = arith.constant 0.000000e+00 : f32
    %24 = vector.broadcast %cst_16 : f32 to vector<16x16xf32>
    %25 = arith.maximumf %23, %24 : vector<16x16xf32>
    %c0_17 = arith.constant 0 : index
    %c0_18 = arith.constant 0 : index
    %26 = vector.load %arg20[%c0_17, %c0_18] : memref<32x16xf32, #tpu.memory_space<vmem>>, vector<16x16xf32>
    tpu.vector_store %arg20[%c0_17, %c0_18], %25 {strides = array<i32>} : memref<32x16xf32, #tpu.memory_space<vmem>>, vector<16x16xf32>,
    %c0_19 = arith.constant 0 : index
    %c0_20 = arith.constant 0 : index
    %27 = vector.load %arg20[%c0_19, %c0_20] : memref<32x16xf32, #tpu.memory_space<vmem>>, vector<32x16xf32>
    %c0_21 = arith.constant 0 : index
    %c0_22 = arith.constant 0 : index
    %28 = vector.load %arg8[%c0_21, %c0_22] : memref<16x32xf32, #tpu.memory_space<vmem>>, vector<16x32xf32>
    %cst_23 = arith.constant dense<0.000000e+00> : vector<32x32xf32>
    %29 = tpu.matmul %27, %28, %cst_23 {dimension_numbers = #tpu.dot_dimension_numbers<[1], [0], [0], [1], [0, 0, 1, 1], [], []>, precision = #tpu.contract_precision<fp32>} : vector<32x16xf32>, vector<16x32xf32>, vector<32x32xf32> -> vector<32x32xf32>
    %c0_24 = arith.constant 0 : index
    %c0_25 = arith.constant 0 : index
    %30 = vector.load %arg9[%c0_24, %c0_25] : memref<1x32xf32, #tpu.memory_space<vmem>>, vector<1x32xf32>
    %31 = vector.broadcast %30 : vector<1x32xf32> to vector<32x32xf32>
    %32 = arith.addf %29, %31 : vector<32x32xf32>
    %cst_26 = arith.constant 0.000000e+00 : f32
    %33 = vector.broadcast %cst_26 : f32 to vector<32x32xf32>
    %34 = arith.maximumf %32, %33 : vector<32x32xf32>
    %c0_27 = arith.constant 0 : index
    %c0_28 = arith.constant 0 : index
    %35 = vector.load %arg21[%c0_27, %c0_28] : memref<32x32xf32, #tpu.memory_space<vmem>>, vector<32x32xf32>
    tpu.vector_store %arg21[%c0_27, %c0_28], %34 {strides = array<i32>} : memref<32x32xf32, #tpu.memory_space<vmem>>, vector<32x32xf32>,
    %36 = vector.extract_strided_slice %29 {offsets = [0, 0], sizes = [16, 32], strides = [1, 1]} : vector<32x32xf32> to vector<16x32xf32>
    %cst_29 = arith.constant dense<0.000000e+00> : vector<16x32xf32>
    %37 = tpu.matmul %0, %36, %cst_29 {dimension_numbers = #tpu.dot_dimension_numbers<[1], [0], [0], [1], [0, 0, 1, 1], [], []>, precision = #tpu.contract_precision<fp32>} : vector<16x16xf32>, vector<16x32xf32>, vector<16x32xf32> -> vector<16x32xf32>
    %38 = vector.broadcast %30 : vector<1x32xf32> to vector<16x32xf32>
    %39 = arith.addf %37, %38 : vector<16x32xf32>
    %cst_30 = arith.constant 0.000000e+00 : f32
    %40 = vector.broadcast %cst_30 : f32 to vector<16x32xf32>
    %41 = arith.maximumf %39, %40 : vector<16x32xf32>
    %c0_31 = arith.constant 0 : index
    %c0_32 = arith.constant 0 : index
    %42 = vector.load %arg21[%c0_31, %c0_32] : memref<32x32xf32, #tpu.memory_space<vmem>>, vector<16x32xf32>
    tpu.vector_store %arg21[%c0_31, %c0_32], %41 {strides = array<i32>} : memref<32x32xf32, #tpu.memory_space<vmem>>, vector<16x32xf32>,
    %c0_33 = arith.constant 0 : index
    %c0_34 = arith.constant 0 : index
    %43 = vector.load %arg21[%c0_33, %c0_34] : memref<32x32xf32, #tpu.memory_space<vmem>>, vector<32x32xf32>
    %c0_35 = arith.constant 0 : index
    %c0_36 = arith.constant 0 : index
    %44 = vector.load %arg5[%c0_35, %c0_36] : memref<16x32xf32, #tpu.memory_space<vmem>>, vector<16x32xf32>
    %cst_37 = arith.constant dense<0.000000e+00> : vector<16x32xf32>
    %45 = tpu.matmul %44, %43, %cst_37 {dimension_numbers = #tpu.dot_dimension_numbers<[1], [0], [0], [1], [0, 0, 1, 1], [], []>, precision = #tpu.contract_precision<fp32>} : vector<16x32xf32>, vector<32x32xf32>, vector<16x32xf32> -> vector<16x32xf32>
    %46 = vector.extract_strided_slice %45 {offsets = [0, 0], sizes = [2, 32], strides = [1, 1]} : vector<16x32xf32> to vector<2x32xf32>
    %47 = vector.extract_strided_slice %45 {offsets = [2, 0], sizes = [2, 32], strides = [1, 1]} : vector<16x32xf32> to vector<2x32xf32>
    %48 = vector.extract_strided_slice %45 {offsets = [4, 0], sizes = [2, 32], strides = [1, 1]} : vector<16x32xf32> to vector<2x32xf32>
    %49 = vector.extract_strided_slice %45 {offsets = [6, 0], sizes = [2, 32], strides = [1, 1]} : vector<16x32xf32> to vector<2x32xf32>
    %50 = vector.extract_strided_slice %45 {offsets = [8, 0], sizes = [2, 32], strides = [1, 1]} : vector<16x32xf32> to vector<2x32xf32>
    %51 = vector.extract_strided_slice %45 {offsets = [10, 0], sizes = [2, 32], strides = [1, 1]} : vector<16x32xf32> to vector<2x32xf32>
    %52 = vector.extract_strided_slice %45 {offsets = [12, 0], sizes = [2, 32], strides = [1, 1]} : vector<16x32xf32> to vector<2x32xf32>
    %53 = vector.extract_strided_slice %45 {offsets = [14, 0], sizes = [2, 32], strides = [1, 1]} : vector<16x32xf32> to vector<2x32xf32>
    %54 = tpu.concatenate %46, %47, %48, %49, %50, %51, %52, %53 in 1 : vector<2x32xf32>, vector<2x32xf32>, vector<2x32xf32>, vector<2x32xf32>, vector<2x32xf32>, vector<2x32xf32>, vector<2x32xf32>, vector<2x32xf32> -> vector<2x256xf32>
    %c0_38 = arith.constant 0 : index
    %c0_39 = arith.constant 0 : index
    %55 = vector.load %arg10[%c0_38, %c0_39] : memref<256x32xf32, #tpu.memory_space<vmem>>, vector<256x32xf32>
    %cst_40 = arith.constant dense<0.000000e+00> : vector<2x32xf32>
    %56 = tpu.matmul %54, %55, %cst_40 {dimension_numbers = #tpu.dot_dimension_numbers<[1], [0], [0], [1], [0, 0, 1, 1], [], []>, precision = #tpu.contract_precision<fp32>} : vector<2x256xf32>, vector<256x32xf32>, vector<2x32xf32> -> vector<2x32xf32>
    %c0_41 = arith.constant 0 : index
    %c0_42 = arith.constant 0 : index
    %57 = vector.load %arg11[%c0_41, %c0_42] : memref<1x32xf32, #tpu.memory_space<vmem>>, vector<1x32xf32>
    %58 = vector.broadcast %57 : vector<1x32xf32> to vector<2x32xf32>
    %59 = arith.addf %56, %58 : vector<2x32xf32>
    %cst_43 = arith.constant 0.000000e+00 : f32
    %60 = vector.broadcast %cst_43 : f32 to vector<2x32xf32>
    %61 = arith.maximumf %59, %60 : vector<2x32xf32>
    %c0_44 = arith.constant 0 : index
    %c0_45 = arith.constant 0 : index
    %62 = vector.load %arg12[%c0_44, %c0_45] : memref<32x8xf32, #tpu.memory_space<vmem>>, vector<32x8xf32>
    %cst_46 = arith.constant dense<0.000000e+00> : vector<2x8xf32>
    %63 = tpu.matmul %61, %62, %cst_46 {dimension_numbers = #tpu.dot_dimension_numbers<[1], [0], [0], [1], [0, 0, 1, 1], [], []>, precision = #tpu.contract_precision<fp32>} : vector<2x32xf32>, vector<32x8xf32>, vector<2x8xf32> -> vector<2x8xf32>
    %c0_47 = arith.constant 0 : index
    %c0_48 = arith.constant 0 : index
    %64 = vector.load %arg13[%c0_47, %c0_48] : memref<1x8xf32, #tpu.memory_space<vmem>>, vector<1x8xf32>
    %65 = vector.broadcast %64 : vector<1x8xf32> to vector<2x8xf32>
    %66 = arith.addf %63, %65 : vector<2x8xf32>
    %c0_49 = arith.constant 0 : index
    %c0_50 = arith.constant 0 : index
    %67 = vector.load %arg18[%c0_49, %c0_50] : memref<2x8xf32, #tpu.memory_space<vmem>>, vector<2x8xf32>
    tpu.vector_store %arg18[%c0_49, %c0_50], %66 {strides = array<i32>} : memref<2x8xf32, #tpu.memory_space<vmem>>, vector<2x8xf32>,
    %c0_51 = arith.constant 0 : index
    %c0_52 = arith.constant 0 : index
    %68 = vector.load %arg14[%c0_51, %c0_52] : memref<16x32xf32, #tpu.memory_space<vmem>>, vector<16x32xf32>
    %cst_53 = arith.constant dense<0.000000e+00> : vector<16x32xf32>
    %69 = tpu.matmul %68, %43, %cst_53 {dimension_numbers = #tpu.dot_dimension_numbers<[1], [1], [0], [0], [0, 0, 1, 0], [], []>, precision = #tpu.contract_precision<fp32>} : vector<16x32xf32>, vector<32x32xf32>, vector<16x32xf32> -> vector<16x32xf32>
    %70 = vector.extract_strided_slice %69 {offsets = [0, 0], sizes = [16, 16], strides = [1, 1]} : vector<16x32xf32> to vector<16x16xf32>
    %cst_54 = arith.constant dense<0.000000e+00> : vector<16x16xf32>
    %71 = tpu.matmul %70, %0, %cst_54 {dimension_numbers = #tpu.dot_dimension_numbers<[1], [0], [0], [1], [0, 0, 1, 1], [], []>, precision = #tpu.contract_precision<fp32>} : vector<16x16xf32>, vector<16x16xf32>, vector<16x16xf32> -> vector<16x16xf32>
    %72 = vector.extract_strided_slice %69 {offsets = [0, 16], sizes = [16, 16], strides = [1, 1]} : vector<16x32xf32> to vector<16x16xf32>
    %73 = tpu.concatenate %71, %72 in 1 : vector<16x16xf32>, vector<16x16xf32> -> vector<16x32xf32>
    %c0_55 = arith.constant 0 : index
    %c0_56 = arith.constant 0 : index
    %74 = vector.load %arg15[%c0_55, %c0_56] : memref<16x1xf32, #tpu.memory_space<vmem>>, vector<16x1xf32>
    %75 = vector.broadcast %74 : vector<16x1xf32> to vector<16x32xf32>
    %76 = arith.addf %73, %75 : vector<16x32xf32>
    %cst_57 = arith.constant 0.000000e+00 : f32
    %77 = vector.broadcast %cst_57 : f32 to vector<16x32xf32>
    %78 = arith.maximumf %76, %77 : vector<16x32xf32>
    %c0_58 = arith.constant 0 : index
    %c0_59 = arith.constant 0 : index
    %79 = vector.load %arg16[%c0_58, %c0_59] : memref<1x16xf32, #tpu.memory_space<vmem>>, vector<1x16xf32>
    %cst_60 = arith.constant dense<0.000000e+00> : vector<1x32xf32>
    %80 = tpu.matmul %79, %78, %cst_60 {dimension_numbers = #tpu.dot_dimension_numbers<[1], [0], [0], [1], [0, 0, 1, 1], [], []>, precision = #tpu.contract_precision<fp32>} : vector<1x16xf32>, vector<16x32xf32>, vector<1x32xf32> -> vector<1x32xf32>
    %c0_61 = arith.constant 0 : index
    %c0_62 = arith.constant 0 : index
    %81 = vector.load %arg17[%c0_61, %c0_62] : memref<1x1xf32, #tpu.memory_space<vmem>>, vector<1x1xf32>
    %82 = vector.extract_strided_slice %80 {offsets = [0, 0], sizes = [1, 16], strides = [1, 1]} : vector<1x32xf32> to vector<1x16xf32>
    %cst_63 = arith.constant dense<0.000000e+00> : vector<1x16xf32>
    %83 = tpu.matmul %82, %0, %cst_63 {dimension_numbers = #tpu.dot_dimension_numbers<[1], [0], [0], [1], [0, 0, 1, 1], [], []>, precision = #tpu.contract_precision<fp32>} : vector<1x16xf32>, vector<16x16xf32>, vector<1x16xf32> -> vector<1x16xf32>
    %84 = vector.broadcast %81 : vector<1x1xf32> to vector<1x16xf32>
    %85 = arith.addf %83, %84 : vector<1x16xf32>
    %c0_64 = arith.constant 0 : index
    %c0_65 = arith.constant 0 : index
    %86 = vector.load %arg19[%c0_64, %c0_65] : memref<1x32xf32, #tpu.memory_space<vmem>>, vector<1x16xf32>
    tpu.vector_store %arg19[%c0_64, %c0_65], %85 {strides = array<i32>} : memref<1x32xf32, #tpu.memory_space<vmem>>, vector<1x16xf32>,
    %87 = vector.extract_strided_slice %80 {offsets = [0, 16], sizes = [1, 16], strides = [1, 1]} : vector<1x32xf32> to vector<1x16xf32>
    %88 = vector.broadcast %81 : vector<1x1xf32> to vector<1x16xf32>
    %89 = arith.addf %87, %88 : vector<1x16xf32>
    %c0_66 = arith.constant 0 : index
    %c16 = arith.constant 16 : index
    %90 = vector.load %arg19[%c0_66, %c16] : memref<1x32xf32, #tpu.memory_space<vmem>>, vector<1x16xf32>
    tpu.vector_store %arg19[%c0_66, %c16], %89 {strides = array<i32>} : memref<1x32xf32, #tpu.memory_space<vmem>>, vector<1x16xf32>,
    return
  }
  func.func @transform_0(%arg0: i32) -> (i32, i32) {
    %c0_i32 = arith.constant 0 : i32
    %c0_i32_0 = arith.constant 0 : i32
    %c0_i32_1 = arith.constant 0 : i32
    return %c0_i32, %c0_i32_0 : i32, i32
  }
  func.func @transform_1(%arg0: i32) -> (i32, i32) {
    %c0_i32 = arith.constant 0 : i32
    %c0_i32_0 = arith.constant 0 : i32
    %c0_i32_1 = arith.constant 0 : i32
    return %c0_i32, %c0_i32_0 : i32, i32
  }
  func.func @transform_2(%arg0: i32) -> (i32, i32) {
    %c0_i32 = arith.constant 0 : i32
    %c0_i32_0 = arith.constant 0 : i32
    %c0_i32_1 = arith.constant 0 : i32
    return %c0_i32, %c0_i32_0 : i32, i32
  }
  func.func @transform_3(%arg0: i32) -> (i32, i32) {
    %c0_i32 = arith.constant 0 : i32
    %c0_i32_0 = arith.constant 0 : i32
    %c0_i32_1 = arith.constant 0 : i32
    return %c0_i32, %c0_i32_0 : i32, i32
  }
  func.func @transform_4(%arg0: i32) -> (i32, i32) {
    %c0_i32 = arith.constant 0 : i32
    %c0_i32_0 = arith.constant 0 : i32
    %c0_i32_1 = arith.constant 0 : i32
    return %c0_i32, %c0_i32_0 : i32, i32
  }
  func.func @transform_5(%arg0: i32) -> (i32, i32) {
    %c0_i32 = arith.constant 0 : i32
    %c0_i32_0 = arith.constant 0 : i32
    %c0_i32_1 = arith.constant 0 : i32
    return %c0_i32, %c0_i32_0 : i32, i32
  }
  func.func @transform_6(%arg0: i32) -> (i32, i32) {
    %c0_i32 = arith.constant 0 : i32
    %c0_i32_0 = arith.constant 0 : i32
    %c0_i32_1 = arith.constant 0 : i32
    return %c0_i32, %c0_i32_0 : i32, i32
  }
  func.func @transform_7(%arg0: i32) -> (i32, i32) {
    %c0_i32 = arith.constant 0 : i32
    %c0_i32_0 = arith.constant 0 : i32
    %c0_i32_1 = arith.constant 0 : i32
    return %c0_i32, %c0_i32_0 : i32, i32
  }
  func.func @transform_8(%arg0: i32) -> (i32, i32) {
    %c0_i32 = arith.constant 0 : i32
    %c0_i32_0 = arith.constant 0 : i32
    %c0_i32_1 = arith.constant 0 : i32
    return %c0_i32, %c0_i32_0 : i32, i32
  }
  func.func @transform_9(%arg0: i32) -> (i32, i32) {
    %c0_i32 = arith.constant 0 : i32
    %c0_i32_0 = arith.constant 0 : i32
    %c0_i32_1 = arith.constant 0 : i32
    return %c0_i32, %c0_i32_0 : i32, i32
  }
  func.func @transform_10(%arg0: i32) -> (i32, i32) {
    %c0_i32 = arith.constant 0 : i32
    %c0_i32_0 = arith.constant 0 : i32
    %c0_i32_1 = arith.constant 0 : i32
    return %c0_i32, %c0_i32_0 : i32, i32
  }
  func.func @transform_11(%arg0: i32) -> (i32, i32) {
    %c0_i32 = arith.constant 0 : i32
    %c0_i32_0 = arith.constant 0 : i32
    %c0_i32_1 = arith.constant 0 : i32
    return %c0_i32, %c0_i32_0 : i32, i32
  }
  func.func @transform_12(%arg0: i32) -> (i32, i32) {
    %c0_i32 = arith.constant 0 : i32
    %c0_i32_0 = arith.constant 0 : i32
    %c0_i32_1 = arith.constant 0 : i32
    return %c0_i32, %c0_i32_0 : i32, i32
  }
  func.func @transform_13(%arg0: i32) -> (i32, i32) {
    %c0_i32 = arith.constant 0 : i32
    %c0_i32_0 = arith.constant 0 : i32
    %c0_i32_1 = arith.constant 0 : i32
    return %c0_i32, %c0_i32_0 : i32, i32
  }
  func.func @transform_14(%arg0: i32) -> (i32, i32) {
    %c0_i32 = arith.constant 0 : i32
    %c0_i32_0 = arith.constant 0 : i32
    %c0_i32_1 = arith.constant 0 : i32
    return %c0_i32, %c0_i32_0 : i32, i32
  }
  func.func @transform_15(%arg0: i32) -> (i32, i32) {
    %c0_i32 = arith.constant 0 : i32
    %c0_i32_0 = arith.constant 0 : i32
    %c0_i32_1 = arith.constant 0 : i32
    return %c0_i32, %c0_i32_0 : i32, i32
  }
  func.func @transform_16(%arg0: i32) -> (i32, i32) {
    %c0_i32 = arith.constant 0 : i32
    %c0_i32_0 = arith.constant 0 : i32
    %c0_i32_1 = arith.constant 0 : i32
    return %c0_i32, %c0_i32_0 : i32, i32
  }
  func.func @transform_17(%arg0: i32) -> (i32, i32) {
    %c0_i32 = arith.constant 0 : i32
    %c0_i32_0 = arith.constant 0 : i32
    %c0_i32_1 = arith.constant 0 : i32
    return %c0_i32, %c0_i32_0 : i32, i32
  }
  func.func @transform_18(%arg0: i32) -> (i32, i32) {
    %c0_i32 = arith.constant 0 : i32
    %c0_i32_0 = arith.constant 0 : i32
    %c0_i32_1 = arith.constant 0 : i32
    return %c0_i32, %c0_i32_0 : i32, i32
  }
}

</mosaic_0001>

<llo_original>
// kernel: gnn_forward.1
$region0: #{gnn_forward.1}
  #allocation0 [shape = 'u32[]', space=smem, size = 0x4, offset = 0x4, fixed_abs, tag = 'smem constant byte address 0x4 - core index']
  #allocation1 [shape = 'u32[144,128]{1,0:T(1,128)}', space=vmem, size = 0x12000, scoped, tag = 'internal scratch']
  #allocation2 [shape = 'f32[32,16]{1,0:T(8,128)}', space=vmem, size = 0x4000, scoped, tag = 'scratch operand']
  #allocation3 [shape = 'f32[32,32]{1,0:T(8,128)}', space=vmem, size = 0x4000, scoped, tag = 'scratch operand']
  #allocation4 [shape = 'f32[1,1]{1,0:T(1,128)S(1)}', space=vmem, size = 0x200, scoped, tag = 'scoped memory for gnn_forward.1']
  %s0 = inlined_call_operand.vmem [shape: f32[8,1], index: 0, kind: input, shape index: {}]
  %s1 = inlined_call_operand.vmem [shape: f32[32,8], index: 1, kind: input, shape index: {}]
  %s2 = inlined_call_operand.vmem [shape: f32[32,1], index: 2, kind: input, shape index: {}]
  %s3 = inlined_call_operand.vmem [shape: f32[16,16], index: 3, kind: input, shape index: {}]
  %s4 = inlined_call_operand.vmem [shape: f32[16,32], index: 4, kind: input, shape index: {}]
  %s5 = inlined_call_operand.vmem [shape: f32[2,16], index: 5, kind: input, shape index: {}]
  %s6 = inlined_call_operand.vmem [shape: f32[1,16], index: 6, kind: input, shape index: {}]
  %s7 = inlined_call_operand.vmem [shape: f32[16,32], index: 7, kind: input, shape index: {}]
  %s8 = inlined_call_operand.vmem [shape: f32[1,32], index: 8, kind: input, shape index: {}]
  %s9 = inlined_call_operand.vmem [shape: f32[256,32], index: 9, kind: input, shape index: {}]
  %s10 = inlined_call_operand.vmem [shape: f32[1,32], index: 10, kind: input, shape index: {}]
  %s11 = inlined_call_operand.vmem [shape: f32[32,8], index: 11, kind: input, shape index: {}]
  %s12 = inlined_call_operand.vmem [shape: f32[1,8], index: 12, kind: input, shape index: {}]
  %s13 = inlined_call_operand.vmem [shape: f32[16,32], index: 13, kind: input, shape index: {}]
  %s14 = inlined_call_operand.vmem [shape: f32[16,1], index: 14, kind: input, shape index: {}]
  %s15 = inlined_call_operand.vmem [shape: f32[1,16], index: 15, kind: input, shape index: {}]
  %s16 = inlined_call_operand.<no memory space> [shape: f32[1,1], index: 16, kind: input, shape index: {}]
  %s17 = inlined_call_operand.hbm [shape: f32[2,8], index: 17, kind: output, shape index: {0}]
  %s18 = inlined_call_operand.vmem [shape: f32[1,32], index: 18, kind: output, shape index: {1}]
  %19 = xla_tuple %s17, %s18
  %s20 = sld [smem:[#allocation0]]
  $region86: #{gnn_forward.1} parent=0
    _
  %s22 = ssub.s32 1, %s20
  %s23 = scalar_select 0, %s22, %s20
  %v24 = vstv %s16
  %25 = vst [vmem:[#allocation4] sm:$0x1] %v24
  $region1: #{gnn_forward.1} parent=0
    #allocation5 [shape = 'u8[1024]{0}', space=vmem, size = 0x400, scoped, tag = 'output window, operand 0, single buffered']
    #allocation6 [shape = 's32[1]{0}', space=sflag, size = 0x4, scoped, tag = 'scoped memory for gnn_forward.1']
    %26 = vsyncpa [#allocation6], 0
    // Predicated region
    $region2: #{gnn_forward.1} parent=1 // pred_check
      _
    $region3: #{gnn_forward.1} parent=1 // pred_check_branch
      %28 = sbr.rel (0) target = $region5
    $region4: #{gnn_forward.1} parent=1 // pred_region
      _
    $region5: #{gnn_forward.1} parent=1 // pred_fallthru
      _
    // Predicated region
    $region6: #{gnn_forward.1} parent=1 // pred_check
      _
    $region7: #{gnn_forward.1} parent=1 // pred_check_branch
      %30 = sbr.rel (0) target = $region9
    $region8: #{gnn_forward.1} parent=1 // pred_region
      _
    $region9: #{gnn_forward.1} parent=1 // pred_fallthru
      _
    // Predicated region
    $region10: #{gnn_forward.1} parent=1 // pred_check
      _
    $region11: #{gnn_forward.1} parent=1 // pred_check_branch
      %32 = sbr.rel (0) target = $region13
    $region12: #{gnn_forward.1} parent=1 // pred_region
      _
    $region13: #{gnn_forward.1} parent=1 // pred_fallthru
      _
    // Predicated region
    $region14: #{gnn_forward.1} parent=1 // pred_check
      _
    $region15: #{gnn_forward.1} parent=1 // pred_check_branch
      %34 = sbr.rel (0) target = $region17
    $region16: #{gnn_forward.1} parent=1 // pred_region
      _
    $region17: #{gnn_forward.1} parent=1 // pred_fallthru
      _
    // Predicated region
    $region18: #{gnn_forward.1} parent=1 // pred_check
      _
    $region19: #{gnn_forward.1} parent=1 // pred_check_branch
      %36 = sbr.rel (0) target = $region21
    $region20: #{gnn_forward.1} parent=1 // pred_region
      _
    $region21: #{gnn_forward.1} parent=1 // pred_fallthru
      _
    // Predicated region
    $region22: #{gnn_forward.1} parent=1 // pred_check
      _
    $region23: #{gnn_forward.1} parent=1 // pred_check_branch
      %38 = sbr.rel (0) target = $region25
    $region24: #{gnn_forward.1} parent=1 // pred_region
      _
    $region25: #{gnn_forward.1} parent=1 // pred_fallthru
      _
    // Predicated region
    $region26: #{gnn_forward.1} parent=1 // pred_check
      _
    $region27: #{gnn_forward.1} parent=1 // pred_check_branch
      %40 = sbr.rel (0) target = $region29
    $region28: #{gnn_forward.1} parent=1 // pred_region
      _
    $region29: #{gnn_forward.1} parent=1 // pred_fallthru
      _
    // Predicated region
    $region30: #{gnn_forward.1} parent=1 // pred_check
      _
    $region31: #{gnn_forward.1} parent=1 // pred_check_branch
      %42 = sbr.rel (0) target = $region33
    $region32: #{gnn_forward.1} parent=1 // pred_region
      _
    $region33: #{gnn_forward.1} parent=1 // pred_fallthru
      _
    // Predicated region
    $region34: #{gnn_forward.1} parent=1 // pred_check
      _
    $region35: #{gnn_forward.1} parent=1 // pred_check_branch
      %44 = sbr.rel (0) target = $region37
    $region36: #{gnn_forward.1} parent=1 // pred_region
      _
    $region37: #{gnn_forward.1} parent=1 // pred_fallthru
      _
    // Predicated region
    $region38: #{gnn_forward.1} parent=1 // pred_check
      _
    $region39: #{gnn_forward.1} parent=1 // pred_check_branch
      %46 = sbr.rel (0) target = $region41
    $region40: #{gnn_forward.1} parent=1 // pred_region
      _
    $region41: #{gnn_forward.1} parent=1 // pred_fallthru
      _
    // Predicated region
    $region42: #{gnn_forward.1} parent=1 // pred_check
      _
    $region43: #{gnn_forward.1} parent=1 // pred_check_branch
      %48 = sbr.rel (0) target = $region45
    $region44: #{gnn_forward.1} parent=1 // pred_region
      _
    $region45: #{gnn_forward.1} parent=1 // pred_fallthru
      _
    // Predicated region
    $region46: #{gnn_forward.1} parent=1 // pred_check
      _
    $region47: #{gnn_forward.1} parent=1 // pred_check_branch
      %50 = sbr.rel (0) target = $region49
    $region48: #{gnn_forward.1} parent=1 // pred_region
      _
    $region49: #{gnn_forward.1} parent=1 // pred_fallthru
      _
    // Predicated region
    $region50: #{gnn_forward.1} parent=1 // pred_check
      _
    $region51: #{gnn_forward.1} parent=1 // pred_check_branch
      %52 = sbr.rel (0) target = $region53
    $region52: #{gnn_forward.1} parent=1 // pred_region
      _
    $region53: #{gnn_forward.1} parent=1 // pred_fallthru
      _
    // Predicated region
    $region54: #{gnn_forward.1} parent=1 // pred_check
      _
    $region55: #{gnn_forward.1} parent=1 // pred_check_branch
      %54 = sbr.rel (0) target = $region57
    $region56: #{gnn_forward.1} parent=1 // pred_region
      _
    $region57: #{gnn_forward.1} parent=1 // pred_fallthru
      _
    // Predicated region
    $region58: #{gnn_forward.1} parent=1 // pred_check
      _
    $region59: #{gnn_forward.1} parent=1 // pred_check_branch
      %56 = sbr.rel (0) target = $region61
    $region60: #{gnn_forward.1} parent=1 // pred_region
      _
    $region61: #{gnn_forward.1} parent=1 // pred_fallthru
      _
    // Predicated region
    $region62: #{gnn_forward.1} parent=1 // pred_check
      _
    $region63: #{gnn_forward.1} parent=1 // pred_check_branch
      %58 = sbr.rel (0) target = $region65
    $region64: #{gnn_forward.1} parent=1 // pred_region
      _
    $region65: #{gnn_forward.1} parent=1 // pred_fallthru
      _
    // Predicated region
    $region66: #{gnn_forward.1} parent=1 // pred_check
      _
    $region67: #{gnn_forward.1} parent=1 // pred_check_branch
      %60 = sbr.rel (0) target = $region69
    $region68: #{gnn_forward.1} parent=1 // pred_region
      _
    $region69: #{gnn_forward.1} parent=1 // pred_fallthru
      _
    %v61 = vld [vmem:[%s3] sm:$0xff]
    %v62 = vld [vmem:[%s3 + $0x8] sm:$0xff]
    %v63 = vld [vmem:[%s1] sm:$0xff]
    %v64 = vld [vmem:[%s1 + $0x8] sm:$0xff]
    %v65 = vld [vmem:[%s1 + $0x10] sm:$0xff]
    %v66 = vld [vmem:[%s1 + $0x18] sm:$0xff]
    %v67 = vld [vmem:[%s0] sm:$0xff]
    %vm68 = vcmask 64512
    %v70 = vsel %vm68, %v63, 0
    %v73 = vsel %vm68, %v64, 0
    %v76 = vsel %vm68, %v65, 0
    %v79 = vsel %vm68, %v66, 0
    %81 = vmatprep.subr.mxu0 0.0
    %82 = vmatpush1.msra.mxu0 0.0
    %83 = vmatprep.subr.mxu0 0.0
    %84 = vmatpush1.msra.mxu0 0.0
    %85 = vmatprep.subr.mxu0 0.0
    %86 = vmatpush1.msra.mxu0 0.0
    %87 = vmatprep.subr.mxu0 0.0
    %88 = vmatpush1.msra.mxu0 0.0
    %89 = vmatprep.subr.mxu0 0.0
    %90 = vmatpush1.msra.mxu0 0.0
    %91 = vmatprep.subr.mxu0 0.0
    %92 = vmatpush1.msra.mxu0 0.0
    %93 = vmatprep.subr.mxu0 0.0
    %94 = vmatpush1.msra.mxu0 0.0
    %95 = vmatprep.subr.mxu0 0.0
    %96 = vmatpush1.msra.mxu0 0.0
    %97 = vmatprep.subr.mxu0 0.0
    %98 = vmatpush1.msra.mxu0 0.0
    %99 = vmatprep.subr.mxu0 0.0
    %100 = vmatpush1.msra.mxu0 0.0
    %101 = vmatprep.subr.mxu0 0.0
    %102 = vmatpush1.msra.mxu0 0.0
    %103 = vmatprep.subr.mxu0 0.0
    %104 = vmatpush1.msra.mxu0 0.0
    %105 = vmatprep.subr.mxu0 0.0
    %106 = vmatpush1.msra.mxu0 0.0
    %107 = vmatprep.subr.mxu0 0.0
    %108 = vmatpush1.msra.mxu0 0.0
    %109 = vmatprep.subr.mxu0 0.0
    %110 = vmatpush1.msra.mxu0 0.0
    %111 = vmatprep.subr.mxu0 0.0
    %v112 = vand.u32 %v67, 4294901760
    %113 = vmatpush1.msra.mxu0 %v112
    %114 = vmatprep.subr.mxu0 0.0
    %115 = vmatpush2.msra.mxu0 0.0
    %116 = vmatprep.subr.mxu0 0.0
    %117 = vmatpush2.msra.mxu0 0.0
    %118 = vmatprep.subr.mxu0 0.0
    %119 = vmatpush2.msra.mxu0 0.0
    %120 = vmatprep.subr.mxu0 0.0
    %121 = vmatpush2.msra.mxu0 0.0
    %122 = vmatprep.subr.mxu0 0.0
    %123 = vmatpush2.msra.mxu0 0.0
    %124 = vmatprep.subr.mxu0 0.0
    %125 = vmatpush2.msra.mxu0 0.0
    %126 = vmatprep.subr.mxu0 0.0
    %127 = vmatpush2.msra.mxu0 0.0
    %128 = vmatprep.subr.mxu0 0.0
    %129 = vmatpush2.msra.mxu0 0.0
    %130 = vmatprep.subr.mxu0 0.0
    %131 = vmatpush2.msra.mxu0 0.0
    %132 = vmatprep.subr.mxu0 0.0
    %133 = vmatpush2.msra.mxu0 0.0
    %134 = vmatprep.subr.mxu0 0.0
    %135 = vmatpush2.msra.mxu0 0.0
    %136 = vmatprep.subr.mxu0 0.0
    %137 = vmatpush2.msra.mxu0 0.0
    %138 = vmatprep.subr.mxu0 0.0
    %139 = vmatpush2.msra.mxu0 0.0
    %140 = vmatprep.subr.mxu0 0.0
    %141 = vmatpush2.msra.mxu0 0.0
    %142 = vmatprep.subr.mxu0 0.0
    %143 = vmatpush2.msra.mxu0 0.0
    %144 = vmatprep.subr.mxu0 0.0
    %145 = vmatpush2.msra.mxu0 0.0
    %146 = vmatprep.mubr.f32.mxu0 0.0
    %v147 = vand.u32 %v70, 4294901760
    %v148 = vsub.f32 %v70, %v147
    %v149 = vand.u32 %v148, 4294901760
    %v150 = vsub.f32 %v148, %v149
    %v151 = vand.u32 %v150, 4294901760
    %152 = vmatmul.mubr.f32.gmra.mxu0 %v151
    %v153 = vpop.f32.mrf.mxu0
    %v154 = vadd.f32 0.0, %v153
    %v155 = vpop.f32.mrf.mxu0
    %156 = vmatprep.mubr.f32.mxu0 0.0
    %v157 = vand.u32 %v73, 4294901760
    %v158 = vsub.f32 %v73, %v157
    %v159 = vand.u32 %v158, 4294901760
    %v160 = vsub.f32 %v158, %v159
    %v161 = vand.u32 %v160, 4294901760
    %162 = vmatmul.mubr.f32.gmra.mxu0 %v161
    %v163 = vpop.f32.mrf.mxu0
    %v164 = vadd.f32 0.0, %v163
    %v165 = vpop.f32.mrf.mxu0
    %166 = vmatprep.mubr.f32.mxu0 0.0
    %v167 = vand.u32 %v76, 4294901760
    %v168 = vsub.f32 %v76, %v167
    %v169 = vand.u32 %v168, 4294901760
    %v170 = vsub.f32 %v168, %v169
    %v171 = vand.u32 %v170, 4294901760
    %172 = vmatmul.mubr.f32.gmra.mxu0 %v171
    %v173 = vpop.f32.mrf.mxu0
    %v174 = vadd.f32 0.0, %v173
    %v175 = vpop.f32.mrf.mxu0
    %176 = vmatprep.mubr.f32.mxu0 0.0
    %v177 = vand.u32 %v79, 4294901760
    %v178 = vsub.f32 %v79, %v177
    %v179 = vand.u32 %v178, 4294901760
    %v180 = vsub.f32 %v178, %v179
    %v181 = vand.u32 %v180, 4294901760
    %182 = vmatmul.mubr.f32.gmra.mxu0 %v181
    %v183 = vpop.f32.mrf.mxu0
    %v184 = vadd.f32 0.0, %v183
    %v185 = vpop.f32.mrf.mxu0
    %186 = vdwg.mxu0
    %187 = vmatprep.subr.mxu0 0.0
    %188 = vmatpush1.msra.mxu0 0.0
    %189 = vmatprep.subr.mxu0 0.0
    %190 = vmatpush1.msra.mxu0 0.0
    %191 = vmatprep.subr.mxu0 0.0
    %192 = vmatpush1.msra.mxu0 0.0
    %193 = vmatprep.subr.mxu0 0.0
    %194 = vmatpush1.msra.mxu0 0.0
    %195 = vmatprep.subr.mxu0 0.0
    %196 = vmatpush1.msra.mxu0 0.0
    %197 = vmatprep.subr.mxu0 0.0
    %198 = vmatpush1.msra.mxu0 0.0
    %199 = vmatprep.subr.mxu0 0.0
    %200 = vmatpush1.msra.mxu0 0.0
    %201 = vmatprep.subr.mxu0 0.0
    %202 = vmatpush1.msra.mxu0 0.0
    %203 = vmatprep.subr.mxu0 0.0
    %204 = vmatpush1.msra.mxu0 0.0
    %205 = vmatprep.subr.mxu0 0.0
    %206 = vmatpush1.msra.mxu0 0.0
    %207 = vmatprep.subr.mxu0 0.0
    %208 = vmatpush1.msra.mxu0 0.0
    %209 = vmatprep.subr.mxu0 0.0
    %210 = vmatpush1.msra.mxu0 0.0
    %211 = vmatprep.subr.mxu0 0.0
    %212 = vmatpush1.msra.mxu0 0.0
    %213 = vmatprep.subr.mxu0 0.0
    %214 = vmatpush1.msra.mxu0 0.0
    %215 = vmatprep.subr.mxu0 0.0
    %216 = vmatpush1.msra.mxu0 0.0
    %217 = vmatprep.subr.mxu0 0.0
    %v218 = vand.u32 %v67, 4294901760
    %v219 = vsub.f32 %v67, %v218
    %v220 = vand.u32 %v219, 4294901760
    %v221 = vsub.f32 %v219, %v220
    %v222 = vand.u32 %v221, 4294901760
    %223 = vmatpush1.msra.mxu0 %v222
    %224 = vmatprep.subr.mxu0 0.0
    %225 = vmatpush2.msra.mxu0 0.0
    %226 = vmatprep.subr.mxu0 0.0
    %227 = vmatpush2.msra.mxu0 0.0
    %228 = vmatprep.subr.mxu0 0.0
    %229 = vmatpush2.msra.mxu0 0.0
    %230 = vmatprep.subr.mxu0 0.0
    %231 = vmatpush2.msra.mxu0 0.0
    %232 = vmatprep.subr.mxu0 0.0
    %233 = vmatpush2.msra.mxu0 0.0
    %234 = vmatprep.subr.mxu0 0.0
    %235 = vmatpush2.msra.mxu0 0.0
    %236 = vmatprep.subr.mxu0 0.0
    %237 = vmatpush2.msra.mxu0 0.0
    %238 = vmatprep.subr.mxu0 0.0
    %239 = vmatpush2.msra.mxu0 0.0
    %240 = vmatprep.subr.mxu0 0.0
    %241 = vmatpush2.msra.mxu0 0.0
    %242 = vmatprep.subr.mxu0 0.0
    %243 = vmatpush2.msra.mxu0 0.0
    %244 = vmatprep.subr.mxu0 0.0
    %245 = vmatpush2.msra.mxu0 0.0
    %246 = vmatprep.subr.mxu0 0.0
    %247 = vmatpush2.msra.mxu0 0.0
    %248 = vmatprep.subr.mxu0 0.0
    %249 = vmatpush2.msra.mxu0 0.0
    %250 = vmatprep.subr.mxu0 0.0
    %251 = vmatpush2.msra.mxu0 0.0
    %252 = vmatprep.subr.mxu0 0.0
    %253 = vmatpush2.msra.mxu0 0.0
    %254 = vmatprep.subr.mxu0 0.0
    %255 = vmatpush2.msra.mxu0 0.0
    %256 = vmatprep.mubr.f32.mxu0 0.0
    %v257 = vand.u32 %v70, 4294901760
    %258 = vmatmul.mubr.f32.gmra.mxu0 %v257
    %v259 = vpop.f32.mrf.mxu0
    %v260 = vadd.f32 %v154, %v259
    %v261 = vpop.f32.mrf.mxu0
    %262 = vmatprep.mubr.f32.mxu0 0.0
    %v263 = vand.u32 %v73, 4294901760
    %264 = vmatmul.mubr.f32.gmra.mxu0 %v263
    %v265 = vpop.f32.mrf.mxu0
    %v266 = vadd.f32 %v164, %v265
    %v267 = vpop.f32.mrf.mxu0
    %268 = vmatprep.mubr.f32.mxu0 0.0
    %v269 = vand.u32 %v76, 4294901760
    %270 = vmatmul.mubr.f32.gmra.mxu0 %v269
    %v271 = vpop.f32.mrf.mxu0
    %v272 = vadd.f32 %v174, %v271
    %v273 = vpop.f32.mrf.mxu0
    %274 = vmatprep.mubr.f32.mxu0 0.0
    %v275 = vand.u32 %v79, 4294901760
    %276 = vmatmul.mubr.f32.gmra.mxu0 %v275
    %v277 = vpop.f32.mrf.mxu0
    %v278 = vadd.f32 %v184, %v277
    %v279 = vpop.f32.mrf.mxu0
    %280 = vdwg.mxu0
    %281 = vmatprep.subr.mxu0 0.0
    %282 = vmatpush1.msra.mxu0 0.0
    %283 = vmatprep.subr.mxu0 0.0
    %284 = vmatpush1.msra.mxu0 0.0
    %285 = vmatprep.subr.mxu0 0.0
    %286 = vmatpush1.msra.mxu0 0.0
    %287 = vmatprep.subr.mxu0 0.0
    %288 = vmatpush1.msra.mxu0 0.0
    %289 = vmatprep.subr.mxu0 0.0
    %290 = vmatpush1.msra.mxu0 0.0
    %291 = vmatprep.subr.mxu0 0.0
    %292 = vmatpush1.msra.mxu0 0.0
    %293 = vmatprep.subr.mxu0 0.0
    %294 = vmatpush1.msra.mxu0 0.0
    %295 = vmatprep.subr.mxu0 0.0
    %296 = vmatpush1.msra.mxu0 0.0
    %297 = vmatprep.subr.mxu0 0.0
    %298 = vmatpush1.msra.mxu0 0.0
    %299 = vmatprep.subr.mxu0 0.0
    %300 = vmatpush1.msra.mxu0 0.0
    %301 = vmatprep.subr.mxu0 0.0
    %302 = vmatpush1.msra.mxu0 0.0
    %303 = vmatprep.subr.mxu0 0.0
    %304 = vmatpush1.msra.mxu0 0.0
    %305 = vmatprep.subr.mxu0 0.0
    %306 = vmatpush1.msra.mxu0 0.0
    %307 = vmatprep.subr.mxu0 0.0
    %308 = vmatpush1.msra.mxu0 0.0
    %309 = vmatprep.subr.mxu0 0.0
    %310 = vmatpush1.msra.mxu0 0.0
    %311 = vmatprep.subr.mxu0 0.0
    %v312 = vand.u32 %v67, 4294901760
    %v313 = vsub.f32 %v67, %v312
    %314 = vmatpush1.msra.mxu0 %v313
    %315 = vmatprep.subr.mxu0 0.0
    %316 = vmatpush2.msra.mxu0 0.0
    %317 = vmatprep.subr.mxu0 0.0
    %318 = vmatpush2.msra.mxu0 0.0
    %319 = vmatprep.subr.mxu0 0.0
    %320 = vmatpush2.msra.mxu0 0.0
    %321 = vmatprep.subr.mxu0 0.0
    %322 = vmatpush2.msra.mxu0 0.0
    %323 = vmatprep.subr.mxu0 0.0
    %324 = vmatpush2.msra.mxu0 0.0
    %325 = vmatprep.subr.mxu0 0.0
    %326 = vmatpush2.msra.mxu0 0.0
    %327 = vmatprep.subr.mxu0 0.0
    %328 = vmatpush2.msra.mxu0 0.0
    %329 = vmatprep.subr.mxu0 0.0
    %330 = vmatpush2.msra.mxu0 0.0
    %331 = vmatprep.subr.mxu0 0.0
    %332 = vmatpush2.msra.mxu0 0.0
    %333 = vmatprep.subr.mxu0 0.0
    %334 = vmatpush2.msra.mxu0 0.0
    %335 = vmatprep.subr.mxu0 0.0
    %336 = vmatpush2.msra.mxu0 0.0
    %337 = vmatprep.subr.mxu0 0.0
    %338 = vmatpush2.msra.mxu0 0.0
    %339 = vmatprep.subr.mxu0 0.0
    %340 = vmatpush2.msra.mxu0 0.0
    %341 = vmatprep.subr.mxu0 0.0
    %342 = vmatpush2.msra.mxu0 0.0
    %343 = vmatprep.subr.mxu0 0.0
    %344 = vmatpush2.msra.mxu0 0.0
    %345 = vmatprep.subr.mxu0 0.0
    %346 = vmatpush2.msra.mxu0 0.0
    %347 = vmatprep.mubr.f32.mxu0 0.0
    %v348 = vand.u32 %v70, 4294901760
    %v349 = vsub.f32 %v70, %v348
    %350 = vmatmul.mubr.f32.gmra.mxu0 %v349
    %v351 = vpop.f32.mrf.mxu0
    %v352 = vadd.f32 %v260, %v351
    %v353 = vpop.f32.mrf.mxu0
    %354 = vmatprep.mubr.f32.mxu0 0.0
    %v355 = vand.u32 %v73, 4294901760
    %v356 = vsub.f32 %v73, %v355
    %357 = vmatmul.mubr.f32.gmra.mxu0 %v356
    %v358 = vpop.f32.mrf.mxu0
    %v359 = vadd.f32 %v266, %v358
    %v360 = vpop.f32.mrf.mxu0
    %361 = vmatprep.mubr.f32.mxu0 0.0
    %v362 = vand.u32 %v76, 4294901760
    %v363 = vsub.f32 %v76, %v362
    %364 = vmatmul.mubr.f32.gmra.mxu0 %v363
    %v365 = vpop.f32.mrf.mxu0
    %v366 = vadd.f32 %v272, %v365
    %v367 = vpop.f32.mrf.mxu0
    %368 = vmatprep.mubr.f32.mxu0 0.0
    %v369 = vand.u32 %v79, 4294901760
    %v370 = vsub.f32 %v79, %v369
    %371 = vmatmul.mubr.f32.gmra.mxu0 %v370
    %v372 = vpop.f32.mrf.mxu0
    %v373 = vadd.f32 %v278, %v372
    %v374 = vpop.f32.mrf.mxu0
    %375 = vdwg.mxu0
    %376 = vmatprep.subr.mxu0 0.0
    %377 = vmatpush1.msra.mxu0 0.0
    %378 = vmatprep.subr.mxu0 0.0
    %379 = vmatpush1.msra.mxu0 0.0
    %380 = vmatprep.subr.mxu0 0.0
    %381 = vmatpush1.msra.mxu0 0.0
    %382 = vmatprep.subr.mxu0 0.0
    %383 = vmatpush1.msra.mxu0 0.0
    %384 = vmatprep.subr.mxu0 0.0
    %385 = vmatpush1.msra.mxu0 0.0
    %386 = vmatprep.subr.mxu0 0.0
    %387 = vmatpush1.msra.mxu0 0.0
    %388 = vmatprep.subr.mxu0 0.0
    %389 = vmatpush1.msra.mxu0 0.0
    %390 = vmatprep.subr.mxu0 0.0
    %391 = vmatpush1.msra.mxu0 0.0
    %392 = vmatprep.subr.mxu0 0.0
    %393 = vmatpush1.msra.mxu0 0.0
    %394 = vmatprep.subr.mxu0 0.0
    %395 = vmatpush1.msra.mxu0 0.0
    %396 = vmatprep.subr.mxu0 0.0
    %397 = vmatpush1.msra.mxu0 0.0
    %398 = vmatprep.subr.mxu0 0.0
    %399 = vmatpush1.msra.mxu0 0.0
    %400 = vmatprep.subr.mxu0 0.0
    %401 = vmatpush1.msra.mxu0 0.0
    %402 = vmatprep.subr.mxu0 0.0
    %403 = vmatpush1.msra.mxu0 0.0
    %404 = vmatprep.subr.mxu0 0.0
    %405 = vmatpush1.msra.mxu0 0.0
    %406 = vmatprep.subr.mxu0 0.0
    %v407 = vand.u32 %v67, 4294901760
    %408 = vmatpush1.msra.mxu0 %v407
    %409 = vmatprep.subr.mxu0 0.0
    %410 = vmatpush2.msra.mxu0 0.0
    %411 = vmatprep.subr.mxu0 0.0
    %412 = vmatpush2.msra.mxu0 0.0
    %413 = vmatprep.subr.mxu0 0.0
    %414 = vmatpush2.msra.mxu0 0.0
    %415 = vmatprep.subr.mxu0 0.0
    %416 = vmatpush2.msra.mxu0 0.0
    %417 = vmatprep.subr.mxu0 0.0
    %418 = vmatpush2.msra.mxu0 0.0
    %419 = vmatprep.subr.mxu0 0.0
    %420 = vmatpush2.msra.mxu0 0.0
    %421 = vmatprep.subr.mxu0 0.0
    %422 = vmatpush2.msra.mxu0 0.0
    %423 = vmatprep.subr.mxu0 0.0
    %424 = vmatpush2.msra.mxu0 0.0
    %425 = vmatprep.subr.mxu0 0.0
    %426 = vmatpush2.msra.mxu0 0.0
    %427 = vmatprep.subr.mxu0 0.0
    %428 = vmatpush2.msra.mxu0 0.0
    %429 = vmatprep.subr.mxu0 0.0
    %430 = vmatpush2.msra.mxu0 0.0
    %431 = vmatprep.subr.mxu0 0.0
    %432 = vmatpush2.msra.mxu0 0.0
    %433 = vmatprep.subr.mxu0 0.0
    %434 = vmatpush2.msra.mxu0 0.0
    %435 = vmatprep.subr.mxu0 0.0
    %436 = vmatpush2.msra.mxu0 0.0
    %437 = vmatprep.subr.mxu0 0.0
    %438 = vmatpush2.msra.mxu0 0.0
    %439 = vmatprep.subr.mxu0 0.0
    %440 = vmatpush2.msra.mxu0 0.0
    %441 = vmatprep.mubr.f32.mxu0 0.0
    %v442 = vand.u32 %v70, 4294901760
    %v443 = vsub.f32 %v70, %v442
    %v444 = vand.u32 %v443, 4294901760
    %445 = vmatmul.mubr.f32.gmra.mxu0 %v444
    %v446 = vpop.f32.mrf.mxu0
    %v447 = vadd.f32 %v352, %v446
    %v448 = vpop.f32.mrf.mxu0
    %449 = vmatprep.mubr.f32.mxu0 0.0
    %v450 = vand.u32 %v73, 4294901760
    %v451 = vsub.f32 %v73, %v450
    %v452 = vand.u32 %v451, 4294901760
    %453 = vmatmul.mubr.f32.gmra.mxu0 %v452
    %v454 = vpop.f32.mrf.mxu0
    %v455 = vadd.f32 %v359, %v454
    %v456 = vpop.f32.mrf.mxu0
    %457 = vmatprep.mubr.f32.mxu0 0.0
    %v458 = vand.u32 %v76, 4294901760
    %v459 = vsub.f32 %v76, %v458
    %v460 = vand.u32 %v459, 4294901760
    %461 = vmatmul.mubr.f32.gmra.mxu0 %v460
    %v462 = vpop.f32.mrf.mxu0
    %v463 = vadd.f32 %v366, %v462
    %v464 = vpop.f32.mrf.mxu0
    %465 = vmatprep.mubr.f32.mxu0 0.0
    %v466 = vand.u32 %v79, 4294901760
    %v467 = vsub.f32 %v79, %v466
    %v468 = vand.u32 %v467, 4294901760
    %469 = vmatmul.mubr.f32.gmra.mxu0 %v468
    %v470 = vpop.f32.mrf.mxu0
    %v471 = vadd.f32 %v373, %v470
    %v472 = vpop.f32.mrf.mxu0
    %473 = vdwg.mxu0
    %474 = vmatprep.subr.mxu0 0.0
    %475 = vmatpush1.msra.mxu0 0.0
    %476 = vmatprep.subr.mxu0 0.0
    %477 = vmatpush1.msra.mxu0 0.0
    %478 = vmatprep.subr.mxu0 0.0
    %479 = vmatpush1.msra.mxu0 0.0
    %480 = vmatprep.subr.mxu0 0.0
    %481 = vmatpush1.msra.mxu0 0.0
    %482 = vmatprep.subr.mxu0 0.0
    %483 = vmatpush1.msra.mxu0 0.0
    %484 = vmatprep.subr.mxu0 0.0
    %485 = vmatpush1.msra.mxu0 0.0
    %486 = vmatprep.subr.mxu0 0.0
    %487 = vmatpush1.msra.mxu0 0.0
    %488 = vmatprep.subr.mxu0 0.0
    %489 = vmatpush1.msra.mxu0 0.0
    %490 = vmatprep.subr.mxu0 0.0
    %491 = vmatpush1.msra.mxu0 0.0
    %492 = vmatprep.subr.mxu0 0.0
    %493 = vmatpush1.msra.mxu0 0.0
    %494 = vmatprep.subr.mxu0 0.0
    %495 = vmatpush1.msra.mxu0 0.0
    %496 = vmatprep.subr.mxu0 0.0
    %497 = vmatpush1.msra.mxu0 0.0
    %498 = vmatprep.subr.mxu0 0.0
    %499 = vmatpush1.msra.mxu0 0.0
    %500 = vmatprep.subr.mxu0 0.0
    %501 = vmatpush1.msra.mxu0 0.0
    %502 = vmatprep.subr.mxu0 0.0
    %503 = vmatpush1.msra.mxu0 0.0
    %504 = vmatprep.subr.mxu0 0.0
    %v505 = vand.u32 %v67, 4294901760
    %v506 = vsub.f32 %v67, %v505
    %v507 = vand.u32 %v506, 4294901760
    %508 = vmatpush1.msra.mxu0 %v507
    %509 = vmatprep.subr.mxu0 0.0
    %510 = vmatpush2.msra.mxu0 0.0
    %511 = vmatprep.subr.mxu0 0.0
    %512 = vmatpush2.msra.mxu0 0.0
    %513 = vmatprep.subr.mxu0 0.0
    %514 = vmatpush2.msra.mxu0 0.0
    %515 = vmatprep.subr.mxu0 0.0
    %516 = vmatpush2.msra.mxu0 0.0
    %517 = vmatprep.subr.mxu0 0.0
    %518 = vmatpush2.msra.mxu0 0.0
    %519 = vmatprep.subr.mxu0 0.0
    %520 = vmatpush2.msra.mxu0 0.0
    %521 = vmatprep.subr.mxu0 0.0
    %522 = vmatpush2.msra.mxu0 0.0
    %523 = vmatprep.subr.mxu0 0.0
    %524 = vmatpush2.msra.mxu0 0.0
    %525 = vmatprep.subr.mxu0 0.0
    %526 = vmatpush2.msra.mxu0 0.0
    %527 = vmatprep.subr.mxu0 0.0
    %528 = vmatpush2.msra.mxu0 0.0
    %529 = vmatprep.subr.mxu0 0.0
    %530 = vmatpush2.msra.mxu0 0.0
    %531 = vmatprep.subr.mxu0 0.0
    %532 = vmatpush2.msra.mxu0 0.0
    %533 = vmatprep.subr.mxu0 0.0
    %534 = vmatpush2.msra.mxu0 0.0
    %535 = vmatprep.subr.mxu0 0.0
    %536 = vmatpush2.msra.mxu0 0.0
    %537 = vmatprep.subr.mxu0 0.0
    %538 = vmatpush2.msra.mxu0 0.0
    %539 = vmatprep.subr.mxu0 0.0
    %540 = vmatpush2.msra.mxu0 0.0
    %541 = vmatprep.mubr.f32.mxu0 0.0
    %v542 = vand.u32 %v70, 4294901760
    %543 = vmatmul.mubr.f32.gmra.mxu0 %v542
    %v544 = vpop.f32.mrf.mxu0
    %v545 = vadd.f32 %v447, %v544
    %v546 = vpop.f32.mrf.mxu0
    %547 = vmatprep.mubr.f32.mxu0 0.0
    %v548 = vand.u32 %v73, 4294901760
    %549 = vmatmul.mubr.f32.gmra.mxu0 %v548
    %v550 = vpop.f32.mrf.mxu0
    %v551 = vadd.f32 %v455, %v550
    %v552 = vpop.f32.mrf.mxu0
    %553 = vmatprep.mubr.f32.mxu0 0.0
    %v554 = vand.u32 %v76, 4294901760
    %555 = vmatmul.mubr.f32.gmra.mxu0 %v554
    %v556 = vpop.f32.mrf.mxu0
    %v557 = vadd.f32 %v463, %v556
    %v558 = vpop.f32.mrf.mxu0
    %559 = vmatprep.mubr.f32.mxu0 0.0
    %v560 = vand.u32 %v79, 4294901760
    %561 = vmatmul.mubr.f32.gmra.mxu0 %v560
    %v562 = vpop.f32.mrf.mxu0
    %v563 = vadd.f32 %v471, %v562
    %v564 = vpop.f32.mrf.mxu0
    %565 = vdwg.mxu0
    %566 = vmatprep.subr.mxu0 0.0
    %567 = vmatpush1.msra.mxu0 0.0
    %568 = vmatprep.subr.mxu0 0.0
    %569 = vmatpush1.msra.mxu0 0.0
    %570 = vmatprep.subr.mxu0 0.0
    %571 = vmatpush1.msra.mxu0 0.0
    %572 = vmatprep.subr.mxu0 0.0
    %573 = vmatpush1.msra.mxu0 0.0
    %574 = vmatprep.subr.mxu0 0.0
    %575 = vmatpush1.msra.mxu0 0.0
    %576 = vmatprep.subr.mxu0 0.0
    %577 = vmatpush1.msra.mxu0 0.0
    %578 = vmatprep.subr.mxu0 0.0
    %579 = vmatpush1.msra.mxu0 0.0
    %580 = vmatprep.subr.mxu0 0.0
    %581 = vmatpush1.msra.mxu0 0.0
    %582 = vmatprep.subr.mxu0 0.0
    %583 = vmatpush1.msra.mxu0 0.0
    %584 = vmatprep.subr.mxu0 0.0
    %585 = vmatpush1.msra.mxu0 0.0
    %586 = vmatprep.subr.mxu0 0.0
    %587 = vmatpush1.msra.mxu0 0.0
    %588 = vmatprep.subr.mxu0 0.0
    %589 = vmatpush1.msra.mxu0 0.0
    %590 = vmatprep.subr.mxu0 0.0
    %591 = vmatpush1.msra.mxu0 0.0
    %592 = vmatprep.subr.mxu0 0.0
    %593 = vmatpush1.msra.mxu0 0.0
    %594 = vmatprep.subr.mxu0 0.0
    %595 = vmatpush1.msra.mxu0 0.0
    %596 = vmatprep.subr.mxu0 0.0
    %v597 = vand.u32 %v67, 4294901760
    %598 = vmatpush1.msra.mxu0 %v597
    %599 = vmatprep.subr.mxu0 0.0
    %600 = vmatpush2.msra.mxu0 0.0
    %601 = vmatprep.subr.mxu0 0.0
    %602 = vmatpush2.msra.mxu0 0.0
    %603 = vmatprep.subr.mxu0 0.0
    %604 = vmatpush2.msra.mxu0 0.0
    %605 = vmatprep.subr.mxu0 0.0
    %606 = vmatpush2.msra.mxu0 0.0
    %607 = vmatprep.subr.mxu0 0.0
    %608 = vmatpush2.msra.mxu0 0.0
    %609 = vmatprep.subr.mxu0 0.0
    %610 = vmatpush2.msra.mxu0 0.0
    %611 = vmatprep.subr.mxu0 0.0
    %612 = vmatpush2.msra.mxu0 0.0
    %613 = vmatprep.subr.mxu0 0.0
    %614 = vmatpush2.msra.mxu0 0.0
    %615 = vmatprep.subr.mxu0 0.0
    %616 = vmatpush2.msra.mxu0 0.0
    %617 = vmatprep.subr.mxu0 0.0
    %618 = vmatpush2.msra.mxu0 0.0
    %619 = vmatprep.subr.mxu0 0.0
    %620 = vmatpush2.msra.mxu0 0.0
    %621 = vmatprep.subr.mxu0 0.0
    %622 = vmatpush2.msra.mxu0 0.0
    %623 = vmatprep.subr.mxu0 0.0
    %624 = vmatpush2.msra.mxu0 0.0
    %625 = vmatprep.subr.mxu0 0.0
    %626 = vmatpush2.msra.mxu0 0.0
    %627 = vmatprep.subr.mxu0 0.0
    %628 = vmatpush2.msra.mxu0 0.0
    %629 = vmatprep.subr.mxu0 0.0
    %630 = vmatpush2.msra.mxu0 0.0
    %631 = vmatprep.mubr.f32.mxu0 0.0
    %v632 = vand.u32 %v70, 4294901760
    %633 = vmatmul.mubr.f32.gmra.mxu0 %v632
    %v634 = vpop.f32.mrf.mxu0
    %v635 = vadd.f32 %v545, %v634
    %v636 = vpop.f32.mrf.mxu0
    %637 = vmatprep.mubr.f32.mxu0 0.0
    %v638 = vand.u32 %v73, 4294901760
    %639 = vmatmul.mubr.f32.gmra.mxu0 %v638
    %v640 = vpop.f32.mrf.mxu0
    %v641 = vadd.f32 %v551, %v640
    %v642 = vpop.f32.mrf.mxu0
    %643 = vmatprep.mubr.f32.mxu0 0.0
    %v644 = vand.u32 %v76, 4294901760
    %645 = vmatmul.mubr.f32.gmra.mxu0 %v644
    %v646 = vpop.f32.mrf.mxu0
    %v647 = vadd.f32 %v557, %v646
    %v648 = vpop.f32.mrf.mxu0
    %649 = vmatprep.mubr.f32.mxu0 0.0
    %v650 = vand.u32 %v79, 4294901760
    %651 = vmatmul.mubr.f32.gmra.mxu0 %v650
    %v652 = vpop.f32.mrf.mxu0
    %v653 = vadd.f32 %v563, %v652
    %v654 = vpop.f32.mrf.mxu0
    %655 = vdwg.mxu0
    %v656 = vld [vmem:[%s5] sm:$0x1]
    %658 = vset.pattern.permute.xlu0 0
    %659 = vperm.xlu0 %658, %v635
    %v660 = vpop.permute.xlu0 %659
    %663 = vset.pattern.permute.xlu0 0
    %664 = vperm.xlu0 %663, %v641
    %v665 = vpop.permute.xlu0 %664
    %668 = vset.pattern.permute.xlu0 0
    %669 = vperm.xlu0 %668, %v647
    %v670 = vpop.permute.xlu0 %669
    %673 = vset.pattern.permute.xlu0 0
    %674 = vperm.xlu0 %673, %v653
    %v675 = vpop.permute.xlu0 %674
    %v677 = vlaneseq
    %v678 = vshrl.u32 %v677, 7
    %v679 = vsub.s32 0, %v678
    %v680 = vrot.slane %v656, %v679
    %v681 = vmul.f32 %v660, %v680
    %v682 = vmul.f32 %v665, %v680
    %v683 = vmul.f32 %v670, %v680
    %v684 = vmul.f32 %v675, %v680
    %v685 = vld [vmem:[%s2] sm:$0xff]
    %v686 = vld [vmem:[%s2 + $0x8] sm:$0xff]
    %v687 = vld [vmem:[%s2 + $0x10] sm:$0xff]
    %v688 = vld [vmem:[%s2 + $0x18] sm:$0xff]
    %v689 = vld [vmem:[%s5 + $0x1] sm:$0x1]
    %691 = vset.pattern.permute.xlu0 0
    %692 = vperm.xlu0 %691, %v685
    %v693 = vpop.permute.xlu0 %692
    %696 = vset.pattern.permute.xlu0 0
    %697 = vperm.xlu0 %696, %v686
    %v698 = vpop.permute.xlu0 %697
    %701 = vset.pattern.permute.xlu0 0
    %702 = vperm.xlu0 %701, %v687
    %v703 = vpop.permute.xlu0 %702
    %706 = vset.pattern.permute.xlu0 0
    %707 = vperm.xlu0 %706, %v688
    %v708 = vpop.permute.xlu0 %707
    %v710 = vlaneseq
    %v711 = vshrl.u32 %v710, 7
    %v712 = vsub.s32 0, %v711
    %v713 = vrot.slane %v689, %v712
    %v714 = vmul.f32 %v693, %v713
    %v715 = vmul.f32 %v698, %v713
    %v716 = vmul.f32 %v703, %v713
    %v717 = vmul.f32 %v708, %v713
    %v718 = vadd.f32 %v681, %v714
    %v719 = vadd.f32 %v682, %v715
    %v720 = vadd.f32 %v683, %v716
    %v721 = vadd.f32 %v684, %v717
    %v722 = vld [vmem:[%s6] sm:$0x1]
    %v724 = vlaneseq
    %v725 = vshrl.u32 %v724, 7
    %v726 = vsub.s32 0, %v725
    %v727 = vrot.slane %v722, %v726
    %v729 = vadd.f32 %v718, %v727
    %v730 = vadd.f32 %v719, %v727
    %v731 = vadd.f32 %v720, %v727
    %v732 = vadd.f32 %v721, %v727
    %v733 = vmax.f32 %v729, 0.0
    %v734 = vmax.f32 %v730, 0.0
    %v735 = vmax.f32 %v731, 0.0
    %v736 = vmax.f32 %v732, 0.0
    %vm737 = vcmask 130048
    %738 = vst.msk [vmem:[#allocation2] sm:$0xff] %vm737, %v733
    %739 = vst.msk [vmem:[#allocation2 + $0x8] sm:$0xff] %vm737, %v734
    %740 = vst.msk [vmem:[#allocation2 + $0x10] sm:$0xff] %vm737, %v735
    %741 = vst.msk [vmem:[#allocation2 + $0x18] sm:$0xff] %vm737, %v736
    %v743 = vsel %vm737, %v61, 0
    %v746 = vsel %vm737, %v62, 0
    %748 = vmatprep.subr.mxu0 0.0
    %749 = vmatpush1.msra.mxu0 0.0
    %750 = vmatprep.subr.mxu0 0.0
    %751 = vmatpush1.msra.mxu0 0.0
    %752 = vmatprep.subr.mxu0 0.0
    %753 = vmatpush1.msra.mxu0 0.0
    %754 = vmatprep.subr.mxu0 0.0
    %755 = vmatpush1.msra.mxu0 0.0
    %756 = vmatprep.subr.mxu0 0.0
    %757 = vmatpush1.msra.mxu0 0.0
    %758 = vmatprep.subr.mxu0 0.0
    %759 = vmatpush1.msra.mxu0 0.0
    %760 = vmatprep.subr.mxu0 0.0
    %761 = vmatpush1.msra.mxu0 0.0
    %762 = vmatprep.subr.mxu0 0.0
    %763 = vmatpush1.msra.mxu0 0.0
    %764 = vmatprep.subr.mxu0 0.0
    %765 = vmatpush1.msra.mxu0 0.0
    %766 = vmatprep.subr.mxu0 0.0
    %767 = vmatpush1.msra.mxu0 0.0
    %768 = vmatprep.subr.mxu0 0.0
    %769 = vmatpush1.msra.mxu0 0.0
    %770 = vmatprep.subr.mxu0 0.0
    %771 = vmatpush1.msra.mxu0 0.0
    %772 = vmatprep.subr.mxu0 0.0
    %773 = vmatpush1.msra.mxu0 0.0
    %774 = vmatprep.subr.mxu0 0.0
    %775 = vmatpush1.msra.mxu0 0.0
    %776 = vmatprep.subr.mxu0 0.0
    %v777 = vand.u32 %v719, 4294901760
    %778 = vmatpush1.msra.mxu0 %v777
    %779 = vmatprep.subr.mxu0 0.0
    %v780 = vand.u32 %v718, 4294901760
    %781 = vmatpush1.msra.mxu0 %v780
    %782 = vmatprep.subr.mxu0 0.0
    %783 = vmatpush2.msra.mxu0 0.0
    %784 = vmatprep.subr.mxu0 0.0
    %785 = vmatpush2.msra.mxu0 0.0
    %786 = vmatprep.subr.mxu0 0.0
    %787 = vmatpush2.msra.mxu0 0.0
    %788 = vmatprep.subr.mxu0 0.0
    %789 = vmatpush2.msra.mxu0 0.0
    %790 = vmatprep.subr.mxu0 0.0
    %791 = vmatpush2.msra.mxu0 0.0
    %792 = vmatprep.subr.mxu0 0.0
    %793 = vmatpush2.msra.mxu0 0.0
    %794 = vmatprep.subr.mxu0 0.0
    %795 = vmatpush2.msra.mxu0 0.0
    %796 = vmatprep.subr.mxu0 0.0
    %797 = vmatpush2.msra.mxu0 0.0
    %798 = vmatprep.subr.mxu0 0.0
    %799 = vmatpush2.msra.mxu0 0.0
    %800 = vmatprep.subr.mxu0 0.0
    %801 = vmatpush2.msra.mxu0 0.0
    %802 = vmatprep.subr.mxu0 0.0
    %803 = vmatpush2.msra.mxu0 0.0
    %804 = vmatprep.subr.mxu0 0.0
    %805 = vmatpush2.msra.mxu0 0.0
    %806 = vmatprep.subr.mxu0 0.0
    %807 = vmatpush2.msra.mxu0 0.0
    %808 = vmatprep.subr.mxu0 0.0
    %809 = vmatpush2.msra.mxu0 0.0
    %810 = vmatprep.subr.mxu0 0.0
    %811 = vmatpush2.msra.mxu0 0.0
    %812 = vmatprep.subr.mxu0 0.0
    %813 = vmatpush2.msra.mxu0 0.0
    %814 = vmatprep.mubr.f32.mxu0 0.0
    %v815 = vand.u32 %v743, 4294901760
    %v816 = vsub.f32 %v743, %v815
    %v817 = vand.u32 %v816, 4294901760
    %v818 = vsub.f32 %v816, %v817
    %v819 = vand.u32 %v818, 4294901760
    %820 = vmatmul.mubr.f32.gmra.mxu0 %v819
    %v821 = vpop.f32.mrf.mxu0
    %v822 = vadd.f32 %v727, %v821
    %v823 = vpop.f32.mrf.mxu0
    %824 = vmatprep.mubr.f32.mxu0 0.0
    %v825 = vand.u32 %v746, 4294901760
    %v826 = vsub.f32 %v746, %v825
    %v827 = vand.u32 %v826, 4294901760
    %v828 = vsub.f32 %v826, %v827
    %v829 = vand.u32 %v828, 4294901760
    %830 = vmatmul.mubr.f32.gmra.mxu0 %v829
    %v831 = vpop.f32.mrf.mxu0
    %v832 = vadd.f32 %v727, %v831
    %v833 = vpop.f32.mrf.mxu0
    %834 = vdwg.mxu0
    %835 = vmatprep.subr.mxu0 0.0
    %836 = vmatpush1.msra.mxu0 0.0
    %837 = vmatprep.subr.mxu0 0.0
    %838 = vmatpush1.msra.mxu0 0.0
    %839 = vmatprep.subr.mxu0 0.0
    %840 = vmatpush1.msra.mxu0 0.0
    %841 = vmatprep.subr.mxu0 0.0
    %842 = vmatpush1.msra.mxu0 0.0
    %843 = vmatprep.subr.mxu0 0.0
    %844 = vmatpush1.msra.mxu0 0.0
    %845 = vmatprep.subr.mxu0 0.0
    %846 = vmatpush1.msra.mxu0 0.0
    %847 = vmatprep.subr.mxu0 0.0
    %848 = vmatpush1.msra.mxu0 0.0
    %849 = vmatprep.subr.mxu0 0.0
    %850 = vmatpush1.msra.mxu0 0.0
    %851 = vmatprep.subr.mxu0 0.0
    %852 = vmatpush1.msra.mxu0 0.0
    %853 = vmatprep.subr.mxu0 0.0
    %854 = vmatpush1.msra.mxu0 0.0
    %855 = vmatprep.subr.mxu0 0.0
    %856 = vmatpush1.msra.mxu0 0.0
    %857 = vmatprep.subr.mxu0 0.0
    %858 = vmatpush1.msra.mxu0 0.0
    %859 = vmatprep.subr.mxu0 0.0
    %860 = vmatpush1.msra.mxu0 0.0
    %861 = vmatprep.subr.mxu0 0.0
    %862 = vmatpush1.msra.mxu0 0.0
    %863 = vmatprep.subr.mxu0 0.0
    %v864 = vand.u32 %v719, 4294901760
    %v865 = vsub.f32 %v719, %v864
    %v866 = vand.u32 %v865, 4294901760
    %v867 = vsub.f32 %v865, %v866
    %v868 = vand.u32 %v867, 4294901760
    %869 = vmatpush1.msra.mxu0 %v868
    %870 = vmatprep.subr.mxu0 0.0
    %v871 = vand.u32 %v718, 4294901760
    %v872 = vsub.f32 %v718, %v871
    %v873 = vand.u32 %v872, 4294901760
    %v874 = vsub.f32 %v872, %v873
    %v875 = vand.u32 %v874, 4294901760
    %876 = vmatpush1.msra.mxu0 %v875
    %877 = vmatprep.subr.mxu0 0.0
    %878 = vmatpush2.msra.mxu0 0.0
    %879 = vmatprep.subr.mxu0 0.0
    %880 = vmatpush2.msra.mxu0 0.0
    %881 = vmatprep.subr.mxu0 0.0
    %882 = vmatpush2.msra.mxu0 0.0
    %883 = vmatprep.subr.mxu0 0.0
    %884 = vmatpush2.msra.mxu0 0.0
    %885 = vmatprep.subr.mxu0 0.0
    %886 = vmatpush2.msra.mxu0 0.0
    %887 = vmatprep.subr.mxu0 0.0
    %888 = vmatpush2.msra.mxu0 0.0
    %889 = vmatprep.subr.mxu0 0.0
    %890 = vmatpush2.msra.mxu0 0.0
    %891 = vmatprep.subr.mxu0 0.0
    %892 = vmatpush2.msra.mxu0 0.0
    %893 = vmatprep.subr.mxu0 0.0
    %894 = vmatpush2.msra.mxu0 0.0
    %895 = vmatprep.subr.mxu0 0.0
    %896 = vmatpush2.msra.mxu0 0.0
    %897 = vmatprep.subr.mxu0 0.0
    %898 = vmatpush2.msra.mxu0 0.0
    %899 = vmatprep.subr.mxu0 0.0
    %900 = vmatpush2.msra.mxu0 0.0
    %901 = vmatprep.subr.mxu0 0.0
    %902 = vmatpush2.msra.mxu0 0.0
    %903 = vmatprep.subr.mxu0 0.0
    %904 = vmatpush2.msra.mxu0 0.0
    %905 = vmatprep.subr.mxu0 0.0
    %906 = vmatpush2.msra.mxu0 0.0
    %907 = vmatprep.subr.mxu0 0.0
    %908 = vmatpush2.msra.mxu0 0.0
    %909 = vmatprep.mubr.f32.mxu0 0.0
    %v910 = vand.u32 %v743, 4294901760
    %911 = vmatmul.mubr.f32.gmra.mxu0 %v910
    %v912 = vpop.f32.mrf.mxu0
    %v913 = vadd.f32 %v822, %v912
    %v914 = vpop.f32.mrf.mxu0
    %915 = vmatprep.mubr.f32.mxu0 0.0
    %v916 = vand.u32 %v746, 4294901760
    %917 = vmatmul.mubr.f32.gmra.mxu0 %v916
    %v918 = vpop.f32.mrf.mxu0
    %v919 = vadd.f32 %v832, %v918
    %v920 = vpop.f32.mrf.mxu0
    %921 = vdwg.mxu0
    %922 = vmatprep.subr.mxu0 0.0
    %923 = vmatpush1.msra.mxu0 0.0
    %924 = vmatprep.subr.mxu0 0.0
    %925 = vmatpush1.msra.mxu0 0.0
    %926 = vmatprep.subr.mxu0 0.0
    %927 = vmatpush1.msra.mxu0 0.0
    %928 = vmatprep.subr.mxu0 0.0
    %929 = vmatpush1.msra.mxu0 0.0
    %930 = vmatprep.subr.mxu0 0.0
    %931 = vmatpush1.msra.mxu0 0.0
    %932 = vmatprep.subr.mxu0 0.0
    %933 = vmatpush1.msra.mxu0 0.0
    %934 = vmatprep.subr.mxu0 0.0
    %935 = vmatpush1.msra.mxu0 0.0
    %936 = vmatprep.subr.mxu0 0.0
    %937 = vmatpush1.msra.mxu0 0.0
    %938 = vmatprep.subr.mxu0 0.0
    %939 = vmatpush1.msra.mxu0 0.0
    %940 = vmatprep.subr.mxu0 0.0
    %941 = vmatpush1.msra.mxu0 0.0
    %942 = vmatprep.subr.mxu0 0.0
    %943 = vmatpush1.msra.mxu0 0.0
    %944 = vmatprep.subr.mxu0 0.0
    %945 = vmatpush1.msra.mxu0 0.0
    %946 = vmatprep.subr.mxu0 0.0
    %947 = vmatpush1.msra.mxu0 0.0
    %948 = vmatprep.subr.mxu0 0.0
    %949 = vmatpush1.msra.mxu0 0.0
    %950 = vmatprep.subr.mxu0 0.0
    %v951 = vand.u32 %v719, 4294901760
    %v952 = vsub.f32 %v719, %v951
    %953 = vmatpush1.msra.mxu0 %v952
    %954 = vmatprep.subr.mxu0 0.0
    %v955 = vand.u32 %v718, 4294901760
    %v956 = vsub.f32 %v718, %v955
    %957 = vmatpush1.msra.mxu0 %v956
    %958 = vmatprep.subr.mxu0 0.0
    %959 = vmatpush2.msra.mxu0 0.0
    %960 = vmatprep.subr.mxu0 0.0
    %961 = vmatpush2.msra.mxu0 0.0
    %962 = vmatprep.subr.mxu0 0.0
    %963 = vmatpush2.msra.mxu0 0.0
    %964 = vmatprep.subr.mxu0 0.0
    %965 = vmatpush2.msra.mxu0 0.0
    %966 = vmatprep.subr.mxu0 0.0
    %967 = vmatpush2.msra.mxu0 0.0
    %968 = vmatprep.subr.mxu0 0.0
    %969 = vmatpush2.msra.mxu0 0.0
    %970 = vmatprep.subr.mxu0 0.0
    %971 = vmatpush2.msra.mxu0 0.0
    %972 = vmatprep.subr.mxu0 0.0
    %973 = vmatpush2.msra.mxu0 0.0
    %974 = vmatprep.subr.mxu0 0.0
    %975 = vmatpush2.msra.mxu0 0.0
    %976 = vmatprep.subr.mxu0 0.0
    %977 = vmatpush2.msra.mxu0 0.0
    %978 = vmatprep.subr.mxu0 0.0
    %979 = vmatpush2.msra.mxu0 0.0
    %980 = vmatprep.subr.mxu0 0.0
    %981 = vmatpush2.msra.mxu0 0.0
    %982 = vmatprep.subr.mxu0 0.0
    %983 = vmatpush2.msra.mxu0 0.0
    %984 = vmatprep.subr.mxu0 0.0
    %985 = vmatpush2.msra.mxu0 0.0
    %986 = vmatprep.subr.mxu0 0.0
    %987 = vmatpush2.msra.mxu0 0.0
    %988 = vmatprep.subr.mxu0 0.0
    %989 = vmatpush2.msra.mxu0 0.0
    %990 = vmatprep.mubr.f32.mxu0 0.0
    %v991 = vand.u32 %v743, 4294901760
    %v992 = vsub.f32 %v743, %v991
    %993 = vmatmul.mubr.f32.gmra.mxu0 %v992
    %v994 = vpop.f32.mrf.mxu0
    %v995 = vadd.f32 %v913, %v994
    %v996 = vpop.f32.mrf.mxu0
    %997 = vmatprep.mubr.f32.mxu0 0.0
    %v998 = vand.u32 %v746, 4294901760
    %v999 = vsub.f32 %v746, %v998
    %1000 = vmatmul.mubr.f32.gmra.mxu0 %v999
    %v1001 = vpop.f32.mrf.mxu0
    %v1002 = vadd.f32 %v919, %v1001
    %v1003 = vpop.f32.mrf.mxu0
    %1004 = vdwg.mxu0
    %1005 = vmatprep.subr.mxu0 0.0
    %1006 = vmatpush1.msra.mxu0 0.0
    %1007 = vmatprep.subr.mxu0 0.0
    %1008 = vmatpush1.msra.mxu0 0.0
    %1009 = vmatprep.subr.mxu0 0.0
    %1010 = vmatpush1.msra.mxu0 0.0
    %1011 = vmatprep.subr.mxu0 0.0
    %1012 = vmatpush1.msra.mxu0 0.0
    %1013 = vmatprep.subr.mxu0 0.0
    %1014 = vmatpush1.msra.mxu0 0.0
    %1015 = vmatprep.subr.mxu0 0.0
    %1016 = vmatpush1.msra.mxu0 0.0
    %1017 = vmatprep.subr.mxu0 0.0
    %1018 = vmatpush1.msra.mxu0 0.0
    %1019 = vmatprep.subr.mxu0 0.0
    %1020 = vmatpush1.msra.mxu0 0.0
    %1021 = vmatprep.subr.mxu0 0.0
    %1022 = vmatpush1.msra.mxu0 0.0
    %1023 = vmatprep.subr.mxu0 0.0
    %1024 = vmatpush1.msra.mxu0 0.0
    %1025 = vmatprep.subr.mxu0 0.0
    %1026 = vmatpush1.msra.mxu0 0.0
    %1027 = vmatprep.subr.mxu0 0.0
    %1028 = vmatpush1.msra.mxu0 0.0
    %1029 = vmatprep.subr.mxu0 0.0
    %1030 = vmatpush1.msra.mxu0 0.0
    %1031 = vmatprep.subr.mxu0 0.0
    %1032 = vmatpush1.msra.mxu0 0.0
    %1033 = vmatprep.subr.mxu0 0.0
    %v1034 = vand.u32 %v719, 4294901760
    %1035 = vmatpush1.msra.mxu0 %v1034
    %1036 = vmatprep.subr.mxu0 0.0
    %v1037 = vand.u32 %v718, 4294901760
    %1038 = vmatpush1.msra.mxu0 %v1037
    %1039 = vmatprep.subr.mxu0 0.0
    %1040 = vmatpush2.msra.mxu0 0.0
    %1041 = vmatprep.subr.mxu0 0.0
    %1042 = vmatpush2.msra.mxu0 0.0
    %1043 = vmatprep.subr.mxu0 0.0
    %1044 = vmatpush2.msra.mxu0 0.0
    %1045 = vmatprep.subr.mxu0 0.0
    %1046 = vmatpush2.msra.mxu0 0.0
    %1047 = vmatprep.subr.mxu0 0.0
    %1048 = vmatpush2.msra.mxu0 0.0
    %1049 = vmatprep.subr.mxu0 0.0
    %1050 = vmatpush2.msra.mxu0 0.0
    %1051 = vmatprep.subr.mxu0 0.0
    %1052 = vmatpush2.msra.mxu0 0.0
    %1053 = vmatprep.subr.mxu0 0.0
    %1054 = vmatpush2.msra.mxu0 0.0
    %1055 = vmatprep.subr.mxu0 0.0
    %1056 = vmatpush2.msra.mxu0 0.0
    %1057 = vmatprep.subr.mxu0 0.0
    %1058 = vmatpush2.msra.mxu0 0.0
    %1059 = vmatprep.subr.mxu0 0.0
    %1060 = vmatpush2.msra.mxu0 0.0
    %1061 = vmatprep.subr.mxu0 0.0
    %1062 = vmatpush2.msra.mxu0 0.0
    %1063 = vmatprep.subr.mxu0 0.0
    %1064 = vmatpush2.msra.mxu0 0.0
    %1065 = vmatprep.subr.mxu0 0.0
    %1066 = vmatpush2.msra.mxu0 0.0
    %1067 = vmatprep.subr.mxu0 0.0
    %1068 = vmatpush2.msra.mxu0 0.0
    %1069 = vmatprep.subr.mxu0 0.0
    %1070 = vmatpush2.msra.mxu0 0.0
    %1071 = vmatprep.mubr.f32.mxu0 0.0
    %v1072 = vand.u32 %v743, 4294901760
    %v1073 = vsub.f32 %v743, %v1072
    %v1074 = vand.u32 %v1073, 4294901760
    %1075 = vmatmul.mubr.f32.gmra.mxu0 %v1074
    %v1076 = vpop.f32.mrf.mxu0
    %v1077 = vadd.f32 %v995, %v1076
    %v1078 = vpop.f32.mrf.mxu0
    %1079 = vmatprep.mubr.f32.mxu0 0.0
    %v1080 = vand.u32 %v746, 4294901760
    %v1081 = vsub.f32 %v746, %v1080
    %v1082 = vand.u32 %v1081, 4294901760
    %1083 = vmatmul.mubr.f32.gmra.mxu0 %v1082
    %v1084 = vpop.f32.mrf.mxu0
    %v1085 = vadd.f32 %v1002, %v1084
    %v1086 = vpop.f32.mrf.mxu0
    %1087 = vdwg.mxu0
    %1088 = vmatprep.subr.mxu0 0.0
    %1089 = vmatpush1.msra.mxu0 0.0
    %1090 = vmatprep.subr.mxu0 0.0
    %1091 = vmatpush1.msra.mxu0 0.0
    %1092 = vmatprep.subr.mxu0 0.0
    %1093 = vmatpush1.msra.mxu0 0.0
    %1094 = vmatprep.subr.mxu0 0.0
    %1095 = vmatpush1.msra.mxu0 0.0
    %1096 = vmatprep.subr.mxu0 0.0
    %1097 = vmatpush1.msra.mxu0 0.0
    %1098 = vmatprep.subr.mxu0 0.0
    %1099 = vmatpush1.msra.mxu0 0.0
    %1100 = vmatprep.subr.mxu0 0.0
    %1101 = vmatpush1.msra.mxu0 0.0
    %1102 = vmatprep.subr.mxu0 0.0
    %1103 = vmatpush1.msra.mxu0 0.0
    %1104 = vmatprep.subr.mxu0 0.0
    %1105 = vmatpush1.msra.mxu0 0.0
    %1106 = vmatprep.subr.mxu0 0.0
    %1107 = vmatpush1.msra.mxu0 0.0
    %1108 = vmatprep.subr.mxu0 0.0
    %1109 = vmatpush1.msra.mxu0 0.0
    %1110 = vmatprep.subr.mxu0 0.0
    %1111 = vmatpush1.msra.mxu0 0.0
    %1112 = vmatprep.subr.mxu0 0.0
    %1113 = vmatpush1.msra.mxu0 0.0
    %1114 = vmatprep.subr.mxu0 0.0
    %1115 = vmatpush1.msra.mxu0 0.0
    %1116 = vmatprep.subr.mxu0 0.0
    %v1117 = vand.u32 %v719, 4294901760
    %v1118 = vsub.f32 %v719, %v1117
    %v1119 = vand.u32 %v1118, 4294901760
    %1120 = vmatpush1.msra.mxu0 %v1119
    %1121 = vmatprep.subr.mxu0 0.0
    %v1122 = vand.u32 %v718, 4294901760
    %v1123 = vsub.f32 %v718, %v1122
    %v1124 = vand.u32 %v1123, 4294901760
    %1125 = vmatpush1.msra.mxu0 %v1124
    %1126 = vmatprep.subr.mxu0 0.0
    %1127 = vmatpush2.msra.mxu0 0.0
    %1128 = vmatprep.subr.mxu0 0.0
    %1129 = vmatpush2.msra.mxu0 0.0
    %1130 = vmatprep.subr.mxu0 0.0
    %1131 = vmatpush2.msra.mxu0 0.0
    %1132 = vmatprep.subr.mxu0 0.0
    %1133 = vmatpush2.msra.mxu0 0.0
    %1134 = vmatprep.subr.mxu0 0.0
    %1135 = vmatpush2.msra.mxu0 0.0
    %1136 = vmatprep.subr.mxu0 0.0
    %1137 = vmatpush2.msra.mxu0 0.0
    %1138 = vmatprep.subr.mxu0 0.0
    %1139 = vmatpush2.msra.mxu0 0.0
    %1140 = vmatprep.subr.mxu0 0.0
    %1141 = vmatpush2.msra.mxu0 0.0
    %1142 = vmatprep.subr.mxu0 0.0
    %1143 = vmatpush2.msra.mxu0 0.0
    %1144 = vmatprep.subr.mxu0 0.0
    %1145 = vmatpush2.msra.mxu0 0.0
    %1146 = vmatprep.subr.mxu0 0.0
    %1147 = vmatpush2.msra.mxu0 0.0
    %1148 = vmatprep.subr.mxu0 0.0
    %1149 = vmatpush2.msra.mxu0 0.0
    %1150 = vmatprep.subr.mxu0 0.0
    %1151 = vmatpush2.msra.mxu0 0.0
    %1152 = vmatprep.subr.mxu0 0.0
    %1153 = vmatpush2.msra.mxu0 0.0
    %1154 = vmatprep.subr.mxu0 0.0
    %1155 = vmatpush2.msra.mxu0 0.0
    %1156 = vmatprep.subr.mxu0 0.0
    %1157 = vmatpush2.msra.mxu0 0.0
    %1158 = vmatprep.mubr.f32.mxu0 0.0
    %v1159 = vand.u32 %v743, 4294901760
    %1160 = vmatmul.mubr.f32.gmra.mxu0 %v1159
    %v1161 = vpop.f32.mrf.mxu0
    %v1162 = vadd.f32 %v1077, %v1161
    %v1163 = vpop.f32.mrf.mxu0
    %1164 = vmatprep.mubr.f32.mxu0 0.0
    %v1165 = vand.u32 %v746, 4294901760
    %1166 = vmatmul.mubr.f32.gmra.mxu0 %v1165
    %v1167 = vpop.f32.mrf.mxu0
    %v1168 = vadd.f32 %v1085, %v1167
    %v1169 = vpop.f32.mrf.mxu0
    %1170 = vdwg.mxu0
    %1171 = vmatprep.subr.mxu0 0.0
    %1172 = vmatpush1.msra.mxu0 0.0
    %1173 = vmatprep.subr.mxu0 0.0
    %1174 = vmatpush1.msra.mxu0 0.0
    %1175 = vmatprep.subr.mxu0 0.0
    %1176 = vmatpush1.msra.mxu0 0.0
    %1177 = vmatprep.subr.mxu0 0.0
    %1178 = vmatpush1.msra.mxu0 0.0
    %1179 = vmatprep.subr.mxu0 0.0
    %1180 = vmatpush1.msra.mxu0 0.0
    %1181 = vmatprep.subr.mxu0 0.0
    %1182 = vmatpush1.msra.mxu0 0.0
    %1183 = vmatprep.subr.mxu0 0.0
    %1184 = vmatpush1.msra.mxu0 0.0
    %1185 = vmatprep.subr.mxu0 0.0
    %1186 = vmatpush1.msra.mxu0 0.0
    %1187 = vmatprep.subr.mxu0 0.0
    %1188 = vmatpush1.msra.mxu0 0.0
    %1189 = vmatprep.subr.mxu0 0.0
    %1190 = vmatpush1.msra.mxu0 0.0
    %1191 = vmatprep.subr.mxu0 0.0
    %1192 = vmatpush1.msra.mxu0 0.0
    %1193 = vmatprep.subr.mxu0 0.0
    %1194 = vmatpush1.msra.mxu0 0.0
    %1195 = vmatprep.subr.mxu0 0.0
    %1196 = vmatpush1.msra.mxu0 0.0
    %1197 = vmatprep.subr.mxu0 0.0
    %1198 = vmatpush1.msra.mxu0 0.0
    %1199 = vmatprep.subr.mxu0 0.0
    %v1200 = vand.u32 %v719, 4294901760
    %1201 = vmatpush1.msra.mxu0 %v1200
    %1202 = vmatprep.subr.mxu0 0.0
    %v1203 = vand.u32 %v718, 4294901760
    %1204 = vmatpush1.msra.mxu0 %v1203
    %1205 = vmatprep.subr.mxu0 0.0
    %1206 = vmatpush2.msra.mxu0 0.0
    %1207 = vmatprep.subr.mxu0 0.0
    %1208 = vmatpush2.msra.mxu0 0.0
    %1209 = vmatprep.subr.mxu0 0.0
    %1210 = vmatpush2.msra.mxu0 0.0
    %1211 = vmatprep.subr.mxu0 0.0
    %1212 = vmatpush2.msra.mxu0 0.0
    %1213 = vmatprep.subr.mxu0 0.0
    %1214 = vmatpush2.msra.mxu0 0.0
    %1215 = vmatprep.subr.mxu0 0.0
    %1216 = vmatpush2.msra.mxu0 0.0
    %1217 = vmatprep.subr.mxu0 0.0
    %1218 = vmatpush2.msra.mxu0 0.0
    %1219 = vmatprep.subr.mxu0 0.0
    %1220 = vmatpush2.msra.mxu0 0.0
    %1221 = vmatprep.subr.mxu0 0.0
    %1222 = vmatpush2.msra.mxu0 0.0
    %1223 = vmatprep.subr.mxu0 0.0
    %1224 = vmatpush2.msra.mxu0 0.0
    %1225 = vmatprep.subr.mxu0 0.0
    %1226 = vmatpush2.msra.mxu0 0.0
    %1227 = vmatprep.subr.mxu0 0.0
    %1228 = vmatpush2.msra.mxu0 0.0
    %1229 = vmatprep.subr.mxu0 0.0
    %1230 = vmatpush2.msra.mxu0 0.0
    %1231 = vmatprep.subr.mxu0 0.0
    %1232 = vmatpush2.msra.mxu0 0.0
    %1233 = vmatprep.subr.mxu0 0.0
    %1234 = vmatpush2.msra.mxu0 0.0
    %1235 = vmatprep.subr.mxu0 0.0
    %1236 = vmatpush2.msra.mxu0 0.0
    %1237 = vmatprep.mubr.f32.mxu0 0.0
    %v1238 = vand.u32 %v743, 4294901760
    %1239 = vmatmul.mubr.f32.gmra.mxu0 %v1238
    %v1240 = vpop.f32.mrf.mxu0
    %v1241 = vadd.f32 %v1162, %v1240
    %v1242 = vpop.f32.mrf.mxu0
    %1243 = vmatprep.mubr.f32.mxu0 0.0
    %v1244 = vand.u32 %v746, 4294901760
    %1245 = vmatmul.mubr.f32.gmra.mxu0 %v1244
    %v1246 = vpop.f32.mrf.mxu0
    %v1247 = vadd.f32 %v1168, %v1246
    %v1248 = vpop.f32.mrf.mxu0
    %1249 = vdwg.mxu0
    %v1250 = vmax.f32 %v1241, 0.0
    %v1251 = vmax.f32 %v1247, 0.0
    %1252 = vst.msk [vmem:[#allocation2] sm:$0xff] %vm737, %v1250
    %1253 = vst.msk [vmem:[#allocation2 + $0x8] sm:$0xff] %vm737, %v1251
    %v1254 = vld [vmem:[#allocation2] sm:$0xff]
    %v1255 = vld [vmem:[#allocation2 + $0x8] sm:$0xff]
    %v1256 = vld [vmem:[#allocation2 + $0x10] sm:$0xff]
    %v1257 = vld [vmem:[#allocation2 + $0x18] sm:$0xff]
    %v1258 = vld [vmem:[%s7] sm:$0xff]
    %v1259 = vld [vmem:[%s7 + $0x8] sm:$0xff]
    %v1261 = vsel %vm737, %v1254, 0
    %v1264 = vsel %vm737, %v1255, 0
    %v1267 = vsel %vm737, %v1256, 0
    %v1270 = vsel %vm737, %v1257, 0
    %1272 = vmatprep.subr.mxu0 0.0
    %1273 = vmatpush1.msra.mxu0 0.0
    %1274 = vmatprep.subr.mxu0 0.0
    %1275 = vmatpush1.msra.mxu0 0.0
    %1276 = vmatprep.subr.mxu0 0.0
    %1277 = vmatpush1.msra.mxu0 0.0
    %1278 = vmatprep.subr.mxu0 0.0
    %1279 = vmatpush1.msra.mxu0 0.0
    %1280 = vmatprep.subr.mxu0 0.0
    %1281 = vmatpush1.msra.mxu0 0.0
    %1282 = vmatprep.subr.mxu0 0.0
    %1283 = vmatpush1.msra.mxu0 0.0
    %1284 = vmatprep.subr.mxu0 0.0
    %1285 = vmatpush1.msra.mxu0 0.0
    %1286 = vmatprep.subr.mxu0 0.0
    %1287 = vmatpush1.msra.mxu0 0.0
    %1288 = vmatprep.subr.mxu0 0.0
    %1289 = vmatpush1.msra.mxu0 0.0
    %1290 = vmatprep.subr.mxu0 0.0
    %1291 = vmatpush1.msra.mxu0 0.0
    %1292 = vmatprep.subr.mxu0 0.0
    %1293 = vmatpush1.msra.mxu0 0.0
    %1294 = vmatprep.subr.mxu0 0.0
    %1295 = vmatpush1.msra.mxu0 0.0
    %1296 = vmatprep.subr.mxu0 0.0
    %1297 = vmatpush1.msra.mxu0 0.0
    %1298 = vmatprep.subr.mxu0 0.0
    %1299 = vmatpush1.msra.mxu0 0.0
    %1300 = vmatprep.subr.mxu0 0.0
    %v1301 = vand.u32 %v1259, 4294901760
    %1302 = vmatpush1.msra.mxu0 %v1301
    %1303 = vmatprep.subr.mxu0 0.0
    %v1304 = vand.u32 %v1258, 4294901760
    %1305 = vmatpush1.msra.mxu0 %v1304
    %1306 = vmatprep.subr.mxu0 0.0
    %1307 = vmatpush2.msra.mxu0 0.0
    %1308 = vmatprep.subr.mxu0 0.0
    %1309 = vmatpush2.msra.mxu0 0.0
    %1310 = vmatprep.subr.mxu0 0.0
    %1311 = vmatpush2.msra.mxu0 0.0
    %1312 = vmatprep.subr.mxu0 0.0
    %1313 = vmatpush2.msra.mxu0 0.0
    %1314 = vmatprep.subr.mxu0 0.0
    %1315 = vmatpush2.msra.mxu0 0.0
    %1316 = vmatprep.subr.mxu0 0.0
    %1317 = vmatpush2.msra.mxu0 0.0
    %1318 = vmatprep.subr.mxu0 0.0
    %1319 = vmatpush2.msra.mxu0 0.0
    %1320 = vmatprep.subr.mxu0 0.0
    %1321 = vmatpush2.msra.mxu0 0.0
    %1322 = vmatprep.subr.mxu0 0.0
    %1323 = vmatpush2.msra.mxu0 0.0
    %1324 = vmatprep.subr.mxu0 0.0
    %1325 = vmatpush2.msra.mxu0 0.0
    %1326 = vmatprep.subr.mxu0 0.0
    %1327 = vmatpush2.msra.mxu0 0.0
    %1328 = vmatprep.subr.mxu0 0.0
    %1329 = vmatpush2.msra.mxu0 0.0
    %1330 = vmatprep.subr.mxu0 0.0
    %1331 = vmatpush2.msra.mxu0 0.0
    %1332 = vmatprep.subr.mxu0 0.0
    %1333 = vmatpush2.msra.mxu0 0.0
    %1334 = vmatprep.subr.mxu0 0.0
    %1335 = vmatpush2.msra.mxu0 0.0
    %1336 = vmatprep.subr.mxu0 0.0
    %1337 = vmatpush2.msra.mxu0 0.0
    %1338 = vmatprep.mubr.f32.mxu0 0.0
    %v1339 = vand.u32 %v1261, 4294901760
    %v1340 = vsub.f32 %v1261, %v1339
    %v1341 = vand.u32 %v1340, 4294901760
    %v1342 = vsub.f32 %v1340, %v1341
    %v1343 = vand.u32 %v1342, 4294901760
    %1344 = vmatmul.mubr.f32.gmra.mxu0 %v1343
    %v1345 = vpop.f32.mrf.mxu0
    %v1346 = vadd.f32 0.0, %v1345
    %v1347 = vpop.f32.mrf.mxu0
    %1348 = vmatprep.mubr.f32.mxu0 0.0
    %v1349 = vand.u32 %v1264, 4294901760
    %v1350 = vsub.f32 %v1264, %v1349
    %v1351 = vand.u32 %v1350, 4294901760
    %v1352 = vsub.f32 %v1350, %v1351
    %v1353 = vand.u32 %v1352, 4294901760
    %1354 = vmatmul.mubr.f32.gmra.mxu0 %v1353
    %v1355 = vpop.f32.mrf.mxu0
    %v1356 = vadd.f32 0.0, %v1355
    %v1357 = vpop.f32.mrf.mxu0
    %1358 = vmatprep.mubr.f32.mxu0 0.0
    %v1359 = vand.u32 %v1267, 4294901760
    %v1360 = vsub.f32 %v1267, %v1359
    %v1361 = vand.u32 %v1360, 4294901760
    %v1362 = vsub.f32 %v1360, %v1361
    %v1363 = vand.u32 %v1362, 4294901760
    %1364 = vmatmul.mubr.f32.gmra.mxu0 %v1363
    %v1365 = vpop.f32.mrf.mxu0
    %v1366 = vadd.f32 0.0, %v1365
    %v1367 = vpop.f32.mrf.mxu0
    %1368 = vmatprep.mubr.f32.mxu0 0.0
    %v1369 = vand.u32 %v1270, 4294901760
    %v1370 = vsub.f32 %v1270, %v1369
    %v1371 = vand.u32 %v1370, 4294901760
    %v1372 = vsub.f32 %v1370, %v1371
    %v1373 = vand.u32 %v1372, 4294901760
    %1374 = vmatmul.mubr.f32.gmra.mxu0 %v1373
    %v1375 = vpop.f32.mrf.mxu0
    %v1376 = vadd.f32 0.0, %v1375
    %v1377 = vpop.f32.mrf.mxu0
    %1378 = vdwg.mxu0
    %1379 = vmatprep.subr.mxu0 0.0
    %1380 = vmatpush1.msra.mxu0 0.0
    %1381 = vmatprep.subr.mxu0 0.0
    %1382 = vmatpush1.msra.mxu0 0.0
    %1383 = vmatprep.subr.mxu0 0.0
    %1384 = vmatpush1.msra.mxu0 0.0
    %1385 = vmatprep.subr.mxu0 0.0
    %1386 = vmatpush1.msra.mxu0 0.0
    %1387 = vmatprep.subr.mxu0 0.0
    %1388 = vmatpush1.msra.mxu0 0.0
    %1389 = vmatprep.subr.mxu0 0.0
    %1390 = vmatpush1.msra.mxu0 0.0
    %1391 = vmatprep.subr.mxu0 0.0
    %1392 = vmatpush1.msra.mxu0 0.0
    %1393 = vmatprep.subr.mxu0 0.0
    %1394 = vmatpush1.msra.mxu0 0.0
    %1395 = vmatprep.subr.mxu0 0.0
    %1396 = vmatpush1.msra.mxu0 0.0
    %1397 = vmatprep.subr.mxu0 0.0
    %1398 = vmatpush1.msra.mxu0 0.0
    %1399 = vmatprep.subr.mxu0 0.0
    %1400 = vmatpush1.msra.mxu0 0.0
    %1401 = vmatprep.subr.mxu0 0.0
    %1402 = vmatpush1.msra.mxu0 0.0
    %1403 = vmatprep.subr.mxu0 0.0
    %1404 = vmatpush1.msra.mxu0 0.0
    %1405 = vmatprep.subr.mxu0 0.0
    %1406 = vmatpush1.msra.mxu0 0.0
    %1407 = vmatprep.subr.mxu0 0.0
    %v1408 = vand.u32 %v1259, 4294901760
    %v1409 = vsub.f32 %v1259, %v1408
    %v1410 = vand.u32 %v1409, 4294901760
    %v1411 = vsub.f32 %v1409, %v1410
    %v1412 = vand.u32 %v1411, 4294901760
    %1413 = vmatpush1.msra.mxu0 %v1412
    %1414 = vmatprep.subr.mxu0 0.0
    %v1415 = vand.u32 %v1258, 4294901760
    %v1416 = vsub.f32 %v1258, %v1415
    %v1417 = vand.u32 %v1416, 4294901760
    %v1418 = vsub.f32 %v1416, %v1417
    %v1419 = vand.u32 %v1418, 4294901760
    %1420 = vmatpush1.msra.mxu0 %v1419
    %1421 = vmatprep.subr.mxu0 0.0
    %1422 = vmatpush2.msra.mxu0 0.0
    %1423 = vmatprep.subr.mxu0 0.0
    %1424 = vmatpush2.msra.mxu0 0.0
    %1425 = vmatprep.subr.mxu0 0.0
    %1426 = vmatpush2.msra.mxu0 0.0
    %1427 = vmatprep.subr.mxu0 0.0
    %1428 = vmatpush2.msra.mxu0 0.0
    %1429 = vmatprep.subr.mxu0 0.0
    %1430 = vmatpush2.msra.mxu0 0.0
    %1431 = vmatprep.subr.mxu0 0.0
    %1432 = vmatpush2.msra.mxu0 0.0
    %1433 = vmatprep.subr.mxu0 0.0
    %1434 = vmatpush2.msra.mxu0 0.0
    %1435 = vmatprep.subr.mxu0 0.0
    %1436 = vmatpush2.msra.mxu0 0.0
    %1437 = vmatprep.subr.mxu0 0.0
    %1438 = vmatpush2.msra.mxu0 0.0
    %1439 = vmatprep.subr.mxu0 0.0
    %1440 = vmatpush2.msra.mxu0 0.0
    %1441 = vmatprep.subr.mxu0 0.0
    %1442 = vmatpush2.msra.mxu0 0.0
    %1443 = vmatprep.subr.mxu0 0.0
    %1444 = vmatpush2.msra.mxu0 0.0
    %1445 = vmatprep.subr.mxu0 0.0
    %1446 = vmatpush2.msra.mxu0 0.0
    %1447 = vmatprep.subr.mxu0 0.0
    %1448 = vmatpush2.msra.mxu0 0.0
    %1449 = vmatprep.subr.mxu0 0.0
    %1450 = vmatpush2.msra.mxu0 0.0
    %1451 = vmatprep.subr.mxu0 0.0
    %1452 = vmatpush2.msra.mxu0 0.0
    %1453 = vmatprep.mubr.f32.mxu0 0.0
    %v1454 = vand.u32 %v1261, 4294901760
    %1455 = vmatmul.mubr.f32.gmra.mxu0 %v1454
    %v1456 = vpop.f32.mrf.mxu0
    %v1457 = vadd.f32 %v1346, %v1456
    %v1458 = vpop.f32.mrf.mxu0
    %1459 = vmatprep.mubr.f32.mxu0 0.0
    %v1460 = vand.u32 %v1264, 4294901760
    %1461 = vmatmul.mubr.f32.gmra.mxu0 %v1460
    %v1462 = vpop.f32.mrf.mxu0
    %v1463 = vadd.f32 %v1356, %v1462
    %v1464 = vpop.f32.mrf.mxu0
    %1465 = vmatprep.mubr.f32.mxu0 0.0
    %v1466 = vand.u32 %v1267, 4294901760
    %1467 = vmatmul.mubr.f32.gmra.mxu0 %v1466
    %v1468 = vpop.f32.mrf.mxu0
    %v1469 = vadd.f32 %v1366, %v1468
    %v1470 = vpop.f32.mrf.mxu0
    %1471 = vmatprep.mubr.f32.mxu0 0.0
    %v1472 = vand.u32 %v1270, 4294901760
    %1473 = vmatmul.mubr.f32.gmra.mxu0 %v1472
    %v1474 = vpop.f32.mrf.mxu0
    %v1475 = vadd.f32 %v1376, %v1474
    %v1476 = vpop.f32.mrf.mxu0
    %1477 = vdwg.mxu0
    %1478 = vmatprep.subr.mxu0 0.0
    %1479 = vmatpush1.msra.mxu0 0.0
    %1480 = vmatprep.subr.mxu0 0.0
    %1481 = vmatpush1.msra.mxu0 0.0
    %1482 = vmatprep.subr.mxu0 0.0
    %1483 = vmatpush1.msra.mxu0 0.0
    %1484 = vmatprep.subr.mxu0 0.0
    %1485 = vmatpush1.msra.mxu0 0.0
    %1486 = vmatprep.subr.mxu0 0.0
    %1487 = vmatpush1.msra.mxu0 0.0
    %1488 = vmatprep.subr.mxu0 0.0
    %1489 = vmatpush1.msra.mxu0 0.0
    %1490 = vmatprep.subr.mxu0 0.0
    %1491 = vmatpush1.msra.mxu0 0.0
    %1492 = vmatprep.subr.mxu0 0.0
    %1493 = vmatpush1.msra.mxu0 0.0
    %1494 = vmatprep.subr.mxu0 0.0
    %1495 = vmatpush1.msra.mxu0 0.0
    %1496 = vmatprep.subr.mxu0 0.0
    %1497 = vmatpush1.msra.mxu0 0.0
    %1498 = vmatprep.subr.mxu0 0.0
    %1499 = vmatpush1.msra.mxu0 0.0
    %1500 = vmatprep.subr.mxu0 0.0
    %1501 = vmatpush1.msra.mxu0 0.0
    %1502 = vmatprep.subr.mxu0 0.0
    %1503 = vmatpush1.msra.mxu0 0.0
    %1504 = vmatprep.subr.mxu0 0.0
    %1505 = vmatpush1.msra.mxu0 0.0
    %1506 = vmatprep.subr.mxu0 0.0
    %v1507 = vand.u32 %v1259, 4294901760
    %v1508 = vsub.f32 %v1259, %v1507
    %1509 = vmatpush1.msra.mxu0 %v1508
    %1510 = vmatprep.subr.mxu0 0.0
    %v1511 = vand.u32 %v1258, 4294901760
    %v1512 = vsub.f32 %v1258, %v1511
    %1513 = vmatpush1.msra.mxu0 %v1512
    %1514 = vmatprep.subr.mxu0 0.0
    %1515 = vmatpush2.msra.mxu0 0.0
    %1516 = vmatprep.subr.mxu0 0.0
    %1517 = vmatpush2.msra.mxu0 0.0
    %1518 = vmatprep.subr.mxu0 0.0
    %1519 = vmatpush2.msra.mxu0 0.0
    %1520 = vmatprep.subr.mxu0 0.0
    %1521 = vmatpush2.msra.mxu0 0.0
    %1522 = vmatprep.subr.mxu0 0.0
    %1523 = vmatpush2.msra.mxu0 0.0
    %1524 = vmatprep.subr.mxu0 0.0
    %1525 = vmatpush2.msra.mxu0 0.0
    %1526 = vmatprep.subr.mxu0 0.0
    %1527 = vmatpush2.msra.mxu0 0.0
    %1528 = vmatprep.subr.mxu0 0.0
    %1529 = vmatpush2.msra.mxu0 0.0
    %1530 = vmatprep.subr.mxu0 0.0
    %1531 = vmatpush2.msra.mxu0 0.0
    %1532 = vmatprep.subr.mxu0 0.0
    %1533 = vmatpush2.msra.mxu0 0.0
    %1534 = vmatprep.subr.mxu0 0.0
    %1535 = vmatpush2.msra.mxu0 0.0
    %1536 = vmatprep.subr.mxu0 0.0
    %1537 = vmatpush2.msra.mxu0 0.0
    %1538 = vmatprep.subr.mxu0 0.0
    %1539 = vmatpush2.msra.mxu0 0.0
    %1540 = vmatprep.subr.mxu0 0.0
    %1541 = vmatpush2.msra.mxu0 0.0
    %1542 = vmatprep.subr.mxu0 0.0
    %1543 = vmatpush2.msra.mxu0 0.0
    %1544 = vmatprep.subr.mxu0 0.0
    %1545 = vmatpush2.msra.mxu0 0.0
    %1546 = vmatprep.mubr.f32.mxu0 0.0
    %v1547 = vand.u32 %v1261, 4294901760
    %v1548 = vsub.f32 %v1261, %v1547
    %1549 = vmatmul.mubr.f32.gmra.mxu0 %v1548
    %v1550 = vpop.f32.mrf.mxu0
    %v1551 = vadd.f32 %v1457, %v1550
    %v1552 = vpop.f32.mrf.mxu0
    %1553 = vmatprep.mubr.f32.mxu0 0.0
    %v1554 = vand.u32 %v1264, 4294901760
    %v1555 = vsub.f32 %v1264, %v1554
    %1556 = vmatmul.mubr.f32.gmra.mxu0 %v1555
    %v1557 = vpop.f32.mrf.mxu0
    %v1558 = vadd.f32 %v1463, %v1557
    %v1559 = vpop.f32.mrf.mxu0
    %1560 = vmatprep.mubr.f32.mxu0 0.0
    %v1561 = vand.u32 %v1267, 4294901760
    %v1562 = vsub.f32 %v1267, %v1561
    %1563 = vmatmul.mubr.f32.gmra.mxu0 %v1562
    %v1564 = vpop.f32.mrf.mxu0
    %v1565 = vadd.f32 %v1469, %v1564
    %v1566 = vpop.f32.mrf.mxu0
    %1567 = vmatprep.mubr.f32.mxu0 0.0
    %v1568 = vand.u32 %v1270, 4294901760
    %v1569 = vsub.f32 %v1270, %v1568
    %1570 = vmatmul.mubr.f32.gmra.mxu0 %v1569
    %v1571 = vpop.f32.mrf.mxu0
    %v1572 = vadd.f32 %v1475, %v1571
    %v1573 = vpop.f32.mrf.mxu0
    %1574 = vdwg.mxu0
    %1575 = vmatprep.subr.mxu0 0.0
    %1576 = vmatpush1.msra.mxu0 0.0
    %1577 = vmatprep.subr.mxu0 0.0
    %1578 = vmatpush1.msra.mxu0 0.0
    %1579 = vmatprep.subr.mxu0 0.0
    %1580 = vmatpush1.msra.mxu0 0.0
    %1581 = vmatprep.subr.mxu0 0.0
    %1582 = vmatpush1.msra.mxu0 0.0
    %1583 = vmatprep.subr.mxu0 0.0
    %1584 = vmatpush1.msra.mxu0 0.0
    %1585 = vmatprep.subr.mxu0 0.0
    %1586 = vmatpush1.msra.mxu0 0.0
    %1587 = vmatprep.subr.mxu0 0.0
    %1588 = vmatpush1.msra.mxu0 0.0
    %1589 = vmatprep.subr.mxu0 0.0
    %1590 = vmatpush1.msra.mxu0 0.0
    %1591 = vmatprep.subr.mxu0 0.0
    %1592 = vmatpush1.msra.mxu0 0.0
    %1593 = vmatprep.subr.mxu0 0.0
    %1594 = vmatpush1.msra.mxu0 0.0
    %1595 = vmatprep.subr.mxu0 0.0
    %1596 = vmatpush1.msra.mxu0 0.0
    %1597 = vmatprep.subr.mxu0 0.0
    %1598 = vmatpush1.msra.mxu0 0.0
    %1599 = vmatprep.subr.mxu0 0.0
    %1600 = vmatpush1.msra.mxu0 0.0
    %1601 = vmatprep.subr.mxu0 0.0
    %1602 = vmatpush1.msra.mxu0 0.0
    %1603 = vmatprep.subr.mxu0 0.0
    %v1604 = vand.u32 %v1259, 4294901760
    %1605 = vmatpush1.msra.mxu0 %v1604
    %1606 = vmatprep.subr.mxu0 0.0
    %v1607 = vand.u32 %v1258, 4294901760
    %1608 = vmatpush1.msra.mxu0 %v1607
    %1609 = vmatprep.subr.mxu0 0.0
    %1610 = vmatpush2.msra.mxu0 0.0
    %1611 = vmatprep.subr.mxu0 0.0
    %1612 = vmatpush2.msra.mxu0 0.0
    %1613 = vmatprep.subr.mxu0 0.0
    %1614 = vmatpush2.msra.mxu0 0.0
    %1615 = vmatprep.subr.mxu0 0.0
    %1616 = vmatpush2.msra.mxu0 0.0
    %1617 = vmatprep.subr.mxu0 0.0
    %1618 = vmatpush2.msra.mxu0 0.0
    %1619 = vmatprep.subr.mxu0 0.0
    %1620 = vmatpush2.msra.mxu0 0.0
    %1621 = vmatprep.subr.mxu0 0.0
    %1622 = vmatpush2.msra.mxu0 0.0
    %1623 = vmatprep.subr.mxu0 0.0
    %1624 = vmatpush2.msra.mxu0 0.0
    %1625 = vmatprep.subr.mxu0 0.0
    %1626 = vmatpush2.msra.mxu0 0.0
    %1627 = vmatprep.subr.mxu0 0.0
    %1628 = vmatpush2.msra.mxu0 0.0
    %1629 = vmatprep.subr.mxu0 0.0
    %1630 = vmatpush2.msra.mxu0 0.0
    %1631 = vmatprep.subr.mxu0 0.0
    %1632 = vmatpush2.msra.mxu0 0.0
    %1633 = vmatprep.subr.mxu0 0.0
    %1634 = vmatpush2.msra.mxu0 0.0
    %1635 = vmatprep.subr.mxu0 0.0
    %1636 = vmatpush2.msra.mxu0 0.0
    %1637 = vmatprep.subr.mxu0 0.0
    %1638 = vmatpush2.msra.mxu0 0.0
    %1639 = vmatprep.subr.mxu0 0.0
    %1640 = vmatpush2.msra.mxu0 0.0
    %1641 = vmatprep.mubr.f32.mxu0 0.0
    %v1642 = vand.u32 %v1261, 4294901760
    %v1643 = vsub.f32 %v1261, %v1642
    %v1644 = vand.u32 %v1643, 4294901760
    %1645 = vmatmul.mubr.f32.gmra.mxu0 %v1644
    %v1646 = vpop.f32.mrf.mxu0
    %v1647 = vadd.f32 %v1551, %v1646
    %v1648 = vpop.f32.mrf.mxu0
    %1649 = vmatprep.mubr.f32.mxu0 0.0
    %v1650 = vand.u32 %v1264, 4294901760
    %v1651 = vsub.f32 %v1264, %v1650
    %v1652 = vand.u32 %v1651, 4294901760
    %1653 = vmatmul.mubr.f32.gmra.mxu0 %v1652
    %v1654 = vpop.f32.mrf.mxu0
    %v1655 = vadd.f32 %v1558, %v1654
    %v1656 = vpop.f32.mrf.mxu0
    %1657 = vmatprep.mubr.f32.mxu0 0.0
    %v1658 = vand.u32 %v1267, 4294901760
    %v1659 = vsub.f32 %v1267, %v1658
    %v1660 = vand.u32 %v1659, 4294901760
    %1661 = vmatmul.mubr.f32.gmra.mxu0 %v1660
    %v1662 = vpop.f32.mrf.mxu0
    %v1663 = vadd.f32 %v1565, %v1662
    %v1664 = vpop.f32.mrf.mxu0
    %1665 = vmatprep.mubr.f32.mxu0 0.0
    %v1666 = vand.u32 %v1270, 4294901760
    %v1667 = vsub.f32 %v1270, %v1666
    %v1668 = vand.u32 %v1667, 4294901760
    %1669 = vmatmul.mubr.f32.gmra.mxu0 %v1668
    %v1670 = vpop.f32.mrf.mxu0
    %v1671 = vadd.f32 %v1572, %v1670
    %v1672 = vpop.f32.mrf.mxu0
    %1673 = vdwg.mxu0
    %1674 = vmatprep.subr.mxu0 0.0
    %1675 = vmatpush1.msra.mxu0 0.0
    %1676 = vmatprep.subr.mxu0 0.0
    %1677 = vmatpush1.msra.mxu0 0.0
    %1678 = vmatprep.subr.mxu0 0.0
    %1679 = vmatpush1.msra.mxu0 0.0
    %1680 = vmatprep.subr.mxu0 0.0
    %1681 = vmatpush1.msra.mxu0 0.0
    %1682 = vmatprep.subr.mxu0 0.0
    %1683 = vmatpush1.msra.mxu0 0.0
    %1684 = vmatprep.subr.mxu0 0.0
    %1685 = vmatpush1.msra.mxu0 0.0
    %1686 = vmatprep.subr.mxu0 0.0
    %1687 = vmatpush1.msra.mxu0 0.0
    %1688 = vmatprep.subr.mxu0 0.0
    %1689 = vmatpush1.msra.mxu0 0.0
    %1690 = vmatprep.subr.mxu0 0.0
    %1691 = vmatpush1.msra.mxu0 0.0
    %1692 = vmatprep.subr.mxu0 0.0
    %1693 = vmatpush1.msra.mxu0 0.0
    %1694 = vmatprep.subr.mxu0 0.0
    %1695 = vmatpush1.msra.mxu0 0.0
    %1696 = vmatprep.subr.mxu0 0.0
    %1697 = vmatpush1.msra.mxu0 0.0
    %1698 = vmatprep.subr.mxu0 0.0
    %1699 = vmatpush1.msra.mxu0 0.0
    %1700 = vmatprep.subr.mxu0 0.0
    %1701 = vmatpush1.msra.mxu0 0.0
    %1702 = vmatprep.subr.mxu0 0.0
    %v1703 = vand.u32 %v1259, 4294901760
    %v1704 = vsub.f32 %v1259, %v1703
    %v1705 = vand.u32 %v1704, 4294901760
    %1706 = vmatpush1.msra.mxu0 %v1705
    %1707 = vmatprep.subr.mxu0 0.0
    %v1708 = vand.u32 %v1258, 4294901760
    %v1709 = vsub.f32 %v1258, %v1708
    %v1710 = vand.u32 %v1709, 4294901760
    %1711 = vmatpush1.msra.mxu0 %v1710
    %1712 = vmatprep.subr.mxu0 0.0
    %1713 = vmatpush2.msra.mxu0 0.0
    %1714 = vmatprep.subr.mxu0 0.0
    %1715 = vmatpush2.msra.mxu0 0.0
    %1716 = vmatprep.subr.mxu0 0.0
    %1717 = vmatpush2.msra.mxu0 0.0
    %1718 = vmatprep.subr.mxu0 0.0
    %1719 = vmatpush2.msra.mxu0 0.0
    %1720 = vmatprep.subr.mxu0 0.0
    %1721 = vmatpush2.msra.mxu0 0.0
    %1722 = vmatprep.subr.mxu0 0.0
    %1723 = vmatpush2.msra.mxu0 0.0
    %1724 = vmatprep.subr.mxu0 0.0
    %1725 = vmatpush2.msra.mxu0 0.0
    %1726 = vmatprep.subr.mxu0 0.0
    %1727 = vmatpush2.msra.mxu0 0.0
    %1728 = vmatprep.subr.mxu0 0.0
    %1729 = vmatpush2.msra.mxu0 0.0
    %1730 = vmatprep.subr.mxu0 0.0
    %1731 = vmatpush2.msra.mxu0 0.0
    %1732 = vmatprep.subr.mxu0 0.0
    %1733 = vmatpush2.msra.mxu0 0.0
    %1734 = vmatprep.subr.mxu0 0.0
    %1735 = vmatpush2.msra.mxu0 0.0
    %1736 = vmatprep.subr.mxu0 0.0
    %1737 = vmatpush2.msra.mxu0 0.0
    %1738 = vmatprep.subr.mxu0 0.0
    %1739 = vmatpush2.msra.mxu0 0.0
    %1740 = vmatprep.subr.mxu0 0.0
    %1741 = vmatpush2.msra.mxu0 0.0
    %1742 = vmatprep.subr.mxu0 0.0
    %1743 = vmatpush2.msra.mxu0 0.0
    %1744 = vmatprep.mubr.f32.mxu0 0.0
    %v1745 = vand.u32 %v1261, 4294901760
    %1746 = vmatmul.mubr.f32.gmra.mxu0 %v1745
    %v1747 = vpop.f32.mrf.mxu0
    %v1748 = vadd.f32 %v1647, %v1747
    %v1749 = vpop.f32.mrf.mxu0
    %1750 = vmatprep.mubr.f32.mxu0 0.0
    %v1751 = vand.u32 %v1264, 4294901760
    %1752 = vmatmul.mubr.f32.gmra.mxu0 %v1751
    %v1753 = vpop.f32.mrf.mxu0
    %v1754 = vadd.f32 %v1655, %v1753
    %v1755 = vpop.f32.mrf.mxu0
    %1756 = vmatprep.mubr.f32.mxu0 0.0
    %v1757 = vand.u32 %v1267, 4294901760
    %1758 = vmatmul.mubr.f32.gmra.mxu0 %v1757
    %v1759 = vpop.f32.mrf.mxu0
    %v1760 = vadd.f32 %v1663, %v1759
    %v1761 = vpop.f32.mrf.mxu0
    %1762 = vmatprep.mubr.f32.mxu0 0.0
    %v1763 = vand.u32 %v1270, 4294901760
    %1764 = vmatmul.mubr.f32.gmra.mxu0 %v1763
    %v1765 = vpop.f32.mrf.mxu0
    %v1766 = vadd.f32 %v1671, %v1765
    %v1767 = vpop.f32.mrf.mxu0
    %1768 = vdwg.mxu0
    %1769 = vmatprep.subr.mxu0 0.0
    %1770 = vmatpush1.msra.mxu0 0.0
    %1771 = vmatprep.subr.mxu0 0.0
    %1772 = vmatpush1.msra.mxu0 0.0
    %1773 = vmatprep.subr.mxu0 0.0
    %1774 = vmatpush1.msra.mxu0 0.0
    %1775 = vmatprep.subr.mxu0 0.0
    %1776 = vmatpush1.msra.mxu0 0.0
    %1777 = vmatprep.subr.mxu0 0.0
    %1778 = vmatpush1.msra.mxu0 0.0
    %1779 = vmatprep.subr.mxu0 0.0
    %1780 = vmatpush1.msra.mxu0 0.0
    %1781 = vmatprep.subr.mxu0 0.0
    %1782 = vmatpush1.msra.mxu0 0.0
    %1783 = vmatprep.subr.mxu0 0.0
    %1784 = vmatpush1.msra.mxu0 0.0
    %1785 = vmatprep.subr.mxu0 0.0
    %1786 = vmatpush1.msra.mxu0 0.0
    %1787 = vmatprep.subr.mxu0 0.0
    %1788 = vmatpush1.msra.mxu0 0.0
    %1789 = vmatprep.subr.mxu0 0.0
    %1790 = vmatpush1.msra.mxu0 0.0
    %1791 = vmatprep.subr.mxu0 0.0
    %1792 = vmatpush1.msra.mxu0 0.0
    %1793 = vmatprep.subr.mxu0 0.0
    %1794 = vmatpush1.msra.mxu0 0.0
    %1795 = vmatprep.subr.mxu0 0.0
    %1796 = vmatpush1.msra.mxu0 0.0
    %1797 = vmatprep.subr.mxu0 0.0
    %v1798 = vand.u32 %v1259, 4294901760
    %1799 = vmatpush1.msra.mxu0 %v1798
    %1800 = vmatprep.subr.mxu0 0.0
    %v1801 = vand.u32 %v1258, 4294901760
    %1802 = vmatpush1.msra.mxu0 %v1801
    %1803 = vmatprep.subr.mxu0 0.0
    %1804 = vmatpush2.msra.mxu0 0.0
    %1805 = vmatprep.subr.mxu0 0.0
    %1806 = vmatpush2.msra.mxu0 0.0
    %1807 = vmatprep.subr.mxu0 0.0
    %1808 = vmatpush2.msra.mxu0 0.0
    %1809 = vmatprep.subr.mxu0 0.0
    %1810 = vmatpush2.msra.mxu0 0.0
    %1811 = vmatprep.subr.mxu0 0.0
    %1812 = vmatpush2.msra.mxu0 0.0
    %1813 = vmatprep.subr.mxu0 0.0
    %1814 = vmatpush2.msra.mxu0 0.0
    %1815 = vmatprep.subr.mxu0 0.0
    %1816 = vmatpush2.msra.mxu0 0.0
    %1817 = vmatprep.subr.mxu0 0.0
    %1818 = vmatpush2.msra.mxu0 0.0
    %1819 = vmatprep.subr.mxu0 0.0
    %1820 = vmatpush2.msra.mxu0 0.0
    %1821 = vmatprep.subr.mxu0 0.0
    %1822 = vmatpush2.msra.mxu0 0.0
    %1823 = vmatprep.subr.mxu0 0.0
    %1824 = vmatpush2.msra.mxu0 0.0
    %1825 = vmatprep.subr.mxu0 0.0
    %1826 = vmatpush2.msra.mxu0 0.0
    %1827 = vmatprep.subr.mxu0 0.0
    %1828 = vmatpush2.msra.mxu0 0.0
    %1829 = vmatprep.subr.mxu0 0.0
    %1830 = vmatpush2.msra.mxu0 0.0
    %1831 = vmatprep.subr.mxu0 0.0
    %1832 = vmatpush2.msra.mxu0 0.0
    %1833 = vmatprep.subr.mxu0 0.0
    %1834 = vmatpush2.msra.mxu0 0.0
    %1835 = vmatprep.mubr.f32.mxu0 0.0
    %v1836 = vand.u32 %v1261, 4294901760
    %1837 = vmatmul.mubr.f32.gmra.mxu0 %v1836
    %v1838 = vpop.f32.mrf.mxu0
    %v1839 = vadd.f32 %v1748, %v1838
    %v1840 = vpop.f32.mrf.mxu0
    %1841 = vmatprep.mubr.f32.mxu0 0.0
    %v1842 = vand.u32 %v1264, 4294901760
    %1843 = vmatmul.mubr.f32.gmra.mxu0 %v1842
    %v1844 = vpop.f32.mrf.mxu0
    %v1845 = vadd.f32 %v1754, %v1844
    %v1846 = vpop.f32.mrf.mxu0
    %1847 = vmatprep.mubr.f32.mxu0 0.0
    %v1848 = vand.u32 %v1267, 4294901760
    %1849 = vmatmul.mubr.f32.gmra.mxu0 %v1848
    %v1850 = vpop.f32.mrf.mxu0
    %v1851 = vadd.f32 %v1760, %v1850
    %v1852 = vpop.f32.mrf.mxu0
    %1853 = vmatprep.mubr.f32.mxu0 0.0
    %v1854 = vand.u32 %v1270, 4294901760
    %1855 = vmatmul.mubr.f32.gmra.mxu0 %v1854
    %v1856 = vpop.f32.mrf.mxu0
    %v1857 = vadd.f32 %v1766, %v1856
    %v1858 = vpop.f32.mrf.mxu0
    %1859 = vdwg.mxu0
    %v1860 = vld [vmem:[%s8] sm:$0x1]
    %v1862 = vlaneseq
    %v1863 = vshrl.u32 %v1862, 7
    %v1864 = vsub.s32 0, %v1863
    %v1865 = vrot.slane %v1860, %v1864
    %v1867 = vadd.f32 %v1839, %v1865
    %v1868 = vadd.f32 %v1845, %v1865
    %v1869 = vadd.f32 %v1851, %v1865
    %v1870 = vadd.f32 %v1857, %v1865
    %v1871 = vmax.f32 %v1867, 0.0
    %v1872 = vmax.f32 %v1868, 0.0
    %v1873 = vmax.f32 %v1869, 0.0
    %v1874 = vmax.f32 %v1870, 0.0
    %vm1875 = vcmask 261120
    %1876 = vst.msk [vmem:[#allocation3] sm:$0xff] %vm1875, %v1871
    %1877 = vst.msk [vmem:[#allocation3 + $0x8] sm:$0xff] %vm1875, %v1872
    %1878 = vst.msk [vmem:[#allocation3 + $0x10] sm:$0xff] %vm1875, %v1873
    %1879 = vst.msk [vmem:[#allocation3 + $0x18] sm:$0xff] %vm1875, %v1874
    %1880 = vmatprep.subr.mxu0 0.0
    %1881 = vmatpush1.msra.mxu0 0.0
    %1882 = vmatprep.subr.mxu0 0.0
    %1883 = vmatpush1.msra.mxu0 0.0
    %1884 = vmatprep.subr.mxu0 0.0
    %1885 = vmatpush1.msra.mxu0 0.0
    %1886 = vmatprep.subr.mxu0 0.0
    %1887 = vmatpush1.msra.mxu0 0.0
    %1888 = vmatprep.subr.mxu0 0.0
    %1889 = vmatpush1.msra.mxu0 0.0
    %1890 = vmatprep.subr.mxu0 0.0
    %1891 = vmatpush1.msra.mxu0 0.0
    %1892 = vmatprep.subr.mxu0 0.0
    %1893 = vmatpush1.msra.mxu0 0.0
    %1894 = vmatprep.subr.mxu0 0.0
    %1895 = vmatpush1.msra.mxu0 0.0
    %1896 = vmatprep.subr.mxu0 0.0
    %1897 = vmatpush1.msra.mxu0 0.0
    %1898 = vmatprep.subr.mxu0 0.0
    %1899 = vmatpush1.msra.mxu0 0.0
    %1900 = vmatprep.subr.mxu0 0.0
    %1901 = vmatpush1.msra.mxu0 0.0
    %1902 = vmatprep.subr.mxu0 0.0
    %1903 = vmatpush1.msra.mxu0 0.0
    %1904 = vmatprep.subr.mxu0 0.0
    %1905 = vmatpush1.msra.mxu0 0.0
    %1906 = vmatprep.subr.mxu0 0.0
    %1907 = vmatpush1.msra.mxu0 0.0
    %1908 = vmatprep.subr.mxu0 0.0
    %v1909 = vand.u32 %v1845, 4294901760
    %1910 = vmatpush1.msra.mxu0 %v1909
    %1911 = vmatprep.subr.mxu0 0.0
    %v1912 = vand.u32 %v1839, 4294901760
    %1913 = vmatpush1.msra.mxu0 %v1912
    %1914 = vmatprep.subr.mxu0 0.0
    %1915 = vmatpush2.msra.mxu0 0.0
    %1916 = vmatprep.subr.mxu0 0.0
    %1917 = vmatpush2.msra.mxu0 0.0
    %1918 = vmatprep.subr.mxu0 0.0
    %1919 = vmatpush2.msra.mxu0 0.0
    %1920 = vmatprep.subr.mxu0 0.0
    %1921 = vmatpush2.msra.mxu0 0.0
    %1922 = vmatprep.subr.mxu0 0.0
    %1923 = vmatpush2.msra.mxu0 0.0
    %1924 = vmatprep.subr.mxu0 0.0
    %1925 = vmatpush2.msra.mxu0 0.0
    %1926 = vmatprep.subr.mxu0 0.0
    %1927 = vmatpush2.msra.mxu0 0.0
    %1928 = vmatprep.subr.mxu0 0.0
    %1929 = vmatpush2.msra.mxu0 0.0
    %1930 = vmatprep.subr.mxu0 0.0
    %1931 = vmatpush2.msra.mxu0 0.0
    %1932 = vmatprep.subr.mxu0 0.0
    %1933 = vmatpush2.msra.mxu0 0.0
    %1934 = vmatprep.subr.mxu0 0.0
    %1935 = vmatpush2.msra.mxu0 0.0
    %1936 = vmatprep.subr.mxu0 0.0
    %1937 = vmatpush2.msra.mxu0 0.0
    %1938 = vmatprep.subr.mxu0 0.0
    %1939 = vmatpush2.msra.mxu0 0.0
    %1940 = vmatprep.subr.mxu0 0.0
    %1941 = vmatpush2.msra.mxu0 0.0
    %1942 = vmatprep.subr.mxu0 0.0
    %1943 = vmatpush2.msra.mxu0 0.0
    %1944 = vmatprep.subr.mxu0 0.0
    %1945 = vmatpush2.msra.mxu0 0.0
    %1946 = vmatprep.mubr.f32.mxu0 0.0
    %v1947 = vand.u32 %v743, 4294901760
    %v1948 = vsub.f32 %v743, %v1947
    %v1949 = vand.u32 %v1948, 4294901760
    %v1950 = vsub.f32 %v1948, %v1949
    %v1951 = vand.u32 %v1950, 4294901760
    %1952 = vmatmul.mubr.f32.gmra.mxu0 %v1951
    %v1953 = vpop.f32.mrf.mxu0
    %v1954 = vadd.f32 %v1865, %v1953
    %v1955 = vpop.f32.mrf.mxu0
    %1956 = vmatprep.mubr.f32.mxu0 0.0
    %v1957 = vand.u32 %v746, 4294901760
    %v1958 = vsub.f32 %v746, %v1957
    %v1959 = vand.u32 %v1958, 4294901760
    %v1960 = vsub.f32 %v1958, %v1959
    %v1961 = vand.u32 %v1960, 4294901760
    %1962 = vmatmul.mubr.f32.gmra.mxu0 %v1961
    %v1963 = vpop.f32.mrf.mxu0
    %v1964 = vadd.f32 %v1865, %v1963
    %v1965 = vpop.f32.mrf.mxu0
    %1966 = vdwg.mxu0
    %1967 = vmatprep.subr.mxu0 0.0
    %1968 = vmatpush1.msra.mxu0 0.0
    %1969 = vmatprep.subr.mxu0 0.0
    %1970 = vmatpush1.msra.mxu0 0.0
    %1971 = vmatprep.subr.mxu0 0.0
    %1972 = vmatpush1.msra.mxu0 0.0
    %1973 = vmatprep.subr.mxu0 0.0
    %1974 = vmatpush1.msra.mxu0 0.0
    %1975 = vmatprep.subr.mxu0 0.0
    %1976 = vmatpush1.msra.mxu0 0.0
    %1977 = vmatprep.subr.mxu0 0.0
    %1978 = vmatpush1.msra.mxu0 0.0
    %1979 = vmatprep.subr.mxu0 0.0
    %1980 = vmatpush1.msra.mxu0 0.0
    %1981 = vmatprep.subr.mxu0 0.0
    %1982 = vmatpush1.msra.mxu0 0.0
    %1983 = vmatprep.subr.mxu0 0.0
    %1984 = vmatpush1.msra.mxu0 0.0
    %1985 = vmatprep.subr.mxu0 0.0
    %1986 = vmatpush1.msra.mxu0 0.0
    %1987 = vmatprep.subr.mxu0 0.0
    %1988 = vmatpush1.msra.mxu0 0.0
    %1989 = vmatprep.subr.mxu0 0.0
    %1990 = vmatpush1.msra.mxu0 0.0
    %1991 = vmatprep.subr.mxu0 0.0
    %1992 = vmatpush1.msra.mxu0 0.0
    %1993 = vmatprep.subr.mxu0 0.0
    %1994 = vmatpush1.msra.mxu0 0.0
    %1995 = vmatprep.subr.mxu0 0.0
    %v1996 = vand.u32 %v1845, 4294901760
    %v1997 = vsub.f32 %v1845, %v1996
    %v1998 = vand.u32 %v1997, 4294901760
    %v1999 = vsub.f32 %v1997, %v1998
    %v2000 = vand.u32 %v1999, 4294901760
    %2001 = vmatpush1.msra.mxu0 %v2000
    %2002 = vmatprep.subr.mxu0 0.0
    %v2003 = vand.u32 %v1839, 4294901760
    %v2004 = vsub.f32 %v1839, %v2003
    %v2005 = vand.u32 %v2004, 4294901760
    %v2006 = vsub.f32 %v2004, %v2005
    %v2007 = vand.u32 %v2006, 4294901760
    %2008 = vmatpush1.msra.mxu0 %v2007
    %2009 = vmatprep.subr.mxu0 0.0
    %2010 = vmatpush2.msra.mxu0 0.0
    %2011 = vmatprep.subr.mxu0 0.0
    %2012 = vmatpush2.msra.mxu0 0.0
    %2013 = vmatprep.subr.mxu0 0.0
    %2014 = vmatpush2.msra.mxu0 0.0
    %2015 = vmatprep.subr.mxu0 0.0
    %2016 = vmatpush2.msra.mxu0 0.0
    %2017 = vmatprep.subr.mxu0 0.0
    %2018 = vmatpush2.msra.mxu0 0.0
    %2019 = vmatprep.subr.mxu0 0.0
    %2020 = vmatpush2.msra.mxu0 0.0
    %2021 = vmatprep.subr.mxu0 0.0
    %2022 = vmatpush2.msra.mxu0 0.0
    %2023 = vmatprep.subr.mxu0 0.0
    %2024 = vmatpush2.msra.mxu0 0.0
    %2025 = vmatprep.subr.mxu0 0.0
    %2026 = vmatpush2.msra.mxu0 0.0
    %2027 = vmatprep.subr.mxu0 0.0
    %2028 = vmatpush2.msra.mxu0 0.0
    %2029 = vmatprep.subr.mxu0 0.0
    %2030 = vmatpush2.msra.mxu0 0.0
    %2031 = vmatprep.subr.mxu0 0.0
    %2032 = vmatpush2.msra.mxu0 0.0
    %2033 = vmatprep.subr.mxu0 0.0
    %2034 = vmatpush2.msra.mxu0 0.0
    %2035 = vmatprep.subr.mxu0 0.0
    %2036 = vmatpush2.msra.mxu0 0.0
    %2037 = vmatprep.subr.mxu0 0.0
    %2038 = vmatpush2.msra.mxu0 0.0
    %2039 = vmatprep.subr.mxu0 0.0
    %2040 = vmatpush2.msra.mxu0 0.0
    %2041 = vmatprep.mubr.f32.mxu0 0.0
    %v2042 = vand.u32 %v743, 4294901760
    %2043 = vmatmul.mubr.f32.gmra.mxu0 %v2042
    %v2044 = vpop.f32.mrf.mxu0
    %v2045 = vadd.f32 %v1954, %v2044
    %v2046 = vpop.f32.mrf.mxu0
    %2047 = vmatprep.mubr.f32.mxu0 0.0
    %v2048 = vand.u32 %v746, 4294901760
    %2049 = vmatmul.mubr.f32.gmra.mxu0 %v2048
    %v2050 = vpop.f32.mrf.mxu0
    %v2051 = vadd.f32 %v1964, %v2050
    %v2052 = vpop.f32.mrf.mxu0
    %2053 = vdwg.mxu0
    %2054 = vmatprep.subr.mxu0 0.0
    %2055 = vmatpush1.msra.mxu0 0.0
    %2056 = vmatprep.subr.mxu0 0.0
    %2057 = vmatpush1.msra.mxu0 0.0
    %2058 = vmatprep.subr.mxu0 0.0
    %2059 = vmatpush1.msra.mxu0 0.0
    %2060 = vmatprep.subr.mxu0 0.0
    %2061 = vmatpush1.msra.mxu0 0.0
    %2062 = vmatprep.subr.mxu0 0.0
    %2063 = vmatpush1.msra.mxu0 0.0
    %2064 = vmatprep.subr.mxu0 0.0
    %2065 = vmatpush1.msra.mxu0 0.0
    %2066 = vmatprep.subr.mxu0 0.0
    %2067 = vmatpush1.msra.mxu0 0.0
    %2068 = vmatprep.subr.mxu0 0.0
    %2069 = vmatpush1.msra.mxu0 0.0
    %2070 = vmatprep.subr.mxu0 0.0
    %2071 = vmatpush1.msra.mxu0 0.0
    %2072 = vmatprep.subr.mxu0 0.0
    %2073 = vmatpush1.msra.mxu0 0.0
    %2074 = vmatprep.subr.mxu0 0.0
    %2075 = vmatpush1.msra.mxu0 0.0
    %2076 = vmatprep.subr.mxu0 0.0
    %2077 = vmatpush1.msra.mxu0 0.0
    %2078 = vmatprep.subr.mxu0 0.0
    %2079 = vmatpush1.msra.mxu0 0.0
    %2080 = vmatprep.subr.mxu0 0.0
    %2081 = vmatpush1.msra.mxu0 0.0
    %2082 = vmatprep.subr.mxu0 0.0
    %v2083 = vand.u32 %v1845, 4294901760
    %v2084 = vsub.f32 %v1845, %v2083
    %2085 = vmatpush1.msra.mxu0 %v2084
    %2086 = vmatprep.subr.mxu0 0.0
    %v2087 = vand.u32 %v1839, 4294901760
    %v2088 = vsub.f32 %v1839, %v2087
    %2089 = vmatpush1.msra.mxu0 %v2088
    %2090 = vmatprep.subr.mxu0 0.0
    %2091 = vmatpush2.msra.mxu0 0.0
    %2092 = vmatprep.subr.mxu0 0.0
    %2093 = vmatpush2.msra.mxu0 0.0
    %2094 = vmatprep.subr.mxu0 0.0
    %2095 = vmatpush2.msra.mxu0 0.0
    %2096 = vmatprep.subr.mxu0 0.0
    %2097 = vmatpush2.msra.mxu0 0.0
    %2098 = vmatprep.subr.mxu0 0.0
    %2099 = vmatpush2.msra.mxu0 0.0
    %2100 = vmatprep.subr.mxu0 0.0
    %2101 = vmatpush2.msra.mxu0 0.0
    %2102 = vmatprep.subr.mxu0 0.0
    %2103 = vmatpush2.msra.mxu0 0.0
    %2104 = vmatprep.subr.mxu0 0.0
    %2105 = vmatpush2.msra.mxu0 0.0
    %2106 = vmatprep.subr.mxu0 0.0
    %2107 = vmatpush2.msra.mxu0 0.0
    %2108 = vmatprep.subr.mxu0 0.0
    %2109 = vmatpush2.msra.mxu0 0.0
    %2110 = vmatprep.subr.mxu0 0.0
    %2111 = vmatpush2.msra.mxu0 0.0
    %2112 = vmatprep.subr.mxu0 0.0
    %2113 = vmatpush2.msra.mxu0 0.0
    %2114 = vmatprep.subr.mxu0 0.0
    %2115 = vmatpush2.msra.mxu0 0.0
    %2116 = vmatprep.subr.mxu0 0.0
    %2117 = vmatpush2.msra.mxu0 0.0
    %2118 = vmatprep.subr.mxu0 0.0
    %2119 = vmatpush2.msra.mxu0 0.0
    %2120 = vmatprep.subr.mxu0 0.0
    %2121 = vmatpush2.msra.mxu0 0.0
    %2122 = vmatprep.mubr.f32.mxu0 0.0
    %v2123 = vand.u32 %v743, 4294901760
    %v2124 = vsub.f32 %v743, %v2123
    %2125 = vmatmul.mubr.f32.gmra.mxu0 %v2124
    %v2126 = vpop.f32.mrf.mxu0
    %v2127 = vadd.f32 %v2045, %v2126
    %v2128 = vpop.f32.mrf.mxu0
    %2129 = vmatprep.mubr.f32.mxu0 0.0
    %v2130 = vand.u32 %v746, 4294901760
    %v2131 = vsub.f32 %v746, %v2130
    %2132 = vmatmul.mubr.f32.gmra.mxu0 %v2131
    %v2133 = vpop.f32.mrf.mxu0
    %v2134 = vadd.f32 %v2051, %v2133
    %v2135 = vpop.f32.mrf.mxu0
    %2136 = vdwg.mxu0
    %2137 = vmatprep.subr.mxu0 0.0
    %2138 = vmatpush1.msra.mxu0 0.0
    %2139 = vmatprep.subr.mxu0 0.0
    %2140 = vmatpush1.msra.mxu0 0.0
    %2141 = vmatprep.subr.mxu0 0.0
    %2142 = vmatpush1.msra.mxu0 0.0
    %2143 = vmatprep.subr.mxu0 0.0
    %2144 = vmatpush1.msra.mxu0 0.0
    %2145 = vmatprep.subr.mxu0 0.0
    %2146 = vmatpush1.msra.mxu0 0.0
    %2147 = vmatprep.subr.mxu0 0.0
    %2148 = vmatpush1.msra.mxu0 0.0
    %2149 = vmatprep.subr.mxu0 0.0
    %2150 = vmatpush1.msra.mxu0 0.0
    %2151 = vmatprep.subr.mxu0 0.0
    %2152 = vmatpush1.msra.mxu0 0.0
    %2153 = vmatprep.subr.mxu0 0.0
    %2154 = vmatpush1.msra.mxu0 0.0
    %2155 = vmatprep.subr.mxu0 0.0
    %2156 = vmatpush1.msra.mxu0 0.0
    %2157 = vmatprep.subr.mxu0 0.0
    %2158 = vmatpush1.msra.mxu0 0.0
    %2159 = vmatprep.subr.mxu0 0.0
    %2160 = vmatpush1.msra.mxu0 0.0
    %2161 = vmatprep.subr.mxu0 0.0
    %2162 = vmatpush1.msra.mxu0 0.0
    %2163 = vmatprep.subr.mxu0 0.0
    %2164 = vmatpush1.msra.mxu0 0.0
    %2165 = vmatprep.subr.mxu0 0.0
    %v2166 = vand.u32 %v1845, 4294901760
    %2167 = vmatpush1.msra.mxu0 %v2166
    %2168 = vmatprep.subr.mxu0 0.0
    %v2169 = vand.u32 %v1839, 4294901760
    %2170 = vmatpush1.msra.mxu0 %v2169
    %2171 = vmatprep.subr.mxu0 0.0
    %2172 = vmatpush2.msra.mxu0 0.0
    %2173 = vmatprep.subr.mxu0 0.0
    %2174 = vmatpush2.msra.mxu0 0.0
    %2175 = vmatprep.subr.mxu0 0.0
    %2176 = vmatpush2.msra.mxu0 0.0
    %2177 = vmatprep.subr.mxu0 0.0
    %2178 = vmatpush2.msra.mxu0 0.0
    %2179 = vmatprep.subr.mxu0 0.0
    %2180 = vmatpush2.msra.mxu0 0.0
    %2181 = vmatprep.subr.mxu0 0.0
    %2182 = vmatpush2.msra.mxu0 0.0
    %2183 = vmatprep.subr.mxu0 0.0
    %2184 = vmatpush2.msra.mxu0 0.0
    %2185 = vmatprep.subr.mxu0 0.0
    %2186 = vmatpush2.msra.mxu0 0.0
    %2187 = vmatprep.subr.mxu0 0.0
    %2188 = vmatpush2.msra.mxu0 0.0
    %2189 = vmatprep.subr.mxu0 0.0
    %2190 = vmatpush2.msra.mxu0 0.0
    %2191 = vmatprep.subr.mxu0 0.0
    %2192 = vmatpush2.msra.mxu0 0.0
    %2193 = vmatprep.subr.mxu0 0.0
    %2194 = vmatpush2.msra.mxu0 0.0
    %2195 = vmatprep.subr.mxu0 0.0
    %2196 = vmatpush2.msra.mxu0 0.0
    %2197 = vmatprep.subr.mxu0 0.0
    %2198 = vmatpush2.msra.mxu0 0.0
    %2199 = vmatprep.subr.mxu0 0.0
    %2200 = vmatpush2.msra.mxu0 0.0
    %2201 = vmatprep.subr.mxu0 0.0
    %2202 = vmatpush2.msra.mxu0 0.0
    %2203 = vmatprep.mubr.f32.mxu0 0.0
    %v2204 = vand.u32 %v743, 4294901760
    %v2205 = vsub.f32 %v743, %v2204
    %v2206 = vand.u32 %v2205, 4294901760
    %2207 = vmatmul.mubr.f32.gmra.mxu0 %v2206
    %v2208 = vpop.f32.mrf.mxu0
    %v2209 = vadd.f32 %v2127, %v2208
    %v2210 = vpop.f32.mrf.mxu0
    %2211 = vmatprep.mubr.f32.mxu0 0.0
    %v2212 = vand.u32 %v746, 4294901760
    %v2213 = vsub.f32 %v746, %v2212
    %v2214 = vand.u32 %v2213, 4294901760
    %2215 = vmatmul.mubr.f32.gmra.mxu0 %v2214
    %v2216 = vpop.f32.mrf.mxu0
    %v2217 = vadd.f32 %v2134, %v2216
    %v2218 = vpop.f32.mrf.mxu0
    %2219 = vdwg.mxu0
    %2220 = vmatprep.subr.mxu0 0.0
    %2221 = vmatpush1.msra.mxu0 0.0
    %2222 = vmatprep.subr.mxu0 0.0
    %2223 = vmatpush1.msra.mxu0 0.0
    %2224 = vmatprep.subr.mxu0 0.0
    %2225 = vmatpush1.msra.mxu0 0.0
    %2226 = vmatprep.subr.mxu0 0.0
    %2227 = vmatpush1.msra.mxu0 0.0
    %2228 = vmatprep.subr.mxu0 0.0
    %2229 = vmatpush1.msra.mxu0 0.0
    %2230 = vmatprep.subr.mxu0 0.0
    %2231 = vmatpush1.msra.mxu0 0.0
    %2232 = vmatprep.subr.mxu0 0.0
    %2233 = vmatpush1.msra.mxu0 0.0
    %2234 = vmatprep.subr.mxu0 0.0
    %2235 = vmatpush1.msra.mxu0 0.0
    %2236 = vmatprep.subr.mxu0 0.0
    %2237 = vmatpush1.msra.mxu0 0.0
    %2238 = vmatprep.subr.mxu0 0.0
    %2239 = vmatpush1.msra.mxu0 0.0
    %2240 = vmatprep.subr.mxu0 0.0
    %2241 = vmatpush1.msra.mxu0 0.0
    %2242 = vmatprep.subr.mxu0 0.0
    %2243 = vmatpush1.msra.mxu0 0.0
    %2244 = vmatprep.subr.mxu0 0.0
    %2245 = vmatpush1.msra.mxu0 0.0
    %2246 = vmatprep.subr.mxu0 0.0
    %2247 = vmatpush1.msra.mxu0 0.0
    %2248 = vmatprep.subr.mxu0 0.0
    %v2249 = vand.u32 %v1845, 4294901760
    %v2250 = vsub.f32 %v1845, %v2249
    %v2251 = vand.u32 %v2250, 4294901760
    %2252 = vmatpush1.msra.mxu0 %v2251
    %2253 = vmatprep.subr.mxu0 0.0
    %v2254 = vand.u32 %v1839, 4294901760
    %v2255 = vsub.f32 %v1839, %v2254
    %v2256 = vand.u32 %v2255, 4294901760
    %2257 = vmatpush1.msra.mxu0 %v2256
    %2258 = vmatprep.subr.mxu0 0.0
    %2259 = vmatpush2.msra.mxu0 0.0
    %2260 = vmatprep.subr.mxu0 0.0
    %2261 = vmatpush2.msra.mxu0 0.0
    %2262 = vmatprep.subr.mxu0 0.0
    %2263 = vmatpush2.msra.mxu0 0.0
    %2264 = vmatprep.subr.mxu0 0.0
    %2265 = vmatpush2.msra.mxu0 0.0
    %2266 = vmatprep.subr.mxu0 0.0
    %2267 = vmatpush2.msra.mxu0 0.0
    %2268 = vmatprep.subr.mxu0 0.0
    %2269 = vmatpush2.msra.mxu0 0.0
    %2270 = vmatprep.subr.mxu0 0.0
    %2271 = vmatpush2.msra.mxu0 0.0
    %2272 = vmatprep.subr.mxu0 0.0
    %2273 = vmatpush2.msra.mxu0 0.0
    %2274 = vmatprep.subr.mxu0 0.0
    %2275 = vmatpush2.msra.mxu0 0.0
    %2276 = vmatprep.subr.mxu0 0.0
    %2277 = vmatpush2.msra.mxu0 0.0
    %2278 = vmatprep.subr.mxu0 0.0
    %2279 = vmatpush2.msra.mxu0 0.0
    %2280 = vmatprep.subr.mxu0 0.0
    %2281 = vmatpush2.msra.mxu0 0.0
    %2282 = vmatprep.subr.mxu0 0.0
    %2283 = vmatpush2.msra.mxu0 0.0
    %2284 = vmatprep.subr.mxu0 0.0
    %2285 = vmatpush2.msra.mxu0 0.0
    %2286 = vmatprep.subr.mxu0 0.0
    %2287 = vmatpush2.msra.mxu0 0.0
    %2288 = vmatprep.subr.mxu0 0.0
    %2289 = vmatpush2.msra.mxu0 0.0
    %2290 = vmatprep.mubr.f32.mxu0 0.0
    %v2291 = vand.u32 %v743, 4294901760
    %2292 = vmatmul.mubr.f32.gmra.mxu0 %v2291
    %v2293 = vpop.f32.mrf.mxu0
    %v2294 = vadd.f32 %v2209, %v2293
    %v2295 = vpop.f32.mrf.mxu0
    %2296 = vmatprep.mubr.f32.mxu0 0.0
    %v2297 = vand.u32 %v746, 4294901760
    %2298 = vmatmul.mubr.f32.gmra.mxu0 %v2297
    %v2299 = vpop.f32.mrf.mxu0
    %v2300 = vadd.f32 %v2217, %v2299
    %v2301 = vpop.f32.mrf.mxu0
    %2302 = vdwg.mxu0
    %2303 = vmatprep.subr.mxu0 0.0
    %2304 = vmatpush1.msra.mxu0 0.0
    %2305 = vmatprep.subr.mxu0 0.0
    %2306 = vmatpush1.msra.mxu0 0.0
    %2307 = vmatprep.subr.mxu0 0.0
    %2308 = vmatpush1.msra.mxu0 0.0
    %2309 = vmatprep.subr.mxu0 0.0
    %2310 = vmatpush1.msra.mxu0 0.0
    %2311 = vmatprep.subr.mxu0 0.0
    %2312 = vmatpush1.msra.mxu0 0.0
    %2313 = vmatprep.subr.mxu0 0.0
    %2314 = vmatpush1.msra.mxu0 0.0
    %2315 = vmatprep.subr.mxu0 0.0
    %2316 = vmatpush1.msra.mxu0 0.0
    %2317 = vmatprep.subr.mxu0 0.0
    %2318 = vmatpush1.msra.mxu0 0.0
    %2319 = vmatprep.subr.mxu0 0.0
    %2320 = vmatpush1.msra.mxu0 0.0
    %2321 = vmatprep.subr.mxu0 0.0
    %2322 = vmatpush1.msra.mxu0 0.0
    %2323 = vmatprep.subr.mxu0 0.0
    %2324 = vmatpush1.msra.mxu0 0.0
    %2325 = vmatprep.subr.mxu0 0.0
    %2326 = vmatpush1.msra.mxu0 0.0
    %2327 = vmatprep.subr.mxu0 0.0
    %2328 = vmatpush1.msra.mxu0 0.0
    %2329 = vmatprep.subr.mxu0 0.0
    %2330 = vmatpush1.msra.mxu0 0.0
    %2331 = vmatprep.subr.mxu0 0.0
    %v2332 = vand.u32 %v1845, 4294901760
    %2333 = vmatpush1.msra.mxu0 %v2332
    %2334 = vmatprep.subr.mxu0 0.0
    %v2335 = vand.u32 %v1839, 4294901760
    %2336 = vmatpush1.msra.mxu0 %v2335
    %2337 = vmatprep.subr.mxu0 0.0
    %2338 = vmatpush2.msra.mxu0 0.0
    %2339 = vmatprep.subr.mxu0 0.0
    %2340 = vmatpush2.msra.mxu0 0.0
    %2341 = vmatprep.subr.mxu0 0.0
    %2342 = vmatpush2.msra.mxu0 0.0
    %2343 = vmatprep.subr.mxu0 0.0
    %2344 = vmatpush2.msra.mxu0 0.0
    %2345 = vmatprep.subr.mxu0 0.0
    %2346 = vmatpush2.msra.mxu0 0.0
    %2347 = vmatprep.subr.mxu0 0.0
    %2348 = vmatpush2.msra.mxu0 0.0
    %2349 = vmatprep.subr.mxu0 0.0
    %2350 = vmatpush2.msra.mxu0 0.0
    %2351 = vmatprep.subr.mxu0 0.0
    %2352 = vmatpush2.msra.mxu0 0.0
    %2353 = vmatprep.subr.mxu0 0.0
    %2354 = vmatpush2.msra.mxu0 0.0
    %2355 = vmatprep.subr.mxu0 0.0
    %2356 = vmatpush2.msra.mxu0 0.0
    %2357 = vmatprep.subr.mxu0 0.0
    %2358 = vmatpush2.msra.mxu0 0.0
    %2359 = vmatprep.subr.mxu0 0.0
    %2360 = vmatpush2.msra.mxu0 0.0
    %2361 = vmatprep.subr.mxu0 0.0
    %2362 = vmatpush2.msra.mxu0 0.0
    %2363 = vmatprep.subr.mxu0 0.0
    %2364 = vmatpush2.msra.mxu0 0.0
    %2365 = vmatprep.subr.mxu0 0.0
    %2366 = vmatpush2.msra.mxu0 0.0
    %2367 = vmatprep.subr.mxu0 0.0
    %2368 = vmatpush2.msra.mxu0 0.0
    %2369 = vmatprep.mubr.f32.mxu0 0.0
    %v2370 = vand.u32 %v743, 4294901760
    %2371 = vmatmul.mubr.f32.gmra.mxu0 %v2370
    %v2372 = vpop.f32.mrf.mxu0
    %v2373 = vadd.f32 %v2294, %v2372
    %v2374 = vpop.f32.mrf.mxu0
    %2375 = vmatprep.mubr.f32.mxu0 0.0
    %v2376 = vand.u32 %v746, 4294901760
    %2377 = vmatmul.mubr.f32.gmra.mxu0 %v2376
    %v2378 = vpop.f32.mrf.mxu0
    %v2379 = vadd.f32 %v2300, %v2378
    %v2380 = vpop.f32.mrf.mxu0
    %2381 = vdwg.mxu0
    %v2382 = vmax.f32 %v2373, 0.0
    %v2383 = vmax.f32 %v2379, 0.0
    %2384 = vst.msk [vmem:[#allocation3] sm:$0xff] %vm1875, %v2382
    %2385 = vst.msk [vmem:[#allocation3 + $0x8] sm:$0xff] %vm1875, %v2383
    %v2386 = vld [vmem:[#allocation3] sm:$0xff]
    %v2387 = vld [vmem:[#allocation3 + $0x8] sm:$0xff]
    %v2388 = vld [vmem:[#allocation3 + $0x10] sm:$0xff]
    %v2389 = vld [vmem:[#allocation3 + $0x18] sm:$0xff]
    %v2390 = vld [vmem:[%s4] sm:$0xff]
    %v2391 = vld [vmem:[%s4 + $0x8] sm:$0xff]
    %v2393 = vsel %vm1875, %v2390, 0
    %v2396 = vsel %vm1875, %v2391, 0
    %2398 = vmatprep.subr.mxu0 0.0
    %2399 = vmatpush1.msra.mxu0 0.0
    %2400 = vmatprep.subr.mxu0 0.0
    %2401 = vmatpush1.msra.mxu0 0.0
    %2402 = vmatprep.subr.mxu0 0.0
    %2403 = vmatpush1.msra.mxu0 0.0
    %2404 = vmatprep.subr.mxu0 0.0
    %2405 = vmatpush1.msra.mxu0 0.0
    %2406 = vmatprep.subr.mxu0 0.0
    %2407 = vmatpush1.msra.mxu0 0.0
    %2408 = vmatprep.subr.mxu0 0.0
    %2409 = vmatpush1.msra.mxu0 0.0
    %2410 = vmatprep.subr.mxu0 0.0
    %2411 = vmatpush1.msra.mxu0 0.0
    %2412 = vmatprep.subr.mxu0 0.0
    %2413 = vmatpush1.msra.mxu0 0.0
    %2414 = vmatprep.subr.mxu0 0.0
    %2415 = vmatpush1.msra.mxu0 0.0
    %2416 = vmatprep.subr.mxu0 0.0
    %2417 = vmatpush1.msra.mxu0 0.0
    %2418 = vmatprep.subr.mxu0 0.0
    %2419 = vmatpush1.msra.mxu0 0.0
    %2420 = vmatprep.subr.mxu0 0.0
    %2421 = vmatpush1.msra.mxu0 0.0
    %2422 = vmatprep.subr.mxu0 0.0
    %v2423 = vand.u32 %v2389, 4294901760
    %2424 = vmatpush1.msra.mxu0 %v2423
    %2425 = vmatprep.subr.mxu0 0.0
    %v2426 = vand.u32 %v2388, 4294901760
    %2427 = vmatpush1.msra.mxu0 %v2426
    %2428 = vmatprep.subr.mxu0 0.0
    %v2429 = vand.u32 %v2387, 4294901760
    %2430 = vmatpush1.msra.mxu0 %v2429
    %2431 = vmatprep.subr.mxu0 0.0
    %v2432 = vand.u32 %v2386, 4294901760
    %2433 = vmatpush1.msra.mxu0 %v2432
    %2434 = vmatprep.subr.mxu0 0.0
    %2435 = vmatpush2.msra.mxu0 0.0
    %2436 = vmatprep.subr.mxu0 0.0
    %2437 = vmatpush2.msra.mxu0 0.0
    %2438 = vmatprep.subr.mxu0 0.0
    %2439 = vmatpush2.msra.mxu0 0.0
    %2440 = vmatprep.subr.mxu0 0.0
    %2441 = vmatpush2.msra.mxu0 0.0
    %2442 = vmatprep.subr.mxu0 0.0
    %2443 = vmatpush2.msra.mxu0 0.0
    %2444 = vmatprep.subr.mxu0 0.0
    %2445 = vmatpush2.msra.mxu0 0.0
    %2446 = vmatprep.subr.mxu0 0.0
    %2447 = vmatpush2.msra.mxu0 0.0
    %2448 = vmatprep.subr.mxu0 0.0
    %2449 = vmatpush2.msra.mxu0 0.0
    %2450 = vmatprep.subr.mxu0 0.0
    %2451 = vmatpush2.msra.mxu0 0.0
    %2452 = vmatprep.subr.mxu0 0.0
    %2453 = vmatpush2.msra.mxu0 0.0
    %2454 = vmatprep.subr.mxu0 0.0
    %2455 = vmatpush2.msra.mxu0 0.0
    %2456 = vmatprep.subr.mxu0 0.0
    %2457 = vmatpush2.msra.mxu0 0.0
    %2458 = vmatprep.subr.mxu0 0.0
    %2459 = vmatpush2.msra.mxu0 0.0
    %2460 = vmatprep.subr.mxu0 0.0
    %2461 = vmatpush2.msra.mxu0 0.0
    %2462 = vmatprep.subr.mxu0 0.0
    %2463 = vmatpush2.msra.mxu0 0.0
    %2464 = vmatprep.subr.mxu0 0.0
    %2465 = vmatpush2.msra.mxu0 0.0
    %2466 = vmatprep.mubr.f32.mxu0 0.0
    %v2467 = vand.u32 %v2393, 4294901760
    %v2468 = vsub.f32 %v2393, %v2467
    %v2469 = vand.u32 %v2468, 4294901760
    %v2470 = vsub.f32 %v2468, %v2469
    %v2471 = vand.u32 %v2470, 4294901760
    %2472 = vmatmul.mubr.f32.gmra.mxu0 %v2471
    %v2473 = vpop.f32.mrf.mxu0
    %v2474 = vadd.f32 0.0, %v2473
    %v2475 = vpop.f32.mrf.mxu0
    %2476 = vmatprep.mubr.f32.mxu0 0.0
    %v2477 = vand.u32 %v2396, 4294901760
    %v2478 = vsub.f32 %v2396, %v2477
    %v2479 = vand.u32 %v2478, 4294901760
    %v2480 = vsub.f32 %v2478, %v2479
    %v2481 = vand.u32 %v2480, 4294901760
    %2482 = vmatmul.mubr.f32.gmra.mxu0 %v2481
    %v2483 = vpop.f32.mrf.mxu0
    %v2484 = vadd.f32 0.0, %v2483
    %v2485 = vpop.f32.mrf.mxu0
    %2486 = vdwg.mxu0
    %2487 = vmatprep.subr.mxu0 0.0
    %2488 = vmatpush1.msra.mxu0 0.0
    %2489 = vmatprep.subr.mxu0 0.0
    %2490 = vmatpush1.msra.mxu0 0.0
    %2491 = vmatprep.subr.mxu0 0.0
    %2492 = vmatpush1.msra.mxu0 0.0
    %2493 = vmatprep.subr.mxu0 0.0
    %2494 = vmatpush1.msra.mxu0 0.0
    %2495 = vmatprep.subr.mxu0 0.0
    %2496 = vmatpush1.msra.mxu0 0.0
    %2497 = vmatprep.subr.mxu0 0.0
    %2498 = vmatpush1.msra.mxu0 0.0
    %2499 = vmatprep.subr.mxu0 0.0
    %2500 = vmatpush1.msra.mxu0 0.0
    %2501 = vmatprep.subr.mxu0 0.0
    %2502 = vmatpush1.msra.mxu0 0.0
    %2503 = vmatprep.subr.mxu0 0.0
    %2504 = vmatpush1.msra.mxu0 0.0
    %2505 = vmatprep.subr.mxu0 0.0
    %2506 = vmatpush1.msra.mxu0 0.0
    %2507 = vmatprep.subr.mxu0 0.0
    %2508 = vmatpush1.msra.mxu0 0.0
    %2509 = vmatprep.subr.mxu0 0.0
    %2510 = vmatpush1.msra.mxu0 0.0
    %2511 = vmatprep.subr.mxu0 0.0
    %v2512 = vand.u32 %v2389, 4294901760
    %v2513 = vsub.f32 %v2389, %v2512
    %v2514 = vand.u32 %v2513, 4294901760
    %v2515 = vsub.f32 %v2513, %v2514
    %v2516 = vand.u32 %v2515, 4294901760
    %2517 = vmatpush1.msra.mxu0 %v2516
    %2518 = vmatprep.subr.mxu0 0.0
    %v2519 = vand.u32 %v2388, 4294901760
    %v2520 = vsub.f32 %v2388, %v2519
    %v2521 = vand.u32 %v2520, 4294901760
    %v2522 = vsub.f32 %v2520, %v2521
    %v2523 = vand.u32 %v2522, 4294901760
    %2524 = vmatpush1.msra.mxu0 %v2523
    %2525 = vmatprep.subr.mxu0 0.0
    %v2526 = vand.u32 %v2387, 4294901760
    %v2527 = vsub.f32 %v2387, %v2526
    %v2528 = vand.u32 %v2527, 4294901760
    %v2529 = vsub.f32 %v2527, %v2528
    %v2530 = vand.u32 %v2529, 4294901760
    %2531 = vmatpush1.msra.mxu0 %v2530
    %2532 = vmatprep.subr.mxu0 0.0
    %v2533 = vand.u32 %v2386, 4294901760
    %v2534 = vsub.f32 %v2386, %v2533
    %v2535 = vand.u32 %v2534, 4294901760
    %v2536 = vsub.f32 %v2534, %v2535
    %v2537 = vand.u32 %v2536, 4294901760
    %2538 = vmatpush1.msra.mxu0 %v2537
    %2539 = vmatprep.subr.mxu0 0.0
    %2540 = vmatpush2.msra.mxu0 0.0
    %2541 = vmatprep.subr.mxu0 0.0
    %2542 = vmatpush2.msra.mxu0 0.0
    %2543 = vmatprep.subr.mxu0 0.0
    %2544 = vmatpush2.msra.mxu0 0.0
    %2545 = vmatprep.subr.mxu0 0.0
    %2546 = vmatpush2.msra.mxu0 0.0
    %2547 = vmatprep.subr.mxu0 0.0
    %2548 = vmatpush2.msra.mxu0 0.0
    %2549 = vmatprep.subr.mxu0 0.0
    %2550 = vmatpush2.msra.mxu0 0.0
    %2551 = vmatprep.subr.mxu0 0.0
    %2552 = vmatpush2.msra.mxu0 0.0
    %2553 = vmatprep.subr.mxu0 0.0
    %2554 = vmatpush2.msra.mxu0 0.0
    %2555 = vmatprep.subr.mxu0 0.0
    %2556 = vmatpush2.msra.mxu0 0.0
    %2557 = vmatprep.subr.mxu0 0.0
    %2558 = vmatpush2.msra.mxu0 0.0
    %2559 = vmatprep.subr.mxu0 0.0
    %2560 = vmatpush2.msra.mxu0 0.0
    %2561 = vmatprep.subr.mxu0 0.0
    %2562 = vmatpush2.msra.mxu0 0.0
    %2563 = vmatprep.subr.mxu0 0.0
    %2564 = vmatpush2.msra.mxu0 0.0
    %2565 = vmatprep.subr.mxu0 0.0
    %2566 = vmatpush2.msra.mxu0 0.0
    %2567 = vmatprep.subr.mxu0 0.0
    %2568 = vmatpush2.msra.mxu0 0.0
    %2569 = vmatprep.subr.mxu0 0.0
    %2570 = vmatpush2.msra.mxu0 0.0
    %2571 = vmatprep.mubr.f32.mxu0 0.0
    %v2572 = vand.u32 %v2393, 4294901760
    %2573 = vmatmul.mubr.f32.gmra.mxu0 %v2572
    %v2574 = vpop.f32.mrf.mxu0
    %v2575 = vadd.f32 %v2474, %v2574
    %v2576 = vpop.f32.mrf.mxu0
    %2577 = vmatprep.mubr.f32.mxu0 0.0
    %v2578 = vand.u32 %v2396, 4294901760
    %2579 = vmatmul.mubr.f32.gmra.mxu0 %v2578
    %v2580 = vpop.f32.mrf.mxu0
    %v2581 = vadd.f32 %v2484, %v2580
    %v2582 = vpop.f32.mrf.mxu0
    %2583 = vdwg.mxu0
    %2584 = vmatprep.subr.mxu0 0.0
    %2585 = vmatpush1.msra.mxu0 0.0
    %2586 = vmatprep.subr.mxu0 0.0
    %2587 = vmatpush1.msra.mxu0 0.0
    %2588 = vmatprep.subr.mxu0 0.0
    %2589 = vmatpush1.msra.mxu0 0.0
    %2590 = vmatprep.subr.mxu0 0.0
    %2591 = vmatpush1.msra.mxu0 0.0
    %2592 = vmatprep.subr.mxu0 0.0
    %2593 = vmatpush1.msra.mxu0 0.0
    %2594 = vmatprep.subr.mxu0 0.0
    %2595 = vmatpush1.msra.mxu0 0.0
    %2596 = vmatprep.subr.mxu0 0.0
    %2597 = vmatpush1.msra.mxu0 0.0
    %2598 = vmatprep.subr.mxu0 0.0
    %2599 = vmatpush1.msra.mxu0 0.0
    %2600 = vmatprep.subr.mxu0 0.0
    %2601 = vmatpush1.msra.mxu0 0.0
    %2602 = vmatprep.subr.mxu0 0.0
    %2603 = vmatpush1.msra.mxu0 0.0
    %2604 = vmatprep.subr.mxu0 0.0
    %2605 = vmatpush1.msra.mxu0 0.0
    %2606 = vmatprep.subr.mxu0 0.0
    %2607 = vmatpush1.msra.mxu0 0.0
    %2608 = vmatprep.subr.mxu0 0.0
    %v2609 = vand.u32 %v2389, 4294901760
    %v2610 = vsub.f32 %v2389, %v2609
    %2611 = vmatpush1.msra.mxu0 %v2610
    %2612 = vmatprep.subr.mxu0 0.0
    %v2613 = vand.u32 %v2388, 4294901760
    %v2614 = vsub.f32 %v2388, %v2613
    %2615 = vmatpush1.msra.mxu0 %v2614
    %2616 = vmatprep.subr.mxu0 0.0
    %v2617 = vand.u32 %v2387, 4294901760
    %v2618 = vsub.f32 %v2387, %v2617
    %2619 = vmatpush1.msra.mxu0 %v2618
    %2620 = vmatprep.subr.mxu0 0.0
    %v2621 = vand.u32 %v2386, 4294901760
    %v2622 = vsub.f32 %v2386, %v2621
    %2623 = vmatpush1.msra.mxu0 %v2622
    %2624 = vmatprep.subr.mxu0 0.0
    %2625 = vmatpush2.msra.mxu0 0.0
    %2626 = vmatprep.subr.mxu0 0.0
    %2627 = vmatpush2.msra.mxu0 0.0
    %2628 = vmatprep.subr.mxu0 0.0
    %2629 = vmatpush2.msra.mxu0 0.0
    %2630 = vmatprep.subr.mxu0 0.0
    %2631 = vmatpush2.msra.mxu0 0.0
    %2632 = vmatprep.subr.mxu0 0.0
    %2633 = vmatpush2.msra.mxu0 0.0
    %2634 = vmatprep.subr.mxu0 0.0
    %2635 = vmatpush2.msra.mxu0 0.0
    %2636 = vmatprep.subr.mxu0 0.0
    %2637 = vmatpush2.msra.mxu0 0.0
    %2638 = vmatprep.subr.mxu0 0.0
    %2639 = vmatpush2.msra.mxu0 0.0
    %2640 = vmatprep.subr.mxu0 0.0
    %2641 = vmatpush2.msra.mxu0 0.0
    %2642 = vmatprep.subr.mxu0 0.0
    %2643 = vmatpush2.msra.mxu0 0.0
    %2644 = vmatprep.subr.mxu0 0.0
    %2645 = vmatpush2.msra.mxu0 0.0
    %2646 = vmatprep.subr.mxu0 0.0
    %2647 = vmatpush2.msra.mxu0 0.0
    %2648 = vmatprep.subr.mxu0 0.0
    %2649 = vmatpush2.msra.mxu0 0.0
    %2650 = vmatprep.subr.mxu0 0.0
    %2651 = vmatpush2.msra.mxu0 0.0
    %2652 = vmatprep.subr.mxu0 0.0
    %2653 = vmatpush2.msra.mxu0 0.0
    %2654 = vmatprep.subr.mxu0 0.0
    %2655 = vmatpush2.msra.mxu0 0.0
    %2656 = vmatprep.mubr.f32.mxu0 0.0
    %v2657 = vand.u32 %v2393, 4294901760
    %v2658 = vsub.f32 %v2393, %v2657
    %2659 = vmatmul.mubr.f32.gmra.mxu0 %v2658
    %v2660 = vpop.f32.mrf.mxu0
    %v2661 = vadd.f32 %v2575, %v2660
    %v2662 = vpop.f32.mrf.mxu0
    %2663 = vmatprep.mubr.f32.mxu0 0.0
    %v2664 = vand.u32 %v2396, 4294901760
    %v2665 = vsub.f32 %v2396, %v2664
    %2666 = vmatmul.mubr.f32.gmra.mxu0 %v2665
    %v2667 = vpop.f32.mrf.mxu0
    %v2668 = vadd.f32 %v2581, %v2667
    %v2669 = vpop.f32.mrf.mxu0
    %2670 = vdwg.mxu0
    %2671 = vmatprep.subr.mxu0 0.0
    %2672 = vmatpush1.msra.mxu0 0.0
    %2673 = vmatprep.subr.mxu0 0.0
    %2674 = vmatpush1.msra.mxu0 0.0
    %2675 = vmatprep.subr.mxu0 0.0
    %2676 = vmatpush1.msra.mxu0 0.0
    %2677 = vmatprep.subr.mxu0 0.0
    %2678 = vmatpush1.msra.mxu0 0.0
    %2679 = vmatprep.subr.mxu0 0.0
    %2680 = vmatpush1.msra.mxu0 0.0
    %2681 = vmatprep.subr.mxu0 0.0
    %2682 = vmatpush1.msra.mxu0 0.0
    %2683 = vmatprep.subr.mxu0 0.0
    %2684 = vmatpush1.msra.mxu0 0.0
    %2685 = vmatprep.subr.mxu0 0.0
    %2686 = vmatpush1.msra.mxu0 0.0
    %2687 = vmatprep.subr.mxu0 0.0
    %2688 = vmatpush1.msra.mxu0 0.0
    %2689 = vmatprep.subr.mxu0 0.0
    %2690 = vmatpush1.msra.mxu0 0.0
    %2691 = vmatprep.subr.mxu0 0.0
    %2692 = vmatpush1.msra.mxu0 0.0
    %2693 = vmatprep.subr.mxu0 0.0
    %2694 = vmatpush1.msra.mxu0 0.0
    %2695 = vmatprep.subr.mxu0 0.0
    %v2696 = vand.u32 %v2389, 4294901760
    %2697 = vmatpush1.msra.mxu0 %v2696
    %2698 = vmatprep.subr.mxu0 0.0
    %v2699 = vand.u32 %v2388, 4294901760
    %2700 = vmatpush1.msra.mxu0 %v2699
    %2701 = vmatprep.subr.mxu0 0.0
    %v2702 = vand.u32 %v2387, 4294901760
    %2703 = vmatpush1.msra.mxu0 %v2702
    %2704 = vmatprep.subr.mxu0 0.0
    %v2705 = vand.u32 %v2386, 4294901760
    %2706 = vmatpush1.msra.mxu0 %v2705
    %2707 = vmatprep.subr.mxu0 0.0
    %2708 = vmatpush2.msra.mxu0 0.0
    %2709 = vmatprep.subr.mxu0 0.0
    %2710 = vmatpush2.msra.mxu0 0.0
    %2711 = vmatprep.subr.mxu0 0.0
    %2712 = vmatpush2.msra.mxu0 0.0
    %2713 = vmatprep.subr.mxu0 0.0
    %2714 = vmatpush2.msra.mxu0 0.0
    %2715 = vmatprep.subr.mxu0 0.0
    %2716 = vmatpush2.msra.mxu0 0.0
    %2717 = vmatprep.subr.mxu0 0.0
    %2718 = vmatpush2.msra.mxu0 0.0
    %2719 = vmatprep.subr.mxu0 0.0
    %2720 = vmatpush2.msra.mxu0 0.0
    %2721 = vmatprep.subr.mxu0 0.0
    %2722 = vmatpush2.msra.mxu0 0.0
    %2723 = vmatprep.subr.mxu0 0.0
    %2724 = vmatpush2.msra.mxu0 0.0
    %2725 = vmatprep.subr.mxu0 0.0
    %2726 = vmatpush2.msra.mxu0 0.0
    %2727 = vmatprep.subr.mxu0 0.0
    %2728 = vmatpush2.msra.mxu0 0.0
    %2729 = vmatprep.subr.mxu0 0.0
    %2730 = vmatpush2.msra.mxu0 0.0
    %2731 = vmatprep.subr.mxu0 0.0
    %2732 = vmatpush2.msra.mxu0 0.0
    %2733 = vmatprep.subr.mxu0 0.0
    %2734 = vmatpush2.msra.mxu0 0.0
    %2735 = vmatprep.subr.mxu0 0.0
    %2736 = vmatpush2.msra.mxu0 0.0
    %2737 = vmatprep.subr.mxu0 0.0
    %2738 = vmatpush2.msra.mxu0 0.0
    %2739 = vmatprep.mubr.f32.mxu0 0.0
    %v2740 = vand.u32 %v2393, 4294901760
    %v2741 = vsub.f32 %v2393, %v2740
    %v2742 = vand.u32 %v2741, 4294901760
    %2743 = vmatmul.mubr.f32.gmra.mxu0 %v2742
    %v2744 = vpop.f32.mrf.mxu0
    %v2745 = vadd.f32 %v2661, %v2744
    %v2746 = vpop.f32.mrf.mxu0
    %2747 = vmatprep.mubr.f32.mxu0 0.0
    %v2748 = vand.u32 %v2396, 4294901760
    %v2749 = vsub.f32 %v2396, %v2748
    %v2750 = vand.u32 %v2749, 4294901760
    %2751 = vmatmul.mubr.f32.gmra.mxu0 %v2750
    %v2752 = vpop.f32.mrf.mxu0
    %v2753 = vadd.f32 %v2668, %v2752
    %v2754 = vpop.f32.mrf.mxu0
    %2755 = vdwg.mxu0
    %2756 = vmatprep.subr.mxu0 0.0
    %2757 = vmatpush1.msra.mxu0 0.0
    %2758 = vmatprep.subr.mxu0 0.0
    %2759 = vmatpush1.msra.mxu0 0.0
    %2760 = vmatprep.subr.mxu0 0.0
    %2761 = vmatpush1.msra.mxu0 0.0
    %2762 = vmatprep.subr.mxu0 0.0
    %2763 = vmatpush1.msra.mxu0 0.0
    %2764 = vmatprep.subr.mxu0 0.0
    %2765 = vmatpush1.msra.mxu0 0.0
    %2766 = vmatprep.subr.mxu0 0.0
    %2767 = vmatpush1.msra.mxu0 0.0
    %2768 = vmatprep.subr.mxu0 0.0
    %2769 = vmatpush1.msra.mxu0 0.0
    %2770 = vmatprep.subr.mxu0 0.0
    %2771 = vmatpush1.msra.mxu0 0.0
    %2772 = vmatprep.subr.mxu0 0.0
    %2773 = vmatpush1.msra.mxu0 0.0
    %2774 = vmatprep.subr.mxu0 0.0
    %2775 = vmatpush1.msra.mxu0 0.0
    %2776 = vmatprep.subr.mxu0 0.0
    %2777 = vmatpush1.msra.mxu0 0.0
    %2778 = vmatprep.subr.mxu0 0.0
    %2779 = vmatpush1.msra.mxu0 0.0
    %2780 = vmatprep.subr.mxu0 0.0
    %v2781 = vand.u32 %v2389, 4294901760
    %v2782 = vsub.f32 %v2389, %v2781
    %v2783 = vand.u32 %v2782, 4294901760
    %2784 = vmatpush1.msra.mxu0 %v2783
    %2785 = vmatprep.subr.mxu0 0.0
    %v2786 = vand.u32 %v2388, 4294901760
    %v2787 = vsub.f32 %v2388, %v2786
    %v2788 = vand.u32 %v2787, 4294901760
    %2789 = vmatpush1.msra.mxu0 %v2788
    %2790 = vmatprep.subr.mxu0 0.0
    %v2791 = vand.u32 %v2387, 4294901760
    %v2792 = vsub.f32 %v2387, %v2791
    %v2793 = vand.u32 %v2792, 4294901760
    %2794 = vmatpush1.msra.mxu0 %v2793
    %2795 = vmatprep.subr.mxu0 0.0
    %v2796 = vand.u32 %v2386, 4294901760
    %v2797 = vsub.f32 %v2386, %v2796
    %v2798 = vand.u32 %v2797, 4294901760
    %2799 = vmatpush1.msra.mxu0 %v2798
    %2800 = vmatprep.subr.mxu0 0.0
    %2801 = vmatpush2.msra.mxu0 0.0
    %2802 = vmatprep.subr.mxu0 0.0
    %2803 = vmatpush2.msra.mxu0 0.0
    %2804 = vmatprep.subr.mxu0 0.0
    %2805 = vmatpush2.msra.mxu0 0.0
    %2806 = vmatprep.subr.mxu0 0.0
    %2807 = vmatpush2.msra.mxu0 0.0
    %2808 = vmatprep.subr.mxu0 0.0
    %2809 = vmatpush2.msra.mxu0 0.0
    %2810 = vmatprep.subr.mxu0 0.0
    %2811 = vmatpush2.msra.mxu0 0.0
    %2812 = vmatprep.subr.mxu0 0.0
    %2813 = vmatpush2.msra.mxu0 0.0
    %2814 = vmatprep.subr.mxu0 0.0
    %2815 = vmatpush2.msra.mxu0 0.0
    %2816 = vmatprep.subr.mxu0 0.0
    %2817 = vmatpush2.msra.mxu0 0.0
    %2818 = vmatprep.subr.mxu0 0.0
    %2819 = vmatpush2.msra.mxu0 0.0
    %2820 = vmatprep.subr.mxu0 0.0
    %2821 = vmatpush2.msra.mxu0 0.0
    %2822 = vmatprep.subr.mxu0 0.0
    %2823 = vmatpush2.msra.mxu0 0.0
    %2824 = vmatprep.subr.mxu0 0.0
    %2825 = vmatpush2.msra.mxu0 0.0
    %2826 = vmatprep.subr.mxu0 0.0
    %2827 = vmatpush2.msra.mxu0 0.0
    %2828 = vmatprep.subr.mxu0 0.0
    %2829 = vmatpush2.msra.mxu0 0.0
    %2830 = vmatprep.subr.mxu0 0.0
    %2831 = vmatpush2.msra.mxu0 0.0
    %2832 = vmatprep.mubr.f32.mxu0 0.0
    %v2833 = vand.u32 %v2393, 4294901760
    %2834 = vmatmul.mubr.f32.gmra.mxu0 %v2833
    %v2835 = vpop.f32.mrf.mxu0
    %v2836 = vadd.f32 %v2745, %v2835
    %v2837 = vpop.f32.mrf.mxu0
    %2838 = vmatprep.mubr.f32.mxu0 0.0
    %v2839 = vand.u32 %v2396, 4294901760
    %2840 = vmatmul.mubr.f32.gmra.mxu0 %v2839
    %v2841 = vpop.f32.mrf.mxu0
    %v2842 = vadd.f32 %v2753, %v2841
    %v2843 = vpop.f32.mrf.mxu0
    %2844 = vdwg.mxu0
    %2845 = vmatprep.subr.mxu0 0.0
    %2846 = vmatpush1.msra.mxu0 0.0
    %2847 = vmatprep.subr.mxu0 0.0
    %2848 = vmatpush1.msra.mxu0 0.0
    %2849 = vmatprep.subr.mxu0 0.0
    %2850 = vmatpush1.msra.mxu0 0.0
    %2851 = vmatprep.subr.mxu0 0.0
    %2852 = vmatpush1.msra.mxu0 0.0
    %2853 = vmatprep.subr.mxu0 0.0
    %2854 = vmatpush1.msra.mxu0 0.0
    %2855 = vmatprep.subr.mxu0 0.0
    %2856 = vmatpush1.msra.mxu0 0.0
    %2857 = vmatprep.subr.mxu0 0.0
    %2858 = vmatpush1.msra.mxu0 0.0
    %2859 = vmatprep.subr.mxu0 0.0
    %2860 = vmatpush1.msra.mxu0 0.0
    %2861 = vmatprep.subr.mxu0 0.0
    %2862 = vmatpush1.msra.mxu0 0.0
    %2863 = vmatprep.subr.mxu0 0.0
    %2864 = vmatpush1.msra.mxu0 0.0
    %2865 = vmatprep.subr.mxu0 0.0
    %2866 = vmatpush1.msra.mxu0 0.0
    %2867 = vmatprep.subr.mxu0 0.0
    %2868 = vmatpush1.msra.mxu0 0.0
    %2869 = vmatprep.subr.mxu0 0.0
    %v2870 = vand.u32 %v2389, 4294901760
    %2871 = vmatpush1.msra.mxu0 %v2870
    %2872 = vmatprep.subr.mxu0 0.0
    %v2873 = vand.u32 %v2388, 4294901760
    %2874 = vmatpush1.msra.mxu0 %v2873
    %2875 = vmatprep.subr.mxu0 0.0
    %v2876 = vand.u32 %v2387, 4294901760
    %2877 = vmatpush1.msra.mxu0 %v2876
    %2878 = vmatprep.subr.mxu0 0.0
    %v2879 = vand.u32 %v2386, 4294901760
    %2880 = vmatpush1.msra.mxu0 %v2879
    %2881 = vmatprep.subr.mxu0 0.0
    %2882 = vmatpush2.msra.mxu0 0.0
    %2883 = vmatprep.subr.mxu0 0.0
    %2884 = vmatpush2.msra.mxu0 0.0
    %2885 = vmatprep.subr.mxu0 0.0
    %2886 = vmatpush2.msra.mxu0 0.0
    %2887 = vmatprep.subr.mxu0 0.0
    %2888 = vmatpush2.msra.mxu0 0.0
    %2889 = vmatprep.subr.mxu0 0.0
    %2890 = vmatpush2.msra.mxu0 0.0
    %2891 = vmatprep.subr.mxu0 0.0
    %2892 = vmatpush2.msra.mxu0 0.0
    %2893 = vmatprep.subr.mxu0 0.0
    %2894 = vmatpush2.msra.mxu0 0.0
    %2895 = vmatprep.subr.mxu0 0.0
    %2896 = vmatpush2.msra.mxu0 0.0
    %2897 = vmatprep.subr.mxu0 0.0
    %2898 = vmatpush2.msra.mxu0 0.0
    %2899 = vmatprep.subr.mxu0 0.0
    %2900 = vmatpush2.msra.mxu0 0.0
    %2901 = vmatprep.subr.mxu0 0.0
    %2902 = vmatpush2.msra.mxu0 0.0
    %2903 = vmatprep.subr.mxu0 0.0
    %2904 = vmatpush2.msra.mxu0 0.0
    %2905 = vmatprep.subr.mxu0 0.0
    %2906 = vmatpush2.msra.mxu0 0.0
    %2907 = vmatprep.subr.mxu0 0.0
    %2908 = vmatpush2.msra.mxu0 0.0
    %2909 = vmatprep.subr.mxu0 0.0
    %2910 = vmatpush2.msra.mxu0 0.0
    %2911 = vmatprep.subr.mxu0 0.0
    %2912 = vmatpush2.msra.mxu0 0.0
    %2913 = vmatprep.mubr.f32.mxu0 0.0
    %v2914 = vand.u32 %v2393, 4294901760
    %2915 = vmatmul.mubr.f32.gmra.mxu0 %v2914
    %v2916 = vpop.f32.mrf.mxu0
    %v2917 = vadd.f32 %v2836, %v2916
    %v2918 = vpop.f32.mrf.mxu0
    %2919 = vmatprep.mubr.f32.mxu0 0.0
    %v2920 = vand.u32 %v2396, 4294901760
    %2921 = vmatmul.mubr.f32.gmra.mxu0 %v2920
    %v2922 = vpop.f32.mrf.mxu0
    %v2923 = vadd.f32 %v2842, %v2922
    %v2924 = vpop.f32.mrf.mxu0
    %2925 = vdwg.mxu0
    %v2927 = vrot.slane %v2917, 2
    %2928 = vrot.lane.b32.xlu0 %v2927, 32
    %v2929 = vpop.permute.xlu0 %2928
    %v2931 = vrot.slane %v2917, 4
    %2932 = vrot.lane.b32.xlu0 %v2931, 64
    %v2933 = vpop.permute.xlu0 %2932
    %v2935 = vrot.slane %v2917, 6
    %2936 = vrot.lane.b32.xlu0 %v2935, 96
    %v2937 = vpop.permute.xlu0 %2936
    %v2940 = vrot.slane %v2923, 2
    %2941 = vrot.lane.b32.xlu0 %v2940, 32
    %v2942 = vpop.permute.xlu0 %2941
    %v2944 = vrot.slane %v2923, 4
    %2945 = vrot.lane.b32.xlu0 %v2944, 64
    %v2946 = vpop.permute.xlu0 %2945
    %v2948 = vrot.slane %v2923, 6
    %2949 = vrot.lane.b32.xlu0 %v2948, 96
    %v2950 = vpop.permute.xlu0 %2949
    %v2952 = vsel %vm1875, %v2917, %v2929
    %vm2953 = vcmask 523264
    %v2954 = vsel %vm2953, %v2952, %v2933
    %vm2955 = vcmask 785408
    %v2956 = vsel %vm2955, %v2954, %v2937
    %v2957 = vsel %vm1875, %v2923, %v2942
    %v2958 = vsel %vm2953, %v2957, %v2946
    %v2959 = vsel %vm2955, %v2958, %v2950
    %v2960 = vld [vmem:[%s9] sm:$0xff]
    %v2961 = vld [vmem:[%s9 + $0x8] sm:$0xff]
    %v2962 = vld [vmem:[%s9 + $0x10] sm:$0xff]
    %v2963 = vld [vmem:[%s9 + $0x18] sm:$0xff]
    %v2964 = vld [vmem:[%s9 + $0x20] sm:$0xff]
    %v2965 = vld [vmem:[%s9 + $0x28] sm:$0xff]
    %v2966 = vld [vmem:[%s9 + $0x30] sm:$0xff]
    %v2967 = vld [vmem:[%s9 + $0x38] sm:$0xff]
    %v2968 = vld [vmem:[%s9 + $0x40] sm:$0xff]
    %v2969 = vld [vmem:[%s9 + $0x48] sm:$0xff]
    %v2970 = vld [vmem:[%s9 + $0x50] sm:$0xff]
    %v2971 = vld [vmem:[%s9 + $0x58] sm:$0xff]
    %v2972 = vld [vmem:[%s9 + $0x60] sm:$0xff]
    %v2973 = vld [vmem:[%s9 + $0x68] sm:$0xff]
    %v2974 = vld [vmem:[%s9 + $0x70] sm:$0xff]
    %v2975 = vld [vmem:[%s9 + $0x78] sm:$0xff]
    %v2976 = vld [vmem:[%s9 + $0x80] sm:$0xff]
    %v2977 = vld [vmem:[%s9 + $0x88] sm:$0xff]
    %v2978 = vld [vmem:[%s9 + $0x90] sm:$0xff]
    %v2979 = vld [vmem:[%s9 + $0x98] sm:$0xff]
    %v2980 = vld [vmem:[%s9 + $0xa0] sm:$0xff]
    %v2981 = vld [vmem:[%s9 + $0xa8] sm:$0xff]
    %v2982 = vld [vmem:[%s9 + $0xb0] sm:$0xff]
    %v2983 = vld [vmem:[%s9 + $0xb8] sm:$0xff]
    %v2984 = vld [vmem:[%s9 + $0xc0] sm:$0xff]
    %v2985 = vld [vmem:[%s9 + $0xc8] sm:$0xff]
    %v2986 = vld [vmem:[%s9 + $0xd0] sm:$0xff]
    %v2987 = vld [vmem:[%s9 + $0xd8] sm:$0xff]
    %v2988 = vld [vmem:[%s9 + $0xe0] sm:$0xff]
    %v2989 = vld [vmem:[%s9 + $0xe8] sm:$0xff]
    %v2990 = vld [vmem:[%s9 + $0xf0] sm:$0xff]
    %v2991 = vld [vmem:[%s9 + $0xf8] sm:$0xff]
    %v2992 = vld [vmem:[%s10] sm:$0x1]
    %v2994 = vlaneseq
    %v2995 = vshrl.u32 %v2994, 7
    %v2996 = vsub.s32 0, %v2995
    %v2997 = vrot.slane %v2992, %v2996
    %2999 = vmatprep.subr.mxu0 0.0
    %v3000 = vand.u32 %v2975, 4294901760
    %3001 = vmatpush1.msra.mxu0 %v3000
    %3002 = vmatprep.subr.mxu0 0.0
    %v3003 = vand.u32 %v2974, 4294901760
    %3004 = vmatpush1.msra.mxu0 %v3003
    %3005 = vmatprep.subr.mxu0 0.0
    %v3006 = vand.u32 %v2973, 4294901760
    %3007 = vmatpush1.msra.mxu0 %v3006
    %3008 = vmatprep.subr.mxu0 0.0
    %v3009 = vand.u32 %v2972, 4294901760
    %3010 = vmatpush1.msra.mxu0 %v3009
    %3011 = vmatprep.subr.mxu0 0.0
    %v3012 = vand.u32 %v2971, 4294901760
    %3013 = vmatpush1.msra.mxu0 %v3012
    %3014 = vmatprep.subr.mxu0 0.0
    %v3015 = vand.u32 %v2970, 4294901760
    %3016 = vmatpush1.msra.mxu0 %v3015
    %3017 = vmatprep.subr.mxu0 0.0
    %v3018 = vand.u32 %v2969, 4294901760
    %3019 = vmatpush1.msra.mxu0 %v3018
    %3020 = vmatprep.subr.mxu0 0.0
    %v3021 = vand.u32 %v2968, 4294901760
    %3022 = vmatpush1.msra.mxu0 %v3021
    %3023 = vmatprep.subr.mxu0 0.0
    %v3024 = vand.u32 %v2967, 4294901760
    %3025 = vmatpush1.msra.mxu0 %v3024
    %3026 = vmatprep.subr.mxu0 0.0
    %v3027 = vand.u32 %v2966, 4294901760
    %3028 = vmatpush1.msra.mxu0 %v3027
    %3029 = vmatprep.subr.mxu0 0.0
    %v3030 = vand.u32 %v2965, 4294901760
    %3031 = vmatpush1.msra.mxu0 %v3030
    %3032 = vmatprep.subr.mxu0 0.0
    %v3033 = vand.u32 %v2964, 4294901760
    %3034 = vmatpush1.msra.mxu0 %v3033
    %3035 = vmatprep.subr.mxu0 0.0
    %v3036 = vand.u32 %v2963, 4294901760
    %3037 = vmatpush1.msra.mxu0 %v3036
    %3038 = vmatprep.subr.mxu0 0.0
    %v3039 = vand.u32 %v2962, 4294901760
    %3040 = vmatpush1.msra.mxu0 %v3039
    %3041 = vmatprep.subr.mxu0 0.0
    %v3042 = vand.u32 %v2961, 4294901760
    %3043 = vmatpush1.msra.mxu0 %v3042
    %3044 = vmatprep.subr.mxu0 0.0
    %v3045 = vand.u32 %v2960, 4294901760
    %3046 = vmatpush1.msra.mxu0 %v3045
    %3047 = vmatprep.subr.mxu0 0.0
    %v3048 = vand.u32 %v2991, 4294901760
    %3049 = vmatpush2.msra.mxu0 %v3048
    %3050 = vmatprep.subr.mxu0 0.0
    %v3051 = vand.u32 %v2990, 4294901760
    %3052 = vmatpush2.msra.mxu0 %v3051
    %3053 = vmatprep.subr.mxu0 0.0
    %v3054 = vand.u32 %v2989, 4294901760
    %3055 = vmatpush2.msra.mxu0 %v3054
    %3056 = vmatprep.subr.mxu0 0.0
    %v3057 = vand.u32 %v2988, 4294901760
    %3058 = vmatpush2.msra.mxu0 %v3057
    %3059 = vmatprep.subr.mxu0 0.0
    %v3060 = vand.u32 %v2987, 4294901760
    %3061 = vmatpush2.msra.mxu0 %v3060
    %3062 = vmatprep.subr.mxu0 0.0
    %v3063 = vand.u32 %v2986, 4294901760
    %3064 = vmatpush2.msra.mxu0 %v3063
    %3065 = vmatprep.subr.mxu0 0.0
    %v3066 = vand.u32 %v2985, 4294901760
    %3067 = vmatpush2.msra.mxu0 %v3066
    %3068 = vmatprep.subr.mxu0 0.0
    %v3069 = vand.u32 %v2984, 4294901760
    %3070 = vmatpush2.msra.mxu0 %v3069
    %3071 = vmatprep.subr.mxu0 0.0
    %v3072 = vand.u32 %v2983, 4294901760
    %3073 = vmatpush2.msra.mxu0 %v3072
    %3074 = vmatprep.subr.mxu0 0.0
    %v3075 = vand.u32 %v2982, 4294901760
    %3076 = vmatpush2.msra.mxu0 %v3075
    %3077 = vmatprep.subr.mxu0 0.0
    %v3078 = vand.u32 %v2981, 4294901760
    %3079 = vmatpush2.msra.mxu0 %v3078
    %3080 = vmatprep.subr.mxu0 0.0
    %v3081 = vand.u32 %v2980, 4294901760
    %3082 = vmatpush2.msra.mxu0 %v3081
    %3083 = vmatprep.subr.mxu0 0.0
    %v3084 = vand.u32 %v2979, 4294901760
    %3085 = vmatpush2.msra.mxu0 %v3084
    %3086 = vmatprep.subr.mxu0 0.0
    %v3087 = vand.u32 %v2978, 4294901760
    %3088 = vmatpush2.msra.mxu0 %v3087
    %3089 = vmatprep.subr.mxu0 0.0
    %v3090 = vand.u32 %v2977, 4294901760
    %3091 = vmatpush2.msra.mxu0 %v3090
    %3092 = vmatprep.subr.mxu0 0.0
    %v3093 = vand.u32 %v2976, 4294901760
    %3094 = vmatpush2.msra.mxu0 %v3093
    %v3095 = vand.u32 %v2959, 4294901760
    %v3096 = vsub.f32 %v2959, %v3095
    %v3097 = vand.u32 %v3096, 4294901760
    %v3098 = vsub.f32 %v3096, %v3097
    %v3099 = vand.u32 %v3098, 4294901760
    %3100 = vmatprep.mubr.f32.mxu0 %v3099
    %v3101 = vand.u32 %v2956, 4294901760
    %v3102 = vsub.f32 %v2956, %v3101
    %v3103 = vand.u32 %v3102, 4294901760
    %v3104 = vsub.f32 %v3102, %v3103
    %v3105 = vand.u32 %v3104, 4294901760
    %3106 = vmatmul.mubr.f32.gmra.mxu0 %v3105
    %v3107 = vpop.f32.mrf.mxu0
    %v3108 = vadd.f32 %v2997, %v3107
    %v3109 = vpop.f32.mrf.mxu0
    %3110 = vdwg.mxu0
    %3111 = vmatprep.subr.mxu0 0.0
    %v3112 = vand.u32 %v2975, 4294901760
    %v3113 = vsub.f32 %v2975, %v3112
    %v3114 = vand.u32 %v3113, 4294901760
    %v3115 = vsub.f32 %v3113, %v3114
    %v3116 = vand.u32 %v3115, 4294901760
    %3117 = vmatpush1.msra.mxu0 %v3116
    %3118 = vmatprep.subr.mxu0 0.0
    %v3119 = vand.u32 %v2974, 4294901760
    %v3120 = vsub.f32 %v2974, %v3119
    %v3121 = vand.u32 %v3120, 4294901760
    %v3122 = vsub.f32 %v3120, %v3121
    %v3123 = vand.u32 %v3122, 4294901760
    %3124 = vmatpush1.msra.mxu0 %v3123
    %3125 = vmatprep.subr.mxu0 0.0
    %v3126 = vand.u32 %v2973, 4294901760
    %v3127 = vsub.f32 %v2973, %v3126
    %v3128 = vand.u32 %v3127, 4294901760
    %v3129 = vsub.f32 %v3127, %v3128
    %v3130 = vand.u32 %v3129, 4294901760
    %3131 = vmatpush1.msra.mxu0 %v3130
    %3132 = vmatprep.subr.mxu0 0.0
    %v3133 = vand.u32 %v2972, 4294901760
    %v3134 = vsub.f32 %v2972, %v3133
    %v3135 = vand.u32 %v3134, 4294901760
    %v3136 = vsub.f32 %v3134, %v3135
    %v3137 = vand.u32 %v3136, 4294901760
    %3138 = vmatpush1.msra.mxu0 %v3137
    %3139 = vmatprep.subr.mxu0 0.0
    %v3140 = vand.u32 %v2971, 4294901760
    %v3141 = vsub.f32 %v2971, %v3140
    %v3142 = vand.u32 %v3141, 4294901760
    %v3143 = vsub.f32 %v3141, %v3142
    %v3144 = vand.u32 %v3143, 4294901760
    %3145 = vmatpush1.msra.mxu0 %v3144
    %3146 = vmatprep.subr.mxu0 0.0
    %v3147 = vand.u32 %v2970, 4294901760
    %v3148 = vsub.f32 %v2970, %v3147
    %v3149 = vand.u32 %v3148, 4294901760
    %v3150 = vsub.f32 %v3148, %v3149
    %v3151 = vand.u32 %v3150, 4294901760
    %3152 = vmatpush1.msra.mxu0 %v3151
    %3153 = vmatprep.subr.mxu0 0.0
    %v3154 = vand.u32 %v2969, 4294901760
    %v3155 = vsub.f32 %v2969, %v3154
    %v3156 = vand.u32 %v3155, 4294901760
    %v3157 = vsub.f32 %v3155, %v3156
    %v3158 = vand.u32 %v3157, 4294901760
    %3159 = vmatpush1.msra.mxu0 %v3158
    %3160 = vmatprep.subr.mxu0 0.0
    %v3161 = vand.u32 %v2968, 4294901760
    %v3162 = vsub.f32 %v2968, %v3161
    %v3163 = vand.u32 %v3162, 4294901760
    %v3164 = vsub.f32 %v3162, %v3163
    %v3165 = vand.u32 %v3164, 4294901760
    %3166 = vmatpush1.msra.mxu0 %v3165
    %3167 = vmatprep.subr.mxu0 0.0
    %v3168 = vand.u32 %v2967, 4294901760
    %v3169 = vsub.f32 %v2967, %v3168
    %v3170 = vand.u32 %v3169, 4294901760
    %v3171 = vsub.f32 %v3169, %v3170
    %v3172 = vand.u32 %v3171, 4294901760
    %3173 = vmatpush1.msra.mxu0 %v3172
    %3174 = vmatprep.subr.mxu0 0.0
    %v3175 = vand.u32 %v2966, 4294901760
    %v3176 = vsub.f32 %v2966, %v3175
    %v3177 = vand.u32 %v3176, 4294901760
    %v3178 = vsub.f32 %v3176, %v3177
    %v3179 = vand.u32 %v3178, 4294901760
    %3180 = vmatpush1.msra.mxu0 %v3179
    %3181 = vmatprep.subr.mxu0 0.0
    %v3182 = vand.u32 %v2965, 4294901760
    %v3183 = vsub.f32 %v2965, %v3182
    %v3184 = vand.u32 %v3183, 4294901760
    %v3185 = vsub.f32 %v3183, %v3184
    %v3186 = vand.u32 %v3185, 4294901760
    %3187 = vmatpush1.msra.mxu0 %v3186
    %3188 = vmatprep.subr.mxu0 0.0
    %v3189 = vand.u32 %v2964, 4294901760
    %v3190 = vsub.f32 %v2964, %v3189
    %v3191 = vand.u32 %v3190, 4294901760
    %v3192 = vsub.f32 %v3190, %v3191
    %v3193 = vand.u32 %v3192, 4294901760
    %3194 = vmatpush1.msra.mxu0 %v3193
    %3195 = vmatprep.subr.mxu0 0.0
    %v3196 = vand.u32 %v2963, 4294901760
    %v3197 = vsub.f32 %v2963, %v3196
    %v3198 = vand.u32 %v3197, 4294901760
    %v3199 = vsub.f32 %v3197, %v3198
    %v3200 = vand.u32 %v3199, 4294901760
    %3201 = vmatpush1.msra.mxu0 %v3200
    %3202 = vmatprep.subr.mxu0 0.0
    %v3203 = vand.u32 %v2962, 4294901760
    %v3204 = vsub.f32 %v2962, %v3203
    %v3205 = vand.u32 %v3204, 4294901760
    %v3206 = vsub.f32 %v3204, %v3205
    %v3207 = vand.u32 %v3206, 4294901760
    %3208 = vmatpush1.msra.mxu0 %v3207
    %3209 = vmatprep.subr.mxu0 0.0
    %v3210 = vand.u32 %v2961, 4294901760
    %v3211 = vsub.f32 %v2961, %v3210
    %v3212 = vand.u32 %v3211, 4294901760
    %v3213 = vsub.f32 %v3211, %v3212
    %v3214 = vand.u32 %v3213, 4294901760
    %3215 = vmatpush1.msra.mxu0 %v3214
    %3216 = vmatprep.subr.mxu0 0.0
    %v3217 = vand.u32 %v2960, 4294901760
    %v3218 = vsub.f32 %v2960, %v3217
    %v3219 = vand.u32 %v3218, 4294901760
    %v3220 = vsub.f32 %v3218, %v3219
    %v3221 = vand.u32 %v3220, 4294901760
    %3222 = vmatpush1.msra.mxu0 %v3221
    %3223 = vmatprep.subr.mxu0 0.0
    %v3224 = vand.u32 %v2991, 4294901760
    %v3225 = vsub.f32 %v2991, %v3224
    %v3226 = vand.u32 %v3225, 4294901760
    %v3227 = vsub.f32 %v3225, %v3226
    %v3228 = vand.u32 %v3227, 4294901760
    %3229 = vmatpush2.msra.mxu0 %v3228
    %3230 = vmatprep.subr.mxu0 0.0
    %v3231 = vand.u32 %v2990, 4294901760
    %v3232 = vsub.f32 %v2990, %v3231
    %v3233 = vand.u32 %v3232, 4294901760
    %v3234 = vsub.f32 %v3232, %v3233
    %v3235 = vand.u32 %v3234, 4294901760
    %3236 = vmatpush2.msra.mxu0 %v3235
    %3237 = vmatprep.subr.mxu0 0.0
    %v3238 = vand.u32 %v2989, 4294901760
    %v3239 = vsub.f32 %v2989, %v3238
    %v3240 = vand.u32 %v3239, 4294901760
    %v3241 = vsub.f32 %v3239, %v3240
    %v3242 = vand.u32 %v3241, 4294901760
    %3243 = vmatpush2.msra.mxu0 %v3242
    %3244 = vmatprep.subr.mxu0 0.0
    %v3245 = vand.u32 %v2988, 4294901760
    %v3246 = vsub.f32 %v2988, %v3245
    %v3247 = vand.u32 %v3246, 4294901760
    %v3248 = vsub.f32 %v3246, %v3247
    %v3249 = vand.u32 %v3248, 4294901760
    %3250 = vmatpush2.msra.mxu0 %v3249
    %3251 = vmatprep.subr.mxu0 0.0
    %v3252 = vand.u32 %v2987, 4294901760
    %v3253 = vsub.f32 %v2987, %v3252
    %v3254 = vand.u32 %v3253, 4294901760
    %v3255 = vsub.f32 %v3253, %v3254
    %v3256 = vand.u32 %v3255, 4294901760
    %3257 = vmatpush2.msra.mxu0 %v3256
    %3258 = vmatprep.subr.mxu0 0.0
    %v3259 = vand.u32 %v2986, 4294901760
    %v3260 = vsub.f32 %v2986, %v3259
    %v3261 = vand.u32 %v3260, 4294901760
    %v3262 = vsub.f32 %v3260, %v3261
    %v3263 = vand.u32 %v3262, 4294901760
    %3264 = vmatpush2.msra.mxu0 %v3263
    %3265 = vmatprep.subr.mxu0 0.0
    %v3266 = vand.u32 %v2985, 4294901760
    %v3267 = vsub.f32 %v2985, %v3266
    %v3268 = vand.u32 %v3267, 4294901760
    %v3269 = vsub.f32 %v3267, %v3268
    %v3270 = vand.u32 %v3269, 4294901760
    %3271 = vmatpush2.msra.mxu0 %v3270
    %3272 = vmatprep.subr.mxu0 0.0
    %v3273 = vand.u32 %v2984, 4294901760
    %v3274 = vsub.f32 %v2984, %v3273
    %v3275 = vand.u32 %v3274, 4294901760
    %v3276 = vsub.f32 %v3274, %v3275
    %v3277 = vand.u32 %v3276, 4294901760
    %3278 = vmatpush2.msra.mxu0 %v3277
    %3279 = vmatprep.subr.mxu0 0.0
    %v3280 = vand.u32 %v2983, 4294901760
    %v3281 = vsub.f32 %v2983, %v3280
    %v3282 = vand.u32 %v3281, 4294901760
    %v3283 = vsub.f32 %v3281, %v3282
    %v3284 = vand.u32 %v3283, 4294901760
    %3285 = vmatpush2.msra.mxu0 %v3284
    %3286 = vmatprep.subr.mxu0 0.0
    %v3287 = vand.u32 %v2982, 4294901760
    %v3288 = vsub.f32 %v2982, %v3287
    %v3289 = vand.u32 %v3288, 4294901760
    %v3290 = vsub.f32 %v3288, %v3289
    %v3291 = vand.u32 %v3290, 4294901760
    %3292 = vmatpush2.msra.mxu0 %v3291
    %3293 = vmatprep.subr.mxu0 0.0
    %v3294 = vand.u32 %v2981, 4294901760
    %v3295 = vsub.f32 %v2981, %v3294
    %v3296 = vand.u32 %v3295, 4294901760
    %v3297 = vsub.f32 %v3295, %v3296
    %v3298 = vand.u32 %v3297, 4294901760
    %3299 = vmatpush2.msra.mxu0 %v3298
    %3300 = vmatprep.subr.mxu0 0.0
    %v3301 = vand.u32 %v2980, 4294901760
    %v3302 = vsub.f32 %v2980, %v3301
    %v3303 = vand.u32 %v3302, 4294901760
    %v3304 = vsub.f32 %v3302, %v3303
    %v3305 = vand.u32 %v3304, 4294901760
    %3306 = vmatpush2.msra.mxu0 %v3305
    %3307 = vmatprep.subr.mxu0 0.0
    %v3308 = vand.u32 %v2979, 4294901760
    %v3309 = vsub.f32 %v2979, %v3308
    %v3310 = vand.u32 %v3309, 4294901760
    %v3311 = vsub.f32 %v3309, %v3310
    %v3312 = vand.u32 %v3311, 4294901760
    %3313 = vmatpush2.msra.mxu0 %v3312
    %3314 = vmatprep.subr.mxu0 0.0
    %v3315 = vand.u32 %v2978, 4294901760
    %v3316 = vsub.f32 %v2978, %v3315
    %v3317 = vand.u32 %v3316, 4294901760
    %v3318 = vsub.f32 %v3316, %v3317
    %v3319 = vand.u32 %v3318, 4294901760
    %3320 = vmatpush2.msra.mxu0 %v3319
    %3321 = vmatprep.subr.mxu0 0.0
    %v3322 = vand.u32 %v2977, 4294901760
    %v3323 = vsub.f32 %v2977, %v3322
    %v3324 = vand.u32 %v3323, 4294901760
    %v3325 = vsub.f32 %v3323, %v3324
    %v3326 = vand.u32 %v3325, 4294901760
    %3327 = vmatpush2.msra.mxu0 %v3326
    %3328 = vmatprep.subr.mxu0 0.0
    %v3329 = vand.u32 %v2976, 4294901760
    %v3330 = vsub.f32 %v2976, %v3329
    %v3331 = vand.u32 %v3330, 4294901760
    %v3332 = vsub.f32 %v3330, %v3331
    %v3333 = vand.u32 %v3332, 4294901760
    %3334 = vmatpush2.msra.mxu0 %v3333
    %v3335 = vand.u32 %v2959, 4294901760
    %3336 = vmatprep.mubr.f32.mxu0 %v3335
    %v3337 = vand.u32 %v2956, 4294901760
    %3338 = vmatmul.mubr.f32.gmra.mxu0 %v3337
    %v3339 = vpop.f32.mrf.mxu0
    %v3340 = vadd.f32 %v3108, %v3339
    %v3341 = vpop.f32.mrf.mxu0
    %3342 = vdwg.mxu0
    %3343 = vmatprep.subr.mxu0 0.0
    %v3344 = vand.u32 %v2975, 4294901760
    %v3345 = vsub.f32 %v2975, %v3344
    %3346 = vmatpush1.msra.mxu0 %v3345
    %3347 = vmatprep.subr.mxu0 0.0
    %v3348 = vand.u32 %v2974, 4294901760
    %v3349 = vsub.f32 %v2974, %v3348
    %3350 = vmatpush1.msra.mxu0 %v3349
    %3351 = vmatprep.subr.mxu0 0.0
    %v3352 = vand.u32 %v2973, 4294901760
    %v3353 = vsub.f32 %v2973, %v3352
    %3354 = vmatpush1.msra.mxu0 %v3353
    %3355 = vmatprep.subr.mxu0 0.0
    %v3356 = vand.u32 %v2972, 4294901760
    %v3357 = vsub.f32 %v2972, %v3356
    %3358 = vmatpush1.msra.mxu0 %v3357
    %3359 = vmatprep.subr.mxu0 0.0
    %v3360 = vand.u32 %v2971, 4294901760
    %v3361 = vsub.f32 %v2971, %v3360
    %3362 = vmatpush1.msra.mxu0 %v3361
    %3363 = vmatprep.subr.mxu0 0.0
    %v3364 = vand.u32 %v2970, 4294901760
    %v3365 = vsub.f32 %v2970, %v3364
    %3366 = vmatpush1.msra.mxu0 %v3365
    %3367 = vmatprep.subr.mxu0 0.0
    %v3368 = vand.u32 %v2969, 4294901760
    %v3369 = vsub.f32 %v2969, %v3368
    %3370 = vmatpush1.msra.mxu0 %v3369
    %3371 = vmatprep.subr.mxu0 0.0
    %v3372 = vand.u32 %v2968, 4294901760
    %v3373 = vsub.f32 %v2968, %v3372
    %3374 = vmatpush1.msra.mxu0 %v3373
    %3375 = vmatprep.subr.mxu0 0.0
    %v3376 = vand.u32 %v2967, 4294901760
    %v3377 = vsub.f32 %v2967, %v3376
    %3378 = vmatpush1.msra.mxu0 %v3377
    %3379 = vmatprep.subr.mxu0 0.0
    %v3380 = vand.u32 %v2966, 4294901760
    %v3381 = vsub.f32 %v2966, %v3380
    %3382 = vmatpush1.msra.mxu0 %v3381
    %3383 = vmatprep.subr.mxu0 0.0
    %v3384 = vand.u32 %v2965, 4294901760
    %v3385 = vsub.f32 %v2965, %v3384
    %3386 = vmatpush1.msra.mxu0 %v3385
    %3387 = vmatprep.subr.mxu0 0.0
    %v3388 = vand.u32 %v2964, 4294901760
    %v3389 = vsub.f32 %v2964, %v3388
    %3390 = vmatpush1.msra.mxu0 %v3389
    %3391 = vmatprep.subr.mxu0 0.0
    %v3392 = vand.u32 %v2963, 4294901760
    %v3393 = vsub.f32 %v2963, %v3392
    %3394 = vmatpush1.msra.mxu0 %v3393
    %3395 = vmatprep.subr.mxu0 0.0
    %v3396 = vand.u32 %v2962, 4294901760
    %v3397 = vsub.f32 %v2962, %v3396
    %3398 = vmatpush1.msra.mxu0 %v3397
    %3399 = vmatprep.subr.mxu0 0.0
    %v3400 = vand.u32 %v2961, 4294901760
    %v3401 = vsub.f32 %v2961, %v3400
    %3402 = vmatpush1.msra.mxu0 %v3401
    %3403 = vmatprep.subr.mxu0 0.0
    %v3404 = vand.u32 %v2960, 4294901760
    %v3405 = vsub.f32 %v2960, %v3404
    %3406 = vmatpush1.msra.mxu0 %v3405
    %3407 = vmatprep.subr.mxu0 0.0
    %v3408 = vand.u32 %v2991, 4294901760
    %v3409 = vsub.f32 %v2991, %v3408
    %3410 = vmatpush2.msra.mxu0 %v3409
    %3411 = vmatprep.subr.mxu0 0.0
    %v3412 = vand.u32 %v2990, 4294901760
    %v3413 = vsub.f32 %v2990, %v3412
    %3414 = vmatpush2.msra.mxu0 %v3413
    %3415 = vmatprep.subr.mxu0 0.0
    %v3416 = vand.u32 %v2989, 4294901760
    %v3417 = vsub.f32 %v2989, %v3416
    %3418 = vmatpush2.msra.mxu0 %v3417
    %3419 = vmatprep.subr.mxu0 0.0
    %v3420 = vand.u32 %v2988, 4294901760
    %v3421 = vsub.f32 %v2988, %v3420
    %3422 = vmatpush2.msra.mxu0 %v3421
    %3423 = vmatprep.subr.mxu0 0.0
    %v3424 = vand.u32 %v2987, 4294901760
    %v3425 = vsub.f32 %v2987, %v3424
    %3426 = vmatpush2.msra.mxu0 %v3425
    %3427 = vmatprep.subr.mxu0 0.0
    %v3428 = vand.u32 %v2986, 4294901760
    %v3429 = vsub.f32 %v2986, %v3428
    %3430 = vmatpush2.msra.mxu0 %v3429
    %3431 = vmatprep.subr.mxu0 0.0
    %v3432 = vand.u32 %v2985, 4294901760
    %v3433 = vsub.f32 %v2985, %v3432
    %3434 = vmatpush2.msra.mxu0 %v3433
    %3435 = vmatprep.subr.mxu0 0.0
    %v3436 = vand.u32 %v2984, 4294901760
    %v3437 = vsub.f32 %v2984, %v3436
    %3438 = vmatpush2.msra.mxu0 %v3437
    %3439 = vmatprep.subr.mxu0 0.0
    %v3440 = vand.u32 %v2983, 4294901760
    %v3441 = vsub.f32 %v2983, %v3440
    %3442 = vmatpush2.msra.mxu0 %v3441
    %3443 = vmatprep.subr.mxu0 0.0
    %v3444 = vand.u32 %v2982, 4294901760
    %v3445 = vsub.f32 %v2982, %v3444
    %3446 = vmatpush2.msra.mxu0 %v3445
    %3447 = vmatprep.subr.mxu0 0.0
    %v3448 = vand.u32 %v2981, 4294901760
    %v3449 = vsub.f32 %v2981, %v3448
    %3450 = vmatpush2.msra.mxu0 %v3449
    %3451 = vmatprep.subr.mxu0 0.0
    %v3452 = vand.u32 %v2980, 4294901760
    %v3453 = vsub.f32 %v2980, %v3452
    %3454 = vmatpush2.msra.mxu0 %v3453
    %3455 = vmatprep.subr.mxu0 0.0
    %v3456 = vand.u32 %v2979, 4294901760
    %v3457 = vsub.f32 %v2979, %v3456
    %3458 = vmatpush2.msra.mxu0 %v3457
    %3459 = vmatprep.subr.mxu0 0.0
    %v3460 = vand.u32 %v2978, 4294901760
    %v3461 = vsub.f32 %v2978, %v3460
    %3462 = vmatpush2.msra.mxu0 %v3461
    %3463 = vmatprep.subr.mxu0 0.0
    %v3464 = vand.u32 %v2977, 4294901760
    %v3465 = vsub.f32 %v2977, %v3464
    %3466 = vmatpush2.msra.mxu0 %v3465
    %3467 = vmatprep.subr.mxu0 0.0
    %v3468 = vand.u32 %v2976, 4294901760
    %v3469 = vsub.f32 %v2976, %v3468
    %3470 = vmatpush2.msra.mxu0 %v3469
    %v3471 = vand.u32 %v2959, 4294901760
    %v3472 = vsub.f32 %v2959, %v3471
    %3473 = vmatprep.mubr.f32.mxu0 %v3472
    %v3474 = vand.u32 %v2956, 4294901760
    %v3475 = vsub.f32 %v2956, %v3474
    %3476 = vmatmul.mubr.f32.gmra.mxu0 %v3475
    %v3477 = vpop.f32.mrf.mxu0
    %v3478 = vadd.f32 %v3340, %v3477
    %v3479 = vpop.f32.mrf.mxu0
    %3480 = vdwg.mxu0
    %3481 = vmatprep.subr.mxu0 0.0
    %v3482 = vand.u32 %v2975, 4294901760
    %3483 = vmatpush1.msra.mxu0 %v3482
    %3484 = vmatprep.subr.mxu0 0.0
    %v3485 = vand.u32 %v2974, 4294901760
    %3486 = vmatpush1.msra.mxu0 %v3485
    %3487 = vmatprep.subr.mxu0 0.0
    %v3488 = vand.u32 %v2973, 4294901760
    %3489 = vmatpush1.msra.mxu0 %v3488
    %3490 = vmatprep.subr.mxu0 0.0
    %v3491 = vand.u32 %v2972, 4294901760
    %3492 = vmatpush1.msra.mxu0 %v3491
    %3493 = vmatprep.subr.mxu0 0.0
    %v3494 = vand.u32 %v2971, 4294901760
    %3495 = vmatpush1.msra.mxu0 %v3494
    %3496 = vmatprep.subr.mxu0 0.0
    %v3497 = vand.u32 %v2970, 4294901760
    %3498 = vmatpush1.msra.mxu0 %v3497
    %3499 = vmatprep.subr.mxu0 0.0
    %v3500 = vand.u32 %v2969, 4294901760
    %3501 = vmatpush1.msra.mxu0 %v3500
    %3502 = vmatprep.subr.mxu0 0.0
    %v3503 = vand.u32 %v2968, 4294901760
    %3504 = vmatpush1.msra.mxu0 %v3503
    %3505 = vmatprep.subr.mxu0 0.0
    %v3506 = vand.u32 %v2967, 4294901760
    %3507 = vmatpush1.msra.mxu0 %v3506
    %3508 = vmatprep.subr.mxu0 0.0
    %v3509 = vand.u32 %v2966, 4294901760
    %3510 = vmatpush1.msra.mxu0 %v3509
    %3511 = vmatprep.subr.mxu0 0.0
    %v3512 = vand.u32 %v2965, 4294901760
    %3513 = vmatpush1.msra.mxu0 %v3512
    %3514 = vmatprep.subr.mxu0 0.0
    %v3515 = vand.u32 %v2964, 4294901760
    %3516 = vmatpush1.msra.mxu0 %v3515
    %3517 = vmatprep.subr.mxu0 0.0
    %v3518 = vand.u32 %v2963, 4294901760
    %3519 = vmatpush1.msra.mxu0 %v3518
    %3520 = vmatprep.subr.mxu0 0.0
    %v3521 = vand.u32 %v2962, 4294901760
    %3522 = vmatpush1.msra.mxu0 %v3521
    %3523 = vmatprep.subr.mxu0 0.0
    %v3524 = vand.u32 %v2961, 4294901760
    %3525 = vmatpush1.msra.mxu0 %v3524
    %3526 = vmatprep.subr.mxu0 0.0
    %v3527 = vand.u32 %v2960, 4294901760
    %3528 = vmatpush1.msra.mxu0 %v3527
    %3529 = vmatprep.subr.mxu0 0.0
    %v3530 = vand.u32 %v2991, 4294901760
    %3531 = vmatpush2.msra.mxu0 %v3530
    %3532 = vmatprep.subr.mxu0 0.0
    %v3533 = vand.u32 %v2990, 4294901760
    %3534 = vmatpush2.msra.mxu0 %v3533
    %3535 = vmatprep.subr.mxu0 0.0
    %v3536 = vand.u32 %v2989, 4294901760
    %3537 = vmatpush2.msra.mxu0 %v3536
    %3538 = vmatprep.subr.mxu0 0.0
    %v3539 = vand.u32 %v2988, 4294901760
    %3540 = vmatpush2.msra.mxu0 %v3539
    %3541 = vmatprep.subr.mxu0 0.0
    %v3542 = vand.u32 %v2987, 4294901760
    %3543 = vmatpush2.msra.mxu0 %v3542
    %3544 = vmatprep.subr.mxu0 0.0
    %v3545 = vand.u32 %v2986, 4294901760
    %3546 = vmatpush2.msra.mxu0 %v3545
    %3547 = vmatprep.subr.mxu0 0.0
    %v3548 = vand.u32 %v2985, 4294901760
    %3549 = vmatpush2.msra.mxu0 %v3548
    %3550 = vmatprep.subr.mxu0 0.0
    %v3551 = vand.u32 %v2984, 4294901760
    %3552 = vmatpush2.msra.mxu0 %v3551
    %3553 = vmatprep.subr.mxu0 0.0
    %v3554 = vand.u32 %v2983, 4294901760
    %3555 = vmatpush2.msra.mxu0 %v3554
    %3556 = vmatprep.subr.mxu0 0.0
    %v3557 = vand.u32 %v2982, 4294901760
    %3558 = vmatpush2.msra.mxu0 %v3557
    %3559 = vmatprep.subr.mxu0 0.0
    %v3560 = vand.u32 %v2981, 4294901760
    %3561 = vmatpush2.msra.mxu0 %v3560
    %3562 = vmatprep.subr.mxu0 0.0
    %v3563 = vand.u32 %v2980, 4294901760
    %3564 = vmatpush2.msra.mxu0 %v3563
    %3565 = vmatprep.subr.mxu0 0.0
    %v3566 = vand.u32 %v2979, 4294901760
    %3567 = vmatpush2.msra.mxu0 %v3566
    %3568 = vmatprep.subr.mxu0 0.0
    %v3569 = vand.u32 %v2978, 4294901760
    %3570 = vmatpush2.msra.mxu0 %v3569
    %3571 = vmatprep.subr.mxu0 0.0
    %v3572 = vand.u32 %v2977, 4294901760
    %3573 = vmatpush2.msra.mxu0 %v3572
    %3574 = vmatprep.subr.mxu0 0.0
    %v3575 = vand.u32 %v2976, 4294901760
    %3576 = vmatpush2.msra.mxu0 %v3575
    %v3577 = vand.u32 %v2959, 4294901760
    %v3578 = vsub.f32 %v2959, %v3577
    %v3579 = vand.u32 %v3578, 4294901760
    %3580 = vmatprep.mubr.f32.mxu0 %v3579
    %v3581 = vand.u32 %v2956, 4294901760
    %v3582 = vsub.f32 %v2956, %v3581
    %v3583 = vand.u32 %v3582, 4294901760
    %3584 = vmatmul.mubr.f32.gmra.mxu0 %v3583
    %v3585 = vpop.f32.mrf.mxu0
    %v3586 = vadd.f32 %v3478, %v3585
    %v3587 = vpop.f32.mrf.mxu0
    %3588 = vdwg.mxu0
    %3589 = vmatprep.subr.mxu0 0.0
    %v3590 = vand.u32 %v2975, 4294901760
    %v3591 = vsub.f32 %v2975, %v3590
    %v3592 = vand.u32 %v3591, 4294901760
    %3593 = vmatpush1.msra.mxu0 %v3592
    %3594 = vmatprep.subr.mxu0 0.0
    %v3595 = vand.u32 %v2974, 4294901760
    %v3596 = vsub.f32 %v2974, %v3595
    %v3597 = vand.u32 %v3596, 4294901760
    %3598 = vmatpush1.msra.mxu0 %v3597
    %3599 = vmatprep.subr.mxu0 0.0
    %v3600 = vand.u32 %v2973, 4294901760
    %v3601 = vsub.f32 %v2973, %v3600
    %v3602 = vand.u32 %v3601, 4294901760
    %3603 = vmatpush1.msra.mxu0 %v3602
    %3604 = vmatprep.subr.mxu0 0.0
    %v3605 = vand.u32 %v2972, 4294901760
    %v3606 = vsub.f32 %v2972, %v3605
    %v3607 = vand.u32 %v3606, 4294901760
    %3608 = vmatpush1.msra.mxu0 %v3607
    %3609 = vmatprep.subr.mxu0 0.0
    %v3610 = vand.u32 %v2971, 4294901760
    %v3611 = vsub.f32 %v2971, %v3610
    %v3612 = vand.u32 %v3611, 4294901760
    %3613 = vmatpush1.msra.mxu0 %v3612
    %3614 = vmatprep.subr.mxu0 0.0
    %v3615 = vand.u32 %v2970, 4294901760
    %v3616 = vsub.f32 %v2970, %v3615
    %v3617 = vand.u32 %v3616, 4294901760
    %3618 = vmatpush1.msra.mxu0 %v3617
    %3619 = vmatprep.subr.mxu0 0.0
    %v3620 = vand.u32 %v2969, 4294901760
    %v3621 = vsub.f32 %v2969, %v3620
    %v3622 = vand.u32 %v3621, 4294901760
    %3623 = vmatpush1.msra.mxu0 %v3622
    %3624 = vmatprep.subr.mxu0 0.0
    %v3625 = vand.u32 %v2968, 4294901760
    %v3626 = vsub.f32 %v2968, %v3625
    %v3627 = vand.u32 %v3626, 4294901760
    %3628 = vmatpush1.msra.mxu0 %v3627
    %3629 = vmatprep.subr.mxu0 0.0
    %v3630 = vand.u32 %v2967, 4294901760
    %v3631 = vsub.f32 %v2967, %v3630
    %v3632 = vand.u32 %v3631, 4294901760
    %3633 = vmatpush1.msra.mxu0 %v3632
    %3634 = vmatprep.subr.mxu0 0.0
    %v3635 = vand.u32 %v2966, 4294901760
    %v3636 = vsub.f32 %v2966, %v3635
    %v3637 = vand.u32 %v3636, 4294901760
    %3638 = vmatpush1.msra.mxu0 %v3637
    %3639 = vmatprep.subr.mxu0 0.0
    %v3640 = vand.u32 %v2965, 4294901760
    %v3641 = vsub.f32 %v2965, %v3640
    %v3642 = vand.u32 %v3641, 4294901760
    %3643 = vmatpush1.msra.mxu0 %v3642
    %3644 = vmatprep.subr.mxu0 0.0
    %v3645 = vand.u32 %v2964, 4294901760
    %v3646 = vsub.f32 %v2964, %v3645
    %v3647 = vand.u32 %v3646, 4294901760
    %3648 = vmatpush1.msra.mxu0 %v3647
    %3649 = vmatprep.subr.mxu0 0.0
    %v3650 = vand.u32 %v2963, 4294901760
    %v3651 = vsub.f32 %v2963, %v3650
    %v3652 = vand.u32 %v3651, 4294901760
    %3653 = vmatpush1.msra.mxu0 %v3652
    %3654 = vmatprep.subr.mxu0 0.0
    %v3655 = vand.u32 %v2962, 4294901760
    %v3656 = vsub.f32 %v2962, %v3655
    %v3657 = vand.u32 %v3656, 4294901760
    %3658 = vmatpush1.msra.mxu0 %v3657
    %3659 = vmatprep.subr.mxu0 0.0
    %v3660 = vand.u32 %v2961, 4294901760
    %v3661 = vsub.f32 %v2961, %v3660
    %v3662 = vand.u32 %v3661, 4294901760
    %3663 = vmatpush1.msra.mxu0 %v3662
    %3664 = vmatprep.subr.mxu0 0.0
    %v3665 = vand.u32 %v2960, 4294901760
    %v3666 = vsub.f32 %v2960, %v3665
    %v3667 = vand.u32 %v3666, 4294901760
    %3668 = vmatpush1.msra.mxu0 %v3667
    %3669 = vmatprep.subr.mxu0 0.0
    %v3670 = vand.u32 %v2991, 4294901760
    %v3671 = vsub.f32 %v2991, %v3670
    %v3672 = vand.u32 %v3671, 4294901760
    %3673 = vmatpush2.msra.mxu0 %v3672
    %3674 = vmatprep.subr.mxu0 0.0
    %v3675 = vand.u32 %v2990, 4294901760
    %v3676 = vsub.f32 %v2990, %v3675
    %v3677 = vand.u32 %v3676, 4294901760
    %3678 = vmatpush2.msra.mxu0 %v3677
    %3679 = vmatprep.subr.mxu0 0.0
    %v3680 = vand.u32 %v2989, 4294901760
    %v3681 = vsub.f32 %v2989, %v3680
    %v3682 = vand.u32 %v3681, 4294901760
    %3683 = vmatpush2.msra.mxu0 %v3682
    %3684 = vmatprep.subr.mxu0 0.0
    %v3685 = vand.u32 %v2988, 4294901760
    %v3686 = vsub.f32 %v2988, %v3685
    %v3687 = vand.u32 %v3686, 4294901760
    %3688 = vmatpush2.msra.mxu0 %v3687
    %3689 = vmatprep.subr.mxu0 0.0
    %v3690 = vand.u32 %v2987, 4294901760
    %v3691 = vsub.f32 %v2987, %v3690
    %v3692 = vand.u32 %v3691, 4294901760
    %3693 = vmatpush2.msra.mxu0 %v3692
    %3694 = vmatprep.subr.mxu0 0.0
    %v3695 = vand.u32 %v2986, 4294901760
    %v3696 = vsub.f32 %v2986, %v3695
    %v3697 = vand.u32 %v3696, 4294901760
    %3698 = vmatpush2.msra.mxu0 %v3697
    %3699 = vmatprep.subr.mxu0 0.0
    %v3700 = vand.u32 %v2985, 4294901760
    %v3701 = vsub.f32 %v2985, %v3700
    %v3702 = vand.u32 %v3701, 4294901760
    %3703 = vmatpush2.msra.mxu0 %v3702
    %3704 = vmatprep.subr.mxu0 0.0
    %v3705 = vand.u32 %v2984, 4294901760
    %v3706 = vsub.f32 %v2984, %v3705
    %v3707 = vand.u32 %v3706, 4294901760
    %3708 = vmatpush2.msra.mxu0 %v3707
    %3709 = vmatprep.subr.mxu0 0.0
    %v3710 = vand.u32 %v2983, 4294901760
    %v3711 = vsub.f32 %v2983, %v3710
    %v3712 = vand.u32 %v3711, 4294901760
    %3713 = vmatpush2.msra.mxu0 %v3712
    %3714 = vmatprep.subr.mxu0 0.0
    %v3715 = vand.u32 %v2982, 4294901760
    %v3716 = vsub.f32 %v2982, %v3715
    %v3717 = vand.u32 %v3716, 4294901760
    %3718 = vmatpush2.msra.mxu0 %v3717
    %3719 = vmatprep.subr.mxu0 0.0
    %v3720 = vand.u32 %v2981, 4294901760
    %v3721 = vsub.f32 %v2981, %v3720
    %v3722 = vand.u32 %v3721, 4294901760
    %3723 = vmatpush2.msra.mxu0 %v3722
    %3724 = vmatprep.subr.mxu0 0.0
    %v3725 = vand.u32 %v2980, 4294901760
    %v3726 = vsub.f32 %v2980, %v3725
    %v3727 = vand.u32 %v3726, 4294901760
    %3728 = vmatpush2.msra.mxu0 %v3727
    %3729 = vmatprep.subr.mxu0 0.0
    %v3730 = vand.u32 %v2979, 4294901760
    %v3731 = vsub.f32 %v2979, %v3730
    %v3732 = vand.u32 %v3731, 4294901760
    %3733 = vmatpush2.msra.mxu0 %v3732
    %3734 = vmatprep.subr.mxu0 0.0
    %v3735 = vand.u32 %v2978, 4294901760
    %v3736 = vsub.f32 %v2978, %v3735
    %v3737 = vand.u32 %v3736, 4294901760
    %3738 = vmatpush2.msra.mxu0 %v3737
    %3739 = vmatprep.subr.mxu0 0.0
    %v3740 = vand.u32 %v2977, 4294901760
    %v3741 = vsub.f32 %v2977, %v3740
    %v3742 = vand.u32 %v3741, 4294901760
    %3743 = vmatpush2.msra.mxu0 %v3742
    %3744 = vmatprep.subr.mxu0 0.0
    %v3745 = vand.u32 %v2976, 4294901760
    %v3746 = vsub.f32 %v2976, %v3745
    %v3747 = vand.u32 %v3746, 4294901760
    %3748 = vmatpush2.msra.mxu0 %v3747
    %v3749 = vand.u32 %v2959, 4294901760
    %3750 = vmatprep.mubr.f32.mxu0 %v3749
    %v3751 = vand.u32 %v2956, 4294901760
    %3752 = vmatmul.mubr.f32.gmra.mxu0 %v3751
    %v3753 = vpop.f32.mrf.mxu0
    %v3754 = vadd.f32 %v3586, %v3753
    %v3755 = vpop.f32.mrf.mxu0
    %3756 = vdwg.mxu0
    %3757 = vmatprep.subr.mxu0 0.0
    %v3758 = vand.u32 %v2975, 4294901760
    %3759 = vmatpush1.msra.mxu0 %v3758
    %3760 = vmatprep.subr.mxu0 0.0
    %v3761 = vand.u32 %v2974, 4294901760
    %3762 = vmatpush1.msra.mxu0 %v3761
    %3763 = vmatprep.subr.mxu0 0.0
    %v3764 = vand.u32 %v2973, 4294901760
    %3765 = vmatpush1.msra.mxu0 %v3764
    %3766 = vmatprep.subr.mxu0 0.0
    %v3767 = vand.u32 %v2972, 4294901760
    %3768 = vmatpush1.msra.mxu0 %v3767
    %3769 = vmatprep.subr.mxu0 0.0
    %v3770 = vand.u32 %v2971, 4294901760
    %3771 = vmatpush1.msra.mxu0 %v3770
    %3772 = vmatprep.subr.mxu0 0.0
    %v3773 = vand.u32 %v2970, 4294901760
    %3774 = vmatpush1.msra.mxu0 %v3773
    %3775 = vmatprep.subr.mxu0 0.0
    %v3776 = vand.u32 %v2969, 4294901760
    %3777 = vmatpush1.msra.mxu0 %v3776
    %3778 = vmatprep.subr.mxu0 0.0
    %v3779 = vand.u32 %v2968, 4294901760
    %3780 = vmatpush1.msra.mxu0 %v3779
    %3781 = vmatprep.subr.mxu0 0.0
    %v3782 = vand.u32 %v2967, 4294901760
    %3783 = vmatpush1.msra.mxu0 %v3782
    %3784 = vmatprep.subr.mxu0 0.0
    %v3785 = vand.u32 %v2966, 4294901760
    %3786 = vmatpush1.msra.mxu0 %v3785
    %3787 = vmatprep.subr.mxu0 0.0
    %v3788 = vand.u32 %v2965, 4294901760
    %3789 = vmatpush1.msra.mxu0 %v3788
    %3790 = vmatprep.subr.mxu0 0.0
    %v3791 = vand.u32 %v2964, 4294901760
    %3792 = vmatpush1.msra.mxu0 %v3791
    %3793 = vmatprep.subr.mxu0 0.0
    %v3794 = vand.u32 %v2963, 4294901760
    %3795 = vmatpush1.msra.mxu0 %v3794
    %3796 = vmatprep.subr.mxu0 0.0
    %v3797 = vand.u32 %v2962, 4294901760
    %3798 = vmatpush1.msra.mxu0 %v3797
    %3799 = vmatprep.subr.mxu0 0.0
    %v3800 = vand.u32 %v2961, 4294901760
    %3801 = vmatpush1.msra.mxu0 %v3800
    %3802 = vmatprep.subr.mxu0 0.0
    %v3803 = vand.u32 %v2960, 4294901760
    %3804 = vmatpush1.msra.mxu0 %v3803
    %3805 = vmatprep.subr.mxu0 0.0
    %v3806 = vand.u32 %v2991, 4294901760
    %3807 = vmatpush2.msra.mxu0 %v3806
    %3808 = vmatprep.subr.mxu0 0.0
    %v3809 = vand.u32 %v2990, 4294901760
    %3810 = vmatpush2.msra.mxu0 %v3809
    %3811 = vmatprep.subr.mxu0 0.0
    %v3812 = vand.u32 %v2989, 4294901760
    %3813 = vmatpush2.msra.mxu0 %v3812
    %3814 = vmatprep.subr.mxu0 0.0
    %v3815 = vand.u32 %v2988, 4294901760
    %3816 = vmatpush2.msra.mxu0 %v3815
    %3817 = vmatprep.subr.mxu0 0.0
    %v3818 = vand.u32 %v2987, 4294901760
    %3819 = vmatpush2.msra.mxu0 %v3818
    %3820 = vmatprep.subr.mxu0 0.0
    %v3821 = vand.u32 %v2986, 4294901760
    %3822 = vmatpush2.msra.mxu0 %v3821
    %3823 = vmatprep.subr.mxu0 0.0
    %v3824 = vand.u32 %v2985, 4294901760
    %3825 = vmatpush2.msra.mxu0 %v3824
    %3826 = vmatprep.subr.mxu0 0.0
    %v3827 = vand.u32 %v2984, 4294901760
    %3828 = vmatpush2.msra.mxu0 %v3827
    %3829 = vmatprep.subr.mxu0 0.0
    %v3830 = vand.u32 %v2983, 4294901760
    %3831 = vmatpush2.msra.mxu0 %v3830
    %3832 = vmatprep.subr.mxu0 0.0
    %v3833 = vand.u32 %v2982, 4294901760
    %3834 = vmatpush2.msra.mxu0 %v3833
    %3835 = vmatprep.subr.mxu0 0.0
    %v3836 = vand.u32 %v2981, 4294901760
    %3837 = vmatpush2.msra.mxu0 %v3836
    %3838 = vmatprep.subr.mxu0 0.0
    %v3839 = vand.u32 %v2980, 4294901760
    %3840 = vmatpush2.msra.mxu0 %v3839
    %3841 = vmatprep.subr.mxu0 0.0
    %v3842 = vand.u32 %v2979, 4294901760
    %3843 = vmatpush2.msra.mxu0 %v3842
    %3844 = vmatprep.subr.mxu0 0.0
    %v3845 = vand.u32 %v2978, 4294901760
    %3846 = vmatpush2.msra.mxu0 %v3845
    %3847 = vmatprep.subr.mxu0 0.0
    %v3848 = vand.u32 %v2977, 4294901760
    %3849 = vmatpush2.msra.mxu0 %v3848
    %3850 = vmatprep.subr.mxu0 0.0
    %v3851 = vand.u32 %v2976, 4294901760
    %3852 = vmatpush2.msra.mxu0 %v3851
    %v3853 = vand.u32 %v2959, 4294901760
    %3854 = vmatprep.mubr.f32.mxu0 %v3853
    %v3855 = vand.u32 %v2956, 4294901760
    %3856 = vmatmul.mubr.f32.gmra.mxu0 %v3855
    %v3857 = vpop.f32.mrf.mxu0
    %v3858 = vadd.f32 %v3754, %v3857
    %v3859 = vpop.f32.mrf.mxu0
    %3860 = vdwg.mxu0
    %v3861 = vmax.f32 %v3858, 0.0
    %v3862 = vld [vmem:[%s11] sm:$0xff]
    %v3863 = vld [vmem:[%s11 + $0x8] sm:$0xff]
    %v3864 = vld [vmem:[%s11 + $0x10] sm:$0xff]
    %v3865 = vld [vmem:[%s11 + $0x18] sm:$0xff]
    %v3866 = vld [vmem:[%s12] sm:$0x1]
    %v3868 = vlaneseq
    %v3869 = vshrl.u32 %v3868, 7
    %v3870 = vsub.s32 0, %v3869
    %v3871 = vrot.slane %v3866, %v3870
    %v3874 = vsel %vm1875, %v3861, 0
    %3876 = vmatprep.subr.mxu0 0.0
    %3877 = vmatpush1.msra.mxu0 0.0
    %3878 = vmatprep.subr.mxu0 0.0
    %3879 = vmatpush1.msra.mxu0 0.0
    %3880 = vmatprep.subr.mxu0 0.0
    %3881 = vmatpush1.msra.mxu0 0.0
    %3882 = vmatprep.subr.mxu0 0.0
    %3883 = vmatpush1.msra.mxu0 0.0
    %3884 = vmatprep.subr.mxu0 0.0
    %3885 = vmatpush1.msra.mxu0 0.0
    %3886 = vmatprep.subr.mxu0 0.0
    %3887 = vmatpush1.msra.mxu0 0.0
    %3888 = vmatprep.subr.mxu0 0.0
    %3889 = vmatpush1.msra.mxu0 0.0
    %3890 = vmatprep.subr.mxu0 0.0
    %3891 = vmatpush1.msra.mxu0 0.0
    %3892 = vmatprep.subr.mxu0 0.0
    %3893 = vmatpush1.msra.mxu0 0.0
    %3894 = vmatprep.subr.mxu0 0.0
    %3895 = vmatpush1.msra.mxu0 0.0
    %3896 = vmatprep.subr.mxu0 0.0
    %3897 = vmatpush1.msra.mxu0 0.0
    %3898 = vmatprep.subr.mxu0 0.0
    %3899 = vmatpush1.msra.mxu0 0.0
    %3900 = vmatprep.subr.mxu0 0.0
    %v3901 = vand.u32 %v3865, 4294901760
    %3902 = vmatpush1.msra.mxu0 %v3901
    %3903 = vmatprep.subr.mxu0 0.0
    %v3904 = vand.u32 %v3864, 4294901760
    %3905 = vmatpush1.msra.mxu0 %v3904
    %3906 = vmatprep.subr.mxu0 0.0
    %v3907 = vand.u32 %v3863, 4294901760
    %3908 = vmatpush1.msra.mxu0 %v3907
    %3909 = vmatprep.subr.mxu0 0.0
    %v3910 = vand.u32 %v3862, 4294901760
    %3911 = vmatpush1.msra.mxu0 %v3910
    %3912 = vmatprep.subr.mxu0 0.0
    %3913 = vmatpush2.msra.mxu0 0.0
    %3914 = vmatprep.subr.mxu0 0.0
    %3915 = vmatpush2.msra.mxu0 0.0
    %3916 = vmatprep.subr.mxu0 0.0
    %3917 = vmatpush2.msra.mxu0 0.0
    %3918 = vmatprep.subr.mxu0 0.0
    %3919 = vmatpush2.msra.mxu0 0.0
    %3920 = vmatprep.subr.mxu0 0.0
    %3921 = vmatpush2.msra.mxu0 0.0
    %3922 = vmatprep.subr.mxu0 0.0
    %3923 = vmatpush2.msra.mxu0 0.0
    %3924 = vmatprep.subr.mxu0 0.0
    %3925 = vmatpush2.msra.mxu0 0.0
    %3926 = vmatprep.subr.mxu0 0.0
    %3927 = vmatpush2.msra.mxu0 0.0
    %3928 = vmatprep.subr.mxu0 0.0
    %3929 = vmatpush2.msra.mxu0 0.0
    %3930 = vmatprep.subr.mxu0 0.0
    %3931 = vmatpush2.msra.mxu0 0.0
    %3932 = vmatprep.subr.mxu0 0.0
    %3933 = vmatpush2.msra.mxu0 0.0
    %3934 = vmatprep.subr.mxu0 0.0
    %3935 = vmatpush2.msra.mxu0 0.0
    %3936 = vmatprep.subr.mxu0 0.0
    %3937 = vmatpush2.msra.mxu0 0.0
    %3938 = vmatprep.subr.mxu0 0.0
    %3939 = vmatpush2.msra.mxu0 0.0
    %3940 = vmatprep.subr.mxu0 0.0
    %3941 = vmatpush2.msra.mxu0 0.0
    %3942 = vmatprep.subr.mxu0 0.0
    %3943 = vmatpush2.msra.mxu0 0.0
    %3944 = vmatprep.mubr.f32.mxu0 0.0
    %v3945 = vand.u32 %v3874, 4294901760
    %v3946 = vsub.f32 %v3874, %v3945
    %v3947 = vand.u32 %v3946, 4294901760
    %v3948 = vsub.f32 %v3946, %v3947
    %v3949 = vand.u32 %v3948, 4294901760
    %3950 = vmatmul.mubr.f32.gmra.mxu0 %v3949
    %v3951 = vpop.f32.mrf.mxu0
    %v3952 = vadd.f32 %v3871, %v3951
    %v3953 = vpop.f32.mrf.mxu0
    %3954 = vdwg.mxu0
    %3955 = vmatprep.subr.mxu0 0.0
    %3956 = vmatpush1.msra.mxu0 0.0
    %3957 = vmatprep.subr.mxu0 0.0
    %3958 = vmatpush1.msra.mxu0 0.0
    %3959 = vmatprep.subr.mxu0 0.0
    %3960 = vmatpush1.msra.mxu0 0.0
    %3961 = vmatprep.subr.mxu0 0.0
    %3962 = vmatpush1.msra.mxu0 0.0
    %3963 = vmatprep.subr.mxu0 0.0
    %3964 = vmatpush1.msra.mxu0 0.0
    %3965 = vmatprep.subr.mxu0 0.0
    %3966 = vmatpush1.msra.mxu0 0.0
    %3967 = vmatprep.subr.mxu0 0.0
    %3968 = vmatpush1.msra.mxu0 0.0
    %3969 = vmatprep.subr.mxu0 0.0
    %3970 = vmatpush1.msra.mxu0 0.0
    %3971 = vmatprep.subr.mxu0 0.0
    %3972 = vmatpush1.msra.mxu0 0.0
    %3973 = vmatprep.subr.mxu0 0.0
    %3974 = vmatpush1.msra.mxu0 0.0
    %3975 = vmatprep.subr.mxu0 0.0
    %3976 = vmatpush1.msra.mxu0 0.0
    %3977 = vmatprep.subr.mxu0 0.0
    %3978 = vmatpush1.msra.mxu0 0.0
    %3979 = vmatprep.subr.mxu0 0.0
    %v3980 = vand.u32 %v3865, 4294901760
    %v3981 = vsub.f32 %v3865, %v3980
    %v3982 = vand.u32 %v3981, 4294901760
    %v3983 = vsub.f32 %v3981, %v3982
    %v3984 = vand.u32 %v3983, 4294901760
    %3985 = vmatpush1.msra.mxu0 %v3984
    %3986 = vmatprep.subr.mxu0 0.0
    %v3987 = vand.u32 %v3864, 4294901760
    %v3988 = vsub.f32 %v3864, %v3987
    %v3989 = vand.u32 %v3988, 4294901760
    %v3990 = vsub.f32 %v3988, %v3989
    %v3991 = vand.u32 %v3990, 4294901760
    %3992 = vmatpush1.msra.mxu0 %v3991
    %3993 = vmatprep.subr.mxu0 0.0
    %v3994 = vand.u32 %v3863, 4294901760
    %v3995 = vsub.f32 %v3863, %v3994
    %v3996 = vand.u32 %v3995, 4294901760
    %v3997 = vsub.f32 %v3995, %v3996
    %v3998 = vand.u32 %v3997, 4294901760
    %3999 = vmatpush1.msra.mxu0 %v3998
    %4000 = vmatprep.subr.mxu0 0.0
    %v4001 = vand.u32 %v3862, 4294901760
    %v4002 = vsub.f32 %v3862, %v4001
    %v4003 = vand.u32 %v4002, 4294901760
    %v4004 = vsub.f32 %v4002, %v4003
    %v4005 = vand.u32 %v4004, 4294901760
    %4006 = vmatpush1.msra.mxu0 %v4005
    %4007 = vmatprep.subr.mxu0 0.0
    %4008 = vmatpush2.msra.mxu0 0.0
    %4009 = vmatprep.subr.mxu0 0.0
    %4010 = vmatpush2.msra.mxu0 0.0
    %4011 = vmatprep.subr.mxu0 0.0
    %4012 = vmatpush2.msra.mxu0 0.0
    %4013 = vmatprep.subr.mxu0 0.0
    %4014 = vmatpush2.msra.mxu0 0.0
    %4015 = vmatprep.subr.mxu0 0.0
    %4016 = vmatpush2.msra.mxu0 0.0
    %4017 = vmatprep.subr.mxu0 0.0
    %4018 = vmatpush2.msra.mxu0 0.0
    %4019 = vmatprep.subr.mxu0 0.0
    %4020 = vmatpush2.msra.mxu0 0.0
    %4021 = vmatprep.subr.mxu0 0.0
    %4022 = vmatpush2.msra.mxu0 0.0
    %4023 = vmatprep.subr.mxu0 0.0
    %4024 = vmatpush2.msra.mxu0 0.0
    %4025 = vmatprep.subr.mxu0 0.0
    %4026 = vmatpush2.msra.mxu0 0.0
    %4027 = vmatprep.subr.mxu0 0.0
    %4028 = vmatpush2.msra.mxu0 0.0
    %4029 = vmatprep.subr.mxu0 0.0
    %4030 = vmatpush2.msra.mxu0 0.0
    %4031 = vmatprep.subr.mxu0 0.0
    %4032 = vmatpush2.msra.mxu0 0.0
    %4033 = vmatprep.subr.mxu0 0.0
    %4034 = vmatpush2.msra.mxu0 0.0
    %4035 = vmatprep.subr.mxu0 0.0
    %4036 = vmatpush2.msra.mxu0 0.0
    %4037 = vmatprep.subr.mxu0 0.0
    %4038 = vmatpush2.msra.mxu0 0.0
    %4039 = vmatprep.mubr.f32.mxu0 0.0
    %v4040 = vand.u32 %v3874, 4294901760
    %4041 = vmatmul.mubr.f32.gmra.mxu0 %v4040
    %v4042 = vpop.f32.mrf.mxu0
    %v4043 = vadd.f32 %v3952, %v4042
    %v4044 = vpop.f32.mrf.mxu0
    %4045 = vdwg.mxu0
    %4046 = vmatprep.subr.mxu0 0.0
    %4047 = vmatpush1.msra.mxu0 0.0
    %4048 = vmatprep.subr.mxu0 0.0
    %4049 = vmatpush1.msra.mxu0 0.0
    %4050 = vmatprep.subr.mxu0 0.0
    %4051 = vmatpush1.msra.mxu0 0.0
    %4052 = vmatprep.subr.mxu0 0.0
    %4053 = vmatpush1.msra.mxu0 0.0
    %4054 = vmatprep.subr.mxu0 0.0
    %4055 = vmatpush1.msra.mxu0 0.0
    %4056 = vmatprep.subr.mxu0 0.0
    %4057 = vmatpush1.msra.mxu0 0.0
    %4058 = vmatprep.subr.mxu0 0.0
    %4059 = vmatpush1.msra.mxu0 0.0
    %4060 = vmatprep.subr.mxu0 0.0
    %4061 = vmatpush1.msra.mxu0 0.0
    %4062 = vmatprep.subr.mxu0 0.0
    %4063 = vmatpush1.msra.mxu0 0.0
    %4064 = vmatprep.subr.mxu0 0.0
    %4065 = vmatpush1.msra.mxu0 0.0
    %4066 = vmatprep.subr.mxu0 0.0
    %4067 = vmatpush1.msra.mxu0 0.0
    %4068 = vmatprep.subr.mxu0 0.0
    %4069 = vmatpush1.msra.mxu0 0.0
    %4070 = vmatprep.subr.mxu0 0.0
    %v4071 = vand.u32 %v3865, 4294901760
    %v4072 = vsub.f32 %v3865, %v4071
    %4073 = vmatpush1.msra.mxu0 %v4072
    %4074 = vmatprep.subr.mxu0 0.0
    %v4075 = vand.u32 %v3864, 4294901760
    %v4076 = vsub.f32 %v3864, %v4075
    %4077 = vmatpush1.msra.mxu0 %v4076
    %4078 = vmatprep.subr.mxu0 0.0
    %v4079 = vand.u32 %v3863, 4294901760
    %v4080 = vsub.f32 %v3863, %v4079
    %4081 = vmatpush1.msra.mxu0 %v4080
    %4082 = vmatprep.subr.mxu0 0.0
    %v4083 = vand.u32 %v3862, 4294901760
    %v4084 = vsub.f32 %v3862, %v4083
    %4085 = vmatpush1.msra.mxu0 %v4084
    %4086 = vmatprep.subr.mxu0 0.0
    %4087 = vmatpush2.msra.mxu0 0.0
    %4088 = vmatprep.subr.mxu0 0.0
    %4089 = vmatpush2.msra.mxu0 0.0
    %4090 = vmatprep.subr.mxu0 0.0
    %4091 = vmatpush2.msra.mxu0 0.0
    %4092 = vmatprep.subr.mxu0 0.0
    %4093 = vmatpush2.msra.mxu0 0.0
    %4094 = vmatprep.subr.mxu0 0.0
    %4095 = vmatpush2.msra.mxu0 0.0
    %4096 = vmatprep.subr.mxu0 0.0
    %4097 = vmatpush2.msra.mxu0 0.0
    %4098 = vmatprep.subr.mxu0 0.0
    %4099 = vmatpush2.msra.mxu0 0.0
    %4100 = vmatprep.subr.mxu0 0.0
    %4101 = vmatpush2.msra.mxu0 0.0
    %4102 = vmatprep.subr.mxu0 0.0
    %4103 = vmatpush2.msra.mxu0 0.0
    %4104 = vmatprep.subr.mxu0 0.0
    %4105 = vmatpush2.msra.mxu0 0.0
    %4106 = vmatprep.subr.mxu0 0.0
    %4107 = vmatpush2.msra.mxu0 0.0
    %4108 = vmatprep.subr.mxu0 0.0
    %4109 = vmatpush2.msra.mxu0 0.0
    %4110 = vmatprep.subr.mxu0 0.0
    %4111 = vmatpush2.msra.mxu0 0.0
    %4112 = vmatprep.subr.mxu0 0.0
    %4113 = vmatpush2.msra.mxu0 0.0
    %4114 = vmatprep.subr.mxu0 0.0
    %4115 = vmatpush2.msra.mxu0 0.0
    %4116 = vmatprep.subr.mxu0 0.0
    %4117 = vmatpush2.msra.mxu0 0.0
    %4118 = vmatprep.mubr.f32.mxu0 0.0
    %v4119 = vand.u32 %v3874, 4294901760
    %v4120 = vsub.f32 %v3874, %v4119
    %4121 = vmatmul.mubr.f32.gmra.mxu0 %v4120
    %v4122 = vpop.f32.mrf.mxu0
    %v4123 = vadd.f32 %v4043, %v4122
    %v4124 = vpop.f32.mrf.mxu0
    %4125 = vdwg.mxu0
    %4126 = vmatprep.subr.mxu0 0.0
    %4127 = vmatpush1.msra.mxu0 0.0
    %4128 = vmatprep.subr.mxu0 0.0
    %4129 = vmatpush1.msra.mxu0 0.0
    %4130 = vmatprep.subr.mxu0 0.0
    %4131 = vmatpush1.msra.mxu0 0.0
    %4132 = vmatprep.subr.mxu0 0.0
    %4133 = vmatpush1.msra.mxu0 0.0
    %4134 = vmatprep.subr.mxu0 0.0
    %4135 = vmatpush1.msra.mxu0 0.0
    %4136 = vmatprep.subr.mxu0 0.0
    %4137 = vmatpush1.msra.mxu0 0.0
    %4138 = vmatprep.subr.mxu0 0.0
    %4139 = vmatpush1.msra.mxu0 0.0
    %4140 = vmatprep.subr.mxu0 0.0
    %4141 = vmatpush1.msra.mxu0 0.0
    %4142 = vmatprep.subr.mxu0 0.0
    %4143 = vmatpush1.msra.mxu0 0.0
    %4144 = vmatprep.subr.mxu0 0.0
    %4145 = vmatpush1.msra.mxu0 0.0
    %4146 = vmatprep.subr.mxu0 0.0
    %4147 = vmatpush1.msra.mxu0 0.0
    %4148 = vmatprep.subr.mxu0 0.0
    %4149 = vmatpush1.msra.mxu0 0.0
    %4150 = vmatprep.subr.mxu0 0.0
    %v4151 = vand.u32 %v3865, 4294901760
    %4152 = vmatpush1.msra.mxu0 %v4151
    %4153 = vmatprep.subr.mxu0 0.0
    %v4154 = vand.u32 %v3864, 4294901760
    %4155 = vmatpush1.msra.mxu0 %v4154
    %4156 = vmatprep.subr.mxu0 0.0
    %v4157 = vand.u32 %v3863, 4294901760
    %4158 = vmatpush1.msra.mxu0 %v4157
    %4159 = vmatprep.subr.mxu0 0.0
    %v4160 = vand.u32 %v3862, 4294901760
    %4161 = vmatpush1.msra.mxu0 %v4160
    %4162 = vmatprep.subr.mxu0 0.0
    %4163 = vmatpush2.msra.mxu0 0.0
    %4164 = vmatprep.subr.mxu0 0.0
    %4165 = vmatpush2.msra.mxu0 0.0
    %4166 = vmatprep.subr.mxu0 0.0
    %4167 = vmatpush2.msra.mxu0 0.0
    %4168 = vmatprep.subr.mxu0 0.0
    %4169 = vmatpush2.msra.mxu0 0.0
    %4170 = vmatprep.subr.mxu0 0.0
    %4171 = vmatpush2.msra.mxu0 0.0
    %4172 = vmatprep.subr.mxu0 0.0
    %4173 = vmatpush2.msra.mxu0 0.0
    %4174 = vmatprep.subr.mxu0 0.0
    %4175 = vmatpush2.msra.mxu0 0.0
    %4176 = vmatprep.subr.mxu0 0.0
    %4177 = vmatpush2.msra.mxu0 0.0
    %4178 = vmatprep.subr.mxu0 0.0
    %4179 = vmatpush2.msra.mxu0 0.0
    %4180 = vmatprep.subr.mxu0 0.0
    %4181 = vmatpush2.msra.mxu0 0.0
    %4182 = vmatprep.subr.mxu0 0.0
    %4183 = vmatpush2.msra.mxu0 0.0
    %4184 = vmatprep.subr.mxu0 0.0
    %4185 = vmatpush2.msra.mxu0 0.0
    %4186 = vmatprep.subr.mxu0 0.0
    %4187 = vmatpush2.msra.mxu0 0.0
    %4188 = vmatprep.subr.mxu0 0.0
    %4189 = vmatpush2.msra.mxu0 0.0
    %4190 = vmatprep.subr.mxu0 0.0
    %4191 = vmatpush2.msra.mxu0 0.0
    %4192 = vmatprep.subr.mxu0 0.0
    %4193 = vmatpush2.msra.mxu0 0.0
    %4194 = vmatprep.mubr.f32.mxu0 0.0
    %v4195 = vand.u32 %v3874, 4294901760
    %v4196 = vsub.f32 %v3874, %v4195
    %v4197 = vand.u32 %v4196, 4294901760
    %4198 = vmatmul.mubr.f32.gmra.mxu0 %v4197
    %v4199 = vpop.f32.mrf.mxu0
    %v4200 = vadd.f32 %v4123, %v4199
    %v4201 = vpop.f32.mrf.mxu0
    %4202 = vdwg.mxu0
    %4203 = vmatprep.subr.mxu0 0.0
    %4204 = vmatpush1.msra.mxu0 0.0
    %4205 = vmatprep.subr.mxu0 0.0
    %4206 = vmatpush1.msra.mxu0 0.0
    %4207 = vmatprep.subr.mxu0 0.0
    %4208 = vmatpush1.msra.mxu0 0.0
    %4209 = vmatprep.subr.mxu0 0.0
    %4210 = vmatpush1.msra.mxu0 0.0
    %4211 = vmatprep.subr.mxu0 0.0
    %4212 = vmatpush1.msra.mxu0 0.0
    %4213 = vmatprep.subr.mxu0 0.0
    %4214 = vmatpush1.msra.mxu0 0.0
    %4215 = vmatprep.subr.mxu0 0.0
    %4216 = vmatpush1.msra.mxu0 0.0
    %4217 = vmatprep.subr.mxu0 0.0
    %4218 = vmatpush1.msra.mxu0 0.0
    %4219 = vmatprep.subr.mxu0 0.0
    %4220 = vmatpush1.msra.mxu0 0.0
    %4221 = vmatprep.subr.mxu0 0.0
    %4222 = vmatpush1.msra.mxu0 0.0
    %4223 = vmatprep.subr.mxu0 0.0
    %4224 = vmatpush1.msra.mxu0 0.0
    %4225 = vmatprep.subr.mxu0 0.0
    %4226 = vmatpush1.msra.mxu0 0.0
    %4227 = vmatprep.subr.mxu0 0.0
    %v4228 = vand.u32 %v3865, 4294901760
    %v4229 = vsub.f32 %v3865, %v4228
    %v4230 = vand.u32 %v4229, 4294901760
    %4231 = vmatpush1.msra.mxu0 %v4230
    %4232 = vmatprep.subr.mxu0 0.0
    %v4233 = vand.u32 %v3864, 4294901760
    %v4234 = vsub.f32 %v3864, %v4233
    %v4235 = vand.u32 %v4234, 4294901760
    %4236 = vmatpush1.msra.mxu0 %v4235
    %4237 = vmatprep.subr.mxu0 0.0
    %v4238 = vand.u32 %v3863, 4294901760
    %v4239 = vsub.f32 %v3863, %v4238
    %v4240 = vand.u32 %v4239, 4294901760
    %4241 = vmatpush1.msra.mxu0 %v4240
    %4242 = vmatprep.subr.mxu0 0.0
    %v4243 = vand.u32 %v3862, 4294901760
    %v4244 = vsub.f32 %v3862, %v4243
    %v4245 = vand.u32 %v4244, 4294901760
    %4246 = vmatpush1.msra.mxu0 %v4245
    %4247 = vmatprep.subr.mxu0 0.0
    %4248 = vmatpush2.msra.mxu0 0.0
    %4249 = vmatprep.subr.mxu0 0.0
    %4250 = vmatpush2.msra.mxu0 0.0
    %4251 = vmatprep.subr.mxu0 0.0
    %4252 = vmatpush2.msra.mxu0 0.0
    %4253 = vmatprep.subr.mxu0 0.0
    %4254 = vmatpush2.msra.mxu0 0.0
    %4255 = vmatprep.subr.mxu0 0.0
    %4256 = vmatpush2.msra.mxu0 0.0
    %4257 = vmatprep.subr.mxu0 0.0
    %4258 = vmatpush2.msra.mxu0 0.0
    %4259 = vmatprep.subr.mxu0 0.0
    %4260 = vmatpush2.msra.mxu0 0.0
    %4261 = vmatprep.subr.mxu0 0.0
    %4262 = vmatpush2.msra.mxu0 0.0
    %4263 = vmatprep.subr.mxu0 0.0
    %4264 = vmatpush2.msra.mxu0 0.0
    %4265 = vmatprep.subr.mxu0 0.0
    %4266 = vmatpush2.msra.mxu0 0.0
    %4267 = vmatprep.subr.mxu0 0.0
    %4268 = vmatpush2.msra.mxu0 0.0
    %4269 = vmatprep.subr.mxu0 0.0
    %4270 = vmatpush2.msra.mxu0 0.0
    %4271 = vmatprep.subr.mxu0 0.0
    %4272 = vmatpush2.msra.mxu0 0.0
    %4273 = vmatprep.subr.mxu0 0.0
    %4274 = vmatpush2.msra.mxu0 0.0
    %4275 = vmatprep.subr.mxu0 0.0
    %4276 = vmatpush2.msra.mxu0 0.0
    %4277 = vmatprep.subr.mxu0 0.0
    %4278 = vmatpush2.msra.mxu0 0.0
    %4279 = vmatprep.mubr.f32.mxu0 0.0
    %v4280 = vand.u32 %v3874, 4294901760
    %4281 = vmatmul.mubr.f32.gmra.mxu0 %v4280
    %v4282 = vpop.f32.mrf.mxu0
    %v4283 = vadd.f32 %v4200, %v4282
    %v4284 = vpop.f32.mrf.mxu0
    %4285 = vdwg.mxu0
    %4286 = vmatprep.subr.mxu0 0.0
    %4287 = vmatpush1.msra.mxu0 0.0
    %4288 = vmatprep.subr.mxu0 0.0
    %4289 = vmatpush1.msra.mxu0 0.0
    %4290 = vmatprep.subr.mxu0 0.0
    %4291 = vmatpush1.msra.mxu0 0.0
    %4292 = vmatprep.subr.mxu0 0.0
    %4293 = vmatpush1.msra.mxu0 0.0
    %4294 = vmatprep.subr.mxu0 0.0
    %4295 = vmatpush1.msra.mxu0 0.0
    %4296 = vmatprep.subr.mxu0 0.0
    %4297 = vmatpush1.msra.mxu0 0.0
    %4298 = vmatprep.subr.mxu0 0.0
    %4299 = vmatpush1.msra.mxu0 0.0
    %4300 = vmatprep.subr.mxu0 0.0
    %4301 = vmatpush1.msra.mxu0 0.0
    %4302 = vmatprep.subr.mxu0 0.0
    %4303 = vmatpush1.msra.mxu0 0.0
    %4304 = vmatprep.subr.mxu0 0.0
    %4305 = vmatpush1.msra.mxu0 0.0
    %4306 = vmatprep.subr.mxu0 0.0
    %4307 = vmatpush1.msra.mxu0 0.0
    %4308 = vmatprep.subr.mxu0 0.0
    %4309 = vmatpush1.msra.mxu0 0.0
    %4310 = vmatprep.subr.mxu0 0.0
    %v4311 = vand.u32 %v3865, 4294901760
    %4312 = vmatpush1.msra.mxu0 %v4311
    %4313 = vmatprep.subr.mxu0 0.0
    %v4314 = vand.u32 %v3864, 4294901760
    %4315 = vmatpush1.msra.mxu0 %v4314
    %4316 = vmatprep.subr.mxu0 0.0
    %v4317 = vand.u32 %v3863, 4294901760
    %4318 = vmatpush1.msra.mxu0 %v4317
    %4319 = vmatprep.subr.mxu0 0.0
    %v4320 = vand.u32 %v3862, 4294901760
    %4321 = vmatpush1.msra.mxu0 %v4320
    %4322 = vmatprep.subr.mxu0 0.0
    %4323 = vmatpush2.msra.mxu0 0.0
    %4324 = vmatprep.subr.mxu0 0.0
    %4325 = vmatpush2.msra.mxu0 0.0
    %4326 = vmatprep.subr.mxu0 0.0
    %4327 = vmatpush2.msra.mxu0 0.0
    %4328 = vmatprep.subr.mxu0 0.0
    %4329 = vmatpush2.msra.mxu0 0.0
    %4330 = vmatprep.subr.mxu0 0.0
    %4331 = vmatpush2.msra.mxu0 0.0
    %4332 = vmatprep.subr.mxu0 0.0
    %4333 = vmatpush2.msra.mxu0 0.0
    %4334 = vmatprep.subr.mxu0 0.0
    %4335 = vmatpush2.msra.mxu0 0.0
    %4336 = vmatprep.subr.mxu0 0.0
    %4337 = vmatpush2.msra.mxu0 0.0
    %4338 = vmatprep.subr.mxu0 0.0
    %4339 = vmatpush2.msra.mxu0 0.0
    %4340 = vmatprep.subr.mxu0 0.0
    %4341 = vmatpush2.msra.mxu0 0.0
    %4342 = vmatprep.subr.mxu0 0.0
    %4343 = vmatpush2.msra.mxu0 0.0
    %4344 = vmatprep.subr.mxu0 0.0
    %4345 = vmatpush2.msra.mxu0 0.0
    %4346 = vmatprep.subr.mxu0 0.0
    %4347 = vmatpush2.msra.mxu0 0.0
    %4348 = vmatprep.subr.mxu0 0.0
    %4349 = vmatpush2.msra.mxu0 0.0
    %4350 = vmatprep.subr.mxu0 0.0
    %4351 = vmatpush2.msra.mxu0 0.0
    %4352 = vmatprep.subr.mxu0 0.0
    %4353 = vmatpush2.msra.mxu0 0.0
    %4354 = vmatprep.mubr.f32.mxu0 0.0
    %v4355 = vand.u32 %v3874, 4294901760
    %4356 = vmatmul.mubr.f32.gmra.mxu0 %v4355
    %v4357 = vpop.f32.mrf.mxu0
    %v4358 = vadd.f32 %v4283, %v4357
    %v4359 = vpop.f32.mrf.mxu0
    %4360 = vdwg.mxu0
    %vm4361 = vcmask 58368
    %4362 = vst.msk [vmem:[#allocation5] sm:$0x3] %vm4361, %v4358
    %v4363 = vld [vmem:[%s13] sm:$0xff]
    %v4364 = vld [vmem:[%s13 + $0x8] sm:$0xff]
    %v4366 = vsel %vm1875, %v4363, 0
    %v4369 = vsel %vm1875, %v4364, 0
    %v4372 = vsel %vm1875, %v2386, 0
    %v4375 = vsel %vm1875, %v2387, 0
    %v4378 = vsel %vm1875, %v2388, 0
    %v4381 = vsel %vm1875, %v2389, 0
    %4383 = vmatprep.subr.mxu0 0.0
    %4384 = vmatpush1.xpose.msra.mxu0 0.0
    %4385 = vmatprep.subr.mxu0 0.0
    %4386 = vmatpush1.xpose.msra.mxu0 0.0
    %4387 = vmatprep.subr.mxu0 0.0
    %4388 = vmatpush1.xpose.msra.mxu0 0.0
    %4389 = vmatprep.subr.mxu0 0.0
    %4390 = vmatpush1.xpose.msra.mxu0 0.0
    %4391 = vmatprep.subr.mxu0 0.0
    %4392 = vmatpush1.xpose.msra.mxu0 0.0
    %4393 = vmatprep.subr.mxu0 0.0
    %4394 = vmatpush1.xpose.msra.mxu0 0.0
    %4395 = vmatprep.subr.mxu0 0.0
    %4396 = vmatpush1.xpose.msra.mxu0 0.0
    %4397 = vmatprep.subr.mxu0 0.0
    %4398 = vmatpush1.xpose.msra.mxu0 0.0
    %4399 = vmatprep.subr.mxu0 0.0
    %4400 = vmatpush1.xpose.msra.mxu0 0.0
    %4401 = vmatprep.subr.mxu0 0.0
    %4402 = vmatpush1.xpose.msra.mxu0 0.0
    %4403 = vmatprep.subr.mxu0 0.0
    %4404 = vmatpush1.xpose.msra.mxu0 0.0
    %4405 = vmatprep.subr.mxu0 0.0
    %4406 = vmatpush1.xpose.msra.mxu0 0.0
    %4407 = vmatprep.subr.mxu0 0.0
    %v4408 = vand.u32 %v4381, 4294901760
    %4409 = vmatpush1.xpose.msra.mxu0 %v4408
    %4410 = vmatprep.subr.mxu0 0.0
    %v4411 = vand.u32 %v4378, 4294901760
    %4412 = vmatpush1.xpose.msra.mxu0 %v4411
    %4413 = vmatprep.subr.mxu0 0.0
    %v4414 = vand.u32 %v4375, 4294901760
    %4415 = vmatpush1.xpose.msra.mxu0 %v4414
    %4416 = vmatprep.subr.mxu0 0.0
    %v4417 = vand.u32 %v4372, 4294901760
    %4418 = vmatpush1.xpose.msra.mxu0 %v4417
    %4419 = vmatprep.subr.mxu0 0.0
    %4420 = vmatpush2.xpose.msra.mxu0 0.0
    %4421 = vmatprep.subr.mxu0 0.0
    %4422 = vmatpush2.xpose.msra.mxu0 0.0
    %4423 = vmatprep.subr.mxu0 0.0
    %4424 = vmatpush2.xpose.msra.mxu0 0.0
    %4425 = vmatprep.subr.mxu0 0.0
    %4426 = vmatpush2.xpose.msra.mxu0 0.0
    %4427 = vmatprep.subr.mxu0 0.0
    %4428 = vmatpush2.xpose.msra.mxu0 0.0
    %4429 = vmatprep.subr.mxu0 0.0
    %4430 = vmatpush2.xpose.msra.mxu0 0.0
    %4431 = vmatprep.subr.mxu0 0.0
    %4432 = vmatpush2.xpose.msra.mxu0 0.0
    %4433 = vmatprep.subr.mxu0 0.0
    %4434 = vmatpush2.xpose.msra.mxu0 0.0
    %4435 = vmatprep.subr.mxu0 0.0
    %4436 = vmatpush2.xpose.msra.mxu0 0.0
    %4437 = vmatprep.subr.mxu0 0.0
    %4438 = vmatpush2.xpose.msra.mxu0 0.0
    %4439 = vmatprep.subr.mxu0 0.0
    %4440 = vmatpush2.xpose.msra.mxu0 0.0
    %4441 = vmatprep.subr.mxu0 0.0
    %4442 = vmatpush2.xpose.msra.mxu0 0.0
    %4443 = vmatprep.subr.mxu0 0.0
    %4444 = vmatpush2.xpose.msra.mxu0 0.0
    %4445 = vmatprep.subr.mxu0 0.0
    %4446 = vmatpush2.xpose.msra.mxu0 0.0
    %4447 = vmatprep.subr.mxu0 0.0
    %4448 = vmatpush2.xpose.msra.mxu0 0.0
    %4449 = vmatprep.subr.mxu0 0.0
    %4450 = vmatpush2.xpose.msra.mxu0 0.0
    %4451 = vmatprep.mubr.f32.mxu0 0.0
    %v4452 = vand.u32 %v4366, 4294901760
    %v4453 = vsub.f32 %v4366, %v4452
    %v4454 = vand.u32 %v4453, 4294901760
    %v4455 = vsub.f32 %v4453, %v4454
    %v4456 = vand.u32 %v4455, 4294901760
    %4457 = vmatmul.mubr.f32.gmra.mxu0 %v4456
    %v4458 = vpop.f32.mrf.mxu0
    %v4459 = vadd.f32 0.0, %v4458
    %v4460 = vpop.f32.mrf.mxu0
    %4461 = vmatprep.mubr.f32.mxu0 0.0
    %v4462 = vand.u32 %v4369, 4294901760
    %v4463 = vsub.f32 %v4369, %v4462
    %v4464 = vand.u32 %v4463, 4294901760
    %v4465 = vsub.f32 %v4463, %v4464
    %v4466 = vand.u32 %v4465, 4294901760
    %4467 = vmatmul.mubr.f32.gmra.mxu0 %v4466
    %v4468 = vpop.f32.mrf.mxu0
    %v4469 = vadd.f32 0.0, %v4468
    %v4470 = vpop.f32.mrf.mxu0
    %4471 = vdwg.mxu0
    %4472 = vmatprep.subr.mxu0 0.0
    %4473 = vmatpush1.xpose.msra.mxu0 0.0
    %4474 = vmatprep.subr.mxu0 0.0
    %4475 = vmatpush1.xpose.msra.mxu0 0.0
    %4476 = vmatprep.subr.mxu0 0.0
    %4477 = vmatpush1.xpose.msra.mxu0 0.0
    %4478 = vmatprep.subr.mxu0 0.0
    %4479 = vmatpush1.xpose.msra.mxu0 0.0
    %4480 = vmatprep.subr.mxu0 0.0
    %4481 = vmatpush1.xpose.msra.mxu0 0.0
    %4482 = vmatprep.subr.mxu0 0.0
    %4483 = vmatpush1.xpose.msra.mxu0 0.0
    %4484 = vmatprep.subr.mxu0 0.0
    %4485 = vmatpush1.xpose.msra.mxu0 0.0
    %4486 = vmatprep.subr.mxu0 0.0
    %4487 = vmatpush1.xpose.msra.mxu0 0.0
    %4488 = vmatprep.subr.mxu0 0.0
    %4489 = vmatpush1.xpose.msra.mxu0 0.0
    %4490 = vmatprep.subr.mxu0 0.0
    %4491 = vmatpush1.xpose.msra.mxu0 0.0
    %4492 = vmatprep.subr.mxu0 0.0
    %4493 = vmatpush1.xpose.msra.mxu0 0.0
    %4494 = vmatprep.subr.mxu0 0.0
    %4495 = vmatpush1.xpose.msra.mxu0 0.0
    %4496 = vmatprep.subr.mxu0 0.0
    %v4497 = vand.u32 %v4381, 4294901760
    %v4498 = vsub.f32 %v4381, %v4497
    %v4499 = vand.u32 %v4498, 4294901760
    %v4500 = vsub.f32 %v4498, %v4499
    %v4501 = vand.u32 %v4500, 4294901760
    %4502 = vmatpush1.xpose.msra.mxu0 %v4501
    %4503 = vmatprep.subr.mxu0 0.0
    %v4504 = vand.u32 %v4378, 4294901760
    %v4505 = vsub.f32 %v4378, %v4504
    %v4506 = vand.u32 %v4505, 4294901760
    %v4507 = vsub.f32 %v4505, %v4506
    %v4508 = vand.u32 %v4507, 4294901760
    %4509 = vmatpush1.xpose.msra.mxu0 %v4508
    %4510 = vmatprep.subr.mxu0 0.0
    %v4511 = vand.u32 %v4375, 4294901760
    %v4512 = vsub.f32 %v4375, %v4511
    %v4513 = vand.u32 %v4512, 4294901760
    %v4514 = vsub.f32 %v4512, %v4513
    %v4515 = vand.u32 %v4514, 4294901760
    %4516 = vmatpush1.xpose.msra.mxu0 %v4515
    %4517 = vmatprep.subr.mxu0 0.0
    %v4518 = vand.u32 %v4372, 4294901760
    %v4519 = vsub.f32 %v4372, %v4518
    %v4520 = vand.u32 %v4519, 4294901760
    %v4521 = vsub.f32 %v4519, %v4520
    %v4522 = vand.u32 %v4521, 4294901760
    %4523 = vmatpush1.xpose.msra.mxu0 %v4522
    %4524 = vmatprep.subr.mxu0 0.0
    %4525 = vmatpush2.xpose.msra.mxu0 0.0
    %4526 = vmatprep.subr.mxu0 0.0
    %4527 = vmatpush2.xpose.msra.mxu0 0.0
    %4528 = vmatprep.subr.mxu0 0.0
    %4529 = vmatpush2.xpose.msra.mxu0 0.0
    %4530 = vmatprep.subr.mxu0 0.0
    %4531 = vmatpush2.xpose.msra.mxu0 0.0
    %4532 = vmatprep.subr.mxu0 0.0
    %4533 = vmatpush2.xpose.msra.mxu0 0.0
    %4534 = vmatprep.subr.mxu0 0.0
    %4535 = vmatpush2.xpose.msra.mxu0 0.0
    %4536 = vmatprep.subr.mxu0 0.0
    %4537 = vmatpush2.xpose.msra.mxu0 0.0
    %4538 = vmatprep.subr.mxu0 0.0
    %4539 = vmatpush2.xpose.msra.mxu0 0.0
    %4540 = vmatprep.subr.mxu0 0.0
    %4541 = vmatpush2.xpose.msra.mxu0 0.0
    %4542 = vmatprep.subr.mxu0 0.0
    %4543 = vmatpush2.xpose.msra.mxu0 0.0
    %4544 = vmatprep.subr.mxu0 0.0
    %4545 = vmatpush2.xpose.msra.mxu0 0.0
    %4546 = vmatprep.subr.mxu0 0.0
    %4547 = vmatpush2.xpose.msra.mxu0 0.0
    %4548 = vmatprep.subr.mxu0 0.0
    %4549 = vmatpush2.xpose.msra.mxu0 0.0
    %4550 = vmatprep.subr.mxu0 0.0
    %4551 = vmatpush2.xpose.msra.mxu0 0.0
    %4552 = vmatprep.subr.mxu0 0.0
    %4553 = vmatpush2.xpose.msra.mxu0 0.0
    %4554 = vmatprep.subr.mxu0 0.0
    %4555 = vmatpush2.xpose.msra.mxu0 0.0
    %4556 = vmatprep.mubr.f32.mxu0 0.0
    %v4557 = vand.u32 %v4366, 4294901760
    %4558 = vmatmul.mubr.f32.gmra.mxu0 %v4557
    %v4559 = vpop.f32.mrf.mxu0
    %v4560 = vadd.f32 %v4459, %v4559
    %v4561 = vpop.f32.mrf.mxu0
    %4562 = vmatprep.mubr.f32.mxu0 0.0
    %v4563 = vand.u32 %v4369, 4294901760
    %4564 = vmatmul.mubr.f32.gmra.mxu0 %v4563
    %v4565 = vpop.f32.mrf.mxu0
    %v4566 = vadd.f32 %v4469, %v4565
    %v4567 = vpop.f32.mrf.mxu0
    %4568 = vdwg.mxu0
    %4569 = vmatprep.subr.mxu0 0.0
    %4570 = vmatpush1.xpose.msra.mxu0 0.0
    %4571 = vmatprep.subr.mxu0 0.0
    %4572 = vmatpush1.xpose.msra.mxu0 0.0
    %4573 = vmatprep.subr.mxu0 0.0
    %4574 = vmatpush1.xpose.msra.mxu0 0.0
    %4575 = vmatprep.subr.mxu0 0.0
    %4576 = vmatpush1.xpose.msra.mxu0 0.0
    %4577 = vmatprep.subr.mxu0 0.0
    %4578 = vmatpush1.xpose.msra.mxu0 0.0
    %4579 = vmatprep.subr.mxu0 0.0
    %4580 = vmatpush1.xpose.msra.mxu0 0.0
    %4581 = vmatprep.subr.mxu0 0.0
    %4582 = vmatpush1.xpose.msra.mxu0 0.0
    %4583 = vmatprep.subr.mxu0 0.0
    %4584 = vmatpush1.xpose.msra.mxu0 0.0
    %4585 = vmatprep.subr.mxu0 0.0
    %4586 = vmatpush1.xpose.msra.mxu0 0.0
    %4587 = vmatprep.subr.mxu0 0.0
    %4588 = vmatpush1.xpose.msra.mxu0 0.0
    %4589 = vmatprep.subr.mxu0 0.0
    %4590 = vmatpush1.xpose.msra.mxu0 0.0
    %4591 = vmatprep.subr.mxu0 0.0
    %4592 = vmatpush1.xpose.msra.mxu0 0.0
    %4593 = vmatprep.subr.mxu0 0.0
    %v4594 = vand.u32 %v4381, 4294901760
    %v4595 = vsub.f32 %v4381, %v4594
    %4596 = vmatpush1.xpose.msra.mxu0 %v4595
    %4597 = vmatprep.subr.mxu0 0.0
    %v4598 = vand.u32 %v4378, 4294901760
    %v4599 = vsub.f32 %v4378, %v4598
    %4600 = vmatpush1.xpose.msra.mxu0 %v4599
    %4601 = vmatprep.subr.mxu0 0.0
    %v4602 = vand.u32 %v4375, 4294901760
    %v4603 = vsub.f32 %v4375, %v4602
    %4604 = vmatpush1.xpose.msra.mxu0 %v4603
    %4605 = vmatprep.subr.mxu0 0.0
    %v4606 = vand.u32 %v4372, 4294901760
    %v4607 = vsub.f32 %v4372, %v4606
    %4608 = vmatpush1.xpose.msra.mxu0 %v4607
    %4609 = vmatprep.subr.mxu0 0.0
    %4610 = vmatpush2.xpose.msra.mxu0 0.0
    %4611 = vmatprep.subr.mxu0 0.0
    %4612 = vmatpush2.xpose.msra.mxu0 0.0
    %4613 = vmatprep.subr.mxu0 0.0
    %4614 = vmatpush2.xpose.msra.mxu0 0.0
    %4615 = vmatprep.subr.mxu0 0.0
    %4616 = vmatpush2.xpose.msra.mxu0 0.0
    %4617 = vmatprep.subr.mxu0 0.0
    %4618 = vmatpush2.xpose.msra.mxu0 0.0
    %4619 = vmatprep.subr.mxu0 0.0
    %4620 = vmatpush2.xpose.msra.mxu0 0.0
    %4621 = vmatprep.subr.mxu0 0.0
    %4622 = vmatpush2.xpose.msra.mxu0 0.0
    %4623 = vmatprep.subr.mxu0 0.0
    %4624 = vmatpush2.xpose.msra.mxu0 0.0
    %4625 = vmatprep.subr.mxu0 0.0
    %4626 = vmatpush2.xpose.msra.mxu0 0.0
    %4627 = vmatprep.subr.mxu0 0.0
    %4628 = vmatpush2.xpose.msra.mxu0 0.0
    %4629 = vmatprep.subr.mxu0 0.0
    %4630 = vmatpush2.xpose.msra.mxu0 0.0
    %4631 = vmatprep.subr.mxu0 0.0
    %4632 = vmatpush2.xpose.msra.mxu0 0.0
    %4633 = vmatprep.subr.mxu0 0.0
    %4634 = vmatpush2.xpose.msra.mxu0 0.0
    %4635 = vmatprep.subr.mxu0 0.0
    %4636 = vmatpush2.xpose.msra.mxu0 0.0
    %4637 = vmatprep.subr.mxu0 0.0
    %4638 = vmatpush2.xpose.msra.mxu0 0.0
    %4639 = vmatprep.subr.mxu0 0.0
    %4640 = vmatpush2.xpose.msra.mxu0 0.0
    %4641 = vmatprep.mubr.f32.mxu0 0.0
    %v4642 = vand.u32 %v4366, 4294901760
    %v4643 = vsub.f32 %v4366, %v4642
    %4644 = vmatmul.mubr.f32.gmra.mxu0 %v4643
    %v4645 = vpop.f32.mrf.mxu0
    %v4646 = vadd.f32 %v4560, %v4645
    %v4647 = vpop.f32.mrf.mxu0
    %4648 = vmatprep.mubr.f32.mxu0 0.0
    %v4649 = vand.u32 %v4369, 4294901760
    %v4650 = vsub.f32 %v4369, %v4649
    %4651 = vmatmul.mubr.f32.gmra.mxu0 %v4650
    %v4652 = vpop.f32.mrf.mxu0
    %v4653 = vadd.f32 %v4566, %v4652
    %v4654 = vpop.f32.mrf.mxu0
    %4655 = vdwg.mxu0
    %4656 = vmatprep.subr.mxu0 0.0
    %4657 = vmatpush1.xpose.msra.mxu0 0.0
    %4658 = vmatprep.subr.mxu0 0.0
    %4659 = vmatpush1.xpose.msra.mxu0 0.0
    %4660 = vmatprep.subr.mxu0 0.0
    %4661 = vmatpush1.xpose.msra.mxu0 0.0
    %4662 = vmatprep.subr.mxu0 0.0
    %4663 = vmatpush1.xpose.msra.mxu0 0.0
    %4664 = vmatprep.subr.mxu0 0.0
    %4665 = vmatpush1.xpose.msra.mxu0 0.0
    %4666 = vmatprep.subr.mxu0 0.0
    %4667 = vmatpush1.xpose.msra.mxu0 0.0
    %4668 = vmatprep.subr.mxu0 0.0
    %4669 = vmatpush1.xpose.msra.mxu0 0.0
    %4670 = vmatprep.subr.mxu0 0.0
    %4671 = vmatpush1.xpose.msra.mxu0 0.0
    %4672 = vmatprep.subr.mxu0 0.0
    %4673 = vmatpush1.xpose.msra.mxu0 0.0
    %4674 = vmatprep.subr.mxu0 0.0
    %4675 = vmatpush1.xpose.msra.mxu0 0.0
    %4676 = vmatprep.subr.mxu0 0.0
    %4677 = vmatpush1.xpose.msra.mxu0 0.0
    %4678 = vmatprep.subr.mxu0 0.0
    %4679 = vmatpush1.xpose.msra.mxu0 0.0
    %4680 = vmatprep.subr.mxu0 0.0
    %v4681 = vand.u32 %v4381, 4294901760
    %4682 = vmatpush1.xpose.msra.mxu0 %v4681
    %4683 = vmatprep.subr.mxu0 0.0
    %v4684 = vand.u32 %v4378, 4294901760
    %4685 = vmatpush1.xpose.msra.mxu0 %v4684
    %4686 = vmatprep.subr.mxu0 0.0
    %v4687 = vand.u32 %v4375, 4294901760
    %4688 = vmatpush1.xpose.msra.mxu0 %v4687
    %4689 = vmatprep.subr.mxu0 0.0
    %v4690 = vand.u32 %v4372, 4294901760
    %4691 = vmatpush1.xpose.msra.mxu0 %v4690
    %4692 = vmatprep.subr.mxu0 0.0
    %4693 = vmatpush2.xpose.msra.mxu0 0.0
    %4694 = vmatprep.subr.mxu0 0.0
    %4695 = vmatpush2.xpose.msra.mxu0 0.0
    %4696 = vmatprep.subr.mxu0 0.0
    %4697 = vmatpush2.xpose.msra.mxu0 0.0
    %4698 = vmatprep.subr.mxu0 0.0
    %4699 = vmatpush2.xpose.msra.mxu0 0.0
    %4700 = vmatprep.subr.mxu0 0.0
    %4701 = vmatpush2.xpose.msra.mxu0 0.0
    %4702 = vmatprep.subr.mxu0 0.0
    %4703 = vmatpush2.xpose.msra.mxu0 0.0
    %4704 = vmatprep.subr.mxu0 0.0
    %4705 = vmatpush2.xpose.msra.mxu0 0.0
    %4706 = vmatprep.subr.mxu0 0.0
    %4707 = vmatpush2.xpose.msra.mxu0 0.0
    %4708 = vmatprep.subr.mxu0 0.0
    %4709 = vmatpush2.xpose.msra.mxu0 0.0
    %4710 = vmatprep.subr.mxu0 0.0
    %4711 = vmatpush2.xpose.msra.mxu0 0.0
    %4712 = vmatprep.subr.mxu0 0.0
    %4713 = vmatpush2.xpose.msra.mxu0 0.0
    %4714 = vmatprep.subr.mxu0 0.0
    %4715 = vmatpush2.xpose.msra.mxu0 0.0
    %4716 = vmatprep.subr.mxu0 0.0
    %4717 = vmatpush2.xpose.msra.mxu0 0.0
    %4718 = vmatprep.subr.mxu0 0.0
    %4719 = vmatpush2.xpose.msra.mxu0 0.0
    %4720 = vmatprep.subr.mxu0 0.0
    %4721 = vmatpush2.xpose.msra.mxu0 0.0
    %4722 = vmatprep.subr.mxu0 0.0
    %4723 = vmatpush2.xpose.msra.mxu0 0.0
    %4724 = vmatprep.mubr.f32.mxu0 0.0
    %v4725 = vand.u32 %v4366, 4294901760
    %v4726 = vsub.f32 %v4366, %v4725
    %v4727 = vand.u32 %v4726, 4294901760
    %4728 = vmatmul.mubr.f32.gmra.mxu0 %v4727
    %v4729 = vpop.f32.mrf.mxu0
    %v4730 = vadd.f32 %v4646, %v4729
    %v4731 = vpop.f32.mrf.mxu0
    %4732 = vmatprep.mubr.f32.mxu0 0.0
    %v4733 = vand.u32 %v4369, 4294901760
    %v4734 = vsub.f32 %v4369, %v4733
    %v4735 = vand.u32 %v4734, 4294901760
    %4736 = vmatmul.mubr.f32.gmra.mxu0 %v4735
    %v4737 = vpop.f32.mrf.mxu0
    %v4738 = vadd.f32 %v4653, %v4737
    %v4739 = vpop.f32.mrf.mxu0
    %4740 = vdwg.mxu0
    %4741 = vmatprep.subr.mxu0 0.0
    %4742 = vmatpush1.xpose.msra.mxu0 0.0
    %4743 = vmatprep.subr.mxu0 0.0
    %4744 = vmatpush1.xpose.msra.mxu0 0.0
    %4745 = vmatprep.subr.mxu0 0.0
    %4746 = vmatpush1.xpose.msra.mxu0 0.0
    %4747 = vmatprep.subr.mxu0 0.0
    %4748 = vmatpush1.xpose.msra.mxu0 0.0
    %4749 = vmatprep.subr.mxu0 0.0
    %4750 = vmatpush1.xpose.msra.mxu0 0.0
    %4751 = vmatprep.subr.mxu0 0.0
    %4752 = vmatpush1.xpose.msra.mxu0 0.0
    %4753 = vmatprep.subr.mxu0 0.0
    %4754 = vmatpush1.xpose.msra.mxu0 0.0
    %4755 = vmatprep.subr.mxu0 0.0
    %4756 = vmatpush1.xpose.msra.mxu0 0.0
    %4757 = vmatprep.subr.mxu0 0.0
    %4758 = vmatpush1.xpose.msra.mxu0 0.0
    %4759 = vmatprep.subr.mxu0 0.0
    %4760 = vmatpush1.xpose.msra.mxu0 0.0
    %4761 = vmatprep.subr.mxu0 0.0
    %4762 = vmatpush1.xpose.msra.mxu0 0.0
    %4763 = vmatprep.subr.mxu0 0.0
    %4764 = vmatpush1.xpose.msra.mxu0 0.0
    %4765 = vmatprep.subr.mxu0 0.0
    %v4766 = vand.u32 %v4381, 4294901760
    %v4767 = vsub.f32 %v4381, %v4766
    %v4768 = vand.u32 %v4767, 4294901760
    %4769 = vmatpush1.xpose.msra.mxu0 %v4768
    %4770 = vmatprep.subr.mxu0 0.0
    %v4771 = vand.u32 %v4378, 4294901760
    %v4772 = vsub.f32 %v4378, %v4771
    %v4773 = vand.u32 %v4772, 4294901760
    %4774 = vmatpush1.xpose.msra.mxu0 %v4773
    %4775 = vmatprep.subr.mxu0 0.0
    %v4776 = vand.u32 %v4375, 4294901760
    %v4777 = vsub.f32 %v4375, %v4776
    %v4778 = vand.u32 %v4777, 4294901760
    %4779 = vmatpush1.xpose.msra.mxu0 %v4778
    %4780 = vmatprep.subr.mxu0 0.0
    %v4781 = vand.u32 %v4372, 4294901760
    %v4782 = vsub.f32 %v4372, %v4781
    %v4783 = vand.u32 %v4782, 4294901760
    %4784 = vmatpush1.xpose.msra.mxu0 %v4783
    %4785 = vmatprep.subr.mxu0 0.0
    %4786 = vmatpush2.xpose.msra.mxu0 0.0
    %4787 = vmatprep.subr.mxu0 0.0
    %4788 = vmatpush2.xpose.msra.mxu0 0.0
    %4789 = vmatprep.subr.mxu0 0.0
    %4790 = vmatpush2.xpose.msra.mxu0 0.0
    %4791 = vmatprep.subr.mxu0 0.0
    %4792 = vmatpush2.xpose.msra.mxu0 0.0
    %4793 = vmatprep.subr.mxu0 0.0
    %4794 = vmatpush2.xpose.msra.mxu0 0.0
    %4795 = vmatprep.subr.mxu0 0.0
    %4796 = vmatpush2.xpose.msra.mxu0 0.0
    %4797 = vmatprep.subr.mxu0 0.0
    %4798 = vmatpush2.xpose.msra.mxu0 0.0
    %4799 = vmatprep.subr.mxu0 0.0
    %4800 = vmatpush2.xpose.msra.mxu0 0.0
    %4801 = vmatprep.subr.mxu0 0.0
    %4802 = vmatpush2.xpose.msra.mxu0 0.0
    %4803 = vmatprep.subr.mxu0 0.0
    %4804 = vmatpush2.xpose.msra.mxu0 0.0
    %4805 = vmatprep.subr.mxu0 0.0
    %4806 = vmatpush2.xpose.msra.mxu0 0.0
    %4807 = vmatprep.subr.mxu0 0.0
    %4808 = vmatpush2.xpose.msra.mxu0 0.0
    %4809 = vmatprep.subr.mxu0 0.0
    %4810 = vmatpush2.xpose.msra.mxu0 0.0
    %4811 = vmatprep.subr.mxu0 0.0
    %4812 = vmatpush2.xpose.msra.mxu0 0.0
    %4813 = vmatprep.subr.mxu0 0.0
    %4814 = vmatpush2.xpose.msra.mxu0 0.0
    %4815 = vmatprep.subr.mxu0 0.0
    %4816 = vmatpush2.xpose.msra.mxu0 0.0
    %4817 = vmatprep.mubr.f32.mxu0 0.0
    %v4818 = vand.u32 %v4366, 4294901760
    %4819 = vmatmul.mubr.f32.gmra.mxu0 %v4818
    %v4820 = vpop.f32.mrf.mxu0
    %v4821 = vadd.f32 %v4730, %v4820
    %v4822 = vpop.f32.mrf.mxu0
    %4823 = vmatprep.mubr.f32.mxu0 0.0
    %v4824 = vand.u32 %v4369, 4294901760
    %4825 = vmatmul.mubr.f32.gmra.mxu0 %v4824
    %v4826 = vpop.f32.mrf.mxu0
    %v4827 = vadd.f32 %v4738, %v4826
    %v4828 = vpop.f32.mrf.mxu0
    %4829 = vdwg.mxu0
    %4830 = vmatprep.subr.mxu0 0.0
    %4831 = vmatpush1.xpose.msra.mxu0 0.0
    %4832 = vmatprep.subr.mxu0 0.0
    %4833 = vmatpush1.xpose.msra.mxu0 0.0
    %4834 = vmatprep.subr.mxu0 0.0
    %4835 = vmatpush1.xpose.msra.mxu0 0.0
    %4836 = vmatprep.subr.mxu0 0.0
    %4837 = vmatpush1.xpose.msra.mxu0 0.0
    %4838 = vmatprep.subr.mxu0 0.0
    %4839 = vmatpush1.xpose.msra.mxu0 0.0
    %4840 = vmatprep.subr.mxu0 0.0
    %4841 = vmatpush1.xpose.msra.mxu0 0.0
    %4842 = vmatprep.subr.mxu0 0.0
    %4843 = vmatpush1.xpose.msra.mxu0 0.0
    %4844 = vmatprep.subr.mxu0 0.0
    %4845 = vmatpush1.xpose.msra.mxu0 0.0
    %4846 = vmatprep.subr.mxu0 0.0
    %4847 = vmatpush1.xpose.msra.mxu0 0.0
    %4848 = vmatprep.subr.mxu0 0.0
    %4849 = vmatpush1.xpose.msra.mxu0 0.0
    %4850 = vmatprep.subr.mxu0 0.0
    %4851 = vmatpush1.xpose.msra.mxu0 0.0
    %4852 = vmatprep.subr.mxu0 0.0
    %4853 = vmatpush1.xpose.msra.mxu0 0.0
    %4854 = vmatprep.subr.mxu0 0.0
    %v4855 = vand.u32 %v4381, 4294901760
    %4856 = vmatpush1.xpose.msra.mxu0 %v4855
    %4857 = vmatprep.subr.mxu0 0.0
    %v4858 = vand.u32 %v4378, 4294901760
    %4859 = vmatpush1.xpose.msra.mxu0 %v4858
    %4860 = vmatprep.subr.mxu0 0.0
    %v4861 = vand.u32 %v4375, 4294901760
    %4862 = vmatpush1.xpose.msra.mxu0 %v4861
    %4863 = vmatprep.subr.mxu0 0.0
    %v4864 = vand.u32 %v4372, 4294901760
    %4865 = vmatpush1.xpose.msra.mxu0 %v4864
    %4866 = vmatprep.subr.mxu0 0.0
    %4867 = vmatpush2.xpose.msra.mxu0 0.0
    %4868 = vmatprep.subr.mxu0 0.0
    %4869 = vmatpush2.xpose.msra.mxu0 0.0
    %4870 = vmatprep.subr.mxu0 0.0
    %4871 = vmatpush2.xpose.msra.mxu0 0.0
    %4872 = vmatprep.subr.mxu0 0.0
    %4873 = vmatpush2.xpose.msra.mxu0 0.0
    %4874 = vmatprep.subr.mxu0 0.0
    %4875 = vmatpush2.xpose.msra.mxu0 0.0
    %4876 = vmatprep.subr.mxu0 0.0
    %4877 = vmatpush2.xpose.msra.mxu0 0.0
    %4878 = vmatprep.subr.mxu0 0.0
    %4879 = vmatpush2.xpose.msra.mxu0 0.0
    %4880 = vmatprep.subr.mxu0 0.0
    %4881 = vmatpush2.xpose.msra.mxu0 0.0
    %4882 = vmatprep.subr.mxu0 0.0
    %4883 = vmatpush2.xpose.msra.mxu0 0.0
    %4884 = vmatprep.subr.mxu0 0.0
    %4885 = vmatpush2.xpose.msra.mxu0 0.0
    %4886 = vmatprep.subr.mxu0 0.0
    %4887 = vmatpush2.xpose.msra.mxu0 0.0
    %4888 = vmatprep.subr.mxu0 0.0
    %4889 = vmatpush2.xpose.msra.mxu0 0.0
    %4890 = vmatprep.subr.mxu0 0.0
    %4891 = vmatpush2.xpose.msra.mxu0 0.0
    %4892 = vmatprep.subr.mxu0 0.0
    %4893 = vmatpush2.xpose.msra.mxu0 0.0
    %4894 = vmatprep.subr.mxu0 0.0
    %4895 = vmatpush2.xpose.msra.mxu0 0.0
    %4896 = vmatprep.subr.mxu0 0.0
    %4897 = vmatpush2.xpose.msra.mxu0 0.0
    %4898 = vmatprep.mubr.f32.mxu0 0.0
    %v4899 = vand.u32 %v4366, 4294901760
    %4900 = vmatmul.mubr.f32.gmra.mxu0 %v4899
    %v4901 = vpop.f32.mrf.mxu0
    %v4902 = vadd.f32 %v4821, %v4901
    %v4903 = vpop.f32.mrf.mxu0
    %4904 = vmatprep.mubr.f32.mxu0 0.0
    %v4905 = vand.u32 %v4369, 4294901760
    %4906 = vmatmul.mubr.f32.gmra.mxu0 %v4905
    %v4907 = vpop.f32.mrf.mxu0
    %v4908 = vadd.f32 %v4827, %v4907
    %v4909 = vpop.f32.mrf.mxu0
    %4910 = vdwg.mxu0
    %v4912 = vsel %vm737, %v4902, 0
    %v4915 = vsel %vm737, %v4908, 0
    %4917 = vmatprep.subr.mxu0 0.0
    %4918 = vmatpush1.msra.mxu0 0.0
    %4919 = vmatprep.subr.mxu0 0.0
    %4920 = vmatpush1.msra.mxu0 0.0
    %4921 = vmatprep.subr.mxu0 0.0
    %4922 = vmatpush1.msra.mxu0 0.0
    %4923 = vmatprep.subr.mxu0 0.0
    %4924 = vmatpush1.msra.mxu0 0.0
    %4925 = vmatprep.subr.mxu0 0.0
    %4926 = vmatpush1.msra.mxu0 0.0
    %4927 = vmatprep.subr.mxu0 0.0
    %4928 = vmatpush1.msra.mxu0 0.0
    %4929 = vmatprep.subr.mxu0 0.0
    %4930 = vmatpush1.msra.mxu0 0.0
    %4931 = vmatprep.subr.mxu0 0.0
    %4932 = vmatpush1.msra.mxu0 0.0
    %4933 = vmatprep.subr.mxu0 0.0
    %4934 = vmatpush1.msra.mxu0 0.0
    %4935 = vmatprep.subr.mxu0 0.0
    %4936 = vmatpush1.msra.mxu0 0.0
    %4937 = vmatprep.subr.mxu0 0.0
    %4938 = vmatpush1.msra.mxu0 0.0
    %4939 = vmatprep.subr.mxu0 0.0
    %4940 = vmatpush1.msra.mxu0 0.0
    %4941 = vmatprep.subr.mxu0 0.0
    %4942 = vmatpush1.msra.mxu0 0.0
    %4943 = vmatprep.subr.mxu0 0.0
    %4944 = vmatpush1.msra.mxu0 0.0
    %4945 = vmatprep.subr.mxu0 0.0
    %v4946 = vand.u32 %v62, 4294901760
    %4947 = vmatpush1.msra.mxu0 %v4946
    %4948 = vmatprep.subr.mxu0 0.0
    %v4949 = vand.u32 %v61, 4294901760
    %4950 = vmatpush1.msra.mxu0 %v4949
    %4951 = vmatprep.subr.mxu0 0.0
    %4952 = vmatpush2.msra.mxu0 0.0
    %4953 = vmatprep.subr.mxu0 0.0
    %4954 = vmatpush2.msra.mxu0 0.0
    %4955 = vmatprep.subr.mxu0 0.0
    %4956 = vmatpush2.msra.mxu0 0.0
    %4957 = vmatprep.subr.mxu0 0.0
    %4958 = vmatpush2.msra.mxu0 0.0
    %4959 = vmatprep.subr.mxu0 0.0
    %4960 = vmatpush2.msra.mxu0 0.0
    %4961 = vmatprep.subr.mxu0 0.0
    %4962 = vmatpush2.msra.mxu0 0.0
    %4963 = vmatprep.subr.mxu0 0.0
    %4964 = vmatpush2.msra.mxu0 0.0
    %4965 = vmatprep.subr.mxu0 0.0
    %4966 = vmatpush2.msra.mxu0 0.0
    %4967 = vmatprep.subr.mxu0 0.0
    %4968 = vmatpush2.msra.mxu0 0.0
    %4969 = vmatprep.subr.mxu0 0.0
    %4970 = vmatpush2.msra.mxu0 0.0
    %4971 = vmatprep.subr.mxu0 0.0
    %4972 = vmatpush2.msra.mxu0 0.0
    %4973 = vmatprep.subr.mxu0 0.0
    %4974 = vmatpush2.msra.mxu0 0.0
    %4975 = vmatprep.subr.mxu0 0.0
    %4976 = vmatpush2.msra.mxu0 0.0
    %4977 = vmatprep.subr.mxu0 0.0
    %4978 = vmatpush2.msra.mxu0 0.0
    %4979 = vmatprep.subr.mxu0 0.0
    %4980 = vmatpush2.msra.mxu0 0.0
    %4981 = vmatprep.subr.mxu0 0.0
    %4982 = vmatpush2.msra.mxu0 0.0
    %4983 = vmatprep.mubr.f32.mxu0 0.0
    %v4984 = vand.u32 %v4912, 4294901760
    %v4985 = vsub.f32 %v4912, %v4984
    %v4986 = vand.u32 %v4985, 4294901760
    %v4987 = vsub.f32 %v4985, %v4986
    %v4988 = vand.u32 %v4987, 4294901760
    %4989 = vmatmul.mubr.f32.gmra.mxu0 %v4988
    %v4990 = vpop.f32.mrf.mxu0
    %v4991 = vadd.f32 0.0, %v4990
    %v4992 = vpop.f32.mrf.mxu0
    %4993 = vmatprep.mubr.f32.mxu0 0.0
    %v4994 = vand.u32 %v4915, 4294901760
    %v4995 = vsub.f32 %v4915, %v4994
    %v4996 = vand.u32 %v4995, 4294901760
    %v4997 = vsub.f32 %v4995, %v4996
    %v4998 = vand.u32 %v4997, 4294901760
    %4999 = vmatmul.mubr.f32.gmra.mxu0 %v4998
    %v5000 = vpop.f32.mrf.mxu0
    %v5001 = vadd.f32 0.0, %v5000
    %v5002 = vpop.f32.mrf.mxu0
    %5003 = vdwg.mxu0
    %5004 = vmatprep.subr.mxu0 0.0
    %5005 = vmatpush1.msra.mxu0 0.0
    %5006 = vmatprep.subr.mxu0 0.0
    %5007 = vmatpush1.msra.mxu0 0.0
    %5008 = vmatprep.subr.mxu0 0.0
    %5009 = vmatpush1.msra.mxu0 0.0
    %5010 = vmatprep.subr.mxu0 0.0
    %5011 = vmatpush1.msra.mxu0 0.0
    %5012 = vmatprep.subr.mxu0 0.0
    %5013 = vmatpush1.msra.mxu0 0.0
    %5014 = vmatprep.subr.mxu0 0.0
    %5015 = vmatpush1.msra.mxu0 0.0
    %5016 = vmatprep.subr.mxu0 0.0
    %5017 = vmatpush1.msra.mxu0 0.0
    %5018 = vmatprep.subr.mxu0 0.0
    %5019 = vmatpush1.msra.mxu0 0.0
    %5020 = vmatprep.subr.mxu0 0.0
    %5021 = vmatpush1.msra.mxu0 0.0
    %5022 = vmatprep.subr.mxu0 0.0
    %5023 = vmatpush1.msra.mxu0 0.0
    %5024 = vmatprep.subr.mxu0 0.0
    %5025 = vmatpush1.msra.mxu0 0.0
    %5026 = vmatprep.subr.mxu0 0.0
    %5027 = vmatpush1.msra.mxu0 0.0
    %5028 = vmatprep.subr.mxu0 0.0
    %5029 = vmatpush1.msra.mxu0 0.0
    %5030 = vmatprep.subr.mxu0 0.0
    %5031 = vmatpush1.msra.mxu0 0.0
    %5032 = vmatprep.subr.mxu0 0.0
    %v5033 = vand.u32 %v62, 4294901760
    %v5034 = vsub.f32 %v62, %v5033
    %v5035 = vand.u32 %v5034, 4294901760
    %v5036 = vsub.f32 %v5034, %v5035
    %v5037 = vand.u32 %v5036, 4294901760
    %5038 = vmatpush1.msra.mxu0 %v5037
    %5039 = vmatprep.subr.mxu0 0.0
    %v5040 = vand.u32 %v61, 4294901760
    %v5041 = vsub.f32 %v61, %v5040
    %v5042 = vand.u32 %v5041, 4294901760
    %v5043 = vsub.f32 %v5041, %v5042
    %v5044 = vand.u32 %v5043, 4294901760
    %5045 = vmatpush1.msra.mxu0 %v5044
    %5046 = vmatprep.subr.mxu0 0.0
    %5047 = vmatpush2.msra.mxu0 0.0
    %5048 = vmatprep.subr.mxu0 0.0
    %5049 = vmatpush2.msra.mxu0 0.0
    %5050 = vmatprep.subr.mxu0 0.0
    %5051 = vmatpush2.msra.mxu0 0.0
    %5052 = vmatprep.subr.mxu0 0.0
    %5053 = vmatpush2.msra.mxu0 0.0
    %5054 = vmatprep.subr.mxu0 0.0
    %5055 = vmatpush2.msra.mxu0 0.0
    %5056 = vmatprep.subr.mxu0 0.0
    %5057 = vmatpush2.msra.mxu0 0.0
    %5058 = vmatprep.subr.mxu0 0.0
    %5059 = vmatpush2.msra.mxu0 0.0
    %5060 = vmatprep.subr.mxu0 0.0
    %5061 = vmatpush2.msra.mxu0 0.0
    %5062 = vmatprep.subr.mxu0 0.0
    %5063 = vmatpush2.msra.mxu0 0.0
    %5064 = vmatprep.subr.mxu0 0.0
    %5065 = vmatpush2.msra.mxu0 0.0
    %5066 = vmatprep.subr.mxu0 0.0
    %5067 = vmatpush2.msra.mxu0 0.0
    %5068 = vmatprep.subr.mxu0 0.0
    %5069 = vmatpush2.msra.mxu0 0.0
    %5070 = vmatprep.subr.mxu0 0.0
    %5071 = vmatpush2.msra.mxu0 0.0
    %5072 = vmatprep.subr.mxu0 0.0
    %5073 = vmatpush2.msra.mxu0 0.0
    %5074 = vmatprep.subr.mxu0 0.0
    %5075 = vmatpush2.msra.mxu0 0.0
    %5076 = vmatprep.subr.mxu0 0.0
    %5077 = vmatpush2.msra.mxu0 0.0
    %5078 = vmatprep.mubr.f32.mxu0 0.0
    %v5079 = vand.u32 %v4912, 4294901760
    %5080 = vmatmul.mubr.f32.gmra.mxu0 %v5079
    %v5081 = vpop.f32.mrf.mxu0
    %v5082 = vadd.f32 %v4991, %v5081
    %v5083 = vpop.f32.mrf.mxu0
    %5084 = vmatprep.mubr.f32.mxu0 0.0
    %v5085 = vand.u32 %v4915, 4294901760
    %5086 = vmatmul.mubr.f32.gmra.mxu0 %v5085
    %v5087 = vpop.f32.mrf.mxu0
    %v5088 = vadd.f32 %v5001, %v5087
    %v5089 = vpop.f32.mrf.mxu0
    %5090 = vdwg.mxu0
    %5091 = vmatprep.subr.mxu0 0.0
    %5092 = vmatpush1.msra.mxu0 0.0
    %5093 = vmatprep.subr.mxu0 0.0
    %5094 = vmatpush1.msra.mxu0 0.0
    %5095 = vmatprep.subr.mxu0 0.0
    %5096 = vmatpush1.msra.mxu0 0.0
    %5097 = vmatprep.subr.mxu0 0.0
    %5098 = vmatpush1.msra.mxu0 0.0
    %5099 = vmatprep.subr.mxu0 0.0
    %5100 = vmatpush1.msra.mxu0 0.0
    %5101 = vmatprep.subr.mxu0 0.0
    %5102 = vmatpush1.msra.mxu0 0.0
    %5103 = vmatprep.subr.mxu0 0.0
    %5104 = vmatpush1.msra.mxu0 0.0
    %5105 = vmatprep.subr.mxu0 0.0
    %5106 = vmatpush1.msra.mxu0 0.0
    %5107 = vmatprep.subr.mxu0 0.0
    %5108 = vmatpush1.msra.mxu0 0.0
    %5109 = vmatprep.subr.mxu0 0.0
    %5110 = vmatpush1.msra.mxu0 0.0
    %5111 = vmatprep.subr.mxu0 0.0
    %5112 = vmatpush1.msra.mxu0 0.0
    %5113 = vmatprep.subr.mxu0 0.0
    %5114 = vmatpush1.msra.mxu0 0.0
    %5115 = vmatprep.subr.mxu0 0.0
    %5116 = vmatpush1.msra.mxu0 0.0
    %5117 = vmatprep.subr.mxu0 0.0
    %5118 = vmatpush1.msra.mxu0 0.0
    %5119 = vmatprep.subr.mxu0 0.0
    %v5120 = vand.u32 %v62, 4294901760
    %v5121 = vsub.f32 %v62, %v5120
    %5122 = vmatpush1.msra.mxu0 %v5121
    %5123 = vmatprep.subr.mxu0 0.0
    %v5124 = vand.u32 %v61, 4294901760
    %v5125 = vsub.f32 %v61, %v5124
    %5126 = vmatpush1.msra.mxu0 %v5125
    %5127 = vmatprep.subr.mxu0 0.0
    %5128 = vmatpush2.msra.mxu0 0.0
    %5129 = vmatprep.subr.mxu0 0.0
    %5130 = vmatpush2.msra.mxu0 0.0
    %5131 = vmatprep.subr.mxu0 0.0
    %5132 = vmatpush2.msra.mxu0 0.0
    %5133 = vmatprep.subr.mxu0 0.0
    %5134 = vmatpush2.msra.mxu0 0.0
    %5135 = vmatprep.subr.mxu0 0.0
    %5136 = vmatpush2.msra.mxu0 0.0
    %5137 = vmatprep.subr.mxu0 0.0
    %5138 = vmatpush2.msra.mxu0 0.0
    %5139 = vmatprep.subr.mxu0 0.0
    %5140 = vmatpush2.msra.mxu0 0.0
    %5141 = vmatprep.subr.mxu0 0.0
    %5142 = vmatpush2.msra.mxu0 0.0
    %5143 = vmatprep.subr.mxu0 0.0
    %5144 = vmatpush2.msra.mxu0 0.0
    %5145 = vmatprep.subr.mxu0 0.0
    %5146 = vmatpush2.msra.mxu0 0.0
    %5147 = vmatprep.subr.mxu0 0.0
    %5148 = vmatpush2.msra.mxu0 0.0
    %5149 = vmatprep.subr.mxu0 0.0
    %5150 = vmatpush2.msra.mxu0 0.0
    %5151 = vmatprep.subr.mxu0 0.0
    %5152 = vmatpush2.msra.mxu0 0.0
    %5153 = vmatprep.subr.mxu0 0.0
    %5154 = vmatpush2.msra.mxu0 0.0
    %5155 = vmatprep.subr.mxu0 0.0
    %5156 = vmatpush2.msra.mxu0 0.0
    %5157 = vmatprep.subr.mxu0 0.0
    %5158 = vmatpush2.msra.mxu0 0.0
    %5159 = vmatprep.mubr.f32.mxu0 0.0
    %v5160 = vand.u32 %v4912, 4294901760
    %v5161 = vsub.f32 %v4912, %v5160
    %5162 = vmatmul.mubr.f32.gmra.mxu0 %v5161
    %v5163 = vpop.f32.mrf.mxu0
    %v5164 = vadd.f32 %v5082, %v5163
    %v5165 = vpop.f32.mrf.mxu0
    %5166 = vmatprep.mubr.f32.mxu0 0.0
    %v5167 = vand.u32 %v4915, 4294901760
    %v5168 = vsub.f32 %v4915, %v5167
    %5169 = vmatmul.mubr.f32.gmra.mxu0 %v5168
    %v5170 = vpop.f32.mrf.mxu0
    %v5171 = vadd.f32 %v5088, %v5170
    %v5172 = vpop.f32.mrf.mxu0
    %5173 = vdwg.mxu0
    %5174 = vmatprep.subr.mxu0 0.0
    %5175 = vmatpush1.msra.mxu0 0.0
    %5176 = vmatprep.subr.mxu0 0.0
    %5177 = vmatpush1.msra.mxu0 0.0
    %5178 = vmatprep.subr.mxu0 0.0
    %5179 = vmatpush1.msra.mxu0 0.0
    %5180 = vmatprep.subr.mxu0 0.0
    %5181 = vmatpush1.msra.mxu0 0.0
    %5182 = vmatprep.subr.mxu0 0.0
    %5183 = vmatpush1.msra.mxu0 0.0
    %5184 = vmatprep.subr.mxu0 0.0
    %5185 = vmatpush1.msra.mxu0 0.0
    %5186 = vmatprep.subr.mxu0 0.0
    %5187 = vmatpush1.msra.mxu0 0.0
    %5188 = vmatprep.subr.mxu0 0.0
    %5189 = vmatpush1.msra.mxu0 0.0
    %5190 = vmatprep.subr.mxu0 0.0
    %5191 = vmatpush1.msra.mxu0 0.0
    %5192 = vmatprep.subr.mxu0 0.0
    %5193 = vmatpush1.msra.mxu0 0.0
    %5194 = vmatprep.subr.mxu0 0.0
    %5195 = vmatpush1.msra.mxu0 0.0
    %5196 = vmatprep.subr.mxu0 0.0
    %5197 = vmatpush1.msra.mxu0 0.0
    %5198 = vmatprep.subr.mxu0 0.0
    %5199 = vmatpush1.msra.mxu0 0.0
    %5200 = vmatprep.subr.mxu0 0.0
    %5201 = vmatpush1.msra.mxu0 0.0
    %5202 = vmatprep.subr.mxu0 0.0
    %v5203 = vand.u32 %v62, 4294901760
    %5204 = vmatpush1.msra.mxu0 %v5203
    %5205 = vmatprep.subr.mxu0 0.0
    %v5206 = vand.u32 %v61, 4294901760
    %5207 = vmatpush1.msra.mxu0 %v5206
    %5208 = vmatprep.subr.mxu0 0.0
    %5209 = vmatpush2.msra.mxu0 0.0
    %5210 = vmatprep.subr.mxu0 0.0
    %5211 = vmatpush2.msra.mxu0 0.0
    %5212 = vmatprep.subr.mxu0 0.0
    %5213 = vmatpush2.msra.mxu0 0.0
    %5214 = vmatprep.subr.mxu0 0.0
    %5215 = vmatpush2.msra.mxu0 0.0
    %5216 = vmatprep.subr.mxu0 0.0
    %5217 = vmatpush2.msra.mxu0 0.0
    %5218 = vmatprep.subr.mxu0 0.0
    %5219 = vmatpush2.msra.mxu0 0.0
    %5220 = vmatprep.subr.mxu0 0.0
    %5221 = vmatpush2.msra.mxu0 0.0
    %5222 = vmatprep.subr.mxu0 0.0
    %5223 = vmatpush2.msra.mxu0 0.0
    %5224 = vmatprep.subr.mxu0 0.0
    %5225 = vmatpush2.msra.mxu0 0.0
    %5226 = vmatprep.subr.mxu0 0.0
    %5227 = vmatpush2.msra.mxu0 0.0
    %5228 = vmatprep.subr.mxu0 0.0
    %5229 = vmatpush2.msra.mxu0 0.0
    %5230 = vmatprep.subr.mxu0 0.0
    %5231 = vmatpush2.msra.mxu0 0.0
    %5232 = vmatprep.subr.mxu0 0.0
    %5233 = vmatpush2.msra.mxu0 0.0
    %5234 = vmatprep.subr.mxu0 0.0
    %5235 = vmatpush2.msra.mxu0 0.0
    %5236 = vmatprep.subr.mxu0 0.0
    %5237 = vmatpush2.msra.mxu0 0.0
    %5238 = vmatprep.subr.mxu0 0.0
    %5239 = vmatpush2.msra.mxu0 0.0
    %5240 = vmatprep.mubr.f32.mxu0 0.0
    %v5241 = vand.u32 %v4912, 4294901760
    %v5242 = vsub.f32 %v4912, %v5241
    %v5243 = vand.u32 %v5242, 4294901760
    %5244 = vmatmul.mubr.f32.gmra.mxu0 %v5243
    %v5245 = vpop.f32.mrf.mxu0
    %v5246 = vadd.f32 %v5164, %v5245
    %v5247 = vpop.f32.mrf.mxu0
    %5248 = vmatprep.mubr.f32.mxu0 0.0
    %v5249 = vand.u32 %v4915, 4294901760
    %v5250 = vsub.f32 %v4915, %v5249
    %v5251 = vand.u32 %v5250, 4294901760
    %5252 = vmatmul.mubr.f32.gmra.mxu0 %v5251
    %v5253 = vpop.f32.mrf.mxu0
    %v5254 = vadd.f32 %v5171, %v5253
    %v5255 = vpop.f32.mrf.mxu0
    %5256 = vdwg.mxu0
    %5257 = vmatprep.subr.mxu0 0.0
    %5258 = vmatpush1.msra.mxu0 0.0
    %5259 = vmatprep.subr.mxu0 0.0
    %5260 = vmatpush1.msra.mxu0 0.0
    %5261 = vmatprep.subr.mxu0 0.0
    %5262 = vmatpush1.msra.mxu0 0.0
    %5263 = vmatprep.subr.mxu0 0.0
    %5264 = vmatpush1.msra.mxu0 0.0
    %5265 = vmatprep.subr.mxu0 0.0
    %5266 = vmatpush1.msra.mxu0 0.0
    %5267 = vmatprep.subr.mxu0 0.0
    %5268 = vmatpush1.msra.mxu0 0.0
    %5269 = vmatprep.subr.mxu0 0.0
    %5270 = vmatpush1.msra.mxu0 0.0
    %5271 = vmatprep.subr.mxu0 0.0
    %5272 = vmatpush1.msra.mxu0 0.0
    %5273 = vmatprep.subr.mxu0 0.0
    %5274 = vmatpush1.msra.mxu0 0.0
    %5275 = vmatprep.subr.mxu0 0.0
    %5276 = vmatpush1.msra.mxu0 0.0
    %5277 = vmatprep.subr.mxu0 0.0
    %5278 = vmatpush1.msra.mxu0 0.0
    %5279 = vmatprep.subr.mxu0 0.0
    %5280 = vmatpush1.msra.mxu0 0.0
    %5281 = vmatprep.subr.mxu0 0.0
    %5282 = vmatpush1.msra.mxu0 0.0
    %5283 = vmatprep.subr.mxu0 0.0
    %5284 = vmatpush1.msra.mxu0 0.0
    %5285 = vmatprep.subr.mxu0 0.0
    %v5286 = vand.u32 %v62, 4294901760
    %v5287 = vsub.f32 %v62, %v5286
    %v5288 = vand.u32 %v5287, 4294901760
    %5289 = vmatpush1.msra.mxu0 %v5288
    %5290 = vmatprep.subr.mxu0 0.0
    %v5291 = vand.u32 %v61, 4294901760
    %v5292 = vsub.f32 %v61, %v5291
    %v5293 = vand.u32 %v5292, 4294901760
    %5294 = vmatpush1.msra.mxu0 %v5293
    %5295 = vmatprep.subr.mxu0 0.0
    %5296 = vmatpush2.msra.mxu0 0.0
    %5297 = vmatprep.subr.mxu0 0.0
    %5298 = vmatpush2.msra.mxu0 0.0
    %5299 = vmatprep.subr.mxu0 0.0
    %5300 = vmatpush2.msra.mxu0 0.0
    %5301 = vmatprep.subr.mxu0 0.0
    %5302 = vmatpush2.msra.mxu0 0.0
    %5303 = vmatprep.subr.mxu0 0.0
    %5304 = vmatpush2.msra.mxu0 0.0
    %5305 = vmatprep.subr.mxu0 0.0
    %5306 = vmatpush2.msra.mxu0 0.0
    %5307 = vmatprep.subr.mxu0 0.0
    %5308 = vmatpush2.msra.mxu0 0.0
    %5309 = vmatprep.subr.mxu0 0.0
    %5310 = vmatpush2.msra.mxu0 0.0
    %5311 = vmatprep.subr.mxu0 0.0
    %5312 = vmatpush2.msra.mxu0 0.0
    %5313 = vmatprep.subr.mxu0 0.0
    %5314 = vmatpush2.msra.mxu0 0.0
    %5315 = vmatprep.subr.mxu0 0.0
    %5316 = vmatpush2.msra.mxu0 0.0
    %5317 = vmatprep.subr.mxu0 0.0
    %5318 = vmatpush2.msra.mxu0 0.0
    %5319 = vmatprep.subr.mxu0 0.0
    %5320 = vmatpush2.msra.mxu0 0.0
    %5321 = vmatprep.subr.mxu0 0.0
    %5322 = vmatpush2.msra.mxu0 0.0
    %5323 = vmatprep.subr.mxu0 0.0
    %5324 = vmatpush2.msra.mxu0 0.0
    %5325 = vmatprep.subr.mxu0 0.0
    %5326 = vmatpush2.msra.mxu0 0.0
    %5327 = vmatprep.mubr.f32.mxu0 0.0
    %v5328 = vand.u32 %v4912, 4294901760
    %5329 = vmatmul.mubr.f32.gmra.mxu0 %v5328
    %v5330 = vpop.f32.mrf.mxu0
    %v5331 = vadd.f32 %v5246, %v5330
    %v5332 = vpop.f32.mrf.mxu0
    %5333 = vmatprep.mubr.f32.mxu0 0.0
    %v5334 = vand.u32 %v4915, 4294901760
    %5335 = vmatmul.mubr.f32.gmra.mxu0 %v5334
    %v5336 = vpop.f32.mrf.mxu0
    %v5337 = vadd.f32 %v5254, %v5336
    %v5338 = vpop.f32.mrf.mxu0
    %5339 = vdwg.mxu0
    %5340 = vmatprep.subr.mxu0 0.0
    %5341 = vmatpush1.msra.mxu0 0.0
    %5342 = vmatprep.subr.mxu0 0.0
    %5343 = vmatpush1.msra.mxu0 0.0
    %5344 = vmatprep.subr.mxu0 0.0
    %5345 = vmatpush1.msra.mxu0 0.0
    %5346 = vmatprep.subr.mxu0 0.0
    %5347 = vmatpush1.msra.mxu0 0.0
    %5348 = vmatprep.subr.mxu0 0.0
    %5349 = vmatpush1.msra.mxu0 0.0
    %5350 = vmatprep.subr.mxu0 0.0
    %5351 = vmatpush1.msra.mxu0 0.0
    %5352 = vmatprep.subr.mxu0 0.0
    %5353 = vmatpush1.msra.mxu0 0.0
    %5354 = vmatprep.subr.mxu0 0.0
    %5355 = vmatpush1.msra.mxu0 0.0
    %5356 = vmatprep.subr.mxu0 0.0
    %5357 = vmatpush1.msra.mxu0 0.0
    %5358 = vmatprep.subr.mxu0 0.0
    %5359 = vmatpush1.msra.mxu0 0.0
    %5360 = vmatprep.subr.mxu0 0.0
    %5361 = vmatpush1.msra.mxu0 0.0
    %5362 = vmatprep.subr.mxu0 0.0
    %5363 = vmatpush1.msra.mxu0 0.0
    %5364 = vmatprep.subr.mxu0 0.0
    %5365 = vmatpush1.msra.mxu0 0.0
    %5366 = vmatprep.subr.mxu0 0.0
    %5367 = vmatpush1.msra.mxu0 0.0
    %5368 = vmatprep.subr.mxu0 0.0
    %v5369 = vand.u32 %v62, 4294901760
    %5370 = vmatpush1.msra.mxu0 %v5369
    %5371 = vmatprep.subr.mxu0 0.0
    %v5372 = vand.u32 %v61, 4294901760
    %5373 = vmatpush1.msra.mxu0 %v5372
    %5374 = vmatprep.subr.mxu0 0.0
    %5375 = vmatpush2.msra.mxu0 0.0
    %5376 = vmatprep.subr.mxu0 0.0
    %5377 = vmatpush2.msra.mxu0 0.0
    %5378 = vmatprep.subr.mxu0 0.0
    %5379 = vmatpush2.msra.mxu0 0.0
    %5380 = vmatprep.subr.mxu0 0.0
    %5381 = vmatpush2.msra.mxu0 0.0
    %5382 = vmatprep.subr.mxu0 0.0
    %5383 = vmatpush2.msra.mxu0 0.0
    %5384 = vmatprep.subr.mxu0 0.0
    %5385 = vmatpush2.msra.mxu0 0.0
    %5386 = vmatprep.subr.mxu0 0.0
    %5387 = vmatpush2.msra.mxu0 0.0
    %5388 = vmatprep.subr.mxu0 0.0
    %5389 = vmatpush2.msra.mxu0 0.0
    %5390 = vmatprep.subr.mxu0 0.0
    %5391 = vmatpush2.msra.mxu0 0.0
    %5392 = vmatprep.subr.mxu0 0.0
    %5393 = vmatpush2.msra.mxu0 0.0
    %5394 = vmatprep.subr.mxu0 0.0
    %5395 = vmatpush2.msra.mxu0 0.0
    %5396 = vmatprep.subr.mxu0 0.0
    %5397 = vmatpush2.msra.mxu0 0.0
    %5398 = vmatprep.subr.mxu0 0.0
    %5399 = vmatpush2.msra.mxu0 0.0
    %5400 = vmatprep.subr.mxu0 0.0
    %5401 = vmatpush2.msra.mxu0 0.0
    %5402 = vmatprep.subr.mxu0 0.0
    %5403 = vmatpush2.msra.mxu0 0.0
    %5404 = vmatprep.subr.mxu0 0.0
    %5405 = vmatpush2.msra.mxu0 0.0
    %5406 = vmatprep.mubr.f32.mxu0 0.0
    %v5407 = vand.u32 %v4912, 4294901760
    %5408 = vmatmul.mubr.f32.gmra.mxu0 %v5407
    %v5409 = vpop.f32.mrf.mxu0
    %v5410 = vadd.f32 %v5331, %v5409
    %v5411 = vpop.f32.mrf.mxu0
    %5412 = vmatprep.mubr.f32.mxu0 0.0
    %v5413 = vand.u32 %v4915, 4294901760
    %5414 = vmatmul.mubr.f32.gmra.mxu0 %v5413
    %v5415 = vpop.f32.mrf.mxu0
    %v5416 = vadd.f32 %v5337, %v5415
    %v5417 = vpop.f32.mrf.mxu0
    %5418 = vdwg.mxu0
    %v5419 = vsel %vm737, %v5410, %v4902
    %v5420 = vsel %vm737, %v5416, %v4908
    %v5421 = vld [vmem:[%s14] sm:$0xff]
    %v5422 = vld [vmem:[%s14 + $0x8] sm:$0xff]
    %5424 = vset.pattern.permute.xlu0 0
    %5425 = vperm.xlu0 %5424, %v5421
    %v5426 = vpop.permute.xlu0 %5425
    %5429 = vset.pattern.permute.xlu0 0
    %5430 = vperm.xlu0 %5429, %v5422
    %v5431 = vpop.permute.xlu0 %5430
    %v5433 = vadd.f32 %v5419, %v5426
    %v5434 = vadd.f32 %v5420, %v5431
    %v5435 = vmax.f32 %v5433, 0.0
    %v5436 = vmax.f32 %v5434, 0.0
    %v5437 = vld [vmem:[%s15] sm:$0x1]
    %v5439 = vsel %vm737, %v5437, 0
    %5441 = vmatprep.subr.mxu0 0.0
    %5442 = vmatpush1.msra.mxu0 0.0
    %5443 = vmatprep.subr.mxu0 0.0
    %5444 = vmatpush1.msra.mxu0 0.0
    %5445 = vmatprep.subr.mxu0 0.0
    %5446 = vmatpush1.msra.mxu0 0.0
    %5447 = vmatprep.subr.mxu0 0.0
    %5448 = vmatpush1.msra.mxu0 0.0
    %5449 = vmatprep.subr.mxu0 0.0
    %5450 = vmatpush1.msra.mxu0 0.0
    %5451 = vmatprep.subr.mxu0 0.0
    %5452 = vmatpush1.msra.mxu0 0.0
    %5453 = vmatprep.subr.mxu0 0.0
    %5454 = vmatpush1.msra.mxu0 0.0
    %5455 = vmatprep.subr.mxu0 0.0
    %5456 = vmatpush1.msra.mxu0 0.0
    %5457 = vmatprep.subr.mxu0 0.0
    %5458 = vmatpush1.msra.mxu0 0.0
    %5459 = vmatprep.subr.mxu0 0.0
    %5460 = vmatpush1.msra.mxu0 0.0
    %5461 = vmatprep.subr.mxu0 0.0
    %5462 = vmatpush1.msra.mxu0 0.0
    %5463 = vmatprep.subr.mxu0 0.0
    %5464 = vmatpush1.msra.mxu0 0.0
    %5465 = vmatprep.subr.mxu0 0.0
    %5466 = vmatpush1.msra.mxu0 0.0
    %5467 = vmatprep.subr.mxu0 0.0
    %5468 = vmatpush1.msra.mxu0 0.0
    %5469 = vmatprep.subr.mxu0 0.0
    %v5470 = vand.u32 %v5436, 4294901760
    %5471 = vmatpush1.msra.mxu0 %v5470
    %5472 = vmatprep.subr.mxu0 0.0
    %v5473 = vand.u32 %v5435, 4294901760
    %5474 = vmatpush1.msra.mxu0 %v5473
    %5475 = vmatprep.subr.mxu0 0.0
    %5476 = vmatpush2.msra.mxu0 0.0
    %5477 = vmatprep.subr.mxu0 0.0
    %5478 = vmatpush2.msra.mxu0 0.0
    %5479 = vmatprep.subr.mxu0 0.0
    %5480 = vmatpush2.msra.mxu0 0.0
    %5481 = vmatprep.subr.mxu0 0.0
    %5482 = vmatpush2.msra.mxu0 0.0
    %5483 = vmatprep.subr.mxu0 0.0
    %5484 = vmatpush2.msra.mxu0 0.0
    %5485 = vmatprep.subr.mxu0 0.0
    %5486 = vmatpush2.msra.mxu0 0.0
    %5487 = vmatprep.subr.mxu0 0.0
    %5488 = vmatpush2.msra.mxu0 0.0
    %5489 = vmatprep.subr.mxu0 0.0
    %5490 = vmatpush2.msra.mxu0 0.0
    %5491 = vmatprep.subr.mxu0 0.0
    %5492 = vmatpush2.msra.mxu0 0.0
    %5493 = vmatprep.subr.mxu0 0.0
    %5494 = vmatpush2.msra.mxu0 0.0
    %5495 = vmatprep.subr.mxu0 0.0
    %5496 = vmatpush2.msra.mxu0 0.0
    %5497 = vmatprep.subr.mxu0 0.0
    %5498 = vmatpush2.msra.mxu0 0.0
    %5499 = vmatprep.subr.mxu0 0.0
    %5500 = vmatpush2.msra.mxu0 0.0
    %5501 = vmatprep.subr.mxu0 0.0
    %5502 = vmatpush2.msra.mxu0 0.0
    %5503 = vmatprep.subr.mxu0 0.0
    %5504 = vmatpush2.msra.mxu0 0.0
    %5505 = vmatprep.subr.mxu0 0.0
    %5506 = vmatpush2.msra.mxu0 0.0
    %5507 = vmatprep.mubr.f32.mxu0 0.0
    %v5508 = vand.u32 %v5439, 4294901760
    %v5509 = vsub.f32 %v5439, %v5508
    %v5510 = vand.u32 %v5509, 4294901760
    %v5511 = vsub.f32 %v5509, %v5510
    %v5512 = vand.u32 %v5511, 4294901760
    %5513 = vmatmul.mubr.f32.gmra.mxu0 %v5512
    %v5514 = vpop.f32.mrf.mxu0
    %v5515 = vadd.f32 0.0, %v5514
    %v5516 = vpop.f32.mrf.mxu0
    %5517 = vdwg.mxu0
    %5518 = vmatprep.subr.mxu0 0.0
    %5519 = vmatpush1.msra.mxu0 0.0
    %5520 = vmatprep.subr.mxu0 0.0
    %5521 = vmatpush1.msra.mxu0 0.0
    %5522 = vmatprep.subr.mxu0 0.0
    %5523 = vmatpush1.msra.mxu0 0.0
    %5524 = vmatprep.subr.mxu0 0.0
    %5525 = vmatpush1.msra.mxu0 0.0
    %5526 = vmatprep.subr.mxu0 0.0
    %5527 = vmatpush1.msra.mxu0 0.0
    %5528 = vmatprep.subr.mxu0 0.0
    %5529 = vmatpush1.msra.mxu0 0.0
    %5530 = vmatprep.subr.mxu0 0.0
    %5531 = vmatpush1.msra.mxu0 0.0
    %5532 = vmatprep.subr.mxu0 0.0
    %5533 = vmatpush1.msra.mxu0 0.0
    %5534 = vmatprep.subr.mxu0 0.0
    %5535 = vmatpush1.msra.mxu0 0.0
    %5536 = vmatprep.subr.mxu0 0.0
    %5537 = vmatpush1.msra.mxu0 0.0
    %5538 = vmatprep.subr.mxu0 0.0
    %5539 = vmatpush1.msra.mxu0 0.0
    %5540 = vmatprep.subr.mxu0 0.0
    %5541 = vmatpush1.msra.mxu0 0.0
    %5542 = vmatprep.subr.mxu0 0.0
    %5543 = vmatpush1.msra.mxu0 0.0
    %5544 = vmatprep.subr.mxu0 0.0
    %5545 = vmatpush1.msra.mxu0 0.0
    %5546 = vmatprep.subr.mxu0 0.0
    %v5547 = vand.u32 %v5436, 4294901760
    %v5548 = vsub.f32 %v5436, %v5547
    %v5549 = vand.u32 %v5548, 4294901760
    %v5550 = vsub.f32 %v5548, %v5549
    %v5551 = vand.u32 %v5550, 4294901760
    %5552 = vmatpush1.msra.mxu0 %v5551
    %5553 = vmatprep.subr.mxu0 0.0
    %v5554 = vand.u32 %v5435, 4294901760
    %v5555 = vsub.f32 %v5435, %v5554
    %v5556 = vand.u32 %v5555, 4294901760
    %v5557 = vsub.f32 %v5555, %v5556
    %v5558 = vand.u32 %v5557, 4294901760
    %5559 = vmatpush1.msra.mxu0 %v5558
    %5560 = vmatprep.subr.mxu0 0.0
    %5561 = vmatpush2.msra.mxu0 0.0
    %5562 = vmatprep.subr.mxu0 0.0
    %5563 = vmatpush2.msra.mxu0 0.0
    %5564 = vmatprep.subr.mxu0 0.0
    %5565 = vmatpush2.msra.mxu0 0.0
    %5566 = vmatprep.subr.mxu0 0.0
    %5567 = vmatpush2.msra.mxu0 0.0
    %5568 = vmatprep.subr.mxu0 0.0
    %5569 = vmatpush2.msra.mxu0 0.0
    %5570 = vmatprep.subr.mxu0 0.0
    %5571 = vmatpush2.msra.mxu0 0.0
    %5572 = vmatprep.subr.mxu0 0.0
    %5573 = vmatpush2.msra.mxu0 0.0
    %5574 = vmatprep.subr.mxu0 0.0
    %5575 = vmatpush2.msra.mxu0 0.0
    %5576 = vmatprep.subr.mxu0 0.0
    %5577 = vmatpush2.msra.mxu0 0.0
    %5578 = vmatprep.subr.mxu0 0.0
    %5579 = vmatpush2.msra.mxu0 0.0
    %5580 = vmatprep.subr.mxu0 0.0
    %5581 = vmatpush2.msra.mxu0 0.0
    %5582 = vmatprep.subr.mxu0 0.0
    %5583 = vmatpush2.msra.mxu0 0.0
    %5584 = vmatprep.subr.mxu0 0.0
    %5585 = vmatpush2.msra.mxu0 0.0
    %5586 = vmatprep.subr.mxu0 0.0
    %5587 = vmatpush2.msra.mxu0 0.0
    %5588 = vmatprep.subr.mxu0 0.0
    %5589 = vmatpush2.msra.mxu0 0.0
    %5590 = vmatprep.subr.mxu0 0.0
    %5591 = vmatpush2.msra.mxu0 0.0
    %5592 = vmatprep.mubr.f32.mxu0 0.0
    %v5593 = vand.u32 %v5439, 4294901760
    %5594 = vmatmul.mubr.f32.gmra.mxu0 %v5593
    %v5595 = vpop.f32.mrf.mxu0
    %v5596 = vadd.f32 %v5515, %v5595
    %v5597 = vpop.f32.mrf.mxu0
    %5598 = vdwg.mxu0
    %5599 = vmatprep.subr.mxu0 0.0
    %5600 = vmatpush1.msra.mxu0 0.0
    %5601 = vmatprep.subr.mxu0 0.0
    %5602 = vmatpush1.msra.mxu0 0.0
    %5603 = vmatprep.subr.mxu0 0.0
    %5604 = vmatpush1.msra.mxu0 0.0
    %5605 = vmatprep.subr.mxu0 0.0
    %5606 = vmatpush1.msra.mxu0 0.0
    %5607 = vmatprep.subr.mxu0 0.0
    %5608 = vmatpush1.msra.mxu0 0.0
    %5609 = vmatprep.subr.mxu0 0.0
    %5610 = vmatpush1.msra.mxu0 0.0
    %5611 = vmatprep.subr.mxu0 0.0
    %5612 = vmatpush1.msra.mxu0 0.0
    %5613 = vmatprep.subr.mxu0 0.0
    %5614 = vmatpush1.msra.mxu0 0.0
    %5615 = vmatprep.subr.mxu0 0.0
    %5616 = vmatpush1.msra.mxu0 0.0
    %5617 = vmatprep.subr.mxu0 0.0
    %5618 = vmatpush1.msra.mxu0 0.0
    %5619 = vmatprep.subr.mxu0 0.0
    %5620 = vmatpush1.msra.mxu0 0.0
    %5621 = vmatprep.subr.mxu0 0.0
    %5622 = vmatpush1.msra.mxu0 0.0
    %5623 = vmatprep.subr.mxu0 0.0
    %5624 = vmatpush1.msra.mxu0 0.0
    %5625 = vmatprep.subr.mxu0 0.0
    %5626 = vmatpush1.msra.mxu0 0.0
    %5627 = vmatprep.subr.mxu0 0.0
    %v5628 = vand.u32 %v5436, 4294901760
    %v5629 = vsub.f32 %v5436, %v5628
    %5630 = vmatpush1.msra.mxu0 %v5629
    %5631 = vmatprep.subr.mxu0 0.0
    %v5632 = vand.u32 %v5435, 4294901760
    %v5633 = vsub.f32 %v5435, %v5632
    %5634 = vmatpush1.msra.mxu0 %v5633
    %5635 = vmatprep.subr.mxu0 0.0
    %5636 = vmatpush2.msra.mxu0 0.0
    %5637 = vmatprep.subr.mxu0 0.0
    %5638 = vmatpush2.msra.mxu0 0.0
    %5639 = vmatprep.subr.mxu0 0.0
    %5640 = vmatpush2.msra.mxu0 0.0
    %5641 = vmatprep.subr.mxu0 0.0
    %5642 = vmatpush2.msra.mxu0 0.0
    %5643 = vmatprep.subr.mxu0 0.0
    %5644 = vmatpush2.msra.mxu0 0.0
    %5645 = vmatprep.subr.mxu0 0.0
    %5646 = vmatpush2.msra.mxu0 0.0
    %5647 = vmatprep.subr.mxu0 0.0
    %5648 = vmatpush2.msra.mxu0 0.0
    %5649 = vmatprep.subr.mxu0 0.0
    %5650 = vmatpush2.msra.mxu0 0.0
    %5651 = vmatprep.subr.mxu0 0.0
    %5652 = vmatpush2.msra.mxu0 0.0
    %5653 = vmatprep.subr.mxu0 0.0
    %5654 = vmatpush2.msra.mxu0 0.0
    %5655 = vmatprep.subr.mxu0 0.0
    %5656 = vmatpush2.msra.mxu0 0.0
    %5657 = vmatprep.subr.mxu0 0.0
    %5658 = vmatpush2.msra.mxu0 0.0
    %5659 = vmatprep.subr.mxu0 0.0
    %5660 = vmatpush2.msra.mxu0 0.0
    %5661 = vmatprep.subr.mxu0 0.0
    %5662 = vmatpush2.msra.mxu0 0.0
    %5663 = vmatprep.subr.mxu0 0.0
    %5664 = vmatpush2.msra.mxu0 0.0
    %5665 = vmatprep.subr.mxu0 0.0
    %5666 = vmatpush2.msra.mxu0 0.0
    %5667 = vmatprep.mubr.f32.mxu0 0.0
    %v5668 = vand.u32 %v5439, 4294901760
    %v5669 = vsub.f32 %v5439, %v5668
    %5670 = vmatmul.mubr.f32.gmra.mxu0 %v5669
    %v5671 = vpop.f32.mrf.mxu0
    %v5672 = vadd.f32 %v5596, %v5671
    %v5673 = vpop.f32.mrf.mxu0
    %5674 = vdwg.mxu0
    %5675 = vmatprep.subr.mxu0 0.0
    %5676 = vmatpush1.msra.mxu0 0.0
    %5677 = vmatprep.subr.mxu0 0.0
    %5678 = vmatpush1.msra.mxu0 0.0
    %5679 = vmatprep.subr.mxu0 0.0
    %5680 = vmatpush1.msra.mxu0 0.0
    %5681 = vmatprep.subr.mxu0 0.0
    %5682 = vmatpush1.msra.mxu0 0.0
    %5683 = vmatprep.subr.mxu0 0.0
    %5684 = vmatpush1.msra.mxu0 0.0
    %5685 = vmatprep.subr.mxu0 0.0
    %5686 = vmatpush1.msra.mxu0 0.0
    %5687 = vmatprep.subr.mxu0 0.0
    %5688 = vmatpush1.msra.mxu0 0.0
    %5689 = vmatprep.subr.mxu0 0.0
    %5690 = vmatpush1.msra.mxu0 0.0
    %5691 = vmatprep.subr.mxu0 0.0
    %5692 = vmatpush1.msra.mxu0 0.0
    %5693 = vmatprep.subr.mxu0 0.0
    %5694 = vmatpush1.msra.mxu0 0.0
    %5695 = vmatprep.subr.mxu0 0.0
    %5696 = vmatpush1.msra.mxu0 0.0
    %5697 = vmatprep.subr.mxu0 0.0
    %5698 = vmatpush1.msra.mxu0 0.0
    %5699 = vmatprep.subr.mxu0 0.0
    %5700 = vmatpush1.msra.mxu0 0.0
    %5701 = vmatprep.subr.mxu0 0.0
    %5702 = vmatpush1.msra.mxu0 0.0
    %5703 = vmatprep.subr.mxu0 0.0
    %v5704 = vand.u32 %v5436, 4294901760
    %5705 = vmatpush1.msra.mxu0 %v5704
    %5706 = vmatprep.subr.mxu0 0.0
    %v5707 = vand.u32 %v5435, 4294901760
    %5708 = vmatpush1.msra.mxu0 %v5707
    %5709 = vmatprep.subr.mxu0 0.0
    %5710 = vmatpush2.msra.mxu0 0.0
    %5711 = vmatprep.subr.mxu0 0.0
    %5712 = vmatpush2.msra.mxu0 0.0
    %5713 = vmatprep.subr.mxu0 0.0
    %5714 = vmatpush2.msra.mxu0 0.0
    %5715 = vmatprep.subr.mxu0 0.0
    %5716 = vmatpush2.msra.mxu0 0.0
    %5717 = vmatprep.subr.mxu0 0.0
    %5718 = vmatpush2.msra.mxu0 0.0
    %5719 = vmatprep.subr.mxu0 0.0
    %5720 = vmatpush2.msra.mxu0 0.0
    %5721 = vmatprep.subr.mxu0 0.0
    %5722 = vmatpush2.msra.mxu0 0.0
    %5723 = vmatprep.subr.mxu0 0.0
    %5724 = vmatpush2.msra.mxu0 0.0
    %5725 = vmatprep.subr.mxu0 0.0
    %5726 = vmatpush2.msra.mxu0 0.0
    %5727 = vmatprep.subr.mxu0 0.0
    %5728 = vmatpush2.msra.mxu0 0.0
    %5729 = vmatprep.subr.mxu0 0.0
    %5730 = vmatpush2.msra.mxu0 0.0
    %5731 = vmatprep.subr.mxu0 0.0
    %5732 = vmatpush2.msra.mxu0 0.0
    %5733 = vmatprep.subr.mxu0 0.0
    %5734 = vmatpush2.msra.mxu0 0.0
    %5735 = vmatprep.subr.mxu0 0.0
    %5736 = vmatpush2.msra.mxu0 0.0
    %5737 = vmatprep.subr.mxu0 0.0
    %5738 = vmatpush2.msra.mxu0 0.0
    %5739 = vmatprep.subr.mxu0 0.0
    %5740 = vmatpush2.msra.mxu0 0.0
    %5741 = vmatprep.mubr.f32.mxu0 0.0
    %v5742 = vand.u32 %v5439, 4294901760
    %v5743 = vsub.f32 %v5439, %v5742
    %v5744 = vand.u32 %v5743, 4294901760
    %5745 = vmatmul.mubr.f32.gmra.mxu0 %v5744
    %v5746 = vpop.f32.mrf.mxu0
    %v5747 = vadd.f32 %v5672, %v5746
    %v5748 = vpop.f32.mrf.mxu0
    %5749 = vdwg.mxu0
    %5750 = vmatprep.subr.mxu0 0.0
    %5751 = vmatpush1.msra.mxu0 0.0
    %5752 = vmatprep.subr.mxu0 0.0
    %5753 = vmatpush1.msra.mxu0 0.0
    %5754 = vmatprep.subr.mxu0 0.0
    %5755 = vmatpush1.msra.mxu0 0.0
    %5756 = vmatprep.subr.mxu0 0.0
    %5757 = vmatpush1.msra.mxu0 0.0
    %5758 = vmatprep.subr.mxu0 0.0
    %5759 = vmatpush1.msra.mxu0 0.0
    %5760 = vmatprep.subr.mxu0 0.0
    %5761 = vmatpush1.msra.mxu0 0.0
    %5762 = vmatprep.subr.mxu0 0.0
    %5763 = vmatpush1.msra.mxu0 0.0
    %5764 = vmatprep.subr.mxu0 0.0
    %5765 = vmatpush1.msra.mxu0 0.0
    %5766 = vmatprep.subr.mxu0 0.0
    %5767 = vmatpush1.msra.mxu0 0.0
    %5768 = vmatprep.subr.mxu0 0.0
    %5769 = vmatpush1.msra.mxu0 0.0
    %5770 = vmatprep.subr.mxu0 0.0
    %5771 = vmatpush1.msra.mxu0 0.0
    %5772 = vmatprep.subr.mxu0 0.0
    %5773 = vmatpush1.msra.mxu0 0.0
    %5774 = vmatprep.subr.mxu0 0.0
    %5775 = vmatpush1.msra.mxu0 0.0
    %5776 = vmatprep.subr.mxu0 0.0
    %5777 = vmatpush1.msra.mxu0 0.0
    %5778 = vmatprep.subr.mxu0 0.0
    %v5779 = vand.u32 %v5436, 4294901760
    %v5780 = vsub.f32 %v5436, %v5779
    %v5781 = vand.u32 %v5780, 4294901760
    %5782 = vmatpush1.msra.mxu0 %v5781
    %5783 = vmatprep.subr.mxu0 0.0
    %v5784 = vand.u32 %v5435, 4294901760
    %v5785 = vsub.f32 %v5435, %v5784
    %v5786 = vand.u32 %v5785, 4294901760
    %5787 = vmatpush1.msra.mxu0 %v5786
    %5788 = vmatprep.subr.mxu0 0.0
    %5789 = vmatpush2.msra.mxu0 0.0
    %5790 = vmatprep.subr.mxu0 0.0
    %5791 = vmatpush2.msra.mxu0 0.0
    %5792 = vmatprep.subr.mxu0 0.0
    %5793 = vmatpush2.msra.mxu0 0.0
    %5794 = vmatprep.subr.mxu0 0.0
    %5795 = vmatpush2.msra.mxu0 0.0
    %5796 = vmatprep.subr.mxu0 0.0
    %5797 = vmatpush2.msra.mxu0 0.0
    %5798 = vmatprep.subr.mxu0 0.0
    %5799 = vmatpush2.msra.mxu0 0.0
    %5800 = vmatprep.subr.mxu0 0.0
    %5801 = vmatpush2.msra.mxu0 0.0
    %5802 = vmatprep.subr.mxu0 0.0
    %5803 = vmatpush2.msra.mxu0 0.0
    %5804 = vmatprep.subr.mxu0 0.0
    %5805 = vmatpush2.msra.mxu0 0.0
    %5806 = vmatprep.subr.mxu0 0.0
    %5807 = vmatpush2.msra.mxu0 0.0
    %5808 = vmatprep.subr.mxu0 0.0
    %5809 = vmatpush2.msra.mxu0 0.0
    %5810 = vmatprep.subr.mxu0 0.0
    %5811 = vmatpush2.msra.mxu0 0.0
    %5812 = vmatprep.subr.mxu0 0.0
    %5813 = vmatpush2.msra.mxu0 0.0
    %5814 = vmatprep.subr.mxu0 0.0
    %5815 = vmatpush2.msra.mxu0 0.0
    %5816 = vmatprep.subr.mxu0 0.0
    %5817 = vmatpush2.msra.mxu0 0.0
    %5818 = vmatprep.subr.mxu0 0.0
    %5819 = vmatpush2.msra.mxu0 0.0
    %5820 = vmatprep.mubr.f32.mxu0 0.0
    %v5821 = vand.u32 %v5439, 4294901760
    %5822 = vmatmul.mubr.f32.gmra.mxu0 %v5821
    %v5823 = vpop.f32.mrf.mxu0
    %v5824 = vadd.f32 %v5747, %v5823
    %v5825 = vpop.f32.mrf.mxu0
    %5826 = vdwg.mxu0
    %5827 = vmatprep.subr.mxu0 0.0
    %5828 = vmatpush1.msra.mxu0 0.0
    %5829 = vmatprep.subr.mxu0 0.0
    %5830 = vmatpush1.msra.mxu0 0.0
    %5831 = vmatprep.subr.mxu0 0.0
    %5832 = vmatpush1.msra.mxu0 0.0
    %5833 = vmatprep.subr.mxu0 0.0
    %5834 = vmatpush1.msra.mxu0 0.0
    %5835 = vmatprep.subr.mxu0 0.0
    %5836 = vmatpush1.msra.mxu0 0.0
    %5837 = vmatprep.subr.mxu0 0.0
    %5838 = vmatpush1.msra.mxu0 0.0
    %5839 = vmatprep.subr.mxu0 0.0
    %5840 = vmatpush1.msra.mxu0 0.0
    %5841 = vmatprep.subr.mxu0 0.0
    %5842 = vmatpush1.msra.mxu0 0.0
    %5843 = vmatprep.subr.mxu0 0.0
    %5844 = vmatpush1.msra.mxu0 0.0
    %5845 = vmatprep.subr.mxu0 0.0
    %5846 = vmatpush1.msra.mxu0 0.0
    %5847 = vmatprep.subr.mxu0 0.0
    %5848 = vmatpush1.msra.mxu0 0.0
    %5849 = vmatprep.subr.mxu0 0.0
    %5850 = vmatpush1.msra.mxu0 0.0
    %5851 = vmatprep.subr.mxu0 0.0
    %5852 = vmatpush1.msra.mxu0 0.0
    %5853 = vmatprep.subr.mxu0 0.0
    %5854 = vmatpush1.msra.mxu0 0.0
    %5855 = vmatprep.subr.mxu0 0.0
    %v5856 = vand.u32 %v5436, 4294901760
    %5857 = vmatpush1.msra.mxu0 %v5856
    %5858 = vmatprep.subr.mxu0 0.0
    %v5859 = vand.u32 %v5435, 4294901760
    %5860 = vmatpush1.msra.mxu0 %v5859
    %5861 = vmatprep.subr.mxu0 0.0
    %5862 = vmatpush2.msra.mxu0 0.0
    %5863 = vmatprep.subr.mxu0 0.0
    %5864 = vmatpush2.msra.mxu0 0.0
    %5865 = vmatprep.subr.mxu0 0.0
    %5866 = vmatpush2.msra.mxu0 0.0
    %5867 = vmatprep.subr.mxu0 0.0
    %5868 = vmatpush2.msra.mxu0 0.0
    %5869 = vmatprep.subr.mxu0 0.0
    %5870 = vmatpush2.msra.mxu0 0.0
    %5871 = vmatprep.subr.mxu0 0.0
    %5872 = vmatpush2.msra.mxu0 0.0
    %5873 = vmatprep.subr.mxu0 0.0
    %5874 = vmatpush2.msra.mxu0 0.0
    %5875 = vmatprep.subr.mxu0 0.0
    %5876 = vmatpush2.msra.mxu0 0.0
    %5877 = vmatprep.subr.mxu0 0.0
    %5878 = vmatpush2.msra.mxu0 0.0
    %5879 = vmatprep.subr.mxu0 0.0
    %5880 = vmatpush2.msra.mxu0 0.0
    %5881 = vmatprep.subr.mxu0 0.0
    %5882 = vmatpush2.msra.mxu0 0.0
    %5883 = vmatprep.subr.mxu0 0.0
    %5884 = vmatpush2.msra.mxu0 0.0
    %5885 = vmatprep.subr.mxu0 0.0
    %5886 = vmatpush2.msra.mxu0 0.0
    %5887 = vmatprep.subr.mxu0 0.0
    %5888 = vmatpush2.msra.mxu0 0.0
    %5889 = vmatprep.subr.mxu0 0.0
    %5890 = vmatpush2.msra.mxu0 0.0
    %5891 = vmatprep.subr.mxu0 0.0
    %5892 = vmatpush2.msra.mxu0 0.0
    %5893 = vmatprep.mubr.f32.mxu0 0.0
    %v5894 = vand.u32 %v5439, 4294901760
    %5895 = vmatmul.mubr.f32.gmra.mxu0 %v5894
    %v5896 = vpop.f32.mrf.mxu0
    %v5897 = vadd.f32 %v5824, %v5896
    %v5898 = vpop.f32.mrf.mxu0
    %5899 = vdwg.mxu0
    %v5900 = vld [vmem:[#allocation4] sm:$0x1]
    %5902 = vset.pattern.permute.xlu0 0
    %5903 = vperm.xlu0 %5902, %v5900
    %v5904 = vpop.permute.xlu0 %5903
    %v5906 = vlaneseq
    %v5907 = vshrl.u32 %v5906, 7
    %v5908 = vsub.s32 0, %v5907
    %v5909 = vrot.slane %v5904, %v5908
    %v5911 = vsel %vm737, %v5897, 0
    %5913 = vmatprep.subr.mxu0 0.0
    %5914 = vmatpush1.msra.mxu0 0.0
    %5915 = vmatprep.subr.mxu0 0.0
    %5916 = vmatpush1.msra.mxu0 0.0
    %5917 = vmatprep.subr.mxu0 0.0
    %5918 = vmatpush1.msra.mxu0 0.0
    %5919 = vmatprep.subr.mxu0 0.0
    %5920 = vmatpush1.msra.mxu0 0.0
    %5921 = vmatprep.subr.mxu0 0.0
    %5922 = vmatpush1.msra.mxu0 0.0
    %5923 = vmatprep.subr.mxu0 0.0
    %5924 = vmatpush1.msra.mxu0 0.0
    %5925 = vmatprep.subr.mxu0 0.0
    %5926 = vmatpush1.msra.mxu0 0.0
    %5927 = vmatprep.subr.mxu0 0.0
    %5928 = vmatpush1.msra.mxu0 0.0
    %5929 = vmatprep.subr.mxu0 0.0
    %5930 = vmatpush1.msra.mxu0 0.0
    %5931 = vmatprep.subr.mxu0 0.0
    %5932 = vmatpush1.msra.mxu0 0.0
    %5933 = vmatprep.subr.mxu0 0.0
    %5934 = vmatpush1.msra.mxu0 0.0
    %5935 = vmatprep.subr.mxu0 0.0
    %5936 = vmatpush1.msra.mxu0 0.0
    %5937 = vmatprep.subr.mxu0 0.0
    %5938 = vmatpush1.msra.mxu0 0.0
    %5939 = vmatprep.subr.mxu0 0.0
    %5940 = vmatpush1.msra.mxu0 0.0
    %5941 = vmatprep.subr.mxu0 0.0
    %v5942 = vand.u32 %v62, 4294901760
    %5943 = vmatpush1.msra.mxu0 %v5942
    %5944 = vmatprep.subr.mxu0 0.0
    %v5945 = vand.u32 %v61, 4294901760
    %5946 = vmatpush1.msra.mxu0 %v5945
    %5947 = vmatprep.subr.mxu0 0.0
    %5948 = vmatpush2.msra.mxu0 0.0
    %5949 = vmatprep.subr.mxu0 0.0
    %5950 = vmatpush2.msra.mxu0 0.0
    %5951 = vmatprep.subr.mxu0 0.0
    %5952 = vmatpush2.msra.mxu0 0.0
    %5953 = vmatprep.subr.mxu0 0.0
    %5954 = vmatpush2.msra.mxu0 0.0
    %5955 = vmatprep.subr.mxu0 0.0
    %5956 = vmatpush2.msra.mxu0 0.0
    %5957 = vmatprep.subr.mxu0 0.0
    %5958 = vmatpush2.msra.mxu0 0.0
    %5959 = vmatprep.subr.mxu0 0.0
    %5960 = vmatpush2.msra.mxu0 0.0
    %5961 = vmatprep.subr.mxu0 0.0
    %5962 = vmatpush2.msra.mxu0 0.0
    %5963 = vmatprep.subr.mxu0 0.0
    %5964 = vmatpush2.msra.mxu0 0.0
    %5965 = vmatprep.subr.mxu0 0.0
    %5966 = vmatpush2.msra.mxu0 0.0
    %5967 = vmatprep.subr.mxu0 0.0
    %5968 = vmatpush2.msra.mxu0 0.0
    %5969 = vmatprep.subr.mxu0 0.0
    %5970 = vmatpush2.msra.mxu0 0.0
    %5971 = vmatprep.subr.mxu0 0.0
    %5972 = vmatpush2.msra.mxu0 0.0
    %5973 = vmatprep.subr.mxu0 0.0
    %5974 = vmatpush2.msra.mxu0 0.0
    %5975 = vmatprep.subr.mxu0 0.0
    %5976 = vmatpush2.msra.mxu0 0.0
    %5977 = vmatprep.subr.mxu0 0.0
    %5978 = vmatpush2.msra.mxu0 0.0
    %5979 = vmatprep.mubr.f32.mxu0 0.0
    %v5980 = vand.u32 %v5911, 4294901760
    %v5981 = vsub.f32 %v5911, %v5980
    %v5982 = vand.u32 %v5981, 4294901760
    %v5983 = vsub.f32 %v5981, %v5982
    %v5984 = vand.u32 %v5983, 4294901760
    %5985 = vmatmul.mubr.f32.gmra.mxu0 %v5984
    %v5986 = vpop.f32.mrf.mxu0
    %v5987 = vadd.f32 %v5909, %v5986
    %v5988 = vpop.f32.mrf.mxu0
    %5989 = vdwg.mxu0
    %5990 = vmatprep.subr.mxu0 0.0
    %5991 = vmatpush1.msra.mxu0 0.0
    %5992 = vmatprep.subr.mxu0 0.0
    %5993 = vmatpush1.msra.mxu0 0.0
    %5994 = vmatprep.subr.mxu0 0.0
    %5995 = vmatpush1.msra.mxu0 0.0
    %5996 = vmatprep.subr.mxu0 0.0
    %5997 = vmatpush1.msra.mxu0 0.0
    %5998 = vmatprep.subr.mxu0 0.0
    %5999 = vmatpush1.msra.mxu0 0.0
    %6000 = vmatprep.subr.mxu0 0.0
    %6001 = vmatpush1.msra.mxu0 0.0
    %6002 = vmatprep.subr.mxu0 0.0
    %6003 = vmatpush1.msra.mxu0 0.0
    %6004 = vmatprep.subr.mxu0 0.0
    %6005 = vmatpush1.msra.mxu0 0.0
    %6006 = vmatprep.subr.mxu0 0.0
    %6007 = vmatpush1.msra.mxu0 0.0
    %6008 = vmatprep.subr.mxu0 0.0
    %6009 = vmatpush1.msra.mxu0 0.0
    %6010 = vmatprep.subr.mxu0 0.0
    %6011 = vmatpush1.msra.mxu0 0.0
    %6012 = vmatprep.subr.mxu0 0.0
    %6013 = vmatpush1.msra.mxu0 0.0
    %6014 = vmatprep.subr.mxu0 0.0
    %6015 = vmatpush1.msra.mxu0 0.0
    %6016 = vmatprep.subr.mxu0 0.0
    %6017 = vmatpush1.msra.mxu0 0.0
    %6018 = vmatprep.subr.mxu0 0.0
    %v6019 = vand.u32 %v62, 4294901760
    %v6020 = vsub.f32 %v62, %v6019
    %v6021 = vand.u32 %v6020, 4294901760
    %v6022 = vsub.f32 %v6020, %v6021
    %v6023 = vand.u32 %v6022, 4294901760
    %6024 = vmatpush1.msra.mxu0 %v6023
    %6025 = vmatprep.subr.mxu0 0.0
    %v6026 = vand.u32 %v61, 4294901760
    %v6027 = vsub.f32 %v61, %v6026
    %v6028 = vand.u32 %v6027, 4294901760
    %v6029 = vsub.f32 %v6027, %v6028
    %v6030 = vand.u32 %v6029, 4294901760
    %6031 = vmatpush1.msra.mxu0 %v6030
    %6032 = vmatprep.subr.mxu0 0.0
    %6033 = vmatpush2.msra.mxu0 0.0
    %6034 = vmatprep.subr.mxu0 0.0
    %6035 = vmatpush2.msra.mxu0 0.0
    %6036 = vmatprep.subr.mxu0 0.0
    %6037 = vmatpush2.msra.mxu0 0.0
    %6038 = vmatprep.subr.mxu0 0.0
    %6039 = vmatpush2.msra.mxu0 0.0
    %6040 = vmatprep.subr.mxu0 0.0
    %6041 = vmatpush2.msra.mxu0 0.0
    %6042 = vmatprep.subr.mxu0 0.0
    %6043 = vmatpush2.msra.mxu0 0.0
    %6044 = vmatprep.subr.mxu0 0.0
    %6045 = vmatpush2.msra.mxu0 0.0
    %6046 = vmatprep.subr.mxu0 0.0
    %6047 = vmatpush2.msra.mxu0 0.0
    %6048 = vmatprep.subr.mxu0 0.0
    %6049 = vmatpush2.msra.mxu0 0.0
    %6050 = vmatprep.subr.mxu0 0.0
    %6051 = vmatpush2.msra.mxu0 0.0
    %6052 = vmatprep.subr.mxu0 0.0
    %6053 = vmatpush2.msra.mxu0 0.0
    %6054 = vmatprep.subr.mxu0 0.0
    %6055 = vmatpush2.msra.mxu0 0.0
    %6056 = vmatprep.subr.mxu0 0.0
    %6057 = vmatpush2.msra.mxu0 0.0
    %6058 = vmatprep.subr.mxu0 0.0
    %6059 = vmatpush2.msra.mxu0 0.0
    %6060 = vmatprep.subr.mxu0 0.0
    %6061 = vmatpush2.msra.mxu0 0.0
    %6062 = vmatprep.subr.mxu0 0.0
    %6063 = vmatpush2.msra.mxu0 0.0
    %6064 = vmatprep.mubr.f32.mxu0 0.0
    %v6065 = vand.u32 %v5911, 4294901760
    %6066 = vmatmul.mubr.f32.gmra.mxu0 %v6065
    %v6067 = vpop.f32.mrf.mxu0
    %v6068 = vadd.f32 %v5987, %v6067
    %v6069 = vpop.f32.mrf.mxu0
    %6070 = vdwg.mxu0
    %6071 = vmatprep.subr.mxu0 0.0
    %6072 = vmatpush1.msra.mxu0 0.0
    %6073 = vmatprep.subr.mxu0 0.0
    %6074 = vmatpush1.msra.mxu0 0.0
    %6075 = vmatprep.subr.mxu0 0.0
    %6076 = vmatpush1.msra.mxu0 0.0
    %6077 = vmatprep.subr.mxu0 0.0
    %6078 = vmatpush1.msra.mxu0 0.0
    %6079 = vmatprep.subr.mxu0 0.0
    %6080 = vmatpush1.msra.mxu0 0.0
    %6081 = vmatprep.subr.mxu0 0.0
    %6082 = vmatpush1.msra.mxu0 0.0
    %6083 = vmatprep.subr.mxu0 0.0
    %6084 = vmatpush1.msra.mxu0 0.0
    %6085 = vmatprep.subr.mxu0 0.0
    %6086 = vmatpush1.msra.mxu0 0.0
    %6087 = vmatprep.subr.mxu0 0.0
    %6088 = vmatpush1.msra.mxu0 0.0
    %6089 = vmatprep.subr.mxu0 0.0
    %6090 = vmatpush1.msra.mxu0 0.0
    %6091 = vmatprep.subr.mxu0 0.0
    %6092 = vmatpush1.msra.mxu0 0.0
    %6093 = vmatprep.subr.mxu0 0.0
    %6094 = vmatpush1.msra.mxu0 0.0
    %6095 = vmatprep.subr.mxu0 0.0
    %6096 = vmatpush1.msra.mxu0 0.0
    %6097 = vmatprep.subr.mxu0 0.0
    %6098 = vmatpush1.msra.mxu0 0.0
    %6099 = vmatprep.subr.mxu0 0.0
    %v6100 = vand.u32 %v62, 4294901760
    %v6101 = vsub.f32 %v62, %v6100
    %6102 = vmatpush1.msra.mxu0 %v6101
    %6103 = vmatprep.subr.mxu0 0.0
    %v6104 = vand.u32 %v61, 4294901760
    %v6105 = vsub.f32 %v61, %v6104
    %6106 = vmatpush1.msra.mxu0 %v6105
    %6107 = vmatprep.subr.mxu0 0.0
    %6108 = vmatpush2.msra.mxu0 0.0
    %6109 = vmatprep.subr.mxu0 0.0
    %6110 = vmatpush2.msra.mxu0 0.0
    %6111 = vmatprep.subr.mxu0 0.0
    %6112 = vmatpush2.msra.mxu0 0.0
    %6113 = vmatprep.subr.mxu0 0.0
    %6114 = vmatpush2.msra.mxu0 0.0
    %6115 = vmatprep.subr.mxu0 0.0
    %6116 = vmatpush2.msra.mxu0 0.0
    %6117 = vmatprep.subr.mxu0 0.0
    %6118 = vmatpush2.msra.mxu0 0.0
    %6119 = vmatprep.subr.mxu0 0.0
    %6120 = vmatpush2.msra.mxu0 0.0
    %6121 = vmatprep.subr.mxu0 0.0
    %6122 = vmatpush2.msra.mxu0 0.0
    %6123 = vmatprep.subr.mxu0 0.0
    %6124 = vmatpush2.msra.mxu0 0.0
    %6125 = vmatprep.subr.mxu0 0.0
    %6126 = vmatpush2.msra.mxu0 0.0
    %6127 = vmatprep.subr.mxu0 0.0
    %6128 = vmatpush2.msra.mxu0 0.0
    %6129 = vmatprep.subr.mxu0 0.0
    %6130 = vmatpush2.msra.mxu0 0.0
    %6131 = vmatprep.subr.mxu0 0.0
    %6132 = vmatpush2.msra.mxu0 0.0
    %6133 = vmatprep.subr.mxu0 0.0
    %6134 = vmatpush2.msra.mxu0 0.0
    %6135 = vmatprep.subr.mxu0 0.0
    %6136 = vmatpush2.msra.mxu0 0.0
    %6137 = vmatprep.subr.mxu0 0.0
    %6138 = vmatpush2.msra.mxu0 0.0
    %6139 = vmatprep.mubr.f32.mxu0 0.0
    %v6140 = vand.u32 %v5911, 4294901760
    %v6141 = vsub.f32 %v5911, %v6140
    %6142 = vmatmul.mubr.f32.gmra.mxu0 %v6141
    %v6143 = vpop.f32.mrf.mxu0
    %v6144 = vadd.f32 %v6068, %v6143
    %v6145 = vpop.f32.mrf.mxu0
    %6146 = vdwg.mxu0
    %6147 = vmatprep.subr.mxu0 0.0
    %6148 = vmatpush1.msra.mxu0 0.0
    %6149 = vmatprep.subr.mxu0 0.0
    %6150 = vmatpush1.msra.mxu0 0.0
    %6151 = vmatprep.subr.mxu0 0.0
    %6152 = vmatpush1.msra.mxu0 0.0
    %6153 = vmatprep.subr.mxu0 0.0
    %6154 = vmatpush1.msra.mxu0 0.0
    %6155 = vmatprep.subr.mxu0 0.0
    %6156 = vmatpush1.msra.mxu0 0.0
    %6157 = vmatprep.subr.mxu0 0.0
    %6158 = vmatpush1.msra.mxu0 0.0
    %6159 = vmatprep.subr.mxu0 0.0
    %6160 = vmatpush1.msra.mxu0 0.0
    %6161 = vmatprep.subr.mxu0 0.0
    %6162 = vmatpush1.msra.mxu0 0.0
    %6163 = vmatprep.subr.mxu0 0.0
    %6164 = vmatpush1.msra.mxu0 0.0
    %6165 = vmatprep.subr.mxu0 0.0
    %6166 = vmatpush1.msra.mxu0 0.0
    %6167 = vmatprep.subr.mxu0 0.0
    %6168 = vmatpush1.msra.mxu0 0.0
    %6169 = vmatprep.subr.mxu0 0.0
    %6170 = vmatpush1.msra.mxu0 0.0
    %6171 = vmatprep.subr.mxu0 0.0
    %6172 = vmatpush1.msra.mxu0 0.0
    %6173 = vmatprep.subr.mxu0 0.0
    %6174 = vmatpush1.msra.mxu0 0.0
    %6175 = vmatprep.subr.mxu0 0.0
    %v6176 = vand.u32 %v62, 4294901760
    %6177 = vmatpush1.msra.mxu0 %v6176
    %6178 = vmatprep.subr.mxu0 0.0
    %v6179 = vand.u32 %v61, 4294901760
    %6180 = vmatpush1.msra.mxu0 %v6179
    %6181 = vmatprep.subr.mxu0 0.0
    %6182 = vmatpush2.msra.mxu0 0.0
    %6183 = vmatprep.subr.mxu0 0.0
    %6184 = vmatpush2.msra.mxu0 0.0
    %6185 = vmatprep.subr.mxu0 0.0
    %6186 = vmatpush2.msra.mxu0 0.0
    %6187 = vmatprep.subr.mxu0 0.0
    %6188 = vmatpush2.msra.mxu0 0.0
    %6189 = vmatprep.subr.mxu0 0.0
    %6190 = vmatpush2.msra.mxu0 0.0
    %6191 = vmatprep.subr.mxu0 0.0
    %6192 = vmatpush2.msra.mxu0 0.0
    %6193 = vmatprep.subr.mxu0 0.0
    %6194 = vmatpush2.msra.mxu0 0.0
    %6195 = vmatprep.subr.mxu0 0.0
    %6196 = vmatpush2.msra.mxu0 0.0
    %6197 = vmatprep.subr.mxu0 0.0
    %6198 = vmatpush2.msra.mxu0 0.0
    %6199 = vmatprep.subr.mxu0 0.0
    %6200 = vmatpush2.msra.mxu0 0.0
    %6201 = vmatprep.subr.mxu0 0.0
    %6202 = vmatpush2.msra.mxu0 0.0
    %6203 = vmatprep.subr.mxu0 0.0
    %6204 = vmatpush2.msra.mxu0 0.0
    %6205 = vmatprep.subr.mxu0 0.0
    %6206 = vmatpush2.msra.mxu0 0.0
    %6207 = vmatprep.subr.mxu0 0.0
    %6208 = vmatpush2.msra.mxu0 0.0
    %6209 = vmatprep.subr.mxu0 0.0
    %6210 = vmatpush2.msra.mxu0 0.0
    %6211 = vmatprep.subr.mxu0 0.0
    %6212 = vmatpush2.msra.mxu0 0.0
    %6213 = vmatprep.mubr.f32.mxu0 0.0
    %v6214 = vand.u32 %v5911, 4294901760
    %v6215 = vsub.f32 %v5911, %v6214
    %v6216 = vand.u32 %v6215, 4294901760
    %6217 = vmatmul.mubr.f32.gmra.mxu0 %v6216
    %v6218 = vpop.f32.mrf.mxu0
    %v6219 = vadd.f32 %v6144, %v6218
    %v6220 = vpop.f32.mrf.mxu0
    %6221 = vdwg.mxu0
    %6222 = vmatprep.subr.mxu0 0.0
    %6223 = vmatpush1.msra.mxu0 0.0
    %6224 = vmatprep.subr.mxu0 0.0
    %6225 = vmatpush1.msra.mxu0 0.0
    %6226 = vmatprep.subr.mxu0 0.0
    %6227 = vmatpush1.msra.mxu0 0.0
    %6228 = vmatprep.subr.mxu0 0.0
    %6229 = vmatpush1.msra.mxu0 0.0
    %6230 = vmatprep.subr.mxu0 0.0
    %6231 = vmatpush1.msra.mxu0 0.0
    %6232 = vmatprep.subr.mxu0 0.0
    %6233 = vmatpush1.msra.mxu0 0.0
    %6234 = vmatprep.subr.mxu0 0.0
    %6235 = vmatpush1.msra.mxu0 0.0
    %6236 = vmatprep.subr.mxu0 0.0
    %6237 = vmatpush1.msra.mxu0 0.0
    %6238 = vmatprep.subr.mxu0 0.0
    %6239 = vmatpush1.msra.mxu0 0.0
    %6240 = vmatprep.subr.mxu0 0.0
    %6241 = vmatpush1.msra.mxu0 0.0
    %6242 = vmatprep.subr.mxu0 0.0
    %6243 = vmatpush1.msra.mxu0 0.0
    %6244 = vmatprep.subr.mxu0 0.0
    %6245 = vmatpush1.msra.mxu0 0.0
    %6246 = vmatprep.subr.mxu0 0.0
    %6247 = vmatpush1.msra.mxu0 0.0
    %6248 = vmatprep.subr.mxu0 0.0
    %6249 = vmatpush1.msra.mxu0 0.0
    %6250 = vmatprep.subr.mxu0 0.0
    %v6251 = vand.u32 %v62, 4294901760
    %v6252 = vsub.f32 %v62, %v6251
    %v6253 = vand.u32 %v6252, 4294901760
    %6254 = vmatpush1.msra.mxu0 %v6253
    %6255 = vmatprep.subr.mxu0 0.0
    %v6256 = vand.u32 %v61, 4294901760
    %v6257 = vsub.f32 %v61, %v6256
    %v6258 = vand.u32 %v6257, 4294901760
    %6259 = vmatpush1.msra.mxu0 %v6258
    %6260 = vmatprep.subr.mxu0 0.0
    %6261 = vmatpush2.msra.mxu0 0.0
    %6262 = vmatprep.subr.mxu0 0.0
    %6263 = vmatpush2.msra.mxu0 0.0
    %6264 = vmatprep.subr.mxu0 0.0
    %6265 = vmatpush2.msra.mxu0 0.0
    %6266 = vmatprep.subr.mxu0 0.0
    %6267 = vmatpush2.msra.mxu0 0.0
    %6268 = vmatprep.subr.mxu0 0.0
    %6269 = vmatpush2.msra.mxu0 0.0
    %6270 = vmatprep.subr.mxu0 0.0
    %6271 = vmatpush2.msra.mxu0 0.0
    %6272 = vmatprep.subr.mxu0 0.0
    %6273 = vmatpush2.msra.mxu0 0.0
    %6274 = vmatprep.subr.mxu0 0.0
    %6275 = vmatpush2.msra.mxu0 0.0
    %6276 = vmatprep.subr.mxu0 0.0
    %6277 = vmatpush2.msra.mxu0 0.0
    %6278 = vmatprep.subr.mxu0 0.0
    %6279 = vmatpush2.msra.mxu0 0.0
    %6280 = vmatprep.subr.mxu0 0.0
    %6281 = vmatpush2.msra.mxu0 0.0
    %6282 = vmatprep.subr.mxu0 0.0
    %6283 = vmatpush2.msra.mxu0 0.0
    %6284 = vmatprep.subr.mxu0 0.0
    %6285 = vmatpush2.msra.mxu0 0.0
    %6286 = vmatprep.subr.mxu0 0.0
    %6287 = vmatpush2.msra.mxu0 0.0
    %6288 = vmatprep.subr.mxu0 0.0
    %6289 = vmatpush2.msra.mxu0 0.0
    %6290 = vmatprep.subr.mxu0 0.0
    %6291 = vmatpush2.msra.mxu0 0.0
    %6292 = vmatprep.mubr.f32.mxu0 0.0
    %v6293 = vand.u32 %v5911, 4294901760
    %6294 = vmatmul.mubr.f32.gmra.mxu0 %v6293
    %v6295 = vpop.f32.mrf.mxu0
    %v6296 = vadd.f32 %v6219, %v6295
    %v6297 = vpop.f32.mrf.mxu0
    %6298 = vdwg.mxu0
    %6299 = vmatprep.subr.mxu0 0.0
    %6300 = vmatpush1.msra.mxu0 0.0
    %6301 = vmatprep.subr.mxu0 0.0
    %6302 = vmatpush1.msra.mxu0 0.0
    %6303 = vmatprep.subr.mxu0 0.0
    %6304 = vmatpush1.msra.mxu0 0.0
    %6305 = vmatprep.subr.mxu0 0.0
    %6306 = vmatpush1.msra.mxu0 0.0
    %6307 = vmatprep.subr.mxu0 0.0
    %6308 = vmatpush1.msra.mxu0 0.0
    %6309 = vmatprep.subr.mxu0 0.0
    %6310 = vmatpush1.msra.mxu0 0.0
    %6311 = vmatprep.subr.mxu0 0.0
    %6312 = vmatpush1.msra.mxu0 0.0
    %6313 = vmatprep.subr.mxu0 0.0
    %6314 = vmatpush1.msra.mxu0 0.0
    %6315 = vmatprep.subr.mxu0 0.0
    %6316 = vmatpush1.msra.mxu0 0.0
    %6317 = vmatprep.subr.mxu0 0.0
    %6318 = vmatpush1.msra.mxu0 0.0
    %6319 = vmatprep.subr.mxu0 0.0
    %6320 = vmatpush1.msra.mxu0 0.0
    %6321 = vmatprep.subr.mxu0 0.0
    %6322 = vmatpush1.msra.mxu0 0.0
    %6323 = vmatprep.subr.mxu0 0.0
    %6324 = vmatpush1.msra.mxu0 0.0
    %6325 = vmatprep.subr.mxu0 0.0
    %6326 = vmatpush1.msra.mxu0 0.0
    %6327 = vmatprep.subr.mxu0 0.0
    %v6328 = vand.u32 %v62, 4294901760
    %6329 = vmatpush1.msra.mxu0 %v6328
    %6330 = vmatprep.subr.mxu0 0.0
    %v6331 = vand.u32 %v61, 4294901760
    %6332 = vmatpush1.msra.mxu0 %v6331
    %6333 = vmatprep.subr.mxu0 0.0
    %6334 = vmatpush2.msra.mxu0 0.0
    %6335 = vmatprep.subr.mxu0 0.0
    %6336 = vmatpush2.msra.mxu0 0.0
    %6337 = vmatprep.subr.mxu0 0.0
    %6338 = vmatpush2.msra.mxu0 0.0
    %6339 = vmatprep.subr.mxu0 0.0
    %6340 = vmatpush2.msra.mxu0 0.0
    %6341 = vmatprep.subr.mxu0 0.0
    %6342 = vmatpush2.msra.mxu0 0.0
    %6343 = vmatprep.subr.mxu0 0.0
    %6344 = vmatpush2.msra.mxu0 0.0
    %6345 = vmatprep.subr.mxu0 0.0
    %6346 = vmatpush2.msra.mxu0 0.0
    %6347 = vmatprep.subr.mxu0 0.0
    %6348 = vmatpush2.msra.mxu0 0.0
    %6349 = vmatprep.subr.mxu0 0.0
    %6350 = vmatpush2.msra.mxu0 0.0
    %6351 = vmatprep.subr.mxu0 0.0
    %6352 = vmatpush2.msra.mxu0 0.0
    %6353 = vmatprep.subr.mxu0 0.0
    %6354 = vmatpush2.msra.mxu0 0.0
    %6355 = vmatprep.subr.mxu0 0.0
    %6356 = vmatpush2.msra.mxu0 0.0
    %6357 = vmatprep.subr.mxu0 0.0
    %6358 = vmatpush2.msra.mxu0 0.0
    %6359 = vmatprep.subr.mxu0 0.0
    %6360 = vmatpush2.msra.mxu0 0.0
    %6361 = vmatprep.subr.mxu0 0.0
    %6362 = vmatpush2.msra.mxu0 0.0
    %6363 = vmatprep.subr.mxu0 0.0
    %6364 = vmatpush2.msra.mxu0 0.0
    %6365 = vmatprep.mubr.f32.mxu0 0.0
    %v6366 = vand.u32 %v5911, 4294901760
    %6367 = vmatmul.mubr.f32.gmra.mxu0 %v6366
    %v6368 = vpop.f32.mrf.mxu0
    %v6369 = vadd.f32 %v6296, %v6368
    %v6370 = vpop.f32.mrf.mxu0
    %6371 = vdwg.mxu0
    %vm6372 = vcmask 122880
    %6373 = vst.msk [vmem:[%s18] sm:$0x1] %vm6372, %v6369
    %v6374 = vadd.f32 %v5897, %v5909
    %vm6375 = vcmask 254080
    %6376 = vst.msk [vmem:[%s18] sm:$0x1] %vm6375, %v6374
    // Predicated region
    $region70: #{gnn_forward.1} parent=1 // pred_check
      _
    $region71: #{gnn_forward.1} parent=1 // pred_check_branch
      %6378 = sbr.rel (0) target = $region73
    $region72: #{gnn_forward.1} parent=1 // pred_region
      %s6380 = ssub.s32 32, 32
      %6381 = vsyncadd [#allocation6], %s6380
      %s6383 = sshll.u32 [#allocation5], 4
      %s6384 = int_to_ptr.vmem [resolvable:$true] %s6383
      %6386 = dma.vmem_to_hbm [thread:$0]  %s6384, 32, %s17, [#allocation6]
    $region73: #{gnn_forward.1} parent=1 // pred_fallthru
      _
    // Predicated region
    $region74: #{gnn_forward.1} parent=1 // pred_check
      _
    $region75: #{gnn_forward.1} parent=1 // pred_check_branch
      %6388 = sbr.rel (0) target = $region77
    $region76: #{gnn_forward.1} parent=1 // pred_region
      _
    $region77: #{gnn_forward.1} parent=1 // pred_fallthru
      _
    // Predicated region
    $region78: #{gnn_forward.1} parent=1 // pred_check
      _
    $region79: #{gnn_forward.1} parent=1 // pred_check_branch
      %6390 = sbr.rel (0) target = $region81
    $region80: #{gnn_forward.1} parent=1 // pred_region
      %6391 = dma.done [#allocation6], 32
    $region81: #{gnn_forward.1} parent=1 // pred_fallthru
      _
    // Predicated region
    $region82: #{gnn_forward.1} parent=1 // pred_check
      _
    $region83: #{gnn_forward.1} parent=1 // pred_check_branch
      %6393 = sbr.rel (0) target = $region85
    $region84: #{gnn_forward.1} parent=1 // pred_region
      _
    $region85: #{gnn_forward.1} parent=1 // pred_fallthru
      _
    %6394 = vsyncpa [#allocation6], 1

</llo_original>
